<compile_context>
chip_gen: v7x
topology: tpu7x:2x2x1
jax: 0.10.0
libtpu: 0.0.40
codegen_flags: <defaults>
</compile_context>

<pallas_src>
import functools

import jax
import jax.numpy as jnp
from jax.experimental import pallas as pl
from jax.experimental.pallas import tpu as pltpu

_HEAD_PAD = 128          # each head's q/k/v slab padded to one full vreg width
_SQRT_HALF = 0.7071067811865476


# ---------------------------------------------------------------------------
# In-kernel helpers (traced only inside the Pallas kernel)
# ---------------------------------------------------------------------------
def _layernorm(x, g, b, eps):
    mu = jnp.mean(x, axis=-1, keepdims=True)
    var = jnp.mean((x - mu) ** 2, axis=-1, keepdims=True)
    return (x - mu) * jax.lax.rsqrt(var + eps) * g + b


def _erf_approx(x):
    # Abramowitz & Stegun 7.1.26, max abs err ~1.5e-7 (fp32-level).
    a1, a2, a3, a4, a5 = (0.254829592, -0.284496736, 1.421413741,
                          -1.453152027, 1.061405429)
    p = 0.3275911
    sgn = jnp.where(x < 0.0, -1.0, 1.0)
    z = jnp.abs(x)
    t = 1.0 / (1.0 + p * z)
    poly = t * (a1 + t * (a2 + t * (a3 + t * (a4 + t * a5))))
    return sgn * (1.0 - poly * jnp.exp(-z * z))


def _gelu(x):
    # TODO(synk): PyTorch nn.GELU() is exact-erf; lax.erf lowering in Mosaic is
    # not relied upon, so a 1.5e-7-accurate polynomial is used in-kernel.
    return 0.5 * x * (1.0 + _erf_approx(x * _SQRT_HALF))


def _transformer_layer(x, layer, vec_ref, wqkv_ref, wo_ref, w1_ref, b1_ref,
                       w2_ref, *, heads, scale):
    """Pre-LN attention + feed-forward block; both residual adds fused.

    vec_ref[layer] rows: [attn_ln_g, attn_ln_b, attn_out_bias,
                          ff_ln_g,   ff_ln_b,   ff_out_bias]
    All per-head slices below start on 128-lane boundaries (padded at pack
    time); heads are lane-concatenated for a single output-projection matmul.
    """
    f32 = jnp.float32
    l = layer
    hp = heads * _HEAD_PAD

    # ---- attention -------------------------------------------------------
    xn = _layernorm(x, vec_ref[l, 0:1, :], vec_ref[l, 1:2, :], 1e-5)
    qkv = jnp.dot(xn, wqkv_ref[l], preferred_element_type=f32)    # (N1, 3*hp)
    head_outs = []
    for h in range(heads):                                        # static unroll
        lo, hi = h * _HEAD_PAD, (h + 1) * _HEAD_PAD               # 128-aligned
        q = qkv[:, lo:hi]
        k = qkv[:, hp + lo:hp + hi]
        v = qkv[:, 2 * hp + lo:2 * hp + hi]
        s = jax.lax.dot_general(q, k, (((1,), (1,)), ((), ())),
                                preferred_element_type=f32) * scale
        s = s - jnp.max(s, axis=-1, keepdims=True)
        p = jnp.exp(s)
        p = p / jnp.sum(p, axis=-1, keepdims=True)   # exact softmax (parity)
        head_outs.append(jnp.dot(p, v, preferred_element_type=f32))
    o_cat = jnp.concatenate(head_outs, axis=-1)                   # (N1, hp)
    x = x + vec_ref[l, 2:3, :] + jnp.dot(o_cat, wo_ref[l],
                                         preferred_element_type=f32)

    # ---- feed-forward (mlp_dim=4 intermediate never leaves vregs) ---------
    # TODO(synk): with mlp_dim=4 these dots could be VPU broadcast-FMAs to skip
    # MXU issue/drain latency; kept as dots for robustness.
    xn = _layernorm(x, vec_ref[l, 3:4, :], vec_ref[l, 4:5, :], 1e-5)
    h1 = jnp.dot(xn, w1_ref[l], preferred_element_type=f32) + b1_ref[l]
    h1 = _gelu(h1)
    return (x + jnp.dot(h1, w2_ref[l], preferred_element_type=f32)
            + vec_ref[l, 5:6, :])


# ---------------------------------------------------------------------------
# The single fused kernel (one grid step = one batch element)
# ---------------------------------------------------------------------------
def _recfield_vit_kernel(
        patches_ref,
        e_pe_ln1_ref, e_pe_w_ref, e_pe_vec_ref, e_poscls_ref,
        e_vec_ref, e_wqkv_ref, e_wo_ref, e_w1_ref, e_b1_ref, e_w2_ref,
        e_head_ref, proj_w_ref,
        d_vec0_ref, d_pos_ref,
        d_vec_ref, d_wqkv_ref, d_wo_ref, d_w1_ref, d_b1_ref, d_w2_ref,
        rest_w_ref, out_vec_ref, unconv_w_ref,
        out_ref,
        *, enc_depth, dec_depth, enc_heads, dec_heads,
        enc_dim_head, dec_dim_head):
    f32 = jnp.float32

    # -- patch embedding: LN -> Linear -> LN (row 0 is a dummy cls slot) ----
    xp = patches_ref[0]                                           # (N1, patch_dim)
    x = _layernorm(xp, e_pe_ln1_ref[0:1, :], e_pe_ln1_ref[1:2, :], 1e-5)
    x = (jnp.dot(x, e_pe_w_ref[...], preferred_element_type=f32)
         + e_pe_vec_ref[0:1, :])
    x = _layernorm(x, e_pe_vec_ref[1:2, :], e_pe_vec_ref[2:3, :], 1e-5)

    # -- cls token + positional embedding (folded: poscls row 0 = cls+pos0) --
    row = jax.lax.broadcasted_iota(jnp.int32, x.shape, 0)
    x = jnp.where(row == 0, 0.0, x) + e_poscls_ref[...]

    # -- encoder transformer (weights VMEM-resident, loop fully unrolled) ----
    for l in range(enc_depth):
        x = _transformer_layer(x, l, e_vec_ref, e_wqkv_ref, e_wo_ref,
                               e_w1_ref, e_b1_ref, e_w2_ref,
                               heads=enc_heads, scale=enc_dim_head ** -0.5)

    # -- encoder final LN -> to_latent LN -> proj -> + decoder pos ----------
    x = _layernorm(x, e_head_ref[0:1, :], e_head_ref[1:2, :], 1e-5)
    x = _layernorm(x, e_head_ref[2:3, :], e_head_ref[3:4, :], 1e-5)
    x = (jnp.dot(x, proj_w_ref[...], preferred_element_type=f32)
         + d_vec0_ref[0:1, :])
    x = x + d_pos_ref[...]

    # -- decoder transformer -------------------------------------------------
    for l in range(dec_depth):
        x = _transformer_layer(x, l, d_vec_ref, d_wqkv_ref, d_wo_ref,
                               d_w1_ref, d_b1_ref, d_w2_ref,
                               heads=dec_heads, scale=dec_dim_head ** -0.5)

    # -- output head: dec final LN -> restruction -> AdaptiveLN -> unconv ----
    x = _layernorm(x, d_vec0_ref[1:2, :], d_vec0_ref[2:3, :], 1e-5)
    r = (jnp.dot(x, rest_w_ref[...], preferred_element_type=f32)
         + out_vec_ref[0:1, :])
    r = _layernorm(r, out_vec_ref[1:2, :], out_vec_ref[2:3, :], 1e-12)
    y = (jnp.dot(r, unconv_w_ref[...], preferred_element_type=f32)
         + out_vec_ref[3:4, :])
    out_ref[0] = y.astype(out_ref.dtype)          # (N1, p*p); cls row dropped outside


_WEIGHT_ORDER = (
    "e_pe_ln1", "e_pe_w", "e_pe_vec", "e_poscls",
    "e_vec", "e_wqkv", "e_wo", "e_w1", "e_b1", "e_w2",
    "e_head", "proj_w",
    "d_vec0", "d_pos",
    "d_vec", "d_wqkv", "d_wo", "d_w1", "d_b1", "d_w2",
    "rest_w", "out_vec", "unconv_w",
)


# ---------------------------------------------------------------------------
# Parameter packing (done eagerly, once, outside jit)
# ---------------------------------------------------------------------------
def _pad_heads_cols(w, heads, dim_head):
    # (dim, heads*dim_head) -> (dim, heads*_HEAD_PAD); each head slab zero-padded
    dim = w.shape[0]
    w = w.reshape(dim, heads, dim_head)
    w = jnp.pad(w, ((0, 0), (0, 0), (0, _HEAD_PAD - dim_head)))
    return w.reshape(dim, heads * _HEAD_PAD)


def _pad_heads_rows(w, heads, dim_head):
    # (heads*dim_head, dim) -> (heads*_HEAD_PAD, dim); padded rows are zero
    dim = w.shape[1]
    w = w.reshape(heads, dim_head, dim)
    w = jnp.pad(w, ((0, 0), (0, _HEAD_PAD - dim_head), (0, 0)))
    return w.reshape(heads * _HEAD_PAD, dim)


def _pack_layers(vit_p, heads, dim_head):
    inner = heads * dim_head
    vec, wqkv, wo, w1, b1, w2 = [], [], [], [], [], []
    for lp in vit_p["layers"]:
        a, f = lp["attn"], lp["ff"]
        vec.append(jnp.stack([a["ln_g"], a["ln_b"], a["bo"],
                              f["ln_g"], f["ln_b"], f["b2"]], axis=0))
        q = a["wqkv"][:, 0 * inner:1 * inner]
        k = a["wqkv"][:, 1 * inner:2 * inner]
        v = a["wqkv"][:, 2 * inner:3 * inner]
        wqkv.append(jnp.concatenate(
            [_pad_heads_cols(q, heads, dim_head),
             _pad_heads_cols(k, heads, dim_head),
             _pad_heads_cols(v, heads, dim_head)], axis=1))
        wo.append(_pad_heads_rows(a["wo"], heads, dim_head))
        w1.append(f["w1"])
        b1.append(f["b1"].reshape(1, -1))
        w2.append(f["w2"])
    return (jnp.stack(vec), jnp.stack(wqkv), jnp.stack(wo),
            jnp.stack(w1), jnp.stack(b1), jnp.stack(w2))


def pack_recfield_params(params, cfg):
    assert cfg["enc"]["dim_head"] <= _HEAD_PAD
    assert cfg["dec"]["dim_head"] <= _HEAD_PAD
    np0, np1 = cfg["num_patch"]
    n = np0 * np1
    pp = cfg["patch"] * cfg["patch"]
    enc, dec = params["enc"], params["dec"]

    e_vec, e_wqkv, e_wo, e_w1, e_b1, e_w2 = _pack_layers(
        enc, cfg["enc"]["heads"], cfg["enc"]["dim_head"])
    d_vec, d_wqkv, d_wo, d_w1, d_b1, d_w2 = _pack_layers(
        dec, cfg["dec"]["heads"], cfg["dec"]["dim_head"])

    e_pos = enc["pos"][0, :n + 1]                                  # (n+1, De)
    e_poscls = jnp.concatenate([e_pos[:1] + enc["cls"][0], e_pos[1:]], axis=0)

    return {
        "e_pe_ln1": jnp.stack([enc["pe_ln1_g"], enc["pe_ln1_b"]]),
        "e_pe_w": enc["pe_w"],
        "e_pe_vec": jnp.stack([enc["pe_b"], enc["pe_ln2_g"], enc["pe_ln2_b"]]),
        "e_poscls": e_poscls,
        "e_vec": e_vec, "e_wqkv": e_wqkv, "e_wo": e_wo,
        "e_w1": e_w1, "e_b1": e_b1, "e_w2": e_w2,
        "e_head": jnp.stack([enc["final_ln_g"], enc["final_ln_b"],
                             enc["lat_g"], enc["lat_b"]]),
        "proj_w": params["proj_w"],
        "d_vec0": jnp.stack([params["proj_b"],
                             dec["final_ln_g"], dec["final_ln_b"]]),
        "d_pos": dec["pos"][0, :n + 1],
        "d_vec": d_vec, "d_wqkv": d_wqkv, "d_wo": d_wo,
        "d_w1": d_w1, "d_b1": d_b1, "d_w2": d_w2,
        "rest_w": params["rest_w"],
        "out_vec": jnp.stack([params["rest_b"], params["pn_g"], params["pn_b"],
                              jnp.broadcast_to(params["unconv_b"], (pp,))]),
        "unconv_w": params["unconv_w"],
    }


# ---------------------------------------------------------------------------
# Forward pass (mirrors RecFieldViT.forward) - one pallas_call
# ---------------------------------------------------------------------------
def rec_field_vit_forward(x, packed, cfg):
    patch = cfg["patch"]
    np0, np1 = cfg["num_patch"]
    b, c, hh, ww = x.shape
    h, w = hh // patch, ww // patch
    n = h * w
    n1 = n + 1
    pd = patch * patch * c
    pp = patch * patch

    # Rearrange 'b c (h p1) (w p2) -> b (h w) (p1 p2 c)' + dummy cls-slot row 0.
    # TODO(synk): pure layout transpose of a tiny input; left as XLA glue.
    t = x.reshape(b, c, h, patch, w, patch)
    t = jnp.transpose(t, (0, 2, 4, 3, 5, 1)).reshape(b, n, pd)
    t = jnp.concatenate([jnp.zeros((b, 1, pd), t.dtype), t], axis=1)  # (b, n1, pd)

    weights = [packed[k] for k in _WEIGHT_ORDER]
    enc_depth = packed["e_wqkv"].shape[0]
    dec_depth = packed["d_wqkv"].shape[0]

    kern = functools.partial(
        _recfield_vit_kernel,
        enc_depth=enc_depth, dec_depth=dec_depth,
        enc_heads=cfg["enc"]["heads"], dec_heads=cfg["dec"]["heads"],
        enc_dim_head=cfg["enc"]["dim_head"], dec_dim_head=cfg["dec"]["dim_head"])

    def _bcast_spec(a):
        zeros = (0,) * a.ndim
        return pl.BlockSpec(a.shape, lambda i, _z=zeros: _z)

    out = pl.pallas_call(
        kern,
        out_shape=jax.ShapeDtypeStruct((b, n1, pp), x.dtype),
        grid=(b,),
        in_specs=[pl.BlockSpec((1, n1, pd), lambda i: (i, 0, 0))]
                 + [_bcast_spec(wa) for wa in weights],
        out_specs=pl.BlockSpec((1, n1, pp), lambda i: (i, 0, 0)),
        compiler_params=pltpu.CompilerParams(
            dimension_semantics=("parallel",)),       # v7x: 2 TCs split the batch
    )(t, *weights)

    # Drop the cls row and scatter patches into the (W/H-swapped) image, exactly
    # as image_norm_token.view(...).permute(0,3,2,1) -> ConvTranspose2d does.
    y = out[:, 1:, :].reshape(b, np0, np1, patch, patch)
    y = jnp.transpose(y, (0, 2, 3, 1, 4)).reshape(b, 1, np1 * patch, np0 * patch)
    return y


# ---------------------------------------------------------------------------
# Pure-JAX reference (unfused, mirrors the PyTorch module) - for validation
# ---------------------------------------------------------------------------
def _ln_ref(x, g, b, eps=1e-5):
    mu = jnp.mean(x, axis=-1, keepdims=True)
    var = jnp.mean((x - mu) ** 2, axis=-1, keepdims=True)
    return (x - mu) / jnp.sqrt(var + eps) * g + b


def _attn_ref(x, lp, heads, dim_head):
    b, n, _ = x.shape
    inner = heads * dim_head
    xn = _ln_ref(x, lp["ln_g"], lp["ln_b"])
    qkv = xn @ lp["wqkv"]
    q, k, v = jnp.split(qkv, 3, axis=-1)
    def split(t):
        return t.reshape(b, n, heads, dim_head).transpose(0, 2, 1, 3)
    q, k, v = split(q), split(k), split(v)
    s = jnp.einsum("bhid,bhjd->bhij", q, k) * dim_head ** -0.5
    p = jax.nn.softmax(s, axis=-1)
    o = jnp.einsum("bhij,bhjd->bhid", p, v)
    o = o.transpose(0, 2, 1, 3).reshape(b, n, inner)
    return o @ lp["wo"] + lp["bo"]


def _ff_ref(x, lp):
    xn = _ln_ref(x, lp["ln_g"], lp["ln_b"])
    h1 = xn @ lp["w1"] + lp["b1"]
    h1 = jax.nn.gelu(h1, approximate=False)
    return h1 @ lp["w2"] + lp["b2"]


def _transformer_ref(x, p, heads, dim_head):
    for lp in p["layers"]:
        x = _attn_ref(x, lp["attn"], heads, dim_head) + x
        x = _ff_ref(x, lp["ff"]) + x
    return _ln_ref(x, p["final_ln_g"], p["final_ln_b"])


def rec_field_vit_reference(x, params, cfg):
    patch = cfg["patch"]
    np0, np1 = cfg["num_patch"]
    b, c, hh, ww = x.shape
    h, w = hh // patch, ww // patch
    n = h * w
    enc, dec = params["enc"], params["dec"]

    t = x.reshape(b, c, h, patch, w, patch)
    t = jnp.transpose(t, (0, 2, 4, 3, 5, 1)).reshape(b, n, patch * patch * c)
    t = _ln_ref(t, enc["pe_ln1_g"], enc["pe_ln1_b"])
    t = t @ enc["pe_w"] + enc["pe_b"]
    t = _ln_ref(t, enc["pe_ln2_g"], enc["pe_ln2_b"])
    cls = jnp.broadcast_to(enc["cls"], (b, 1, t.shape[-1]))
    t = jnp.concatenate([cls, t], axis=1) + enc["pos"][:, :n + 1]
    t = _transformer_ref(t, enc, cfg["enc"]["heads"], cfg["enc"]["dim_head"])
    t = _ln_ref(t, enc["lat_g"], enc["lat_b"])
    t = t @ params["proj_w"] + params["proj_b"]
    t = t + dec["pos"]
    t = _transformer_ref(t, dec, cfg["dec"]["heads"], cfg["dec"]["dim_head"])
    r = t @ params["rest_w"] + params["rest_b"]
    r = r[:, 1:, :]
    r = _ln_ref(r, params["pn_g"], params["pn_b"], eps=1e-12)
    y = r @ params["unconv_w"] + params["unconv_b"]
    y = y.reshape(b, np0, np1, patch, patch)
    y = jnp.transpose(y, (0, 2, 3, 1, 4)).reshape(b, 1, np1 * patch, np0 * patch)
    return y


# ---------------------------------------------------------------------------
# Deterministic parameter initialization
# ---------------------------------------------------------------------------
def xavier(key, fan_in, fan_out):
    limit = (6.0 / (fan_in + fan_out)) ** 0.5
    return jax.random.uniform(key, (fan_in, fan_out), jnp.float32, -limit, limit)


def init_vit(key, *, patch_dim, dim, depth, heads, dim_head, mlp_dim, num_patches):
    keys = jax.random.split(key, 4 + depth)
    inner = heads * dim_head
    p = {
        "pe_ln1_g": jnp.ones((patch_dim,), jnp.float32),
        "pe_ln1_b": jnp.zeros((patch_dim,), jnp.float32),
        "pe_w": xavier(keys[0], patch_dim, dim),
        "pe_b": jnp.zeros((dim,), jnp.float32),
        "pe_ln2_g": jnp.ones((dim,), jnp.float32),
        "pe_ln2_b": jnp.zeros((dim,), jnp.float32),
        "pos": jax.random.normal(keys[1], (1, num_patches + 1, dim), jnp.float32),
        "cls": jax.random.normal(keys[2], (1, 1, dim), jnp.float32),
        "final_ln_g": jnp.ones((dim,), jnp.float32),
        "final_ln_b": jnp.zeros((dim,), jnp.float32),
        "lat_g": jnp.ones((dim,), jnp.float32),
        "lat_b": jnp.zeros((dim,), jnp.float32),
    }
    layers = []
    for i in range(depth):
        lk = jax.random.split(keys[4 + i], 4)
        attn = {
            "ln_g": jnp.ones((dim,), jnp.float32),
            "ln_b": jnp.zeros((dim,), jnp.float32),
            "wqkv": xavier(lk[0], dim, inner * 3),
            "wo": xavier(lk[1], inner, dim),
            "bo": jnp.zeros((dim,), jnp.float32),
        }
        ff = {
            "ln_g": jnp.ones((dim,), jnp.float32),
            "ln_b": jnp.zeros((dim,), jnp.float32),
            "w1": xavier(lk[2], dim, mlp_dim),
            "b1": jnp.zeros((mlp_dim,), jnp.float32),
            "w2": xavier(lk[3], mlp_dim, dim),
            "b2": jnp.zeros((dim,), jnp.float32),
        }
        layers.append({"attn": attn, "ff": ff})
    p["layers"] = layers
    return p


# ---------------------------------------------------------------------------
if __name__ == "__main__":
    root = jax.random.PRNGKey(0)
    k_enc, k_dec, k_proj, k_rest, k_unconv, k_x = jax.random.split(root, 6)

    # Small config consistent with RecFieldViT (channels=1, mlp_dim=4,
    # dropout=0, dim_head=64 default).
    B = 2
    image_size = (16, 8)
    patch = 4
    enc_dim, enc_depth, enc_heads = 32, 2, 2
    dec_dim, dec_depth, dec_heads = 16, 2, 2
    dim_head = 64
    mlp_dim = 4

    np0, np1 = image_size[0] // patch, image_size[1] // patch
    num_patches = np0 * np1
    patch_dim = 1 * patch * patch
    output_dim = patch * patch

    params = {
        "enc": init_vit(
            k_enc, patch_dim=patch_dim, dim=enc_dim, depth=enc_depth,
            heads=enc_heads, dim_head=dim_head, mlp_dim=mlp_dim,
            num_patches=num_patches,
        ),
        "dec": init_vit(
            k_dec, patch_dim=patch_dim, dim=dec_dim, depth=dec_depth,
            heads=dec_heads, dim_head=dim_head, mlp_dim=mlp_dim,
            num_patches=num_patches,
        ),
        "proj_w": xavier(k_proj, enc_dim, dec_dim),
        "proj_b": jnp.zeros((dec_dim,), jnp.float32),
        "rest_w": xavier(k_rest, dec_dim, output_dim),
        "rest_b": jnp.zeros((output_dim,), jnp.float32),
        "pn_g": jnp.ones((output_dim,), jnp.float32),
        "pn_b": jnp.zeros((output_dim,), jnp.float32),
        # ConvTranspose2d weight (in=output_dim, out=1, k, k) flattened to
        # (output_dim, patch*patch); bias is per output channel (1,).
        "unconv_w": 0.05 * jax.random.normal(
            k_unconv, (output_dim, patch * patch), jnp.float32),
        "unconv_b": jnp.zeros((1,), jnp.float32),
    }

    cfg = {
        "patch": patch,
        "num_patch": (np0, np1),
        "enc": {"heads": enc_heads, "dim_head": dim_head},
        "dec": {"heads": dec_heads, "dim_head": dim_head},
    }

    # Pack (stack / head-pad / fold cls+pos) once, eagerly, outside jit.
    packed = pack_recfield_params(params, cfg)

    x = jax.random.normal(k_x, (B, 1, image_size[0], image_size[1]), jnp.float32)

    fwd = jax.jit(lambda xx, pk: rec_field_vit_forward(xx, pk, cfg))
    out = jax.block_until_ready(fwd(x, packed))

    ref = jax.block_until_ready(
        jax.jit(lambda xx, pr: rec_field_vit_reference(xx, pr, cfg))(x, params))

    assert out.shape == (B, 1, np1 * patch, np0 * patch), out.shape
    assert bool(jnp.all(jnp.isfinite(out)))
    assert bool(jnp.allclose(out, ref, rtol=3e-2, atol=3e-2)), \
        float(jnp.max(jnp.abs(out - ref)))
    print("KERNEL_OK")
</pallas_src>

<mosaic_0001>
module attributes {stable_mosaic.version = 11 : i64} {
  func.func @_recfield_vit_kernel(%arg0: i32, %arg1: memref<1x9x16xf32, #tpu.memory_space<vmem>>, %arg2: memref<2x16xf32, #tpu.memory_space<vmem>>, %arg3: memref<16x32xf32, #tpu.memory_space<vmem>>, %arg4: memref<3x32xf32, #tpu.memory_space<vmem>>, %arg5: memref<9x32xf32, #tpu.memory_space<vmem>>, %arg6: memref<2x6x32xf32, #tpu.memory_space<vmem>>, %arg7: memref<2x32x768xf32, #tpu.memory_space<vmem>>, %arg8: memref<2x256x32xf32, #tpu.memory_space<vmem>>, %arg9: memref<2x32x4xf32, #tpu.memory_space<vmem>>, %arg10: memref<2x1x4xf32, #tpu.memory_space<vmem>>, %arg11: memref<2x4x32xf32, #tpu.memory_space<vmem>>, %arg12: memref<4x32xf32, #tpu.memory_space<vmem>>, %arg13: memref<32x16xf32, #tpu.memory_space<vmem>>, %arg14: memref<3x16xf32, #tpu.memory_space<vmem>>, %arg15: memref<9x16xf32, #tpu.memory_space<vmem>>, %arg16: memref<2x6x16xf32, #tpu.memory_space<vmem>>, %arg17: memref<2x16x768xf32, #tpu.memory_space<vmem>>, %arg18: memref<2x256x16xf32, #tpu.memory_space<vmem>>, %arg19: memref<2x16x4xf32, #tpu.memory_space<vmem>>, %arg20: memref<2x1x4xf32, #tpu.memory_space<vmem>>, %arg21: memref<2x4x16xf32, #tpu.memory_space<vmem>>, %arg22: memref<16x16xf32, #tpu.memory_space<vmem>>, %arg23: memref<4x16xf32, #tpu.memory_space<vmem>>, %arg24: memref<16x16xf32, #tpu.memory_space<vmem>>, %arg25: memref<1x9x16xf32, #tpu.memory_space<vmem>>) attributes {dimension_semantics = [#tpu.dimension_semantics<parallel>], iteration_bounds = array<i64: 2>, scalar_prefetch = 0 : i64, scratch_operands = 0 : i64, tpu.core_type = #tpu.core_type<tc>, window_params = [{transform_indices = @transform_0, window_bounds = array<i64: 1, 9, 16>}, {pipeline_mode = #tpu.pipeline_mode<synchronous>, transform_indices = @transform_1, window_bounds = array<i64: 2, 16>}, {pipeline_mode = #tpu.pipeline_mode<synchronous>, transform_indices = @transform_2, window_bounds = array<i64: 16, 32>}, {pipeline_mode = #tpu.pipeline_mode<synchronous>, transform_indices = @transform_3, window_bounds = array<i64: 3, 32>}, {pipeline_mode = #tpu.pipeline_mode<synchronous>, transform_indices = @transform_4, window_bounds = array<i64: 9, 32>}, {pipeline_mode = #tpu.pipeline_mode<synchronous>, transform_indices = @transform_5, window_bounds = array<i64: 2, 6, 32>}, {pipeline_mode = #tpu.pipeline_mode<synchronous>, transform_indices = @transform_6, window_bounds = array<i64: 2, 32, 768>}, {pipeline_mode = #tpu.pipeline_mode<synchronous>, transform_indices = @transform_7, window_bounds = array<i64: 2, 256, 32>}, {pipeline_mode = #tpu.pipeline_mode<synchronous>, transform_indices = @transform_8, window_bounds = array<i64: 2, 32, 4>}, {pipeline_mode = #tpu.pipeline_mode<synchronous>, transform_indices = @transform_9, window_bounds = array<i64: 2, 1, 4>}, {pipeline_mode = #tpu.pipeline_mode<synchronous>, transform_indices = @transform_10, window_bounds = array<i64: 2, 4, 32>}, {pipeline_mode = #tpu.pipeline_mode<synchronous>, transform_indices = @transform_11, window_bounds = array<i64: 4, 32>}, {pipeline_mode = #tpu.pipeline_mode<synchronous>, transform_indices = @transform_12, window_bounds = array<i64: 32, 16>}, {pipeline_mode = #tpu.pipeline_mode<synchronous>, transform_indices = @transform_13, window_bounds = array<i64: 3, 16>}, {pipeline_mode = #tpu.pipeline_mode<synchronous>, transform_indices = @transform_14, window_bounds = array<i64: 9, 16>}, {pipeline_mode = #tpu.pipeline_mode<synchronous>, transform_indices = @transform_15, window_bounds = array<i64: 2, 6, 16>}, {pipeline_mode = #tpu.pipeline_mode<synchronous>, transform_indices = @transform_16, window_bounds = array<i64: 2, 16, 768>}, {pipeline_mode = #tpu.pipeline_mode<synchronous>, transform_indices = @transform_17, window_bounds = array<i64: 2, 256, 16>}, {pipeline_mode = #tpu.pipeline_mode<synchronous>, transform_indices = @transform_18, window_bounds = array<i64: 2, 16, 4>}, {pipeline_mode = #tpu.pipeline_mode<synchronous>, transform_indices = @transform_19, window_bounds = array<i64: 2, 1, 4>}, {pipeline_mode = #tpu.pipeline_mode<synchronous>, transform_indices = @transform_20, window_bounds = array<i64: 2, 4, 16>}, {pipeline_mode = #tpu.pipeline_mode<synchronous>, transform_indices = @transform_21, window_bounds = array<i64: 16, 16>}, {pipeline_mode = #tpu.pipeline_mode<synchronous>, transform_indices = @transform_22, window_bounds = array<i64: 4, 16>}, {pipeline_mode = #tpu.pipeline_mode<synchronous>, transform_indices = @transform_23, window_bounds = array<i64: 16, 16>}, {transform_indices = @transform_24, window_bounds = array<i64: 1, 9, 16>}]} {
    %c0 = arith.constant 0 : index
    %c0_0 = arith.constant 0 : index
    %c0_1 = arith.constant 0 : index
    %0 = vector.load %arg1[%c0, %c0_0, %c0_1] : memref<1x9x16xf32, #tpu.memory_space<vmem>>, vector<1x9x16xf32>
    %1 = vector.shape_cast %0 : vector<1x9x16xf32> to vector<9x16xf32>
    %c0_2 = arith.constant 0 : index
    %c0_3 = arith.constant 0 : index
    %2 = vector.load %arg2[%c0_2, %c0_3] : memref<2x16xf32, #tpu.memory_space<vmem>>, vector<1x16xf32>
    %c1 = arith.constant 1 : index
    %c0_4 = arith.constant 0 : index
    %3 = vector.load %arg2[%c1, %c0_4] : memref<2x16xf32, #tpu.memory_space<vmem>>, vector<1x16xf32>
    %cst = arith.constant dense<0.000000e+00> : vector<9xf32>
    %4 = vector.multi_reduction <add>, %1, %cst [1] : vector<9x16xf32> to vector<9xf32>
    %5 = vector.shape_cast %4 : vector<9xf32> to vector<9x1xf32>
    %cst_5 = arith.constant 1.600000e+01 : f32
    %6 = vector.broadcast %cst_5 : f32 to vector<9x1xf32>
    %7 = arith.divf %5, %6 : vector<9x1xf32>
    %8 = vector.broadcast %7 : vector<9x1xf32> to vector<9x16xf32>
    %9 = arith.subf %1, %8 : vector<9x16xf32>
    %10 = arith.mulf %9, %9 : vector<9x16xf32>
    %cst_6 = arith.constant dense<0.000000e+00> : vector<9xf32>
    %11 = vector.multi_reduction <add>, %10, %cst_6 [1] : vector<9x16xf32> to vector<9xf32>
    %12 = vector.shape_cast %11 : vector<9xf32> to vector<9x1xf32>
    %cst_7 = arith.constant 1.600000e+01 : f32
    %13 = vector.broadcast %cst_7 : f32 to vector<9x1xf32>
    %14 = arith.divf %12, %13 : vector<9x1xf32>
    %15 = vector.broadcast %7 : vector<9x1xf32> to vector<9x16xf32>
    %16 = arith.subf %1, %15 : vector<9x16xf32>
    %cst_8 = arith.constant 9.99999974E-6 : f32
    %17 = vector.broadcast %cst_8 : f32 to vector<9x1xf32>
    %18 = arith.addf %14, %17 : vector<9x1xf32>
    %19 = math.rsqrt %18 : vector<9x1xf32>
    %20 = vector.broadcast %19 : vector<9x1xf32> to vector<9x16xf32>
    %21 = arith.mulf %16, %20 : vector<9x16xf32>
    %22 = vector.broadcast %2 : vector<1x16xf32> to vector<9x16xf32>
    %23 = arith.mulf %21, %22 : vector<9x16xf32>
    %24 = vector.broadcast %3 : vector<1x16xf32> to vector<9x16xf32>
    %25 = arith.addf %23, %24 : vector<9x16xf32>
    %c0_9 = arith.constant 0 : index
    %c0_10 = arith.constant 0 : index
    %26 = vector.load %arg3[%c0_9, %c0_10] : memref<16x32xf32, #tpu.memory_space<vmem>>, vector<16x32xf32>
    %cst_11 = arith.constant dense<0.000000e+00> : vector<9x32xf32>
    %27 = tpu.matmul %25, %26, %cst_11 {dimension_numbers = #tpu.dot_dimension_numbers<[1], [0], [0], [1], [0, 0, 1, 1], [], []>} : vector<9x16xf32>, vector<16x32xf32>, vector<9x32xf32> -> vector<9x32xf32>
    %c0_12 = arith.constant 0 : index
    %c0_13 = arith.constant 0 : index
    %28 = vector.load %arg4[%c0_12, %c0_13] : memref<3x32xf32, #tpu.memory_space<vmem>>, vector<1x32xf32>
    %29 = vector.broadcast %28 : vector<1x32xf32> to vector<9x32xf32>
    %30 = arith.addf %27, %29 : vector<9x32xf32>
    %c1_14 = arith.constant 1 : index
    %c0_15 = arith.constant 0 : index
    %31 = vector.load %arg4[%c1_14, %c0_15] : memref<3x32xf32, #tpu.memory_space<vmem>>, vector<1x32xf32>
    %c2 = arith.constant 2 : index
    %c0_16 = arith.constant 0 : index
    %32 = vector.load %arg4[%c2, %c0_16] : memref<3x32xf32, #tpu.memory_space<vmem>>, vector<1x32xf32>
    %cst_17 = arith.constant dense<0.000000e+00> : vector<9xf32>
    %33 = vector.multi_reduction <add>, %30, %cst_17 [1] : vector<9x32xf32> to vector<9xf32>
    %34 = vector.shape_cast %33 : vector<9xf32> to vector<9x1xf32>
    %cst_18 = arith.constant 3.200000e+01 : f32
    %35 = vector.broadcast %cst_18 : f32 to vector<9x1xf32>
    %36 = arith.divf %34, %35 : vector<9x1xf32>
    %37 = vector.broadcast %36 : vector<9x1xf32> to vector<9x32xf32>
    %38 = arith.subf %30, %37 : vector<9x32xf32>
    %39 = arith.mulf %38, %38 : vector<9x32xf32>
    %cst_19 = arith.constant dense<0.000000e+00> : vector<9xf32>
    %40 = vector.multi_reduction <add>, %39, %cst_19 [1] : vector<9x32xf32> to vector<9xf32>
    %41 = vector.shape_cast %40 : vector<9xf32> to vector<9x1xf32>
    %cst_20 = arith.constant 3.200000e+01 : f32
    %42 = vector.broadcast %cst_20 : f32 to vector<9x1xf32>
    %43 = arith.divf %41, %42 : vector<9x1xf32>
    %44 = vector.broadcast %36 : vector<9x1xf32> to vector<9x32xf32>
    %45 = arith.subf %30, %44 : vector<9x32xf32>
    %cst_21 = arith.constant 9.99999974E-6 : f32
    %46 = vector.broadcast %cst_21 : f32 to vector<9x1xf32>
    %47 = arith.addf %43, %46 : vector<9x1xf32>
    %48 = math.rsqrt %47 : vector<9x1xf32>
    %49 = vector.broadcast %48 : vector<9x1xf32> to vector<9x32xf32>
    %50 = arith.mulf %45, %49 : vector<9x32xf32>
    %51 = vector.broadcast %31 : vector<1x32xf32> to vector<9x32xf32>
    %52 = arith.mulf %50, %51 : vector<9x32xf32>
    %53 = vector.broadcast %32 : vector<1x32xf32> to vector<9x32xf32>
    %54 = arith.addf %52, %53 : vector<9x32xf32>
    %55 = tpu.iota {dimensions = array<i32: 0>} : vector<9x32xi32>
    %c0_i32 = arith.constant 0 : i32
    %56 = vector.broadcast %c0_i32 : i32 to vector<9x32xi32>
    %57 = arith.cmpi eq, %55, %56 : vector<9x32xi32>
    %cst_22 = arith.constant 0.000000e+00 : f32
    %58 = vector.broadcast %cst_22 : f32 to vector<9x32xf32>
    %59 = arith.select %57, %58, %54 : vector<9x32xi1>, vector<9x32xf32>
    %c0_23 = arith.constant 0 : index
    %c0_24 = arith.constant 0 : index
    %60 = vector.load %arg5[%c0_23, %c0_24] : memref<9x32xf32, #tpu.memory_space<vmem>>, vector<9x32xf32>
    %61 = arith.addf %59, %60 : vector<9x32xf32>
    %c0_25 = arith.constant 0 : index
    %c0_26 = arith.constant 0 : index
    %c0_27 = arith.constant 0 : index
    %62 = vector.load %arg6[%c0_25, %c0_26, %c0_27] : memref<2x6x32xf32, #tpu.memory_space<vmem>>, vector<1x1x32xf32>
    %63 = vector.shape_cast %62 : vector<1x1x32xf32> to vector<1x32xf32>
    %c0_28 = arith.constant 0 : index
    %c1_29 = arith.constant 1 : index
    %c0_30 = arith.constant 0 : index
    %64 = vector.load %arg6[%c0_28, %c1_29, %c0_30] : memref<2x6x32xf32, #tpu.memory_space<vmem>>, vector<1x1x32xf32>
    %65 = vector.shape_cast %64 : vector<1x1x32xf32> to vector<1x32xf32>
    %cst_31 = arith.constant dense<0.000000e+00> : vector<9xf32>
    %66 = vector.multi_reduction <add>, %61, %cst_31 [1] : vector<9x32xf32> to vector<9xf32>
    %67 = vector.shape_cast %66 : vector<9xf32> to vector<9x1xf32>
    %cst_32 = arith.constant 3.200000e+01 : f32
    %68 = vector.broadcast %cst_32 : f32 to vector<9x1xf32>
    %69 = arith.divf %67, %68 : vector<9x1xf32>
    %70 = vector.broadcast %69 : vector<9x1xf32> to vector<9x32xf32>
    %71 = arith.subf %61, %70 : vector<9x32xf32>
    %72 = arith.mulf %71, %71 : vector<9x32xf32>
    %cst_33 = arith.constant dense<0.000000e+00> : vector<9xf32>
    %73 = vector.multi_reduction <add>, %72, %cst_33 [1] : vector<9x32xf32> to vector<9xf32>
    %74 = vector.shape_cast %73 : vector<9xf32> to vector<9x1xf32>
    %cst_34 = arith.constant 3.200000e+01 : f32
    %75 = vector.broadcast %cst_34 : f32 to vector<9x1xf32>
    %76 = arith.divf %74, %75 : vector<9x1xf32>
    %77 = vector.broadcast %69 : vector<9x1xf32> to vector<9x32xf32>
    %78 = arith.subf %61, %77 : vector<9x32xf32>
    %cst_35 = arith.constant 9.99999974E-6 : f32
    %79 = vector.broadcast %cst_35 : f32 to vector<9x1xf32>
    %80 = arith.addf %76, %79 : vector<9x1xf32>
    %81 = math.rsqrt %80 : vector<9x1xf32>
    %82 = vector.broadcast %81 : vector<9x1xf32> to vector<9x32xf32>
    %83 = arith.mulf %78, %82 : vector<9x32xf32>
    %84 = vector.broadcast %63 : vector<1x32xf32> to vector<9x32xf32>
    %85 = arith.mulf %83, %84 : vector<9x32xf32>
    %86 = vector.broadcast %65 : vector<1x32xf32> to vector<9x32xf32>
    %87 = arith.addf %85, %86 : vector<9x32xf32>
    %c0_36 = arith.constant 0 : index
    %c0_37 = arith.constant 0 : index
    %c0_38 = arith.constant 0 : index
    %88 = vector.load %arg7[%c0_36, %c0_37, %c0_38] : memref<2x32x768xf32, #tpu.memory_space<vmem>>, vector<1x32x768xf32>
    %89 = vector.shape_cast %88 : vector<1x32x768xf32> to vector<32x768xf32>
    %cst_39 = arith.constant dense<0.000000e+00> : vector<9x768xf32>
    %90 = tpu.matmul %87, %89, %cst_39 {dimension_numbers = #tpu.dot_dimension_numbers<[1], [0], [0], [1], [0, 0, 1, 1], [], []>} : vector<9x32xf32>, vector<32x768xf32>, vector<9x768xf32> -> vector<9x768xf32>
    %91 = vector.extract_strided_slice %90 {offsets = [0, 0], sizes = [9, 128], strides = [1, 1]} : vector<9x768xf32> to vector<9x128xf32>
    %92 = vector.extract_strided_slice %90 {offsets = [0, 256], sizes = [9, 128], strides = [1, 1]} : vector<9x768xf32> to vector<9x128xf32>
    %93 = vector.extract_strided_slice %90 {offsets = [0, 512], sizes = [9, 128], strides = [1, 1]} : vector<9x768xf32> to vector<9x128xf32>
    %cst_40 = arith.constant dense<0.000000e+00> : vector<9x9xf32>
    %94 = tpu.matmul %91, %92, %cst_40 {dimension_numbers = #tpu.dot_dimension_numbers<[1], [1], [0], [0], [0, 0, 1, 0], [], []>} : vector<9x128xf32>, vector<9x128xf32>, vector<9x9xf32> -> vector<9x9xf32>
    %cst_41 = arith.constant 1.250000e-01 : f32
    %95 = vector.broadcast %cst_41 : f32 to vector<9x9xf32>
    %96 = arith.mulf %94, %95 : vector<9x9xf32>
    %cst_42 = arith.constant dense<0xFF800000> : vector<9xf32>
    %97 = vector.multi_reduction <maximumf>, %96, %cst_42 [1] : vector<9x9xf32> to vector<9xf32>
    %98 = vector.shape_cast %97 : vector<9xf32> to vector<9x1xf32>
    %99 = vector.broadcast %98 : vector<9x1xf32> to vector<9x9xf32>
    %100 = arith.subf %96, %99 : vector<9x9xf32>
    %101 = math.exp %100 : vector<9x9xf32>
    %cst_43 = arith.constant dense<0.000000e+00> : vector<9xf32>
    %102 = vector.multi_reduction <add>, %101, %cst_43 [1] : vector<9x9xf32> to vector<9xf32>
    %103 = vector.shape_cast %102 : vector<9xf32> to vector<9x1xf32>
    %104 = vector.broadcast %103 : vector<9x1xf32> to vector<9x9xf32>
    %105 = arith.divf %101, %104 : vector<9x9xf32>
    %cst_44 = arith.constant dense<0.000000e+00> : vector<9x128xf32>
    %106 = tpu.matmul %105, %93, %cst_44 {dimension_numbers = #tpu.dot_dimension_numbers<[1], [0], [0], [1], [0, 0, 1, 1], [], []>} : vector<9x9xf32>, vector<9x128xf32>, vector<9x128xf32> -> vector<9x128xf32>
    %107 = vector.extract_strided_slice %90 {offsets = [0, 128], sizes = [9, 128], strides = [1, 1]} : vector<9x768xf32> to vector<9x128xf32>
    %108 = vector.extract_strided_slice %90 {offsets = [0, 384], sizes = [9, 128], strides = [1, 1]} : vector<9x768xf32> to vector<9x128xf32>
    %109 = vector.extract_strided_slice %90 {offsets = [0, 640], sizes = [9, 128], strides = [1, 1]} : vector<9x768xf32> to vector<9x128xf32>
    %cst_45 = arith.constant dense<0.000000e+00> : vector<9x9xf32>
    %110 = tpu.matmul %107, %108, %cst_45 {dimension_numbers = #tpu.dot_dimension_numbers<[1], [1], [0], [0], [0, 0, 1, 0], [], []>} : vector<9x128xf32>, vector<9x128xf32>, vector<9x9xf32> -> vector<9x9xf32>
    %cst_46 = arith.constant 1.250000e-01 : f32
    %111 = vector.broadcast %cst_46 : f32 to vector<9x9xf32>
    %112 = arith.mulf %110, %111 : vector<9x9xf32>
    %cst_47 = arith.constant dense<0xFF800000> : vector<9xf32>
    %113 = vector.multi_reduction <maximumf>, %112, %cst_47 [1] : vector<9x9xf32> to vector<9xf32>
    %114 = vector.shape_cast %113 : vector<9xf32> to vector<9x1xf32>
    %115 = vector.broadcast %114 : vector<9x1xf32> to vector<9x9xf32>
    %116 = arith.subf %112, %115 : vector<9x9xf32>
    %117 = math.exp %116 : vector<9x9xf32>
    %cst_48 = arith.constant dense<0.000000e+00> : vector<9xf32>
    %118 = vector.multi_reduction <add>, %117, %cst_48 [1] : vector<9x9xf32> to vector<9xf32>
    %119 = vector.shape_cast %118 : vector<9xf32> to vector<9x1xf32>
    %120 = vector.broadcast %119 : vector<9x1xf32> to vector<9x9xf32>
    %121 = arith.divf %117, %120 : vector<9x9xf32>
    %cst_49 = arith.constant dense<0.000000e+00> : vector<9x128xf32>
    %122 = tpu.matmul %121, %109, %cst_49 {dimension_numbers = #tpu.dot_dimension_numbers<[1], [0], [0], [1], [0, 0, 1, 1], [], []>} : vector<9x9xf32>, vector<9x128xf32>, vector<9x128xf32> -> vector<9x128xf32>
    %123 = tpu.concatenate %106, %122 in 1 : vector<9x128xf32>, vector<9x128xf32> -> vector<9x256xf32>
    %c0_50 = arith.constant 0 : index
    %c2_51 = arith.constant 2 : index
    %c0_52 = arith.constant 0 : index
    %124 = vector.load %arg6[%c0_50, %c2_51, %c0_52] : memref<2x6x32xf32, #tpu.memory_space<vmem>>, vector<1x1x32xf32>
    %125 = vector.shape_cast %124 : vector<1x1x32xf32> to vector<1x32xf32>
    %126 = vector.broadcast %125 : vector<1x32xf32> to vector<9x32xf32>
    %127 = arith.addf %61, %126 : vector<9x32xf32>
    %c0_53 = arith.constant 0 : index
    %c0_54 = arith.constant 0 : index
    %c0_55 = arith.constant 0 : index
    %128 = vector.load %arg8[%c0_53, %c0_54, %c0_55] : memref<2x256x32xf32, #tpu.memory_space<vmem>>, vector<1x256x32xf32>
    %129 = vector.shape_cast %128 : vector<1x256x32xf32> to vector<256x32xf32>
    %cst_56 = arith.constant dense<0.000000e+00> : vector<9x32xf32>
    %130 = tpu.matmul %123, %129, %cst_56 {dimension_numbers = #tpu.dot_dimension_numbers<[1], [0], [0], [1], [0, 0, 1, 1], [], []>} : vector<9x256xf32>, vector<256x32xf32>, vector<9x32xf32> -> vector<9x32xf32>
    %131 = arith.addf %127, %130 : vector<9x32xf32>
    %c0_57 = arith.constant 0 : index
    %c3 = arith.constant 3 : index
    %c0_58 = arith.constant 0 : index
    %132 = vector.load %arg6[%c0_57, %c3, %c0_58] : memref<2x6x32xf32, #tpu.memory_space<vmem>>, vector<1x1x32xf32>
    %133 = vector.shape_cast %132 : vector<1x1x32xf32> to vector<1x32xf32>
    %c0_59 = arith.constant 0 : index
    %c4 = arith.constant 4 : index
    %c0_60 = arith.constant 0 : index
    %134 = vector.load %arg6[%c0_59, %c4, %c0_60] : memref<2x6x32xf32, #tpu.memory_space<vmem>>, vector<1x1x32xf32>
    %135 = vector.shape_cast %134 : vector<1x1x32xf32> to vector<1x32xf32>
    %cst_61 = arith.constant dense<0.000000e+00> : vector<9xf32>
    %136 = vector.multi_reduction <add>, %131, %cst_61 [1] : vector<9x32xf32> to vector<9xf32>
    %137 = vector.shape_cast %136 : vector<9xf32> to vector<9x1xf32>
    %cst_62 = arith.constant 3.200000e+01 : f32
    %138 = vector.broadcast %cst_62 : f32 to vector<9x1xf32>
    %139 = arith.divf %137, %138 : vector<9x1xf32>
    %140 = vector.broadcast %139 : vector<9x1xf32> to vector<9x32xf32>
    %141 = arith.subf %131, %140 : vector<9x32xf32>
    %142 = arith.mulf %141, %141 : vector<9x32xf32>
    %cst_63 = arith.constant dense<0.000000e+00> : vector<9xf32>
    %143 = vector.multi_reduction <add>, %142, %cst_63 [1] : vector<9x32xf32> to vector<9xf32>
    %144 = vector.shape_cast %143 : vector<9xf32> to vector<9x1xf32>
    %cst_64 = arith.constant 3.200000e+01 : f32
    %145 = vector.broadcast %cst_64 : f32 to vector<9x1xf32>
    %146 = arith.divf %144, %145 : vector<9x1xf32>
    %147 = vector.broadcast %139 : vector<9x1xf32> to vector<9x32xf32>
    %148 = arith.subf %131, %147 : vector<9x32xf32>
    %cst_65 = arith.constant 9.99999974E-6 : f32
    %149 = vector.broadcast %cst_65 : f32 to vector<9x1xf32>
    %150 = arith.addf %146, %149 : vector<9x1xf32>
    %151 = math.rsqrt %150 : vector<9x1xf32>
    %152 = vector.broadcast %151 : vector<9x1xf32> to vector<9x32xf32>
    %153 = arith.mulf %148, %152 : vector<9x32xf32>
    %154 = vector.broadcast %133 : vector<1x32xf32> to vector<9x32xf32>
    %155 = arith.mulf %153, %154 : vector<9x32xf32>
    %156 = vector.broadcast %135 : vector<1x32xf32> to vector<9x32xf32>
    %157 = arith.addf %155, %156 : vector<9x32xf32>
    %c0_66 = arith.constant 0 : index
    %c0_67 = arith.constant 0 : index
    %c0_68 = arith.constant 0 : index
    %158 = vector.load %arg9[%c0_66, %c0_67, %c0_68] : memref<2x32x4xf32, #tpu.memory_space<vmem>>, vector<1x32x4xf32>
    %159 = vector.shape_cast %158 : vector<1x32x4xf32> to vector<32x4xf32>
    %cst_69 = arith.constant dense<0.000000e+00> : vector<9x4xf32>
    %160 = tpu.matmul %157, %159, %cst_69 {dimension_numbers = #tpu.dot_dimension_numbers<[1], [0], [0], [1], [0, 0, 1, 1], [], []>} : vector<9x32xf32>, vector<32x4xf32>, vector<9x4xf32> -> vector<9x4xf32>
    %c0_70 = arith.constant 0 : index
    %c0_71 = arith.constant 0 : index
    %c0_72 = arith.constant 0 : index
    %161 = vector.load %arg10[%c0_70, %c0_71, %c0_72] : memref<2x1x4xf32, #tpu.memory_space<vmem>>, vector<1x1x4xf32>
    %162 = vector.shape_cast %161 : vector<1x1x4xf32> to vector<1x4xf32>
    %163 = vector.broadcast %162 : vector<1x4xf32> to vector<9x4xf32>
    %164 = arith.addf %160, %163 : vector<9x4xf32>
    %cst_73 = arith.constant 5.000000e-01 : f32
    %165 = vector.broadcast %cst_73 : f32 to vector<9x4xf32>
    %166 = arith.mulf %165, %164 : vector<9x4xf32>
    %cst_74 = arith.constant 0.707106769 : f32
    %167 = vector.broadcast %cst_74 : f32 to vector<9x4xf32>
    %168 = arith.mulf %164, %167 : vector<9x4xf32>
    %cst_75 = arith.constant 0.000000e+00 : f32
    %169 = vector.broadcast %cst_75 : f32 to vector<9x4xf32>
    %170 = arith.cmpf olt, %168, %169 : vector<9x4xf32>
    %cst_76 = arith.constant -1.000000e+00 : f32
    %cst_77 = arith.constant 1.000000e+00 : f32
    %171 = vector.broadcast %cst_76 : f32 to vector<9x4xf32>
    %172 = vector.broadcast %cst_77 : f32 to vector<9x4xf32>
    %173 = arith.select %170, %171, %172 : vector<9x4xi1>, vector<9x4xf32>
    %174 = math.absf %168 : vector<9x4xf32>
    %cst_78 = arith.constant 0.327591091 : f32
    %175 = vector.broadcast %cst_78 : f32 to vector<9x4xf32>
    %176 = arith.mulf %175, %174 : vector<9x4xf32>
    %cst_79 = arith.constant 1.000000e+00 : f32
    %177 = vector.broadcast %cst_79 : f32 to vector<9x4xf32>
    %178 = arith.addf %177, %176 : vector<9x4xf32>
    %cst_80 = arith.constant 1.000000e+00 : f32
    %179 = vector.broadcast %cst_80 : f32 to vector<9x4xf32>
    %180 = arith.divf %179, %178 : vector<9x4xf32>
    %cst_81 = arith.constant 1.06140542 : f32
    %181 = vector.broadcast %cst_81 : f32 to vector<9x4xf32>
    %182 = arith.mulf %180, %181 : vector<9x4xf32>
    %cst_82 = arith.constant -1.45315206 : f32
    %183 = vector.broadcast %cst_82 : f32 to vector<9x4xf32>
    %184 = arith.addf %183, %182 : vector<9x4xf32>
    %185 = arith.mulf %180, %184 : vector<9x4xf32>
    %cst_83 = arith.constant 1.42141378 : f32
    %186 = vector.broadcast %cst_83 : f32 to vector<9x4xf32>
    %187 = arith.addf %186, %185 : vector<9x4xf32>
    %188 = arith.mulf %180, %187 : vector<9x4xf32>
    %cst_84 = arith.constant -0.284496725 : f32
    %189 = vector.broadcast %cst_84 : f32 to vector<9x4xf32>
    %190 = arith.addf %189, %188 : vector<9x4xf32>
    %191 = arith.mulf %180, %190 : vector<9x4xf32>
    %cst_85 = arith.constant 0.254829586 : f32
    %192 = vector.broadcast %cst_85 : f32 to vector<9x4xf32>
    %193 = arith.addf %192, %191 : vector<9x4xf32>
    %194 = arith.mulf %180, %193 : vector<9x4xf32>
    %cst_86 = arith.constant 0.000000e+00 : f32
    %195 = vector.broadcast %cst_86 : f32 to vector<9x4xf32>
    %196 = arith.subf %195, %174 : vector<9x4xf32>
    %197 = arith.mulf %196, %174 : vector<9x4xf32>
    %198 = math.exp %197 : vector<9x4xf32>
    %199 = arith.mulf %194, %198 : vector<9x4xf32>
    %cst_87 = arith.constant 1.000000e+00 : f32
    %200 = vector.broadcast %cst_87 : f32 to vector<9x4xf32>
    %201 = arith.subf %200, %199 : vector<9x4xf32>
    %202 = arith.mulf %173, %201 : vector<9x4xf32>
    %cst_88 = arith.constant 1.000000e+00 : f32
    %203 = vector.broadcast %cst_88 : f32 to vector<9x4xf32>
    %204 = arith.addf %203, %202 : vector<9x4xf32>
    %205 = arith.mulf %166, %204 : vector<9x4xf32>
    %c0_89 = arith.constant 0 : index
    %c0_90 = arith.constant 0 : index
    %c0_91 = arith.constant 0 : index
    %206 = vector.load %arg11[%c0_89, %c0_90, %c0_91] : memref<2x4x32xf32, #tpu.memory_space<vmem>>, vector<1x4x32xf32>
    %207 = vector.shape_cast %206 : vector<1x4x32xf32> to vector<4x32xf32>
    %cst_92 = arith.constant dense<0.000000e+00> : vector<9x32xf32>
    %208 = tpu.matmul %205, %207, %cst_92 {dimension_numbers = #tpu.dot_dimension_numbers<[1], [0], [0], [1], [0, 0, 1, 1], [], []>} : vector<9x4xf32>, vector<4x32xf32>, vector<9x32xf32> -> vector<9x32xf32>
    %209 = arith.addf %131, %208 : vector<9x32xf32>
    %c0_93 = arith.constant 0 : index
    %c5 = arith.constant 5 : index
    %c0_94 = arith.constant 0 : index
    %210 = vector.load %arg6[%c0_93, %c5, %c0_94] : memref<2x6x32xf32, #tpu.memory_space<vmem>>, vector<1x1x32xf32>
    %211 = vector.shape_cast %210 : vector<1x1x32xf32> to vector<1x32xf32>
    %212 = vector.broadcast %211 : vector<1x32xf32> to vector<9x32xf32>
    %213 = arith.addf %209, %212 : vector<9x32xf32>
    %c1_95 = arith.constant 1 : index
    %c0_96 = arith.constant 0 : index
    %c0_97 = arith.constant 0 : index
    %214 = vector.load %arg6[%c1_95, %c0_96, %c0_97] : memref<2x6x32xf32, #tpu.memory_space<vmem>>, vector<1x1x32xf32>
    %215 = vector.shape_cast %214 : vector<1x1x32xf32> to vector<1x32xf32>
    %c1_98 = arith.constant 1 : index
    %c1_99 = arith.constant 1 : index
    %c0_100 = arith.constant 0 : index
    %216 = vector.load %arg6[%c1_98, %c1_99, %c0_100] : memref<2x6x32xf32, #tpu.memory_space<vmem>>, vector<1x1x32xf32>
    %217 = vector.shape_cast %216 : vector<1x1x32xf32> to vector<1x32xf32>
    %cst_101 = arith.constant dense<0.000000e+00> : vector<9xf32>
    %218 = vector.multi_reduction <add>, %213, %cst_101 [1] : vector<9x32xf32> to vector<9xf32>
    %219 = vector.shape_cast %218 : vector<9xf32> to vector<9x1xf32>
    %cst_102 = arith.constant 3.200000e+01 : f32
    %220 = vector.broadcast %cst_102 : f32 to vector<9x1xf32>
    %221 = arith.divf %219, %220 : vector<9x1xf32>
    %222 = vector.broadcast %221 : vector<9x1xf32> to vector<9x32xf32>
    %223 = arith.subf %213, %222 : vector<9x32xf32>
    %224 = arith.mulf %223, %223 : vector<9x32xf32>
    %cst_103 = arith.constant dense<0.000000e+00> : vector<9xf32>
    %225 = vector.multi_reduction <add>, %224, %cst_103 [1] : vector<9x32xf32> to vector<9xf32>
    %226 = vector.shape_cast %225 : vector<9xf32> to vector<9x1xf32>
    %cst_104 = arith.constant 3.200000e+01 : f32
    %227 = vector.broadcast %cst_104 : f32 to vector<9x1xf32>
    %228 = arith.divf %226, %227 : vector<9x1xf32>
    %229 = vector.broadcast %221 : vector<9x1xf32> to vector<9x32xf32>
    %230 = arith.subf %213, %229 : vector<9x32xf32>
    %cst_105 = arith.constant 9.99999974E-6 : f32
    %231 = vector.broadcast %cst_105 : f32 to vector<9x1xf32>
    %232 = arith.addf %228, %231 : vector<9x1xf32>
    %233 = math.rsqrt %232 : vector<9x1xf32>
    %234 = vector.broadcast %233 : vector<9x1xf32> to vector<9x32xf32>
    %235 = arith.mulf %230, %234 : vector<9x32xf32>
    %236 = vector.broadcast %215 : vector<1x32xf32> to vector<9x32xf32>
    %237 = arith.mulf %235, %236 : vector<9x32xf32>
    %238 = vector.broadcast %217 : vector<1x32xf32> to vector<9x32xf32>
    %239 = arith.addf %237, %238 : vector<9x32xf32>
    %c1_106 = arith.constant 1 : index
    %c0_107 = arith.constant 0 : index
    %c0_108 = arith.constant 0 : index
    %240 = vector.load %arg7[%c1_106, %c0_107, %c0_108] : memref<2x32x768xf32, #tpu.memory_space<vmem>>, vector<1x32x768xf32>
    %241 = vector.shape_cast %240 : vector<1x32x768xf32> to vector<32x768xf32>
    %cst_109 = arith.constant dense<0.000000e+00> : vector<9x768xf32>
    %242 = tpu.matmul %239, %241, %cst_109 {dimension_numbers = #tpu.dot_dimension_numbers<[1], [0], [0], [1], [0, 0, 1, 1], [], []>} : vector<9x32xf32>, vector<32x768xf32>, vector<9x768xf32> -> vector<9x768xf32>
    %243 = vector.extract_strided_slice %242 {offsets = [0, 0], sizes = [9, 128], strides = [1, 1]} : vector<9x768xf32> to vector<9x128xf32>
    %244 = vector.extract_strided_slice %242 {offsets = [0, 256], sizes = [9, 128], strides = [1, 1]} : vector<9x768xf32> to vector<9x128xf32>
    %245 = vector.extract_strided_slice %242 {offsets = [0, 512], sizes = [9, 128], strides = [1, 1]} : vector<9x768xf32> to vector<9x128xf32>
    %cst_110 = arith.constant dense<0.000000e+00> : vector<9x9xf32>
    %246 = tpu.matmul %243, %244, %cst_110 {dimension_numbers = #tpu.dot_dimension_numbers<[1], [1], [0], [0], [0, 0, 1, 0], [], []>} : vector<9x128xf32>, vector<9x128xf32>, vector<9x9xf32> -> vector<9x9xf32>
    %cst_111 = arith.constant 1.250000e-01 : f32
    %247 = vector.broadcast %cst_111 : f32 to vector<9x9xf32>
    %248 = arith.mulf %246, %247 : vector<9x9xf32>
    %cst_112 = arith.constant dense<0xFF800000> : vector<9xf32>
    %249 = vector.multi_reduction <maximumf>, %248, %cst_112 [1] : vector<9x9xf32> to vector<9xf32>
    %250 = vector.shape_cast %249 : vector<9xf32> to vector<9x1xf32>
    %251 = vector.broadcast %250 : vector<9x1xf32> to vector<9x9xf32>
    %252 = arith.subf %248, %251 : vector<9x9xf32>
    %253 = math.exp %252 : vector<9x9xf32>
    %cst_113 = arith.constant dense<0.000000e+00> : vector<9xf32>
    %254 = vector.multi_reduction <add>, %253, %cst_113 [1] : vector<9x9xf32> to vector<9xf32>
    %255 = vector.shape_cast %254 : vector<9xf32> to vector<9x1xf32>
    %256 = vector.broadcast %255 : vector<9x1xf32> to vector<9x9xf32>
    %257 = arith.divf %253, %256 : vector<9x9xf32>
    %cst_114 = arith.constant dense<0.000000e+00> : vector<9x128xf32>
    %258 = tpu.matmul %257, %245, %cst_114 {dimension_numbers = #tpu.dot_dimension_numbers<[1], [0], [0], [1], [0, 0, 1, 1], [], []>} : vector<9x9xf32>, vector<9x128xf32>, vector<9x128xf32> -> vector<9x128xf32>
    %259 = vector.extract_strided_slice %242 {offsets = [0, 128], sizes = [9, 128], strides = [1, 1]} : vector<9x768xf32> to vector<9x128xf32>
    %260 = vector.extract_strided_slice %242 {offsets = [0, 384], sizes = [9, 128], strides = [1, 1]} : vector<9x768xf32> to vector<9x128xf32>
    %261 = vector.extract_strided_slice %242 {offsets = [0, 640], sizes = [9, 128], strides = [1, 1]} : vector<9x768xf32> to vector<9x128xf32>
    %cst_115 = arith.constant dense<0.000000e+00> : vector<9x9xf32>
    %262 = tpu.matmul %259, %260, %cst_115 {dimension_numbers = #tpu.dot_dimension_numbers<[1], [1], [0], [0], [0, 0, 1, 0], [], []>} : vector<9x128xf32>, vector<9x128xf32>, vector<9x9xf32> -> vector<9x9xf32>
    %cst_116 = arith.constant 1.250000e-01 : f32
    %263 = vector.broadcast %cst_116 : f32 to vector<9x9xf32>
    %264 = arith.mulf %262, %263 : vector<9x9xf32>
    %cst_117 = arith.constant dense<0xFF800000> : vector<9xf32>
    %265 = vector.multi_reduction <maximumf>, %264, %cst_117 [1] : vector<9x9xf32> to vector<9xf32>
    %266 = vector.shape_cast %265 : vector<9xf32> to vector<9x1xf32>
    %267 = vector.broadcast %266 : vector<9x1xf32> to vector<9x9xf32>
    %268 = arith.subf %264, %267 : vector<9x9xf32>
    %269 = math.exp %268 : vector<9x9xf32>
    %cst_118 = arith.constant dense<0.000000e+00> : vector<9xf32>
    %270 = vector.multi_reduction <add>, %269, %cst_118 [1] : vector<9x9xf32> to vector<9xf32>
    %271 = vector.shape_cast %270 : vector<9xf32> to vector<9x1xf32>
    %272 = vector.broadcast %271 : vector<9x1xf32> to vector<9x9xf32>
    %273 = arith.divf %269, %272 : vector<9x9xf32>
    %cst_119 = arith.constant dense<0.000000e+00> : vector<9x128xf32>
    %274 = tpu.matmul %273, %261, %cst_119 {dimension_numbers = #tpu.dot_dimension_numbers<[1], [0], [0], [1], [0, 0, 1, 1], [], []>} : vector<9x9xf32>, vector<9x128xf32>, vector<9x128xf32> -> vector<9x128xf32>
    %275 = tpu.concatenate %258, %274 in 1 : vector<9x128xf32>, vector<9x128xf32> -> vector<9x256xf32>
    %c1_120 = arith.constant 1 : index
    %c2_121 = arith.constant 2 : index
    %c0_122 = arith.constant 0 : index
    %276 = vector.load %arg6[%c1_120, %c2_121, %c0_122] : memref<2x6x32xf32, #tpu.memory_space<vmem>>, vector<1x1x32xf32>
    %277 = vector.shape_cast %276 : vector<1x1x32xf32> to vector<1x32xf32>
    %278 = vector.broadcast %277 : vector<1x32xf32> to vector<9x32xf32>
    %279 = arith.addf %213, %278 : vector<9x32xf32>
    %c1_123 = arith.constant 1 : index
    %c0_124 = arith.constant 0 : index
    %c0_125 = arith.constant 0 : index
    %280 = vector.load %arg8[%c1_123, %c0_124, %c0_125] : memref<2x256x32xf32, #tpu.memory_space<vmem>>, vector<1x256x32xf32>
    %281 = vector.shape_cast %280 : vector<1x256x32xf32> to vector<256x32xf32>
    %cst_126 = arith.constant dense<0.000000e+00> : vector<9x32xf32>
    %282 = tpu.matmul %275, %281, %cst_126 {dimension_numbers = #tpu.dot_dimension_numbers<[1], [0], [0], [1], [0, 0, 1, 1], [], []>} : vector<9x256xf32>, vector<256x32xf32>, vector<9x32xf32> -> vector<9x32xf32>
    %283 = arith.addf %279, %282 : vector<9x32xf32>
    %c1_127 = arith.constant 1 : index
    %c3_128 = arith.constant 3 : index
    %c0_129 = arith.constant 0 : index
    %284 = vector.load %arg6[%c1_127, %c3_128, %c0_129] : memref<2x6x32xf32, #tpu.memory_space<vmem>>, vector<1x1x32xf32>
    %285 = vector.shape_cast %284 : vector<1x1x32xf32> to vector<1x32xf32>
    %c1_130 = arith.constant 1 : index
    %c4_131 = arith.constant 4 : index
    %c0_132 = arith.constant 0 : index
    %286 = vector.load %arg6[%c1_130, %c4_131, %c0_132] : memref<2x6x32xf32, #tpu.memory_space<vmem>>, vector<1x1x32xf32>
    %287 = vector.shape_cast %286 : vector<1x1x32xf32> to vector<1x32xf32>
    %cst_133 = arith.constant dense<0.000000e+00> : vector<9xf32>
    %288 = vector.multi_reduction <add>, %283, %cst_133 [1] : vector<9x32xf32> to vector<9xf32>
    %289 = vector.shape_cast %288 : vector<9xf32> to vector<9x1xf32>
    %cst_134 = arith.constant 3.200000e+01 : f32
    %290 = vector.broadcast %cst_134 : f32 to vector<9x1xf32>
    %291 = arith.divf %289, %290 : vector<9x1xf32>
    %292 = vector.broadcast %291 : vector<9x1xf32> to vector<9x32xf32>
    %293 = arith.subf %283, %292 : vector<9x32xf32>
    %294 = arith.mulf %293, %293 : vector<9x32xf32>
    %cst_135 = arith.constant dense<0.000000e+00> : vector<9xf32>
    %295 = vector.multi_reduction <add>, %294, %cst_135 [1] : vector<9x32xf32> to vector<9xf32>
    %296 = vector.shape_cast %295 : vector<9xf32> to vector<9x1xf32>
    %cst_136 = arith.constant 3.200000e+01 : f32
    %297 = vector.broadcast %cst_136 : f32 to vector<9x1xf32>
    %298 = arith.divf %296, %297 : vector<9x1xf32>
    %299 = vector.broadcast %291 : vector<9x1xf32> to vector<9x32xf32>
    %300 = arith.subf %283, %299 : vector<9x32xf32>
    %cst_137 = arith.constant 9.99999974E-6 : f32
    %301 = vector.broadcast %cst_137 : f32 to vector<9x1xf32>
    %302 = arith.addf %298, %301 : vector<9x1xf32>
    %303 = math.rsqrt %302 : vector<9x1xf32>
    %304 = vector.broadcast %303 : vector<9x1xf32> to vector<9x32xf32>
    %305 = arith.mulf %300, %304 : vector<9x32xf32>
    %306 = vector.broadcast %285 : vector<1x32xf32> to vector<9x32xf32>
    %307 = arith.mulf %305, %306 : vector<9x32xf32>
    %308 = vector.broadcast %287 : vector<1x32xf32> to vector<9x32xf32>
    %309 = arith.addf %307, %308 : vector<9x32xf32>
    %c1_138 = arith.constant 1 : index
    %c0_139 = arith.constant 0 : index
    %c0_140 = arith.constant 0 : index
    %310 = vector.load %arg9[%c1_138, %c0_139, %c0_140] : memref<2x32x4xf32, #tpu.memory_space<vmem>>, vector<1x32x4xf32>
    %311 = vector.shape_cast %310 : vector<1x32x4xf32> to vector<32x4xf32>
    %cst_141 = arith.constant dense<0.000000e+00> : vector<9x4xf32>
    %312 = tpu.matmul %309, %311, %cst_141 {dimension_numbers = #tpu.dot_dimension_numbers<[1], [0], [0], [1], [0, 0, 1, 1], [], []>} : vector<9x32xf32>, vector<32x4xf32>, vector<9x4xf32> -> vector<9x4xf32>
    %c1_142 = arith.constant 1 : index
    %c0_143 = arith.constant 0 : index
    %c0_144 = arith.constant 0 : index
    %313 = vector.load %arg10[%c1_142, %c0_143, %c0_144] : memref<2x1x4xf32, #tpu.memory_space<vmem>>, vector<1x1x4xf32>
    %314 = vector.shape_cast %313 : vector<1x1x4xf32> to vector<1x4xf32>
    %315 = vector.broadcast %314 : vector<1x4xf32> to vector<9x4xf32>
    %316 = arith.addf %312, %315 : vector<9x4xf32>
    %cst_145 = arith.constant 5.000000e-01 : f32
    %317 = vector.broadcast %cst_145 : f32 to vector<9x4xf32>
    %318 = arith.mulf %317, %316 : vector<9x4xf32>
    %cst_146 = arith.constant 0.707106769 : f32
    %319 = vector.broadcast %cst_146 : f32 to vector<9x4xf32>
    %320 = arith.mulf %316, %319 : vector<9x4xf32>
    %cst_147 = arith.constant 0.000000e+00 : f32
    %321 = vector.broadcast %cst_147 : f32 to vector<9x4xf32>
    %322 = arith.cmpf olt, %320, %321 : vector<9x4xf32>
    %cst_148 = arith.constant -1.000000e+00 : f32
    %cst_149 = arith.constant 1.000000e+00 : f32
    %323 = vector.broadcast %cst_148 : f32 to vector<9x4xf32>
    %324 = vector.broadcast %cst_149 : f32 to vector<9x4xf32>
    %325 = arith.select %322, %323, %324 : vector<9x4xi1>, vector<9x4xf32>
    %326 = math.absf %320 : vector<9x4xf32>
    %cst_150 = arith.constant 0.327591091 : f32
    %327 = vector.broadcast %cst_150 : f32 to vector<9x4xf32>
    %328 = arith.mulf %327, %326 : vector<9x4xf32>
    %cst_151 = arith.constant 1.000000e+00 : f32
    %329 = vector.broadcast %cst_151 : f32 to vector<9x4xf32>
    %330 = arith.addf %329, %328 : vector<9x4xf32>
    %cst_152 = arith.constant 1.000000e+00 : f32
    %331 = vector.broadcast %cst_152 : f32 to vector<9x4xf32>
    %332 = arith.divf %331, %330 : vector<9x4xf32>
    %cst_153 = arith.constant 1.06140542 : f32
    %333 = vector.broadcast %cst_153 : f32 to vector<9x4xf32>
    %334 = arith.mulf %332, %333 : vector<9x4xf32>
    %cst_154 = arith.constant -1.45315206 : f32
    %335 = vector.broadcast %cst_154 : f32 to vector<9x4xf32>
    %336 = arith.addf %335, %334 : vector<9x4xf32>
    %337 = arith.mulf %332, %336 : vector<9x4xf32>
    %cst_155 = arith.constant 1.42141378 : f32
    %338 = vector.broadcast %cst_155 : f32 to vector<9x4xf32>
    %339 = arith.addf %338, %337 : vector<9x4xf32>
    %340 = arith.mulf %332, %339 : vector<9x4xf32>
    %cst_156 = arith.constant -0.284496725 : f32
    %341 = vector.broadcast %cst_156 : f32 to vector<9x4xf32>
    %342 = arith.addf %341, %340 : vector<9x4xf32>
    %343 = arith.mulf %332, %342 : vector<9x4xf32>
    %cst_157 = arith.constant 0.254829586 : f32
    %344 = vector.broadcast %cst_157 : f32 to vector<9x4xf32>
    %345 = arith.addf %344, %343 : vector<9x4xf32>
    %346 = arith.mulf %332, %345 : vector<9x4xf32>
    %cst_158 = arith.constant 0.000000e+00 : f32
    %347 = vector.broadcast %cst_158 : f32 to vector<9x4xf32>
    %348 = arith.subf %347, %326 : vector<9x4xf32>
    %349 = arith.mulf %348, %326 : vector<9x4xf32>
    %350 = math.exp %349 : vector<9x4xf32>
    %351 = arith.mulf %346, %350 : vector<9x4xf32>
    %cst_159 = arith.constant 1.000000e+00 : f32
    %352 = vector.broadcast %cst_159 : f32 to vector<9x4xf32>
    %353 = arith.subf %352, %351 : vector<9x4xf32>
    %354 = arith.mulf %325, %353 : vector<9x4xf32>
    %cst_160 = arith.constant 1.000000e+00 : f32
    %355 = vector.broadcast %cst_160 : f32 to vector<9x4xf32>
    %356 = arith.addf %355, %354 : vector<9x4xf32>
    %357 = arith.mulf %318, %356 : vector<9x4xf32>
    %c1_161 = arith.constant 1 : index
    %c0_162 = arith.constant 0 : index
    %c0_163 = arith.constant 0 : index
    %358 = vector.load %arg11[%c1_161, %c0_162, %c0_163] : memref<2x4x32xf32, #tpu.memory_space<vmem>>, vector<1x4x32xf32>
    %359 = vector.shape_cast %358 : vector<1x4x32xf32> to vector<4x32xf32>
    %cst_164 = arith.constant dense<0.000000e+00> : vector<9x32xf32>
    %360 = tpu.matmul %357, %359, %cst_164 {dimension_numbers = #tpu.dot_dimension_numbers<[1], [0], [0], [1], [0, 0, 1, 1], [], []>} : vector<9x4xf32>, vector<4x32xf32>, vector<9x32xf32> -> vector<9x32xf32>
    %361 = arith.addf %283, %360 : vector<9x32xf32>
    %c1_165 = arith.constant 1 : index
    %c5_166 = arith.constant 5 : index
    %c0_167 = arith.constant 0 : index
    %362 = vector.load %arg6[%c1_165, %c5_166, %c0_167] : memref<2x6x32xf32, #tpu.memory_space<vmem>>, vector<1x1x32xf32>
    %363 = vector.shape_cast %362 : vector<1x1x32xf32> to vector<1x32xf32>
    %364 = vector.broadcast %363 : vector<1x32xf32> to vector<9x32xf32>
    %365 = arith.addf %361, %364 : vector<9x32xf32>
    %c0_168 = arith.constant 0 : index
    %c0_169 = arith.constant 0 : index
    %366 = vector.load %arg12[%c0_168, %c0_169] : memref<4x32xf32, #tpu.memory_space<vmem>>, vector<1x32xf32>
    %c1_170 = arith.constant 1 : index
    %c0_171 = arith.constant 0 : index
    %367 = vector.load %arg12[%c1_170, %c0_171] : memref<4x32xf32, #tpu.memory_space<vmem>>, vector<1x32xf32>
    %cst_172 = arith.constant dense<0.000000e+00> : vector<9xf32>
    %368 = vector.multi_reduction <add>, %365, %cst_172 [1] : vector<9x32xf32> to vector<9xf32>
    %369 = vector.shape_cast %368 : vector<9xf32> to vector<9x1xf32>
    %cst_173 = arith.constant 3.200000e+01 : f32
    %370 = vector.broadcast %cst_173 : f32 to vector<9x1xf32>
    %371 = arith.divf %369, %370 : vector<9x1xf32>
    %372 = vector.broadcast %371 : vector<9x1xf32> to vector<9x32xf32>
    %373 = arith.subf %365, %372 : vector<9x32xf32>
    %374 = arith.mulf %373, %373 : vector<9x32xf32>
    %cst_174 = arith.constant dense<0.000000e+00> : vector<9xf32>
    %375 = vector.multi_reduction <add>, %374, %cst_174 [1] : vector<9x32xf32> to vector<9xf32>
    %376 = vector.shape_cast %375 : vector<9xf32> to vector<9x1xf32>
    %cst_175 = arith.constant 3.200000e+01 : f32
    %377 = vector.broadcast %cst_175 : f32 to vector<9x1xf32>
    %378 = arith.divf %376, %377 : vector<9x1xf32>
    %379 = vector.broadcast %371 : vector<9x1xf32> to vector<9x32xf32>
    %380 = arith.subf %365, %379 : vector<9x32xf32>
    %cst_176 = arith.constant 9.99999974E-6 : f32
    %381 = vector.broadcast %cst_176 : f32 to vector<9x1xf32>
    %382 = arith.addf %378, %381 : vector<9x1xf32>
    %383 = math.rsqrt %382 : vector<9x1xf32>
    %384 = vector.broadcast %383 : vector<9x1xf32> to vector<9x32xf32>
    %385 = arith.mulf %380, %384 : vector<9x32xf32>
    %386 = vector.broadcast %366 : vector<1x32xf32> to vector<9x32xf32>
    %387 = arith.mulf %385, %386 : vector<9x32xf32>
    %388 = vector.broadcast %367 : vector<1x32xf32> to vector<9x32xf32>
    %389 = arith.addf %387, %388 : vector<9x32xf32>
    %c2_177 = arith.constant 2 : index
    %c0_178 = arith.constant 0 : index
    %390 = vector.load %arg12[%c2_177, %c0_178] : memref<4x32xf32, #tpu.memory_space<vmem>>, vector<1x32xf32>
    %c3_179 = arith.constant 3 : index
    %c0_180 = arith.constant 0 : index
    %391 = vector.load %arg12[%c3_179, %c0_180] : memref<4x32xf32, #tpu.memory_space<vmem>>, vector<1x32xf32>
    %cst_181 = arith.constant dense<0.000000e+00> : vector<9xf32>
    %392 = vector.multi_reduction <add>, %389, %cst_181 [1] : vector<9x32xf32> to vector<9xf32>
    %393 = vector.shape_cast %392 : vector<9xf32> to vector<9x1xf32>
    %cst_182 = arith.constant 3.200000e+01 : f32
    %394 = vector.broadcast %cst_182 : f32 to vector<9x1xf32>
    %395 = arith.divf %393, %394 : vector<9x1xf32>
    %396 = vector.broadcast %395 : vector<9x1xf32> to vector<9x32xf32>
    %397 = arith.subf %389, %396 : vector<9x32xf32>
    %398 = arith.mulf %397, %397 : vector<9x32xf32>
    %cst_183 = arith.constant dense<0.000000e+00> : vector<9xf32>
    %399 = vector.multi_reduction <add>, %398, %cst_183 [1] : vector<9x32xf32> to vector<9xf32>
    %400 = vector.shape_cast %399 : vector<9xf32> to vector<9x1xf32>
    %cst_184 = arith.constant 3.200000e+01 : f32
    %401 = vector.broadcast %cst_184 : f32 to vector<9x1xf32>
    %402 = arith.divf %400, %401 : vector<9x1xf32>
    %403 = vector.broadcast %395 : vector<9x1xf32> to vector<9x32xf32>
    %404 = arith.subf %389, %403 : vector<9x32xf32>
    %cst_185 = arith.constant 9.99999974E-6 : f32
    %405 = vector.broadcast %cst_185 : f32 to vector<9x1xf32>
    %406 = arith.addf %402, %405 : vector<9x1xf32>
    %407 = math.rsqrt %406 : vector<9x1xf32>
    %408 = vector.broadcast %407 : vector<9x1xf32> to vector<9x32xf32>
    %409 = arith.mulf %404, %408 : vector<9x32xf32>
    %410 = vector.broadcast %390 : vector<1x32xf32> to vector<9x32xf32>
    %411 = arith.mulf %409, %410 : vector<9x32xf32>
    %412 = vector.broadcast %391 : vector<1x32xf32> to vector<9x32xf32>
    %413 = arith.addf %411, %412 : vector<9x32xf32>
    %c0_186 = arith.constant 0 : index
    %c0_187 = arith.constant 0 : index
    %414 = vector.load %arg13[%c0_186, %c0_187] : memref<32x16xf32, #tpu.memory_space<vmem>>, vector<32x16xf32>
    %cst_188 = arith.constant dense<0.000000e+00> : vector<9x16xf32>
    %415 = tpu.matmul %413, %414, %cst_188 {dimension_numbers = #tpu.dot_dimension_numbers<[1], [0], [0], [1], [0, 0, 1, 1], [], []>} : vector<9x32xf32>, vector<32x16xf32>, vector<9x16xf32> -> vector<9x16xf32>
    %c0_189 = arith.constant 0 : index
    %c0_190 = arith.constant 0 : index
    %416 = vector.load %arg14[%c0_189, %c0_190] : memref<3x16xf32, #tpu.memory_space<vmem>>, vector<1x16xf32>
    %417 = vector.broadcast %416 : vector<1x16xf32> to vector<9x16xf32>
    %418 = arith.addf %415, %417 : vector<9x16xf32>
    %c0_191 = arith.constant 0 : index
    %c0_192 = arith.constant 0 : index
    %419 = vector.load %arg15[%c0_191, %c0_192] : memref<9x16xf32, #tpu.memory_space<vmem>>, vector<9x16xf32>
    %420 = arith.addf %418, %419 : vector<9x16xf32>
    %c0_193 = arith.constant 0 : index
    %c0_194 = arith.constant 0 : index
    %c0_195 = arith.constant 0 : index
    %421 = vector.load %arg16[%c0_193, %c0_194, %c0_195] : memref<2x6x16xf32, #tpu.memory_space<vmem>>, vector<1x1x16xf32>
    %422 = vector.shape_cast %421 : vector<1x1x16xf32> to vector<1x16xf32>
    %c0_196 = arith.constant 0 : index
    %c1_197 = arith.constant 1 : index
    %c0_198 = arith.constant 0 : index
    %423 = vector.load %arg16[%c0_196, %c1_197, %c0_198] : memref<2x6x16xf32, #tpu.memory_space<vmem>>, vector<1x1x16xf32>
    %424 = vector.shape_cast %423 : vector<1x1x16xf32> to vector<1x16xf32>
    %cst_199 = arith.constant dense<0.000000e+00> : vector<9xf32>
    %425 = vector.multi_reduction <add>, %420, %cst_199 [1] : vector<9x16xf32> to vector<9xf32>
    %426 = vector.shape_cast %425 : vector<9xf32> to vector<9x1xf32>
    %cst_200 = arith.constant 1.600000e+01 : f32
    %427 = vector.broadcast %cst_200 : f32 to vector<9x1xf32>
    %428 = arith.divf %426, %427 : vector<9x1xf32>
    %429 = vector.broadcast %428 : vector<9x1xf32> to vector<9x16xf32>
    %430 = arith.subf %420, %429 : vector<9x16xf32>
    %431 = arith.mulf %430, %430 : vector<9x16xf32>
    %cst_201 = arith.constant dense<0.000000e+00> : vector<9xf32>
    %432 = vector.multi_reduction <add>, %431, %cst_201 [1] : vector<9x16xf32> to vector<9xf32>
    %433 = vector.shape_cast %432 : vector<9xf32> to vector<9x1xf32>
    %cst_202 = arith.constant 1.600000e+01 : f32
    %434 = vector.broadcast %cst_202 : f32 to vector<9x1xf32>
    %435 = arith.divf %433, %434 : vector<9x1xf32>
    %436 = vector.broadcast %428 : vector<9x1xf32> to vector<9x16xf32>
    %437 = arith.subf %420, %436 : vector<9x16xf32>
    %cst_203 = arith.constant 9.99999974E-6 : f32
    %438 = vector.broadcast %cst_203 : f32 to vector<9x1xf32>
    %439 = arith.addf %435, %438 : vector<9x1xf32>
    %440 = math.rsqrt %439 : vector<9x1xf32>
    %441 = vector.broadcast %440 : vector<9x1xf32> to vector<9x16xf32>
    %442 = arith.mulf %437, %441 : vector<9x16xf32>
    %443 = vector.broadcast %422 : vector<1x16xf32> to vector<9x16xf32>
    %444 = arith.mulf %442, %443 : vector<9x16xf32>
    %445 = vector.broadcast %424 : vector<1x16xf32> to vector<9x16xf32>
    %446 = arith.addf %444, %445 : vector<9x16xf32>
    %c0_204 = arith.constant 0 : index
    %c0_205 = arith.constant 0 : index
    %c0_206 = arith.constant 0 : index
    %447 = vector.load %arg17[%c0_204, %c0_205, %c0_206] : memref<2x16x768xf32, #tpu.memory_space<vmem>>, vector<1x16x768xf32>
    %448 = vector.shape_cast %447 : vector<1x16x768xf32> to vector<16x768xf32>
    %cst_207 = arith.constant dense<0.000000e+00> : vector<9x768xf32>
    %449 = tpu.matmul %446, %448, %cst_207 {dimension_numbers = #tpu.dot_dimension_numbers<[1], [0], [0], [1], [0, 0, 1, 1], [], []>} : vector<9x16xf32>, vector<16x768xf32>, vector<9x768xf32> -> vector<9x768xf32>
    %450 = vector.extract_strided_slice %449 {offsets = [0, 0], sizes = [9, 128], strides = [1, 1]} : vector<9x768xf32> to vector<9x128xf32>
    %451 = vector.extract_strided_slice %449 {offsets = [0, 256], sizes = [9, 128], strides = [1, 1]} : vector<9x768xf32> to vector<9x128xf32>
    %452 = vector.extract_strided_slice %449 {offsets = [0, 512], sizes = [9, 128], strides = [1, 1]} : vector<9x768xf32> to vector<9x128xf32>
    %cst_208 = arith.constant dense<0.000000e+00> : vector<9x9xf32>
    %453 = tpu.matmul %450, %451, %cst_208 {dimension_numbers = #tpu.dot_dimension_numbers<[1], [1], [0], [0], [0, 0, 1, 0], [], []>} : vector<9x128xf32>, vector<9x128xf32>, vector<9x9xf32> -> vector<9x9xf32>
    %cst_209 = arith.constant 1.250000e-01 : f32
    %454 = vector.broadcast %cst_209 : f32 to vector<9x9xf32>
    %455 = arith.mulf %453, %454 : vector<9x9xf32>
    %cst_210 = arith.constant dense<0xFF800000> : vector<9xf32>
    %456 = vector.multi_reduction <maximumf>, %455, %cst_210 [1] : vector<9x9xf32> to vector<9xf32>
    %457 = vector.shape_cast %456 : vector<9xf32> to vector<9x1xf32>
    %458 = vector.broadcast %457 : vector<9x1xf32> to vector<9x9xf32>
    %459 = arith.subf %455, %458 : vector<9x9xf32>
    %460 = math.exp %459 : vector<9x9xf32>
    %cst_211 = arith.constant dense<0.000000e+00> : vector<9xf32>
    %461 = vector.multi_reduction <add>, %460, %cst_211 [1] : vector<9x9xf32> to vector<9xf32>
    %462 = vector.shape_cast %461 : vector<9xf32> to vector<9x1xf32>
    %463 = vector.broadcast %462 : vector<9x1xf32> to vector<9x9xf32>
    %464 = arith.divf %460, %463 : vector<9x9xf32>
    %cst_212 = arith.constant dense<0.000000e+00> : vector<9x128xf32>
    %465 = tpu.matmul %464, %452, %cst_212 {dimension_numbers = #tpu.dot_dimension_numbers<[1], [0], [0], [1], [0, 0, 1, 1], [], []>} : vector<9x9xf32>, vector<9x128xf32>, vector<9x128xf32> -> vector<9x128xf32>
    %466 = vector.extract_strided_slice %449 {offsets = [0, 128], sizes = [9, 128], strides = [1, 1]} : vector<9x768xf32> to vector<9x128xf32>
    %467 = vector.extract_strided_slice %449 {offsets = [0, 384], sizes = [9, 128], strides = [1, 1]} : vector<9x768xf32> to vector<9x128xf32>
    %468 = vector.extract_strided_slice %449 {offsets = [0, 640], sizes = [9, 128], strides = [1, 1]} : vector<9x768xf32> to vector<9x128xf32>
    %cst_213 = arith.constant dense<0.000000e+00> : vector<9x9xf32>
    %469 = tpu.matmul %466, %467, %cst_213 {dimension_numbers = #tpu.dot_dimension_numbers<[1], [1], [0], [0], [0, 0, 1, 0], [], []>} : vector<9x128xf32>, vector<9x128xf32>, vector<9x9xf32> -> vector<9x9xf32>
    %cst_214 = arith.constant 1.250000e-01 : f32
    %470 = vector.broadcast %cst_214 : f32 to vector<9x9xf32>
    %471 = arith.mulf %469, %470 : vector<9x9xf32>
    %cst_215 = arith.constant dense<0xFF800000> : vector<9xf32>
    %472 = vector.multi_reduction <maximumf>, %471, %cst_215 [1] : vector<9x9xf32> to vector<9xf32>
    %473 = vector.shape_cast %472 : vector<9xf32> to vector<9x1xf32>
    %474 = vector.broadcast %473 : vector<9x1xf32> to vector<9x9xf32>
    %475 = arith.subf %471, %474 : vector<9x9xf32>
    %476 = math.exp %475 : vector<9x9xf32>
    %cst_216 = arith.constant dense<0.000000e+00> : vector<9xf32>
    %477 = vector.multi_reduction <add>, %476, %cst_216 [1] : vector<9x9xf32> to vector<9xf32>
    %478 = vector.shape_cast %477 : vector<9xf32> to vector<9x1xf32>
    %479 = vector.broadcast %478 : vector<9x1xf32> to vector<9x9xf32>
    %480 = arith.divf %476, %479 : vector<9x9xf32>
    %cst_217 = arith.constant dense<0.000000e+00> : vector<9x128xf32>
    %481 = tpu.matmul %480, %468, %cst_217 {dimension_numbers = #tpu.dot_dimension_numbers<[1], [0], [0], [1], [0, 0, 1, 1], [], []>} : vector<9x9xf32>, vector<9x128xf32>, vector<9x128xf32> -> vector<9x128xf32>
    %482 = tpu.concatenate %465, %481 in 1 : vector<9x128xf32>, vector<9x128xf32> -> vector<9x256xf32>
    %c0_218 = arith.constant 0 : index
    %c2_219 = arith.constant 2 : index
    %c0_220 = arith.constant 0 : index
    %483 = vector.load %arg16[%c0_218, %c2_219, %c0_220] : memref<2x6x16xf32, #tpu.memory_space<vmem>>, vector<1x1x16xf32>
    %484 = vector.shape_cast %483 : vector<1x1x16xf32> to vector<1x16xf32>
    %485 = vector.broadcast %484 : vector<1x16xf32> to vector<9x16xf32>
    %486 = arith.addf %420, %485 : vector<9x16xf32>
    %c0_221 = arith.constant 0 : index
    %c0_222 = arith.constant 0 : index
    %c0_223 = arith.constant 0 : index
    %487 = vector.load %arg18[%c0_221, %c0_222, %c0_223] : memref<2x256x16xf32, #tpu.memory_space<vmem>>, vector<1x256x16xf32>
    %488 = vector.shape_cast %487 : vector<1x256x16xf32> to vector<256x16xf32>
    %cst_224 = arith.constant dense<0.000000e+00> : vector<9x16xf32>
    %489 = tpu.matmul %482, %488, %cst_224 {dimension_numbers = #tpu.dot_dimension_numbers<[1], [0], [0], [1], [0, 0, 1, 1], [], []>} : vector<9x256xf32>, vector<256x16xf32>, vector<9x16xf32> -> vector<9x16xf32>
    %490 = arith.addf %486, %489 : vector<9x16xf32>
    %c0_225 = arith.constant 0 : index
    %c3_226 = arith.constant 3 : index
    %c0_227 = arith.constant 0 : index
    %491 = vector.load %arg16[%c0_225, %c3_226, %c0_227] : memref<2x6x16xf32, #tpu.memory_space<vmem>>, vector<1x1x16xf32>
    %492 = vector.shape_cast %491 : vector<1x1x16xf32> to vector<1x16xf32>
    %c0_228 = arith.constant 0 : index
    %c4_229 = arith.constant 4 : index
    %c0_230 = arith.constant 0 : index
    %493 = vector.load %arg16[%c0_228, %c4_229, %c0_230] : memref<2x6x16xf32, #tpu.memory_space<vmem>>, vector<1x1x16xf32>
    %494 = vector.shape_cast %493 : vector<1x1x16xf32> to vector<1x16xf32>
    %cst_231 = arith.constant dense<0.000000e+00> : vector<9xf32>
    %495 = vector.multi_reduction <add>, %490, %cst_231 [1] : vector<9x16xf32> to vector<9xf32>
    %496 = vector.shape_cast %495 : vector<9xf32> to vector<9x1xf32>
    %cst_232 = arith.constant 1.600000e+01 : f32
    %497 = vector.broadcast %cst_232 : f32 to vector<9x1xf32>
    %498 = arith.divf %496, %497 : vector<9x1xf32>
    %499 = vector.broadcast %498 : vector<9x1xf32> to vector<9x16xf32>
    %500 = arith.subf %490, %499 : vector<9x16xf32>
    %501 = arith.mulf %500, %500 : vector<9x16xf32>
    %cst_233 = arith.constant dense<0.000000e+00> : vector<9xf32>
    %502 = vector.multi_reduction <add>, %501, %cst_233 [1] : vector<9x16xf32> to vector<9xf32>
    %503 = vector.shape_cast %502 : vector<9xf32> to vector<9x1xf32>
    %cst_234 = arith.constant 1.600000e+01 : f32
    %504 = vector.broadcast %cst_234 : f32 to vector<9x1xf32>
    %505 = arith.divf %503, %504 : vector<9x1xf32>
    %506 = vector.broadcast %498 : vector<9x1xf32> to vector<9x16xf32>
    %507 = arith.subf %490, %506 : vector<9x16xf32>
    %cst_235 = arith.constant 9.99999974E-6 : f32
    %508 = vector.broadcast %cst_235 : f32 to vector<9x1xf32>
    %509 = arith.addf %505, %508 : vector<9x1xf32>
    %510 = math.rsqrt %509 : vector<9x1xf32>
    %511 = vector.broadcast %510 : vector<9x1xf32> to vector<9x16xf32>
    %512 = arith.mulf %507, %511 : vector<9x16xf32>
    %513 = vector.broadcast %492 : vector<1x16xf32> to vector<9x16xf32>
    %514 = arith.mulf %512, %513 : vector<9x16xf32>
    %515 = vector.broadcast %494 : vector<1x16xf32> to vector<9x16xf32>
    %516 = arith.addf %514, %515 : vector<9x16xf32>
    %c0_236 = arith.constant 0 : index
    %c0_237 = arith.constant 0 : index
    %c0_238 = arith.constant 0 : index
    %517 = vector.load %arg19[%c0_236, %c0_237, %c0_238] : memref<2x16x4xf32, #tpu.memory_space<vmem>>, vector<1x16x4xf32>
    %518 = vector.shape_cast %517 : vector<1x16x4xf32> to vector<16x4xf32>
    %cst_239 = arith.constant dense<0.000000e+00> : vector<9x4xf32>
    %519 = tpu.matmul %516, %518, %cst_239 {dimension_numbers = #tpu.dot_dimension_numbers<[1], [0], [0], [1], [0, 0, 1, 1], [], []>} : vector<9x16xf32>, vector<16x4xf32>, vector<9x4xf32> -> vector<9x4xf32>
    %c0_240 = arith.constant 0 : index
    %c0_241 = arith.constant 0 : index
    %c0_242 = arith.constant 0 : index
    %520 = vector.load %arg20[%c0_240, %c0_241, %c0_242] : memref<2x1x4xf32, #tpu.memory_space<vmem>>, vector<1x1x4xf32>
    %521 = vector.shape_cast %520 : vector<1x1x4xf32> to vector<1x4xf32>
    %522 = vector.broadcast %521 : vector<1x4xf32> to vector<9x4xf32>
    %523 = arith.addf %519, %522 : vector<9x4xf32>
    %cst_243 = arith.constant 5.000000e-01 : f32
    %524 = vector.broadcast %cst_243 : f32 to vector<9x4xf32>
    %525 = arith.mulf %524, %523 : vector<9x4xf32>
    %cst_244 = arith.constant 0.707106769 : f32
    %526 = vector.broadcast %cst_244 : f32 to vector<9x4xf32>
    %527 = arith.mulf %523, %526 : vector<9x4xf32>
    %cst_245 = arith.constant 0.000000e+00 : f32
    %528 = vector.broadcast %cst_245 : f32 to vector<9x4xf32>
    %529 = arith.cmpf olt, %527, %528 : vector<9x4xf32>
    %cst_246 = arith.constant -1.000000e+00 : f32
    %cst_247 = arith.constant 1.000000e+00 : f32
    %530 = vector.broadcast %cst_246 : f32 to vector<9x4xf32>
    %531 = vector.broadcast %cst_247 : f32 to vector<9x4xf32>
    %532 = arith.select %529, %530, %531 : vector<9x4xi1>, vector<9x4xf32>
    %533 = math.absf %527 : vector<9x4xf32>
    %cst_248 = arith.constant 0.327591091 : f32
    %534 = vector.broadcast %cst_248 : f32 to vector<9x4xf32>
    %535 = arith.mulf %534, %533 : vector<9x4xf32>
    %cst_249 = arith.constant 1.000000e+00 : f32
    %536 = vector.broadcast %cst_249 : f32 to vector<9x4xf32>
    %537 = arith.addf %536, %535 : vector<9x4xf32>
    %cst_250 = arith.constant 1.000000e+00 : f32
    %538 = vector.broadcast %cst_250 : f32 to vector<9x4xf32>
    %539 = arith.divf %538, %537 : vector<9x4xf32>
    %cst_251 = arith.constant 1.06140542 : f32
    %540 = vector.broadcast %cst_251 : f32 to vector<9x4xf32>
    %541 = arith.mulf %539, %540 : vector<9x4xf32>
    %cst_252 = arith.constant -1.45315206 : f32
    %542 = vector.broadcast %cst_252 : f32 to vector<9x4xf32>
    %543 = arith.addf %542, %541 : vector<9x4xf32>
    %544 = arith.mulf %539, %543 : vector<9x4xf32>
    %cst_253 = arith.constant 1.42141378 : f32
    %545 = vector.broadcast %cst_253 : f32 to vector<9x4xf32>
    %546 = arith.addf %545, %544 : vector<9x4xf32>
    %547 = arith.mulf %539, %546 : vector<9x4xf32>
    %cst_254 = arith.constant -0.284496725 : f32
    %548 = vector.broadcast %cst_254 : f32 to vector<9x4xf32>
    %549 = arith.addf %548, %547 : vector<9x4xf32>
    %550 = arith.mulf %539, %549 : vector<9x4xf32>
    %cst_255 = arith.constant 0.254829586 : f32
    %551 = vector.broadcast %cst_255 : f32 to vector<9x4xf32>
    %552 = arith.addf %551, %550 : vector<9x4xf32>
    %553 = arith.mulf %539, %552 : vector<9x4xf32>
    %cst_256 = arith.constant 0.000000e+00 : f32
    %554 = vector.broadcast %cst_256 : f32 to vector<9x4xf32>
    %555 = arith.subf %554, %533 : vector<9x4xf32>
    %556 = arith.mulf %555, %533 : vector<9x4xf32>
    %557 = math.exp %556 : vector<9x4xf32>
    %558 = arith.mulf %553, %557 : vector<9x4xf32>
    %cst_257 = arith.constant 1.000000e+00 : f32
    %559 = vector.broadcast %cst_257 : f32 to vector<9x4xf32>
    %560 = arith.subf %559, %558 : vector<9x4xf32>
    %561 = arith.mulf %532, %560 : vector<9x4xf32>
    %cst_258 = arith.constant 1.000000e+00 : f32
    %562 = vector.broadcast %cst_258 : f32 to vector<9x4xf32>
    %563 = arith.addf %562, %561 : vector<9x4xf32>
    %564 = arith.mulf %525, %563 : vector<9x4xf32>
    %c0_259 = arith.constant 0 : index
    %c0_260 = arith.constant 0 : index
    %c0_261 = arith.constant 0 : index
    %565 = vector.load %arg21[%c0_259, %c0_260, %c0_261] : memref<2x4x16xf32, #tpu.memory_space<vmem>>, vector<1x4x16xf32>
    %566 = vector.shape_cast %565 : vector<1x4x16xf32> to vector<4x16xf32>
    %cst_262 = arith.constant dense<0.000000e+00> : vector<9x16xf32>
    %567 = tpu.matmul %564, %566, %cst_262 {dimension_numbers = #tpu.dot_dimension_numbers<[1], [0], [0], [1], [0, 0, 1, 1], [], []>} : vector<9x4xf32>, vector<4x16xf32>, vector<9x16xf32> -> vector<9x16xf32>
    %568 = arith.addf %490, %567 : vector<9x16xf32>
    %c0_263 = arith.constant 0 : index
    %c5_264 = arith.constant 5 : index
    %c0_265 = arith.constant 0 : index
    %569 = vector.load %arg16[%c0_263, %c5_264, %c0_265] : memref<2x6x16xf32, #tpu.memory_space<vmem>>, vector<1x1x16xf32>
    %570 = vector.shape_cast %569 : vector<1x1x16xf32> to vector<1x16xf32>
    %571 = vector.broadcast %570 : vector<1x16xf32> to vector<9x16xf32>
    %572 = arith.addf %568, %571 : vector<9x16xf32>
    %c1_266 = arith.constant 1 : index
    %c0_267 = arith.constant 0 : index
    %c0_268 = arith.constant 0 : index
    %573 = vector.load %arg16[%c1_266, %c0_267, %c0_268] : memref<2x6x16xf32, #tpu.memory_space<vmem>>, vector<1x1x16xf32>
    %574 = vector.shape_cast %573 : vector<1x1x16xf32> to vector<1x16xf32>
    %c1_269 = arith.constant 1 : index
    %c1_270 = arith.constant 1 : index
    %c0_271 = arith.constant 0 : index
    %575 = vector.load %arg16[%c1_269, %c1_270, %c0_271] : memref<2x6x16xf32, #tpu.memory_space<vmem>>, vector<1x1x16xf32>
    %576 = vector.shape_cast %575 : vector<1x1x16xf32> to vector<1x16xf32>
    %cst_272 = arith.constant dense<0.000000e+00> : vector<9xf32>
    %577 = vector.multi_reduction <add>, %572, %cst_272 [1] : vector<9x16xf32> to vector<9xf32>
    %578 = vector.shape_cast %577 : vector<9xf32> to vector<9x1xf32>
    %cst_273 = arith.constant 1.600000e+01 : f32
    %579 = vector.broadcast %cst_273 : f32 to vector<9x1xf32>
    %580 = arith.divf %578, %579 : vector<9x1xf32>
    %581 = vector.broadcast %580 : vector<9x1xf32> to vector<9x16xf32>
    %582 = arith.subf %572, %581 : vector<9x16xf32>
    %583 = arith.mulf %582, %582 : vector<9x16xf32>
    %cst_274 = arith.constant dense<0.000000e+00> : vector<9xf32>
    %584 = vector.multi_reduction <add>, %583, %cst_274 [1] : vector<9x16xf32> to vector<9xf32>
    %585 = vector.shape_cast %584 : vector<9xf32> to vector<9x1xf32>
    %cst_275 = arith.constant 1.600000e+01 : f32
    %586 = vector.broadcast %cst_275 : f32 to vector<9x1xf32>
    %587 = arith.divf %585, %586 : vector<9x1xf32>
    %588 = vector.broadcast %580 : vector<9x1xf32> to vector<9x16xf32>
    %589 = arith.subf %572, %588 : vector<9x16xf32>
    %cst_276 = arith.constant 9.99999974E-6 : f32
    %590 = vector.broadcast %cst_276 : f32 to vector<9x1xf32>
    %591 = arith.addf %587, %590 : vector<9x1xf32>
    %592 = math.rsqrt %591 : vector<9x1xf32>
    %593 = vector.broadcast %592 : vector<9x1xf32> to vector<9x16xf32>
    %594 = arith.mulf %589, %593 : vector<9x16xf32>
    %595 = vector.broadcast %574 : vector<1x16xf32> to vector<9x16xf32>
    %596 = arith.mulf %594, %595 : vector<9x16xf32>
    %597 = vector.broadcast %576 : vector<1x16xf32> to vector<9x16xf32>
    %598 = arith.addf %596, %597 : vector<9x16xf32>
    %c1_277 = arith.constant 1 : index
    %c0_278 = arith.constant 0 : index
    %c0_279 = arith.constant 0 : index
    %599 = vector.load %arg17[%c1_277, %c0_278, %c0_279] : memref<2x16x768xf32, #tpu.memory_space<vmem>>, vector<1x16x768xf32>
    %600 = vector.shape_cast %599 : vector<1x16x768xf32> to vector<16x768xf32>
    %cst_280 = arith.constant dense<0.000000e+00> : vector<9x768xf32>
    %601 = tpu.matmul %598, %600, %cst_280 {dimension_numbers = #tpu.dot_dimension_numbers<[1], [0], [0], [1], [0, 0, 1, 1], [], []>} : vector<9x16xf32>, vector<16x768xf32>, vector<9x768xf32> -> vector<9x768xf32>
    %602 = vector.extract_strided_slice %601 {offsets = [0, 0], sizes = [9, 128], strides = [1, 1]} : vector<9x768xf32> to vector<9x128xf32>
    %603 = vector.extract_strided_slice %601 {offsets = [0, 256], sizes = [9, 128], strides = [1, 1]} : vector<9x768xf32> to vector<9x128xf32>
    %604 = vector.extract_strided_slice %601 {offsets = [0, 512], sizes = [9, 128], strides = [1, 1]} : vector<9x768xf32> to vector<9x128xf32>
    %cst_281 = arith.constant dense<0.000000e+00> : vector<9x9xf32>
    %605 = tpu.matmul %602, %603, %cst_281 {dimension_numbers = #tpu.dot_dimension_numbers<[1], [1], [0], [0], [0, 0, 1, 0], [], []>} : vector<9x128xf32>, vector<9x128xf32>, vector<9x9xf32> -> vector<9x9xf32>
    %cst_282 = arith.constant 1.250000e-01 : f32
    %606 = vector.broadcast %cst_282 : f32 to vector<9x9xf32>
    %607 = arith.mulf %605, %606 : vector<9x9xf32>
    %cst_283 = arith.constant dense<0xFF800000> : vector<9xf32>
    %608 = vector.multi_reduction <maximumf>, %607, %cst_283 [1] : vector<9x9xf32> to vector<9xf32>
    %609 = vector.shape_cast %608 : vector<9xf32> to vector<9x1xf32>
    %610 = vector.broadcast %609 : vector<9x1xf32> to vector<9x9xf32>
    %611 = arith.subf %607, %610 : vector<9x9xf32>
    %612 = math.exp %611 : vector<9x9xf32>
    %cst_284 = arith.constant dense<0.000000e+00> : vector<9xf32>
    %613 = vector.multi_reduction <add>, %612, %cst_284 [1] : vector<9x9xf32> to vector<9xf32>
    %614 = vector.shape_cast %613 : vector<9xf32> to vector<9x1xf32>
    %615 = vector.broadcast %614 : vector<9x1xf32> to vector<9x9xf32>
    %616 = arith.divf %612, %615 : vector<9x9xf32>
    %cst_285 = arith.constant dense<0.000000e+00> : vector<9x128xf32>
    %617 = tpu.matmul %616, %604, %cst_285 {dimension_numbers = #tpu.dot_dimension_numbers<[1], [0], [0], [1], [0, 0, 1, 1], [], []>} : vector<9x9xf32>, vector<9x128xf32>, vector<9x128xf32> -> vector<9x128xf32>
    %618 = vector.extract_strided_slice %601 {offsets = [0, 128], sizes = [9, 128], strides = [1, 1]} : vector<9x768xf32> to vector<9x128xf32>
    %619 = vector.extract_strided_slice %601 {offsets = [0, 384], sizes = [9, 128], strides = [1, 1]} : vector<9x768xf32> to vector<9x128xf32>
    %620 = vector.extract_strided_slice %601 {offsets = [0, 640], sizes = [9, 128], strides = [1, 1]} : vector<9x768xf32> to vector<9x128xf32>
    %cst_286 = arith.constant dense<0.000000e+00> : vector<9x9xf32>
    %621 = tpu.matmul %618, %619, %cst_286 {dimension_numbers = #tpu.dot_dimension_numbers<[1], [1], [0], [0], [0, 0, 1, 0], [], []>} : vector<9x128xf32>, vector<9x128xf32>, vector<9x9xf32> -> vector<9x9xf32>
    %cst_287 = arith.constant 1.250000e-01 : f32
    %622 = vector.broadcast %cst_287 : f32 to vector<9x9xf32>
    %623 = arith.mulf %621, %622 : vector<9x9xf32>
    %cst_288 = arith.constant dense<0xFF800000> : vector<9xf32>
    %624 = vector.multi_reduction <maximumf>, %623, %cst_288 [1] : vector<9x9xf32> to vector<9xf32>
    %625 = vector.shape_cast %624 : vector<9xf32> to vector<9x1xf32>
    %626 = vector.broadcast %625 : vector<9x1xf32> to vector<9x9xf32>
    %627 = arith.subf %623, %626 : vector<9x9xf32>
    %628 = math.exp %627 : vector<9x9xf32>
    %cst_289 = arith.constant dense<0.000000e+00> : vector<9xf32>
    %629 = vector.multi_reduction <add>, %628, %cst_289 [1] : vector<9x9xf32> to vector<9xf32>
    %630 = vector.shape_cast %629 : vector<9xf32> to vector<9x1xf32>
    %631 = vector.broadcast %630 : vector<9x1xf32> to vector<9x9xf32>
    %632 = arith.divf %628, %631 : vector<9x9xf32>
    %cst_290 = arith.constant dense<0.000000e+00> : vector<9x128xf32>
    %633 = tpu.matmul %632, %620, %cst_290 {dimension_numbers = #tpu.dot_dimension_numbers<[1], [0], [0], [1], [0, 0, 1, 1], [], []>} : vector<9x9xf32>, vector<9x128xf32>, vector<9x128xf32> -> vector<9x128xf32>
    %634 = tpu.concatenate %617, %633 in 1 : vector<9x128xf32>, vector<9x128xf32> -> vector<9x256xf32>
    %c1_291 = arith.constant 1 : index
    %c2_292 = arith.constant 2 : index
    %c0_293 = arith.constant 0 : index
    %635 = vector.load %arg16[%c1_291, %c2_292, %c0_293] : memref<2x6x16xf32, #tpu.memory_space<vmem>>, vector<1x1x16xf32>
    %636 = vector.shape_cast %635 : vector<1x1x16xf32> to vector<1x16xf32>
    %637 = vector.broadcast %636 : vector<1x16xf32> to vector<9x16xf32>
    %638 = arith.addf %572, %637 : vector<9x16xf32>
    %c1_294 = arith.constant 1 : index
    %c0_295 = arith.constant 0 : index
    %c0_296 = arith.constant 0 : index
    %639 = vector.load %arg18[%c1_294, %c0_295, %c0_296] : memref<2x256x16xf32, #tpu.memory_space<vmem>>, vector<1x256x16xf32>
    %640 = vector.shape_cast %639 : vector<1x256x16xf32> to vector<256x16xf32>
    %cst_297 = arith.constant dense<0.000000e+00> : vector<9x16xf32>
    %641 = tpu.matmul %634, %640, %cst_297 {dimension_numbers = #tpu.dot_dimension_numbers<[1], [0], [0], [1], [0, 0, 1, 1], [], []>} : vector<9x256xf32>, vector<256x16xf32>, vector<9x16xf32> -> vector<9x16xf32>
    %642 = arith.addf %638, %641 : vector<9x16xf32>
    %c1_298 = arith.constant 1 : index
    %c3_299 = arith.constant 3 : index
    %c0_300 = arith.constant 0 : index
    %643 = vector.load %arg16[%c1_298, %c3_299, %c0_300] : memref<2x6x16xf32, #tpu.memory_space<vmem>>, vector<1x1x16xf32>
    %644 = vector.shape_cast %643 : vector<1x1x16xf32> to vector<1x16xf32>
    %c1_301 = arith.constant 1 : index
    %c4_302 = arith.constant 4 : index
    %c0_303 = arith.constant 0 : index
    %645 = vector.load %arg16[%c1_301, %c4_302, %c0_303] : memref<2x6x16xf32, #tpu.memory_space<vmem>>, vector<1x1x16xf32>
    %646 = vector.shape_cast %645 : vector<1x1x16xf32> to vector<1x16xf32>
    %cst_304 = arith.constant dense<0.000000e+00> : vector<9xf32>
    %647 = vector.multi_reduction <add>, %642, %cst_304 [1] : vector<9x16xf32> to vector<9xf32>
    %648 = vector.shape_cast %647 : vector<9xf32> to vector<9x1xf32>
    %cst_305 = arith.constant 1.600000e+01 : f32
    %649 = vector.broadcast %cst_305 : f32 to vector<9x1xf32>
    %650 = arith.divf %648, %649 : vector<9x1xf32>
    %651 = vector.broadcast %650 : vector<9x1xf32> to vector<9x16xf32>
    %652 = arith.subf %642, %651 : vector<9x16xf32>
    %653 = arith.mulf %652, %652 : vector<9x16xf32>
    %cst_306 = arith.constant dense<0.000000e+00> : vector<9xf32>
    %654 = vector.multi_reduction <add>, %653, %cst_306 [1] : vector<9x16xf32> to vector<9xf32>
    %655 = vector.shape_cast %654 : vector<9xf32> to vector<9x1xf32>
    %cst_307 = arith.constant 1.600000e+01 : f32
    %656 = vector.broadcast %cst_307 : f32 to vector<9x1xf32>
    %657 = arith.divf %655, %656 : vector<9x1xf32>
    %658 = vector.broadcast %650 : vector<9x1xf32> to vector<9x16xf32>
    %659 = arith.subf %642, %658 : vector<9x16xf32>
    %cst_308 = arith.constant 9.99999974E-6 : f32
    %660 = vector.broadcast %cst_308 : f32 to vector<9x1xf32>
    %661 = arith.addf %657, %660 : vector<9x1xf32>
    %662 = math.rsqrt %661 : vector<9x1xf32>
    %663 = vector.broadcast %662 : vector<9x1xf32> to vector<9x16xf32>
    %664 = arith.mulf %659, %663 : vector<9x16xf32>
    %665 = vector.broadcast %644 : vector<1x16xf32> to vector<9x16xf32>
    %666 = arith.mulf %664, %665 : vector<9x16xf32>
    %667 = vector.broadcast %646 : vector<1x16xf32> to vector<9x16xf32>
    %668 = arith.addf %666, %667 : vector<9x16xf32>
    %c1_309 = arith.constant 1 : index
    %c0_310 = arith.constant 0 : index
    %c0_311 = arith.constant 0 : index
    %669 = vector.load %arg19[%c1_309, %c0_310, %c0_311] : memref<2x16x4xf32, #tpu.memory_space<vmem>>, vector<1x16x4xf32>
    %670 = vector.shape_cast %669 : vector<1x16x4xf32> to vector<16x4xf32>
    %cst_312 = arith.constant dense<0.000000e+00> : vector<9x4xf32>
    %671 = tpu.matmul %668, %670, %cst_312 {dimension_numbers = #tpu.dot_dimension_numbers<[1], [0], [0], [1], [0, 0, 1, 1], [], []>} : vector<9x16xf32>, vector<16x4xf32>, vector<9x4xf32> -> vector<9x4xf32>
    %c1_313 = arith.constant 1 : index
    %c0_314 = arith.constant 0 : index
    %c0_315 = arith.constant 0 : index
    %672 = vector.load %arg20[%c1_313, %c0_314, %c0_315] : memref<2x1x4xf32, #tpu.memory_space<vmem>>, vector<1x1x4xf32>
    %673 = vector.shape_cast %672 : vector<1x1x4xf32> to vector<1x4xf32>
    %674 = vector.broadcast %673 : vector<1x4xf32> to vector<9x4xf32>
    %675 = arith.addf %671, %674 : vector<9x4xf32>
    %cst_316 = arith.constant 5.000000e-01 : f32
    %676 = vector.broadcast %cst_316 : f32 to vector<9x4xf32>
    %677 = arith.mulf %676, %675 : vector<9x4xf32>
    %cst_317 = arith.constant 0.707106769 : f32
    %678 = vector.broadcast %cst_317 : f32 to vector<9x4xf32>
    %679 = arith.mulf %675, %678 : vector<9x4xf32>
    %cst_318 = arith.constant 0.000000e+00 : f32
    %680 = vector.broadcast %cst_318 : f32 to vector<9x4xf32>
    %681 = arith.cmpf olt, %679, %680 : vector<9x4xf32>
    %cst_319 = arith.constant -1.000000e+00 : f32
    %cst_320 = arith.constant 1.000000e+00 : f32
    %682 = vector.broadcast %cst_319 : f32 to vector<9x4xf32>
    %683 = vector.broadcast %cst_320 : f32 to vector<9x4xf32>
    %684 = arith.select %681, %682, %683 : vector<9x4xi1>, vector<9x4xf32>
    %685 = math.absf %679 : vector<9x4xf32>
    %cst_321 = arith.constant 0.327591091 : f32
    %686 = vector.broadcast %cst_321 : f32 to vector<9x4xf32>
    %687 = arith.mulf %686, %685 : vector<9x4xf32>
    %cst_322 = arith.constant 1.000000e+00 : f32
    %688 = vector.broadcast %cst_322 : f32 to vector<9x4xf32>
    %689 = arith.addf %688, %687 : vector<9x4xf32>
    %cst_323 = arith.constant 1.000000e+00 : f32
    %690 = vector.broadcast %cst_323 : f32 to vector<9x4xf32>
    %691 = arith.divf %690, %689 : vector<9x4xf32>
    %cst_324 = arith.constant 1.06140542 : f32
    %692 = vector.broadcast %cst_324 : f32 to vector<9x4xf32>
    %693 = arith.mulf %691, %692 : vector<9x4xf32>
    %cst_325 = arith.constant -1.45315206 : f32
    %694 = vector.broadcast %cst_325 : f32 to vector<9x4xf32>
    %695 = arith.addf %694, %693 : vector<9x4xf32>
    %696 = arith.mulf %691, %695 : vector<9x4xf32>
    %cst_326 = arith.constant 1.42141378 : f32
    %697 = vector.broadcast %cst_326 : f32 to vector<9x4xf32>
    %698 = arith.addf %697, %696 : vector<9x4xf32>
    %699 = arith.mulf %691, %698 : vector<9x4xf32>
    %cst_327 = arith.constant -0.284496725 : f32
    %700 = vector.broadcast %cst_327 : f32 to vector<9x4xf32>
    %701 = arith.addf %700, %699 : vector<9x4xf32>
    %702 = arith.mulf %691, %701 : vector<9x4xf32>
    %cst_328 = arith.constant 0.254829586 : f32
    %703 = vector.broadcast %cst_328 : f32 to vector<9x4xf32>
    %704 = arith.addf %703, %702 : vector<9x4xf32>
    %705 = arith.mulf %691, %704 : vector<9x4xf32>
    %cst_329 = arith.constant 0.000000e+00 : f32
    %706 = vector.broadcast %cst_329 : f32 to vector<9x4xf32>
    %707 = arith.subf %706, %685 : vector<9x4xf32>
    %708 = arith.mulf %707, %685 : vector<9x4xf32>
    %709 = math.exp %708 : vector<9x4xf32>
    %710 = arith.mulf %705, %709 : vector<9x4xf32>
    %cst_330 = arith.constant 1.000000e+00 : f32
    %711 = vector.broadcast %cst_330 : f32 to vector<9x4xf32>
    %712 = arith.subf %711, %710 : vector<9x4xf32>
    %713 = arith.mulf %684, %712 : vector<9x4xf32>
    %cst_331 = arith.constant 1.000000e+00 : f32
    %714 = vector.broadcast %cst_331 : f32 to vector<9x4xf32>
    %715 = arith.addf %714, %713 : vector<9x4xf32>
    %716 = arith.mulf %677, %715 : vector<9x4xf32>
    %c1_332 = arith.constant 1 : index
    %c0_333 = arith.constant 0 : index
    %c0_334 = arith.constant 0 : index
    %717 = vector.load %arg21[%c1_332, %c0_333, %c0_334] : memref<2x4x16xf32, #tpu.memory_space<vmem>>, vector<1x4x16xf32>
    %718 = vector.shape_cast %717 : vector<1x4x16xf32> to vector<4x16xf32>
    %cst_335 = arith.constant dense<0.000000e+00> : vector<9x16xf32>
    %719 = tpu.matmul %716, %718, %cst_335 {dimension_numbers = #tpu.dot_dimension_numbers<[1], [0], [0], [1], [0, 0, 1, 1], [], []>} : vector<9x4xf32>, vector<4x16xf32>, vector<9x16xf32> -> vector<9x16xf32>
    %720 = arith.addf %642, %719 : vector<9x16xf32>
    %c1_336 = arith.constant 1 : index
    %c5_337 = arith.constant 5 : index
    %c0_338 = arith.constant 0 : index
    %721 = vector.load %arg16[%c1_336, %c5_337, %c0_338] : memref<2x6x16xf32, #tpu.memory_space<vmem>>, vector<1x1x16xf32>
    %722 = vector.shape_cast %721 : vector<1x1x16xf32> to vector<1x16xf32>
    %723 = vector.broadcast %722 : vector<1x16xf32> to vector<9x16xf32>
    %724 = arith.addf %720, %723 : vector<9x16xf32>
    %c1_339 = arith.constant 1 : index
    %c0_340 = arith.constant 0 : index
    %725 = vector.load %arg14[%c1_339, %c0_340] : memref<3x16xf32, #tpu.memory_space<vmem>>, vector<1x16xf32>
    %c2_341 = arith.constant 2 : index
    %c0_342 = arith.constant 0 : index
    %726 = vector.load %arg14[%c2_341, %c0_342] : memref<3x16xf32, #tpu.memory_space<vmem>>, vector<1x16xf32>
    %cst_343 = arith.constant dense<0.000000e+00> : vector<9xf32>
    %727 = vector.multi_reduction <add>, %724, %cst_343 [1] : vector<9x16xf32> to vector<9xf32>
    %728 = vector.shape_cast %727 : vector<9xf32> to vector<9x1xf32>
    %cst_344 = arith.constant 1.600000e+01 : f32
    %729 = vector.broadcast %cst_344 : f32 to vector<9x1xf32>
    %730 = arith.divf %728, %729 : vector<9x1xf32>
    %731 = vector.broadcast %730 : vector<9x1xf32> to vector<9x16xf32>
    %732 = arith.subf %724, %731 : vector<9x16xf32>
    %733 = arith.mulf %732, %732 : vector<9x16xf32>
    %cst_345 = arith.constant dense<0.000000e+00> : vector<9xf32>
    %734 = vector.multi_reduction <add>, %733, %cst_345 [1] : vector<9x16xf32> to vector<9xf32>
    %735 = vector.shape_cast %734 : vector<9xf32> to vector<9x1xf32>
    %cst_346 = arith.constant 1.600000e+01 : f32
    %736 = vector.broadcast %cst_346 : f32 to vector<9x1xf32>
    %737 = arith.divf %735, %736 : vector<9x1xf32>
    %738 = vector.broadcast %730 : vector<9x1xf32> to vector<9x16xf32>
    %739 = arith.subf %724, %738 : vector<9x16xf32>
    %cst_347 = arith.constant 9.99999974E-6 : f32
    %740 = vector.broadcast %cst_347 : f32 to vector<9x1xf32>
    %741 = arith.addf %737, %740 : vector<9x1xf32>
    %742 = math.rsqrt %741 : vector<9x1xf32>
    %743 = vector.broadcast %742 : vector<9x1xf32> to vector<9x16xf32>
    %744 = arith.mulf %739, %743 : vector<9x16xf32>
    %745 = vector.broadcast %725 : vector<1x16xf32> to vector<9x16xf32>
    %746 = arith.mulf %744, %745 : vector<9x16xf32>
    %747 = vector.broadcast %726 : vector<1x16xf32> to vector<9x16xf32>
    %748 = arith.addf %746, %747 : vector<9x16xf32>
    %c0_348 = arith.constant 0 : index
    %c0_349 = arith.constant 0 : index
    %749 = vector.load %arg22[%c0_348, %c0_349] : memref<16x16xf32, #tpu.memory_space<vmem>>, vector<16x16xf32>
    %cst_350 = arith.constant dense<0.000000e+00> : vector<9x16xf32>
    %750 = tpu.matmul %748, %749, %cst_350 {dimension_numbers = #tpu.dot_dimension_numbers<[1], [0], [0], [1], [0, 0, 1, 1], [], []>} : vector<9x16xf32>, vector<16x16xf32>, vector<9x16xf32> -> vector<9x16xf32>
    %c0_351 = arith.constant 0 : index
    %c0_352 = arith.constant 0 : index
    %751 = vector.load %arg23[%c0_351, %c0_352] : memref<4x16xf32, #tpu.memory_space<vmem>>, vector<1x16xf32>
    %752 = vector.broadcast %751 : vector<1x16xf32> to vector<9x16xf32>
    %753 = arith.addf %750, %752 : vector<9x16xf32>
    %c1_353 = arith.constant 1 : index
    %c0_354 = arith.constant 0 : index
    %754 = vector.load %arg23[%c1_353, %c0_354] : memref<4x16xf32, #tpu.memory_space<vmem>>, vector<1x16xf32>
    %c2_355 = arith.constant 2 : index
    %c0_356 = arith.constant 0 : index
    %755 = vector.load %arg23[%c2_355, %c0_356] : memref<4x16xf32, #tpu.memory_space<vmem>>, vector<1x16xf32>
    %cst_357 = arith.constant dense<0.000000e+00> : vector<9xf32>
    %756 = vector.multi_reduction <add>, %753, %cst_357 [1] : vector<9x16xf32> to vector<9xf32>
    %757 = vector.shape_cast %756 : vector<9xf32> to vector<9x1xf32>
    %cst_358 = arith.constant 1.600000e+01 : f32
    %758 = vector.broadcast %cst_358 : f32 to vector<9x1xf32>
    %759 = arith.divf %757, %758 : vector<9x1xf32>
    %760 = vector.broadcast %759 : vector<9x1xf32> to vector<9x16xf32>
    %761 = arith.subf %753, %760 : vector<9x16xf32>
    %762 = arith.mulf %761, %761 : vector<9x16xf32>
    %cst_359 = arith.constant dense<0.000000e+00> : vector<9xf32>
    %763 = vector.multi_reduction <add>, %762, %cst_359 [1] : vector<9x16xf32> to vector<9xf32>
    %764 = vector.shape_cast %763 : vector<9xf32> to vector<9x1xf32>
    %cst_360 = arith.constant 1.600000e+01 : f32
    %765 = vector.broadcast %cst_360 : f32 to vector<9x1xf32>
    %766 = arith.divf %764, %765 : vector<9x1xf32>
    %767 = vector.broadcast %759 : vector<9x1xf32> to vector<9x16xf32>
    %768 = arith.subf %753, %767 : vector<9x16xf32>
    %cst_361 = arith.constant 9.99999996E-13 : f32
    %769 = vector.broadcast %cst_361 : f32 to vector<9x1xf32>
    %770 = arith.addf %766, %769 : vector<9x1xf32>
    %771 = math.rsqrt %770 : vector<9x1xf32>
    %772 = vector.broadcast %771 : vector<9x1xf32> to vector<9x16xf32>
    %773 = arith.mulf %768, %772 : vector<9x16xf32>
    %774 = vector.broadcast %754 : vector<1x16xf32> to vector<9x16xf32>
    %775 = arith.mulf %773, %774 : vector<9x16xf32>
    %776 = vector.broadcast %755 : vector<1x16xf32> to vector<9x16xf32>
    %777 = arith.addf %775, %776 : vector<9x16xf32>
    %c0_362 = arith.constant 0 : index
    %c0_363 = arith.constant 0 : index
    %778 = vector.load %arg24[%c0_362, %c0_363] : memref<16x16xf32, #tpu.memory_space<vmem>>, vector<16x16xf32>
    %cst_364 = arith.constant dense<0.000000e+00> : vector<9x16xf32>
    %779 = tpu.matmul %777, %778, %cst_364 {dimension_numbers = #tpu.dot_dimension_numbers<[1], [0], [0], [1], [0, 0, 1, 1], [], []>} : vector<9x16xf32>, vector<16x16xf32>, vector<9x16xf32> -> vector<9x16xf32>
    %c3_365 = arith.constant 3 : index
    %c0_366 = arith.constant 0 : index
    %780 = vector.load %arg23[%c3_365, %c0_366] : memref<4x16xf32, #tpu.memory_space<vmem>>, vector<1x16xf32>
    %781 = vector.broadcast %780 : vector<1x16xf32> to vector<9x16xf32>
    %782 = arith.addf %779, %781 : vector<9x16xf32>
    %c0_367 = arith.constant 0 : index
    %c0_368 = arith.constant 0 : index
    %c0_369 = arith.constant 0 : index
    %783 = vector.load %arg25[%c0_367, %c0_368, %c0_369] : memref<1x9x16xf32, #tpu.memory_space<vmem>>, vector<1x9x16xf32>
    %784 = vector.shape_cast %783 : vector<1x9x16xf32> to vector<9x16xf32>
    %785 = vector.shape_cast %782 : vector<9x16xf32> to vector<1x9x16xf32>
    tpu.vector_store %arg25[%c0_367, %c0_368, %c0_369], %785 {strides = array<i32>} : memref<1x9x16xf32, #tpu.memory_space<vmem>>, vector<1x9x16xf32>,
    return
  }
  func.func @transform_0(%arg0: i32) -> (i32, i32, i32) {
    %c0_i32 = arith.constant 0 : i32
    %c0_i32_0 = arith.constant 0 : i32
    %c0_i32_1 = arith.constant 0 : i32
    return %arg0, %c0_i32, %c0_i32_0 : i32, i32, i32
  }
  func.func @transform_1(%arg0: i32) -> (i32, i32) {
    %c0_i32 = arith.constant 0 : i32
    %c0_i32_0 = arith.constant 0 : i32
    %c0_i32_1 = arith.constant 0 : i32
    return %c0_i32, %c0_i32_0 : i32, i32
  }
  func.func @transform_2(%arg0: i32) -> (i32, i32) {
    %c0_i32 = arith.constant 0 : i32
    %c0_i32_0 = arith.constant 0 : i32
    %c0_i32_1 = arith.constant 0 : i32
    return %c0_i32, %c0_i32_0 : i32, i32
  }
  func.func @transform_3(%arg0: i32) -> (i32, i32) {
    %c0_i32 = arith.constant 0 : i32
    %c0_i32_0 = arith.constant 0 : i32
    %c0_i32_1 = arith.constant 0 : i32
    return %c0_i32, %c0_i32_0 : i32, i32
  }
  func.func @transform_4(%arg0: i32) -> (i32, i32) {
    %c0_i32 = arith.constant 0 : i32
    %c0_i32_0 = arith.constant 0 : i32
    %c0_i32_1 = arith.constant 0 : i32
    return %c0_i32, %c0_i32_0 : i32, i32
  }
  func.func @transform_5(%arg0: i32) -> (i32, i32, i32) {
    %c0_i32 = arith.constant 0 : i32
    %c0_i32_0 = arith.constant 0 : i32
    %c0_i32_1 = arith.constant 0 : i32
    %c0_i32_2 = arith.constant 0 : i32
    return %c0_i32, %c0_i32_0, %c0_i32_1 : i32, i32, i32
  }
  func.func @transform_6(%arg0: i32) -> (i32, i32, i32) {
    %c0_i32 = arith.constant 0 : i32
    %c0_i32_0 = arith.constant 0 : i32
    %c0_i32_1 = arith.constant 0 : i32
    %c0_i32_2 = arith.constant 0 : i32
    return %c0_i32, %c0_i32_0, %c0_i32_1 : i32, i32, i32
  }
  func.func @transform_7(%arg0: i32) -> (i32, i32, i32) {
    %c0_i32 = arith.constant 0 : i32
    %c0_i32_0 = arith.constant 0 : i32
    %c0_i32_1 = arith.constant 0 : i32
    %c0_i32_2 = arith.constant 0 : i32
    return %c0_i32, %c0_i32_0, %c0_i32_1 : i32, i32, i32
  }
  func.func @transform_8(%arg0: i32) -> (i32, i32, i32) {
    %c0_i32 = arith.constant 0 : i32
    %c0_i32_0 = arith.constant 0 : i32
    %c0_i32_1 = arith.constant 0 : i32
    %c0_i32_2 = arith.constant 0 : i32
    return %c0_i32, %c0_i32_0, %c0_i32_1 : i32, i32, i32
  }
  func.func @transform_9(%arg0: i32) -> (i32, i32, i32) {
    %c0_i32 = arith.constant 0 : i32
    %c0_i32_0 = arith.constant 0 : i32
    %c0_i32_1 = arith.constant 0 : i32
    %c0_i32_2 = arith.constant 0 : i32
    return %c0_i32, %c0_i32_0, %c0_i32_1 : i32, i32, i32
  }
  func.func @transform_10(%arg0: i32) -> (i32, i32, i32) {
    %c0_i32 = arith.constant 0 : i32
    %c0_i32_0 = arith.constant 0 : i32
    %c0_i32_1 = arith.constant 0 : i32
    %c0_i32_2 = arith.constant 0 : i32
    return %c0_i32, %c0_i32_0, %c0_i32_1 : i32, i32, i32
  }
  func.func @transform_11(%arg0: i32) -> (i32, i32) {
    %c0_i32 = arith.constant 0 : i32
    %c0_i32_0 = arith.constant 0 : i32
    %c0_i32_1 = arith.constant 0 : i32
    return %c0_i32, %c0_i32_0 : i32, i32
  }
  func.func @transform_12(%arg0: i32) -> (i32, i32) {
    %c0_i32 = arith.constant 0 : i32
    %c0_i32_0 = arith.constant 0 : i32
    %c0_i32_1 = arith.constant 0 : i32
    return %c0_i32, %c0_i32_0 : i32, i32
  }
  func.func @transform_13(%arg0: i32) -> (i32, i32) {
    %c0_i32 = arith.constant 0 : i32
    %c0_i32_0 = arith.constant 0 : i32
    %c0_i32_1 = arith.constant 0 : i32
    return %c0_i32, %c0_i32_0 : i32, i32
  }
  func.func @transform_14(%arg0: i32) -> (i32, i32) {
    %c0_i32 = arith.constant 0 : i32
    %c0_i32_0 = arith.constant 0 : i32
    %c0_i32_1 = arith.constant 0 : i32
    return %c0_i32, %c0_i32_0 : i32, i32
  }
  func.func @transform_15(%arg0: i32) -> (i32, i32, i32) {
    %c0_i32 = arith.constant 0 : i32
    %c0_i32_0 = arith.constant 0 : i32
    %c0_i32_1 = arith.constant 0 : i32
    %c0_i32_2 = arith.constant 0 : i32
    return %c0_i32, %c0_i32_0, %c0_i32_1 : i32, i32, i32
  }
  func.func @transform_16(%arg0: i32) -> (i32, i32, i32) {
    %c0_i32 = arith.constant 0 : i32
    %c0_i32_0 = arith.constant 0 : i32
    %c0_i32_1 = arith.constant 0 : i32
    %c0_i32_2 = arith.constant 0 : i32
    return %c0_i32, %c0_i32_0, %c0_i32_1 : i32, i32, i32
  }
  func.func @transform_17(%arg0: i32) -> (i32, i32, i32) {
    %c0_i32 = arith.constant 0 : i32
    %c0_i32_0 = arith.constant 0 : i32
    %c0_i32_1 = arith.constant 0 : i32
    %c0_i32_2 = arith.constant 0 : i32
    return %c0_i32, %c0_i32_0, %c0_i32_1 : i32, i32, i32
  }
  func.func @transform_18(%arg0: i32) -> (i32, i32, i32) {
    %c0_i32 = arith.constant 0 : i32
    %c0_i32_0 = arith.constant 0 : i32
    %c0_i32_1 = arith.constant 0 : i32
    %c0_i32_2 = arith.constant 0 : i32
    return %c0_i32, %c0_i32_0, %c0_i32_1 : i32, i32, i32
  }
  func.func @transform_19(%arg0: i32) -> (i32, i32, i32) {
    %c0_i32 = arith.constant 0 : i32
    %c0_i32_0 = arith.constant 0 : i32
    %c0_i32_1 = arith.constant 0 : i32
    %c0_i32_2 = arith.constant 0 : i32
    return %c0_i32, %c0_i32_0, %c0_i32_1 : i32, i32, i32
  }
  func.func @transform_20(%arg0: i32) -> (i32, i32, i32) {
    %c0_i32 = arith.constant 0 : i32
    %c0_i32_0 = arith.constant 0 : i32
    %c0_i32_1 = arith.constant 0 : i32
    %c0_i32_2 = arith.constant 0 : i32
    return %c0_i32, %c0_i32_0, %c0_i32_1 : i32, i32, i32
  }
  func.func @transform_21(%arg0: i32) -> (i32, i32) {
    %c0_i32 = arith.constant 0 : i32
    %c0_i32_0 = arith.constant 0 : i32
    %c0_i32_1 = arith.constant 0 : i32
    return %c0_i32, %c0_i32_0 : i32, i32
  }
  func.func @transform_22(%arg0: i32) -> (i32, i32) {
    %c0_i32 = arith.constant 0 : i32
    %c0_i32_0 = arith.constant 0 : i32
    %c0_i32_1 = arith.constant 0 : i32
    return %c0_i32, %c0_i32_0 : i32, i32
  }
  func.func @transform_23(%arg0: i32) -> (i32, i32) {
    %c0_i32 = arith.constant 0 : i32
    %c0_i32_0 = arith.constant 0 : i32
    %c0_i32_1 = arith.constant 0 : i32
    return %c0_i32, %c0_i32_0 : i32, i32
  }
  func.func @transform_24(%arg0: i32) -> (i32, i32, i32) {
    %c0_i32 = arith.constant 0 : i32
    %c0_i32_0 = arith.constant 0 : i32
    %c0_i32_1 = arith.constant 0 : i32
    return %arg0, %c0_i32, %c0_i32_0 : i32, i32, i32
  }
}

</mosaic_0001>

<llo_original>
// kernel: _lambda_.1
$region0: #{_lambda_.1}
  #allocation0 [shape = 'u32[]', space=smem, size = 0x4, offset = 0x4, fixed_abs, tag = 'smem constant byte address 0x4 - core index']
  #allocation1 [shape = 'u32[144,128]{1,0:T(1,128)}', space=vmem, size = 0x12000, scoped, tag = 'internal scratch']
  %s0 = inlined_call_operand.vmem [shape: f32[2,9,16], index: 0, kind: input, shape index: {}]
  %s1 = inlined_call_operand.vmem [shape: f32[2,16], index: 1, kind: input, shape index: {}]
  %s2 = inlined_call_operand.vmem [shape: f32[16,32], index: 2, kind: input, shape index: {}]
  %s3 = inlined_call_operand.vmem [shape: f32[3,32], index: 3, kind: input, shape index: {}]
  %s4 = inlined_call_operand.vmem [shape: f32[9,32], index: 4, kind: input, shape index: {}]
  %s5 = inlined_call_operand.vmem [shape: f32[2,6,32], index: 5, kind: input, shape index: {}]
  %s6 = inlined_call_operand.vmem [shape: f32[2,32,768], index: 6, kind: input, shape index: {}]
  %s7 = inlined_call_operand.vmem [shape: f32[2,256,32], index: 7, kind: input, shape index: {}]
  %s8 = inlined_call_operand.vmem [shape: f32[2,32,4], index: 8, kind: input, shape index: {}]
  %s9 = inlined_call_operand.vmem [shape: f32[2,1,4], index: 9, kind: input, shape index: {}]
  %s10 = inlined_call_operand.vmem [shape: f32[2,4,32], index: 10, kind: input, shape index: {}]
  %s11 = inlined_call_operand.vmem [shape: f32[4,32], index: 11, kind: input, shape index: {}]
  %s12 = inlined_call_operand.vmem [shape: f32[32,16], index: 12, kind: input, shape index: {}]
  %s13 = inlined_call_operand.vmem [shape: f32[3,16], index: 13, kind: input, shape index: {}]
  %s14 = inlined_call_operand.vmem [shape: f32[9,16], index: 14, kind: input, shape index: {}]
  %s15 = inlined_call_operand.vmem [shape: f32[2,6,16], index: 15, kind: input, shape index: {}]
  %s16 = inlined_call_operand.vmem [shape: f32[2,16,768], index: 16, kind: input, shape index: {}]
  %s17 = inlined_call_operand.vmem [shape: f32[2,256,16], index: 17, kind: input, shape index: {}]
  %s18 = inlined_call_operand.vmem [shape: f32[2,16,4], index: 18, kind: input, shape index: {}]
  %s19 = inlined_call_operand.vmem [shape: f32[2,1,4], index: 19, kind: input, shape index: {}]
  %s20 = inlined_call_operand.vmem [shape: f32[2,4,16], index: 20, kind: input, shape index: {}]
  %s21 = inlined_call_operand.vmem [shape: f32[16,16], index: 21, kind: input, shape index: {}]
  %s22 = inlined_call_operand.vmem [shape: f32[4,16], index: 22, kind: input, shape index: {}]
  %s23 = inlined_call_operand.vmem [shape: f32[16,16], index: 23, kind: input, shape index: {}]
  %s24 = inlined_call_operand.vmem [shape: f32[2,9,16], index: 24, kind: output, shape index: {}]
  %s25 = sld [smem:[#allocation0]]
  $region129: #{_lambda_.1} parent=0
    _
  %s27 = ssub.s32 1, %s25
  %s28 = scalar_select 0, %s27, %s25
  loop: start=0, step=1, limit=4
  $region2: #{_lambda_.1} parent=0 // loop_pre_header
    _
  $region3: #{_lambda_.1} parent=0 // loop_header
    %s30 = sphi 0, %s34
    %p31 = scmp.ge.s32.totalorder %s30, 4
    %s40 = sphi 0, %s42
    %s43 = sphi 0, %s40
    %s44 = sphi 0, %s43
    %s60 = sphi 0, %s44
    %s64 = sphi 0, %s64
    %s66 = sphi 0, %s64
    %s67 = sphi 0, %s66
    %s81 = sphi 0, %s67
    %s85 = sphi 0, %s85
    %s87 = sphi 0, %s85
    %s88 = sphi 0, %s87
    %s102 = sphi 0, %s88
    %s106 = sphi 0, %s106
    %s108 = sphi 0, %s106
    %s109 = sphi 0, %s108
    %s123 = sphi 0, %s109
    %s127 = sphi 0, %s127
    %s129 = sphi 0, %s127
    %s130 = sphi 0, %s129
    %s144 = sphi 0, %s130
    %s148 = sphi 0, %s148
    %s150 = sphi 0, %s148
    %s151 = sphi 0, %s150
    %s165 = sphi 0, %s151
    %s169 = sphi 0, %s169
    %s171 = sphi 0, %s169
    %s172 = sphi 0, %s171
    %s186 = sphi 0, %s172
    %s190 = sphi 0, %s190
    %s192 = sphi 0, %s190
    %s193 = sphi 0, %s192
    %s207 = sphi 0, %s193
    %s211 = sphi 0, %s211
    %s213 = sphi 0, %s211
    %s214 = sphi 0, %s213
    %s228 = sphi 0, %s214
    %s232 = sphi 0, %s232
    %s234 = sphi 0, %s232
    %s235 = sphi 0, %s234
    %s249 = sphi 0, %s235
    %s253 = sphi 0, %s253
    %s255 = sphi 0, %s253
    %s256 = sphi 0, %s255
    %s270 = sphi 0, %s256
    %s274 = sphi 0, %s274
    %s276 = sphi 0, %s274
    %s277 = sphi 0, %s276
    %s291 = sphi 0, %s277
    %s295 = sphi 0, %s295
    %s297 = sphi 0, %s295
    %s298 = sphi 0, %s297
    %s312 = sphi 0, %s298
    %s316 = sphi 0, %s316
    %s318 = sphi 0, %s316
    %s319 = sphi 0, %s318
    %s333 = sphi 0, %s319
    %s337 = sphi 0, %s337
    %s339 = sphi 0, %s337
    %s340 = sphi 0, %s339
    %s354 = sphi 0, %s340
    %s358 = sphi 0, %s358
    %s360 = sphi 0, %s358
    %s361 = sphi 0, %s360
    %s375 = sphi 0, %s361
    %s379 = sphi 0, %s379
    %s381 = sphi 0, %s379
    %s382 = sphi 0, %s381
    %s396 = sphi 0, %s382
    %s400 = sphi 0, %s400
    %s402 = sphi 0, %s400
    %s403 = sphi 0, %s402
    %s417 = sphi 0, %s403
    %s421 = sphi 0, %s421
    %s423 = sphi 0, %s421
    %s424 = sphi 0, %s423
    %s438 = sphi 0, %s424
    %s442 = sphi 0, %s442
    %s444 = sphi 0, %s442
    %s445 = sphi 0, %s444
    %s459 = sphi 0, %s445
    %s463 = sphi 0, %s463
    %s465 = sphi 0, %s463
    %s466 = sphi 0, %s465
    %s480 = sphi 0, %s466
    %s484 = sphi 0, %s484
    %s486 = sphi 0, %s484
    %s487 = sphi 0, %s486
    %s501 = sphi 0, %s487
    %s505 = sphi 0, %s505
    %s507 = sphi 0, %s505
    %s508 = sphi 0, %s507
    %s522 = sphi 0, %s508
    %s526 = sphi 0, %s526
    %s528 = sphi 0, %s526
    %s529 = sphi 0, %s528
    %s543 = sphi 0, %s529
    %s549 = sphi 0, %s551
    %s552 = sphi 0, %s549
    %s553 = sphi 0, %s552
    %s569 = sphi 0, %s553
  $region4: #{_lambda_.1} parent=0 // loop_header_branch
    %33 = sbr.rel (%p31) target = $region8
  $region5: #{_lambda_.1} parent=0 // loop_body
    %s35 = ssub.s32 %s30, 1
    %s36 = ssub.s32 %s30, 2
    %s37 = sadd.s32 %s30, 1
    %s38 = ssub.s32 %s30, %s37
    %p39 = scmp.eq.s32.totalorder %s38, 0
    %s41 = sadd.s32 %s40, 1
    %s42 = scalar_select %p39, %s40, %s41
    %p45 = pneg %p39
    %p46 = scmp.eq.s32.totalorder %s30, 1
    %p47 = por %p45, %p46
    %p48 = scmp.ne.s32.totalorder %s40, %s43
    %p49 = scmp.eq.s32.totalorder %s30, 0
    %p50 = por %p48, %p49
    %p51 = scmp.ne.s32.totalorder %s40, %s43
    %p52 = scmp.eq.s32.totalorder %s35, 1
    %p53 = por %p51, %p52
    %p54 = scmp.ne.s32.totalorder %s43, %s44
    %p55 = scmp.eq.s32.totalorder %s35, 0
    %p56 = por %p54, %p55
    %p57 = scmp.ne.s32.totalorder %s43, %s44
    %p58 = scmp.eq.s32.totalorder %s36, 1
    %p59 = por %p57, %p58
    %p61 = scmp.ne.s32.totalorder %s44, %s60
    %p62 = scmp.eq.s32.totalorder %s36, 0
    %p63 = por %p61, %p62
    %s65 = sadd.s32 %s64, 1
    %p68 = scmp.eq.s32.totalorder %s30, 1
    %p69 = scmp.ne.s32.totalorder %s64, %s66
    %p70 = scmp.eq.s32.totalorder %s30, 0
    %p71 = por %p69, %p70
    %p72 = scmp.ne.s32.totalorder %s64, %s66
    %p73 = scmp.eq.s32.totalorder %s35, 1
    %p74 = por %p72, %p73
    %p75 = scmp.ne.s32.totalorder %s66, %s67
    %p76 = scmp.eq.s32.totalorder %s35, 0
    %p77 = por %p75, %p76
    %p78 = scmp.ne.s32.totalorder %s66, %s67
    %p79 = scmp.eq.s32.totalorder %s36, 1
    %p80 = por %p78, %p79
    %p82 = scmp.ne.s32.totalorder %s67, %s81
    %p83 = scmp.eq.s32.totalorder %s36, 0
    %p84 = por %p82, %p83
    %s86 = sadd.s32 %s85, 1
    %p89 = scmp.eq.s32.totalorder %s30, 1
    %p90 = scmp.ne.s32.totalorder %s85, %s87
    %p91 = scmp.eq.s32.totalorder %s30, 0
    %p92 = por %p90, %p91
    %p93 = scmp.ne.s32.totalorder %s85, %s87
    %p94 = scmp.eq.s32.totalorder %s35, 1
    %p95 = por %p93, %p94
    %p96 = scmp.ne.s32.totalorder %s87, %s88
    %p97 = scmp.eq.s32.totalorder %s35, 0
    %p98 = por %p96, %p97
    %p99 = scmp.ne.s32.totalorder %s87, %s88
    %p100 = scmp.eq.s32.totalorder %s36, 1
    %p101 = por %p99, %p100
    %p103 = scmp.ne.s32.totalorder %s88, %s102
    %p104 = scmp.eq.s32.totalorder %s36, 0
    %p105 = por %p103, %p104
    %s107 = sadd.s32 %s106, 1
    %p110 = scmp.eq.s32.totalorder %s30, 1
    %p111 = scmp.ne.s32.totalorder %s106, %s108
    %p112 = scmp.eq.s32.totalorder %s30, 0
    %p113 = por %p111, %p112
    %p114 = scmp.ne.s32.totalorder %s106, %s108
    %p115 = scmp.eq.s32.totalorder %s35, 1
    %p116 = por %p114, %p115
    %p117 = scmp.ne.s32.totalorder %s108, %s109
    %p118 = scmp.eq.s32.totalorder %s35, 0
    %p119 = por %p117, %p118
    %p120 = scmp.ne.s32.totalorder %s108, %s109
    %p121 = scmp.eq.s32.totalorder %s36, 1
    %p122 = por %p120, %p121
    %p124 = scmp.ne.s32.totalorder %s109, %s123
    %p125 = scmp.eq.s32.totalorder %s36, 0
    %p126 = por %p124, %p125
    %s128 = sadd.s32 %s127, 1
    %p131 = scmp.eq.s32.totalorder %s30, 1
    %p132 = scmp.ne.s32.totalorder %s127, %s129
    %p133 = scmp.eq.s32.totalorder %s30, 0
    %p134 = por %p132, %p133
    %p135 = scmp.ne.s32.totalorder %s127, %s129
    %p136 = scmp.eq.s32.totalorder %s35, 1
    %p137 = por %p135, %p136
    %p138 = scmp.ne.s32.totalorder %s129, %s130
    %p139 = scmp.eq.s32.totalorder %s35, 0
    %p140 = por %p138, %p139
    %p141 = scmp.ne.s32.totalorder %s129, %s130
    %p142 = scmp.eq.s32.totalorder %s36, 1
    %p143 = por %p141, %p142
    %p145 = scmp.ne.s32.totalorder %s130, %s144
    %p146 = scmp.eq.s32.totalorder %s36, 0
    %p147 = por %p145, %p146
    %s149 = sadd.s32 %s148, 1
    %p152 = scmp.eq.s32.totalorder %s30, 1
    %p153 = scmp.ne.s32.totalorder %s148, %s150
    %p154 = scmp.eq.s32.totalorder %s30, 0
    %p155 = por %p153, %p154
    %p156 = scmp.ne.s32.totalorder %s148, %s150
    %p157 = scmp.eq.s32.totalorder %s35, 1
    %p158 = por %p156, %p157
    %p159 = scmp.ne.s32.totalorder %s150, %s151
    %p160 = scmp.eq.s32.totalorder %s35, 0
    %p161 = por %p159, %p160
    %p162 = scmp.ne.s32.totalorder %s150, %s151
    %p163 = scmp.eq.s32.totalorder %s36, 1
    %p164 = por %p162, %p163
    %p166 = scmp.ne.s32.totalorder %s151, %s165
    %p167 = scmp.eq.s32.totalorder %s36, 0
    %p168 = por %p166, %p167
    %s170 = sadd.s32 %s169, 1
    %p173 = scmp.eq.s32.totalorder %s30, 1
    %p174 = scmp.ne.s32.totalorder %s169, %s171
    %p175 = scmp.eq.s32.totalorder %s30, 0
    %p176 = por %p174, %p175
    %p177 = scmp.ne.s32.totalorder %s169, %s171
    %p178 = scmp.eq.s32.totalorder %s35, 1
    %p179 = por %p177, %p178
    %p180 = scmp.ne.s32.totalorder %s171, %s172
    %p181 = scmp.eq.s32.totalorder %s35, 0
    %p182 = por %p180, %p181
    %p183 = scmp.ne.s32.totalorder %s171, %s172
    %p184 = scmp.eq.s32.totalorder %s36, 1
    %p185 = por %p183, %p184
    %p187 = scmp.ne.s32.totalorder %s172, %s186
    %p188 = scmp.eq.s32.totalorder %s36, 0
    %p189 = por %p187, %p188
    %s191 = sadd.s32 %s190, 1
    %p194 = scmp.eq.s32.totalorder %s30, 1
    %p195 = scmp.ne.s32.totalorder %s190, %s192
    %p196 = scmp.eq.s32.totalorder %s30, 0
    %p197 = por %p195, %p196
    %p198 = scmp.ne.s32.totalorder %s190, %s192
    %p199 = scmp.eq.s32.totalorder %s35, 1
    %p200 = por %p198, %p199
    %p201 = scmp.ne.s32.totalorder %s192, %s193
    %p202 = scmp.eq.s32.totalorder %s35, 0
    %p203 = por %p201, %p202
    %p204 = scmp.ne.s32.totalorder %s192, %s193
    %p205 = scmp.eq.s32.totalorder %s36, 1
    %p206 = por %p204, %p205
    %p208 = scmp.ne.s32.totalorder %s193, %s207
    %p209 = scmp.eq.s32.totalorder %s36, 0
    %p210 = por %p208, %p209
    %s212 = sadd.s32 %s211, 1
    %p215 = scmp.eq.s32.totalorder %s30, 1
    %p216 = scmp.ne.s32.totalorder %s211, %s213
    %p217 = scmp.eq.s32.totalorder %s30, 0
    %p218 = por %p216, %p217
    %p219 = scmp.ne.s32.totalorder %s211, %s213
    %p220 = scmp.eq.s32.totalorder %s35, 1
    %p221 = por %p219, %p220
    %p222 = scmp.ne.s32.totalorder %s213, %s214
    %p223 = scmp.eq.s32.totalorder %s35, 0
    %p224 = por %p222, %p223
    %p225 = scmp.ne.s32.totalorder %s213, %s214
    %p226 = scmp.eq.s32.totalorder %s36, 1
    %p227 = por %p225, %p226
    %p229 = scmp.ne.s32.totalorder %s214, %s228
    %p230 = scmp.eq.s32.totalorder %s36, 0
    %p231 = por %p229, %p230
    %s233 = sadd.s32 %s232, 1
    %p236 = scmp.eq.s32.totalorder %s30, 1
    %p237 = scmp.ne.s32.totalorder %s232, %s234
    %p238 = scmp.eq.s32.totalorder %s30, 0
    %p239 = por %p237, %p238
    %p240 = scmp.ne.s32.totalorder %s232, %s234
    %p241 = scmp.eq.s32.totalorder %s35, 1
    %p242 = por %p240, %p241
    %p243 = scmp.ne.s32.totalorder %s234, %s235
    %p244 = scmp.eq.s32.totalorder %s35, 0
    %p245 = por %p243, %p244
    %p246 = scmp.ne.s32.totalorder %s234, %s235
    %p247 = scmp.eq.s32.totalorder %s36, 1
    %p248 = por %p246, %p247
    %p250 = scmp.ne.s32.totalorder %s235, %s249
    %p251 = scmp.eq.s32.totalorder %s36, 0
    %p252 = por %p250, %p251
    %s254 = sadd.s32 %s253, 1
    %p257 = scmp.eq.s32.totalorder %s30, 1
    %p258 = scmp.ne.s32.totalorder %s253, %s255
    %p259 = scmp.eq.s32.totalorder %s30, 0
    %p260 = por %p258, %p259
    %p261 = scmp.ne.s32.totalorder %s253, %s255
    %p262 = scmp.eq.s32.totalorder %s35, 1
    %p263 = por %p261, %p262
    %p264 = scmp.ne.s32.totalorder %s255, %s256
    %p265 = scmp.eq.s32.totalorder %s35, 0
    %p266 = por %p264, %p265
    %p267 = scmp.ne.s32.totalorder %s255, %s256
    %p268 = scmp.eq.s32.totalorder %s36, 1
    %p269 = por %p267, %p268
    %p271 = scmp.ne.s32.totalorder %s256, %s270
    %p272 = scmp.eq.s32.totalorder %s36, 0
    %p273 = por %p271, %p272
    %s275 = sadd.s32 %s274, 1
    %p278 = scmp.eq.s32.totalorder %s30, 1
    %p279 = scmp.ne.s32.totalorder %s274, %s276
    %p280 = scmp.eq.s32.totalorder %s30, 0
    %p281 = por %p279, %p280
    %p282 = scmp.ne.s32.totalorder %s274, %s276
    %p283 = scmp.eq.s32.totalorder %s35, 1
    %p284 = por %p282, %p283
    %p285 = scmp.ne.s32.totalorder %s276, %s277
    %p286 = scmp.eq.s32.totalorder %s35, 0
    %p287 = por %p285, %p286
    %p288 = scmp.ne.s32.totalorder %s276, %s277
    %p289 = scmp.eq.s32.totalorder %s36, 1
    %p290 = por %p288, %p289
    %p292 = scmp.ne.s32.totalorder %s277, %s291
    %p293 = scmp.eq.s32.totalorder %s36, 0
    %p294 = por %p292, %p293
    %s296 = sadd.s32 %s295, 1
    %p299 = scmp.eq.s32.totalorder %s30, 1
    %p300 = scmp.ne.s32.totalorder %s295, %s297
    %p301 = scmp.eq.s32.totalorder %s30, 0
    %p302 = por %p300, %p301
    %p303 = scmp.ne.s32.totalorder %s295, %s297
    %p304 = scmp.eq.s32.totalorder %s35, 1
    %p305 = por %p303, %p304
    %p306 = scmp.ne.s32.totalorder %s297, %s298
    %p307 = scmp.eq.s32.totalorder %s35, 0
    %p308 = por %p306, %p307
    %p309 = scmp.ne.s32.totalorder %s297, %s298
    %p310 = scmp.eq.s32.totalorder %s36, 1
    %p311 = por %p309, %p310
    %p313 = scmp.ne.s32.totalorder %s298, %s312
    %p314 = scmp.eq.s32.totalorder %s36, 0
    %p315 = por %p313, %p314
    %s317 = sadd.s32 %s316, 1
    %p320 = scmp.eq.s32.totalorder %s30, 1
    %p321 = scmp.ne.s32.totalorder %s316, %s318
    %p322 = scmp.eq.s32.totalorder %s30, 0
    %p323 = por %p321, %p322
    %p324 = scmp.ne.s32.totalorder %s316, %s318
    %p325 = scmp.eq.s32.totalorder %s35, 1
    %p326 = por %p324, %p325
    %p327 = scmp.ne.s32.totalorder %s318, %s319
    %p328 = scmp.eq.s32.totalorder %s35, 0
    %p329 = por %p327, %p328
    %p330 = scmp.ne.s32.totalorder %s318, %s319
    %p331 = scmp.eq.s32.totalorder %s36, 1
    %p332 = por %p330, %p331
    %p334 = scmp.ne.s32.totalorder %s319, %s333
    %p335 = scmp.eq.s32.totalorder %s36, 0
    %p336 = por %p334, %p335
    %s338 = sadd.s32 %s337, 1
    %p341 = scmp.eq.s32.totalorder %s30, 1
    %p342 = scmp.ne.s32.totalorder %s337, %s339
    %p343 = scmp.eq.s32.totalorder %s30, 0
    %p344 = por %p342, %p343
    %p345 = scmp.ne.s32.totalorder %s337, %s339
    %p346 = scmp.eq.s32.totalorder %s35, 1
    %p347 = por %p345, %p346
    %p348 = scmp.ne.s32.totalorder %s339, %s340
    %p349 = scmp.eq.s32.totalorder %s35, 0
    %p350 = por %p348, %p349
    %p351 = scmp.ne.s32.totalorder %s339, %s340
    %p352 = scmp.eq.s32.totalorder %s36, 1
    %p353 = por %p351, %p352
    %p355 = scmp.ne.s32.totalorder %s340, %s354
    %p356 = scmp.eq.s32.totalorder %s36, 0
    %p357 = por %p355, %p356
    %s359 = sadd.s32 %s358, 1
    %p362 = scmp.eq.s32.totalorder %s30, 1
    %p363 = scmp.ne.s32.totalorder %s358, %s360
    %p364 = scmp.eq.s32.totalorder %s30, 0
    %p365 = por %p363, %p364
    %p366 = scmp.ne.s32.totalorder %s358, %s360
    %p367 = scmp.eq.s32.totalorder %s35, 1
    %p368 = por %p366, %p367
    %p369 = scmp.ne.s32.totalorder %s360, %s361
    %p370 = scmp.eq.s32.totalorder %s35, 0
    %p371 = por %p369, %p370
    %p372 = scmp.ne.s32.totalorder %s360, %s361
    %p373 = scmp.eq.s32.totalorder %s36, 1
    %p374 = por %p372, %p373
    %p376 = scmp.ne.s32.totalorder %s361, %s375
    %p377 = scmp.eq.s32.totalorder %s36, 0
    %p378 = por %p376, %p377
    %s380 = sadd.s32 %s379, 1
    %p383 = scmp.eq.s32.totalorder %s30, 1
    %p384 = scmp.ne.s32.totalorder %s379, %s381
    %p385 = scmp.eq.s32.totalorder %s30, 0
    %p386 = por %p384, %p385
    %p387 = scmp.ne.s32.totalorder %s379, %s381
    %p388 = scmp.eq.s32.totalorder %s35, 1
    %p389 = por %p387, %p388
    %p390 = scmp.ne.s32.totalorder %s381, %s382
    %p391 = scmp.eq.s32.totalorder %s35, 0
    %p392 = por %p390, %p391
    %p393 = scmp.ne.s32.totalorder %s381, %s382
    %p394 = scmp.eq.s32.totalorder %s36, 1
    %p395 = por %p393, %p394
    %p397 = scmp.ne.s32.totalorder %s382, %s396
    %p398 = scmp.eq.s32.totalorder %s36, 0
    %p399 = por %p397, %p398
    %s401 = sadd.s32 %s400, 1
    %p404 = scmp.eq.s32.totalorder %s30, 1
    %p405 = scmp.ne.s32.totalorder %s400, %s402
    %p406 = scmp.eq.s32.totalorder %s30, 0
    %p407 = por %p405, %p406
    %p408 = scmp.ne.s32.totalorder %s400, %s402
    %p409 = scmp.eq.s32.totalorder %s35, 1
    %p410 = por %p408, %p409
    %p411 = scmp.ne.s32.totalorder %s402, %s403
    %p412 = scmp.eq.s32.totalorder %s35, 0
    %p413 = por %p411, %p412
    %p414 = scmp.ne.s32.totalorder %s402, %s403
    %p415 = scmp.eq.s32.totalorder %s36, 1
    %p416 = por %p414, %p415
    %p418 = scmp.ne.s32.totalorder %s403, %s417
    %p419 = scmp.eq.s32.totalorder %s36, 0
    %p420 = por %p418, %p419
    %s422 = sadd.s32 %s421, 1
    %p425 = scmp.eq.s32.totalorder %s30, 1
    %p426 = scmp.ne.s32.totalorder %s421, %s423
    %p427 = scmp.eq.s32.totalorder %s30, 0
    %p428 = por %p426, %p427
    %p429 = scmp.ne.s32.totalorder %s421, %s423
    %p430 = scmp.eq.s32.totalorder %s35, 1
    %p431 = por %p429, %p430
    %p432 = scmp.ne.s32.totalorder %s423, %s424
    %p433 = scmp.eq.s32.totalorder %s35, 0
    %p434 = por %p432, %p433
    %p435 = scmp.ne.s32.totalorder %s423, %s424
    %p436 = scmp.eq.s32.totalorder %s36, 1
    %p437 = por %p435, %p436
    %p439 = scmp.ne.s32.totalorder %s424, %s438
    %p440 = scmp.eq.s32.totalorder %s36, 0
    %p441 = por %p439, %p440
    %s443 = sadd.s32 %s442, 1
    %p446 = scmp.eq.s32.totalorder %s30, 1
    %p447 = scmp.ne.s32.totalorder %s442, %s444
    %p448 = scmp.eq.s32.totalorder %s30, 0
    %p449 = por %p447, %p448
    %p450 = scmp.ne.s32.totalorder %s442, %s444
    %p451 = scmp.eq.s32.totalorder %s35, 1
    %p452 = por %p450, %p451
    %p453 = scmp.ne.s32.totalorder %s444, %s445
    %p454 = scmp.eq.s32.totalorder %s35, 0
    %p455 = por %p453, %p454
    %p456 = scmp.ne.s32.totalorder %s444, %s445
    %p457 = scmp.eq.s32.totalorder %s36, 1
    %p458 = por %p456, %p457
    %p460 = scmp.ne.s32.totalorder %s445, %s459
    %p461 = scmp.eq.s32.totalorder %s36, 0
    %p462 = por %p460, %p461
    %s464 = sadd.s32 %s463, 1
    %p467 = scmp.eq.s32.totalorder %s30, 1
    %p468 = scmp.ne.s32.totalorder %s463, %s465
    %p469 = scmp.eq.s32.totalorder %s30, 0
    %p470 = por %p468, %p469
    %p471 = scmp.ne.s32.totalorder %s463, %s465
    %p472 = scmp.eq.s32.totalorder %s35, 1
    %p473 = por %p471, %p472
    %p474 = scmp.ne.s32.totalorder %s465, %s466
    %p475 = scmp.eq.s32.totalorder %s35, 0
    %p476 = por %p474, %p475
    %p477 = scmp.ne.s32.totalorder %s465, %s466
    %p478 = scmp.eq.s32.totalorder %s36, 1
    %p479 = por %p477, %p478
    %p481 = scmp.ne.s32.totalorder %s466, %s480
    %p482 = scmp.eq.s32.totalorder %s36, 0
    %p483 = por %p481, %p482
    %s485 = sadd.s32 %s484, 1
    %p488 = scmp.eq.s32.totalorder %s30, 1
    %p489 = scmp.ne.s32.totalorder %s484, %s486
    %p490 = scmp.eq.s32.totalorder %s30, 0
    %p491 = por %p489, %p490
    %p492 = scmp.ne.s32.totalorder %s484, %s486
    %p493 = scmp.eq.s32.totalorder %s35, 1
    %p494 = por %p492, %p493
    %p495 = scmp.ne.s32.totalorder %s486, %s487
    %p496 = scmp.eq.s32.totalorder %s35, 0
    %p497 = por %p495, %p496
    %p498 = scmp.ne.s32.totalorder %s486, %s487
    %p499 = scmp.eq.s32.totalorder %s36, 1
    %p500 = por %p498, %p499
    %p502 = scmp.ne.s32.totalorder %s487, %s501
    %p503 = scmp.eq.s32.totalorder %s36, 0
    %p504 = por %p502, %p503
    %s506 = sadd.s32 %s505, 1
    %p509 = scmp.eq.s32.totalorder %s30, 1
    %p510 = scmp.ne.s32.totalorder %s505, %s507
    %p511 = scmp.eq.s32.totalorder %s30, 0
    %p512 = por %p510, %p511
    %p513 = scmp.ne.s32.totalorder %s505, %s507
    %p514 = scmp.eq.s32.totalorder %s35, 1
    %p515 = por %p513, %p514
    %p516 = scmp.ne.s32.totalorder %s507, %s508
    %p517 = scmp.eq.s32.totalorder %s35, 0
    %p518 = por %p516, %p517
    %p519 = scmp.ne.s32.totalorder %s507, %s508
    %p520 = scmp.eq.s32.totalorder %s36, 1
    %p521 = por %p519, %p520
    %p523 = scmp.ne.s32.totalorder %s508, %s522
    %p524 = scmp.eq.s32.totalorder %s36, 0
    %p525 = por %p523, %p524
    %s527 = sadd.s32 %s526, 1
    %p530 = scmp.eq.s32.totalorder %s30, 1
    %p531 = scmp.ne.s32.totalorder %s526, %s528
    %p532 = scmp.eq.s32.totalorder %s30, 0
    %p533 = por %p531, %p532
    %p534 = scmp.ne.s32.totalorder %s526, %s528
    %p535 = scmp.eq.s32.totalorder %s35, 1
    %p536 = por %p534, %p535
    %p537 = scmp.ne.s32.totalorder %s528, %s529
    %p538 = scmp.eq.s32.totalorder %s35, 0
    %p539 = por %p537, %p538
    %p540 = scmp.ne.s32.totalorder %s528, %s529
    %p541 = scmp.eq.s32.totalorder %s36, 1
    %p542 = por %p540, %p541
    %p544 = scmp.ne.s32.totalorder %s529, %s543
    %p545 = scmp.eq.s32.totalorder %s36, 0
    %p546 = por %p544, %p545
    %s547 = ssub.s32 %s30, %s37
    %p548 = scmp.eq.s32.totalorder %s547, 0
    %s550 = sadd.s32 %s549, 1
    %s551 = scalar_select %p548, %s549, %s550
    %p554 = pneg %p548
    %p555 = scmp.eq.s32.totalorder %s30, 1
    %p556 = por %p554, %p555
    %p557 = scmp.ne.s32.totalorder %s549, %s552
    %p558 = scmp.eq.s32.totalorder %s30, 0
    %p559 = por %p557, %p558
    %p560 = scmp.ne.s32.totalorder %s549, %s552
    %p561 = scmp.eq.s32.totalorder %s35, 1
    %p562 = por %p560, %p561
    %p563 = scmp.ne.s32.totalorder %s552, %s553
    %p564 = scmp.eq.s32.totalorder %s35, 0
    %p565 = por %p563, %p564
    %p566 = scmp.ne.s32.totalorder %s552, %s553
    %p567 = scmp.eq.s32.totalorder %s36, 1
    %p568 = por %p566, %p567
    %p570 = scmp.ne.s32.totalorder %s553, %s569
    %p571 = scmp.eq.s32.totalorder %s36, 0
    %p572 = por %p570, %p571
    %p573 = scmp.le.s32.totalorder 1, %s30
    %p574 = scmp.lt.s32.totalorder %s30, 3
    %p575 = pnand %p573, %p574
    %p576 = pneg %p575
    // Predicated region
    $region9: #{_lambda_.1} parent=5 // pred_check
      _
    $region10: #{_lambda_.1} parent=5 // pred_check_branch
      %578 = sbr.rel (%p575) target = $region12
    $region11: #{_lambda_.1} parent=5 // pred_region
      %s579 = ssub.s32 %s30, 1
      // Predicated region
      $region13: #{_lambda_.1} parent=11 // pred_check
        %p580 = pneg %p77
      $region14: #{_lambda_.1} parent=11 // pred_check_branch
        %582 = sbr.rel (%p580) target = $region16
      $region15: #{_lambda_.1} parent=11 // pred_region
        _
      $region16: #{_lambda_.1} parent=11 // pred_fallthru
        _
      // Predicated region
      $region17: #{_lambda_.1} parent=11 // pred_check
        %p583 = pneg %p98
      $region18: #{_lambda_.1} parent=11 // pred_check_branch
        %585 = sbr.rel (%p583) target = $region20
      $region19: #{_lambda_.1} parent=11 // pred_region
        _
      $region20: #{_lambda_.1} parent=11 // pred_fallthru
        _
      // Predicated region
      $region21: #{_lambda_.1} parent=11 // pred_check
        %p586 = pneg %p119
      $region22: #{_lambda_.1} parent=11 // pred_check_branch
        %588 = sbr.rel (%p586) target = $region24
      $region23: #{_lambda_.1} parent=11 // pred_region
        _
      $region24: #{_lambda_.1} parent=11 // pred_fallthru
        _
      // Predicated region
      $region25: #{_lambda_.1} parent=11 // pred_check
        %p589 = pneg %p140
      $region26: #{_lambda_.1} parent=11 // pred_check_branch
        %591 = sbr.rel (%p589) target = $region28
      $region27: #{_lambda_.1} parent=11 // pred_region
        _
      $region28: #{_lambda_.1} parent=11 // pred_fallthru
        _
      // Predicated region
      $region29: #{_lambda_.1} parent=11 // pred_check
        %p592 = pneg %p161
      $region30: #{_lambda_.1} parent=11 // pred_check_branch
        %594 = sbr.rel (%p592) target = $region32
      $region31: #{_lambda_.1} parent=11 // pred_region
        _
      $region32: #{_lambda_.1} parent=11 // pred_fallthru
        _
      // Predicated region
      $region33: #{_lambda_.1} parent=11 // pred_check
        %p595 = pneg %p182
      $region34: #{_lambda_.1} parent=11 // pred_check_branch
        %597 = sbr.rel (%p595) target = $region36
      $region35: #{_lambda_.1} parent=11 // pred_region
        _
      $region36: #{_lambda_.1} parent=11 // pred_fallthru
        _
      // Predicated region
      $region37: #{_lambda_.1} parent=11 // pred_check
        %p598 = pneg %p203
      $region38: #{_lambda_.1} parent=11 // pred_check_branch
        %600 = sbr.rel (%p598) target = $region40
      $region39: #{_lambda_.1} parent=11 // pred_region
        _
      $region40: #{_lambda_.1} parent=11 // pred_fallthru
        _
      // Predicated region
      $region41: #{_lambda_.1} parent=11 // pred_check
        %p601 = pneg %p224
      $region42: #{_lambda_.1} parent=11 // pred_check_branch
        %603 = sbr.rel (%p601) target = $region44
      $region43: #{_lambda_.1} parent=11 // pred_region
        _
      $region44: #{_lambda_.1} parent=11 // pred_fallthru
        _
      // Predicated region
      $region45: #{_lambda_.1} parent=11 // pred_check
        %p604 = pneg %p245
      $region46: #{_lambda_.1} parent=11 // pred_check_branch
        %606 = sbr.rel (%p604) target = $region48
      $region47: #{_lambda_.1} parent=11 // pred_region
        _
      $region48: #{_lambda_.1} parent=11 // pred_fallthru
        _
      // Predicated region
      $region49: #{_lambda_.1} parent=11 // pred_check
        %p607 = pneg %p266
      $region50: #{_lambda_.1} parent=11 // pred_check_branch
        %609 = sbr.rel (%p607) target = $region52
      $region51: #{_lambda_.1} parent=11 // pred_region
        _
      $region52: #{_lambda_.1} parent=11 // pred_fallthru
        _
      // Predicated region
      $region53: #{_lambda_.1} parent=11 // pred_check
        %p610 = pneg %p287
      $region54: #{_lambda_.1} parent=11 // pred_check_branch
        %612 = sbr.rel (%p610) target = $region56
      $region55: #{_lambda_.1} parent=11 // pred_region
        _
      $region56: #{_lambda_.1} parent=11 // pred_fallthru
        _
      // Predicated region
      $region57: #{_lambda_.1} parent=11 // pred_check
        %p613 = pneg %p308
      $region58: #{_lambda_.1} parent=11 // pred_check_branch
        %615 = sbr.rel (%p613) target = $region60
      $region59: #{_lambda_.1} parent=11 // pred_region
        _
      $region60: #{_lambda_.1} parent=11 // pred_fallthru
        _
      // Predicated region
      $region61: #{_lambda_.1} parent=11 // pred_check
        %p616 = pneg %p329
      $region62: #{_lambda_.1} parent=11 // pred_check_branch
        %618 = sbr.rel (%p616) target = $region64
      $region63: #{_lambda_.1} parent=11 // pred_region
        _
      $region64: #{_lambda_.1} parent=11 // pred_fallthru
        _
      // Predicated region
      $region65: #{_lambda_.1} parent=11 // pred_check
        %p619 = pneg %p350
      $region66: #{_lambda_.1} parent=11 // pred_check_branch
        %621 = sbr.rel (%p619) target = $region68
      $region67: #{_lambda_.1} parent=11 // pred_region
        _
      $region68: #{_lambda_.1} parent=11 // pred_fallthru
        _
      // Predicated region
      $region69: #{_lambda_.1} parent=11 // pred_check
        %p622 = pneg %p371
      $region70: #{_lambda_.1} parent=11 // pred_check_branch
        %624 = sbr.rel (%p622) target = $region72
      $region71: #{_lambda_.1} parent=11 // pred_region
        _
      $region72: #{_lambda_.1} parent=11 // pred_fallthru
        _
      // Predicated region
      $region73: #{_lambda_.1} parent=11 // pred_check
        %p625 = pneg %p392
      $region74: #{_lambda_.1} parent=11 // pred_check_branch
        %627 = sbr.rel (%p625) target = $region76
      $region75: #{_lambda_.1} parent=11 // pred_region
        _
      $region76: #{_lambda_.1} parent=11 // pred_fallthru
        _
      // Predicated region
      $region77: #{_lambda_.1} parent=11 // pred_check
        %p628 = pneg %p413
      $region78: #{_lambda_.1} parent=11 // pred_check_branch
        %630 = sbr.rel (%p628) target = $region80
      $region79: #{_lambda_.1} parent=11 // pred_region
        _
      $region80: #{_lambda_.1} parent=11 // pred_fallthru
        _
      // Predicated region
      $region81: #{_lambda_.1} parent=11 // pred_check
        %p631 = pneg %p434
      $region82: #{_lambda_.1} parent=11 // pred_check_branch
        %633 = sbr.rel (%p631) target = $region84
      $region83: #{_lambda_.1} parent=11 // pred_region
        _
      $region84: #{_lambda_.1} parent=11 // pred_fallthru
        _
      // Predicated region
      $region85: #{_lambda_.1} parent=11 // pred_check
        %p634 = pneg %p455
      $region86: #{_lambda_.1} parent=11 // pred_check_branch
        %636 = sbr.rel (%p634) target = $region88
      $region87: #{_lambda_.1} parent=11 // pred_region
        _
      $region88: #{_lambda_.1} parent=11 // pred_fallthru
        _
      // Predicated region
      $region89: #{_lambda_.1} parent=11 // pred_check
        %p637 = pneg %p476
      $region90: #{_lambda_.1} parent=11 // pred_check_branch
        %639 = sbr.rel (%p637) target = $region92
      $region91: #{_lambda_.1} parent=11 // pred_region
        _
      $region92: #{_lambda_.1} parent=11 // pred_fallthru
        _
      // Predicated region
      $region93: #{_lambda_.1} parent=11 // pred_check
        %p640 = pneg %p497
      $region94: #{_lambda_.1} parent=11 // pred_check_branch
        %642 = sbr.rel (%p640) target = $region96
      $region95: #{_lambda_.1} parent=11 // pred_region
        _
      $region96: #{_lambda_.1} parent=11 // pred_fallthru
        _
      // Predicated region
      $region97: #{_lambda_.1} parent=11 // pred_check
        %p643 = pneg %p518
      $region98: #{_lambda_.1} parent=11 // pred_check_branch
        %645 = sbr.rel (%p643) target = $region100
      $region99: #{_lambda_.1} parent=11 // pred_region
        _
      $region100: #{_lambda_.1} parent=11 // pred_fallthru
        _
      // Predicated region
      $region101: #{_lambda_.1} parent=11 // pred_check
        %p646 = pneg %p539
      $region102: #{_lambda_.1} parent=11 // pred_check_branch
        %648 = sbr.rel (%p646) target = $region104
      $region103: #{_lambda_.1} parent=11 // pred_region
        _
      $region104: #{_lambda_.1} parent=11 // pred_fallthru
        _
    $region12: #{_lambda_.1} parent=5 // pred_fallthru
      _
    %p649 = scmp.lt.s32.totalorder %s30, 2
    // Predicated region
    $region105: #{_lambda_.1} parent=5 // pred_check
      %p650 = pneg %p649
    $region106: #{_lambda_.1} parent=5 // pred_check_branch
      %652 = sbr.rel (%p650) target = $region108
    $region107: #{_lambda_.1} parent=5 // pred_region
      // Predicated region
      $region109: #{_lambda_.1} parent=107 // pred_check
        %p653 = pneg %p50
      $region110: #{_lambda_.1} parent=107 // pred_check_branch
        %655 = sbr.rel (%p653) target = $region112
      $region111: #{_lambda_.1} parent=107 // pred_region
        %p656 = scmp.lt.s32.totalorder %s30, 1
        %s657 = scalar_select %p656, %s30, 1
        %s658 = smul.addr %s657, 2
        %s659 = smul.addr %s658, 8
        %s660 = scalar_lea.vmem %s0, %s659
      $region112: #{_lambda_.1} parent=107 // pred_fallthru
        _
    $region108: #{_lambda_.1} parent=5 // pred_fallthru
      _
    %p661 = scmp.le.s32.totalorder 1, %s30
    %p662 = scmp.lt.s32.totalorder %s30, 3
    %p663 = pnand %p661, %p662
    %p664 = pneg %p663
    // Predicated region
    $region113: #{_lambda_.1} parent=5 // pred_check
      _
    $region114: #{_lambda_.1} parent=5 // pred_check_branch
      %666 = sbr.rel (%p663) target = $region116
    $region115: #{_lambda_.1} parent=5 // pred_region
      %s667 = ssub.s32 %s30, 1
      %p668 = scmp.lt.s32.totalorder %s35, 1
      %s669 = scalar_select %p668, %s35, 1
      %s670 = smul.addr %s669, 2
      %s671 = smul.addr %s670, 8
      %s672 = scalar_lea.vmem %s0, %s671
      %p673 = pneg %p56
      %p674 = pneg %p53
      %p675 = pneg %p77
      %p676 = pneg %p74
      %p677 = pneg %p98
      %p678 = pneg %p95
      %p679 = pneg %p119
      %p680 = pneg %p116
      %p681 = pneg %p140
      %p682 = pneg %p137
      %p683 = pneg %p161
      %p684 = pneg %p158
      %p685 = pneg %p182
      %p686 = pneg %p179
      %p687 = pneg %p203
      %p688 = pneg %p200
      %p689 = pneg %p224
      %p690 = pneg %p221
      %p691 = pneg %p245
      %p692 = pneg %p242
      %p693 = pneg %p266
      %p694 = pneg %p263
      %p695 = pneg %p287
      %p696 = pneg %p284
      %p697 = pneg %p308
      %p698 = pneg %p305
      %p699 = pneg %p329
      %p700 = pneg %p326
      %p701 = pneg %p350
      %p702 = pneg %p347
      %p703 = pneg %p371
      %p704 = pneg %p368
      %p705 = pneg %p392
      %p706 = pneg %p389
      %p707 = pneg %p413
      %p708 = pneg %p410
      %p709 = pneg %p434
      %p710 = pneg %p431
      %p711 = pneg %p455
      %p712 = pneg %p452
      %p713 = pneg %p476
      %p714 = pneg %p473
      %p715 = pneg %p497
      %p716 = pneg %p494
      %p717 = pneg %p518
      %p718 = pneg %p515
      %p719 = pneg %p539
      %p720 = pneg %p536
      %p721 = pneg %p565
      %p722 = pneg %p562
      %p723 = scmp.lt.s32.totalorder %s35, 1
      %s724 = scalar_select %p723, %s35, 1
      %s725 = smul.addr %s724, 2
      %s726 = smul.addr %s725, 8
      %s727 = scalar_lea.vmem %s24, %s726
      %p728 = scmp.lt.s32.totalorder %s35, 1
      %s729 = scalar_select %p728, %s35, 1
      %s730 = smul.addr %s729, 2
      %s731 = smul.addr %s730, 8
      %s732 = scalar_lea.vmem %s0, %s731
      %p733 = scmp.lt.s32.totalorder %s35, 1
      %s734 = scalar_select %p733, %s35, 1
      %s735 = smul.addr %s734, 2
      %s736 = smul.addr %s735, 8
      %s737 = scalar_lea.vmem %s24, %s736
      %v738 = vld [vmem:[%s732] sm:$0xff]
      %v739 = vld [vmem:[%s732 + $0x8] sm:$0x1]
      %v740 = vld [vmem:[%s1] sm:$0x1]
      %v741 = vld [vmem:[%s1 + $0x1] sm:$0x1]
      %vm742 = vcmask 130048
      %v743 = vsel %vm742, %v738, 0.0
      %744 = vadd.xlane.f32.xlu0 %v743
      %v745 = vpop.xlane.xlu0 %744
      %vm746 = vcmask 122880
      %v747 = vsel %vm746, %v739, 0.0
      %748 = vadd.xlane.f32.xlu0 %v747
      %v749 = vpop.xlane.xlu0 %748
      %v750 = vrcp.pop 16.0
      %v751 = vmul.f32 %v745, %v750
      %v752 = vmul.f32 %v749, %v750
      %v753 = vsub.f32 %v738, %v751
      %v754 = vsub.f32 %v739, %v752
      %v755 = vmul.f32 %v753, %v753
      %v756 = vmul.f32 %v754, %v754
      %v757 = vsel %vm742, %v755, 0.0
      %758 = vadd.xlane.f32.xlu0 %v757
      %v759 = vpop.xlane.xlu0 %758
      %v760 = vsel %vm746, %v756, 0.0
      %761 = vadd.xlane.f32.xlu0 %v760
      %v762 = vpop.xlane.xlu0 %761
      %v763 = vmul.f32 %v759, %v750
      %v764 = vmul.f32 %v762, %v750
      %v765 = vadd.f32 %v763, 1e-05
      %v766 = vadd.f32 %v764, 1e-05
      %v767 = vrsqrt.pop %v765
      %v768 = vrsqrt.pop %v766
      %v769 = vmul.f32 %v753, %v767
      %v770 = vmul.f32 %v754, %v768
      %v771 = vlaneseq
      %v772 = vshrl.u32 %v771, 7
      %v773 = vsub.s32 0, %v772
      %v774 = vrot.slane %v740, %v773
      %v775 = vmul.f32 %v769, %v774
      %v776 = vmul.f32 %v770, %v774
      %v777 = vlaneseq
      %v778 = vshrl.u32 %v777, 7
      %v779 = vsub.s32 0, %v778
      %v780 = vrot.slane %v741, %v779
      %v781 = vadd.f32 %v775, %v780
      %v782 = vadd.f32 %v776, %v780
      %v783 = vld [vmem:[%s2] sm:$0xff]
      %v784 = vld [vmem:[%s2 + $0x8] sm:$0xff]
      %v785 = vld [vmem:[%s3] sm:$0x1]
      %v786 = vlaneseq
      %v787 = vshrl.u32 %v786, 7
      %v788 = vsub.s32 0, %v787
      %v789 = vrot.slane %v785, %v788
      %v791 = vsel %vm742, %v781, 0
      %v794 = vsel %vm742, %v782, 0
      %796 = vmatprep.subr.mxu0 0.0
      %797 = vmatpush1.msra.mxu0 %v783
      %798 = vmatprep.subr.mxu0 0.0
      %799 = vmatpush1.msra.mxu0 %v784
      %800 = vmatprep.subr.mxu0 0.0
      %801 = vmatpush1.msra.mxu0 0.0
      %802 = vmatprep.subr.mxu0 0.0
      %803 = vmatpush1.msra.mxu0 0.0
      %804 = vmatprep.subr.mxu0 0.0
      %805 = vmatpush1.msra.mxu0 0.0
      %806 = vmatprep.subr.mxu0 0.0
      %807 = vmatpush1.msra.mxu0 0.0
      %808 = vmatprep.subr.mxu0 0.0
      %809 = vmatpush1.msra.mxu0 0.0
      %810 = vmatprep.subr.mxu0 0.0
      %811 = vmatpush1.msra.mxu0 0.0
      %812 = vmatprep.subr.mxu0 0.0
      %813 = vmatpush1.msra.mxu0 0.0
      %814 = vmatprep.subr.mxu0 0.0
      %815 = vmatpush1.msra.mxu0 0.0
      %816 = vmatprep.subr.mxu0 0.0
      %817 = vmatpush1.msra.mxu0 0.0
      %818 = vmatprep.subr.mxu0 0.0
      %819 = vmatpush1.msra.mxu0 0.0
      %820 = vmatprep.subr.mxu0 0.0
      %821 = vmatpush1.msra.mxu0 0.0
      %822 = vmatprep.subr.mxu0 0.0
      %823 = vmatpush1.msra.mxu0 0.0
      %824 = vmatprep.subr.mxu0 0.0
      %825 = vmatpush1.msra.mxu0 0.0
      %826 = vmatprep.subr.mxu0 0.0
      %827 = vmatpush1.msra.mxu0 0.0
      %828 = vmatprep.subr.mxu0 0.0
      %829 = vmatpush1.msra.mxu0 0.0
      %830 = vmatprep.subr.mxu0 0.0
      %831 = vmatpush1.msra.mxu0 0.0
      %832 = vmatprep.subr.mxu0 0.0
      %833 = vmatpush1.msra.mxu0 0.0
      %834 = vmatprep.subr.mxu0 0.0
      %835 = vmatpush1.msra.mxu0 0.0
      %836 = vmatprep.subr.mxu0 0.0
      %837 = vmatpush1.msra.mxu0 0.0
      %838 = vmatprep.subr.mxu0 0.0
      %839 = vmatpush1.msra.mxu0 0.0
      %840 = vmatprep.subr.mxu0 0.0
      %841 = vmatpush1.msra.mxu0 0.0
      %842 = vmatprep.subr.mxu0 0.0
      %843 = vmatpush1.msra.mxu0 0.0
      %844 = vmatprep.subr.mxu0 0.0
      %845 = vmatpush1.msra.mxu0 0.0
      %846 = vmatprep.subr.mxu0 0.0
      %847 = vmatpush1.msra.mxu0 0.0
      %848 = vmatprep.subr.mxu0 0.0
      %849 = vmatpush1.msra.mxu0 0.0
      %850 = vmatprep.subr.mxu0 0.0
      %851 = vmatpush1.msra.mxu0 0.0
      %852 = vmatprep.subr.mxu0 0.0
      %853 = vmatpush1.msra.mxu0 0.0
      %854 = vmatprep.subr.mxu0 0.0
      %855 = vmatpush1.msra.mxu0 0.0
      %856 = vmatprep.subr.mxu0 0.0
      %857 = vmatpush1.msra.mxu0 0.0
      %858 = vmatprep.subr.mxu0 0.0
      %859 = vmatpush1.msra.mxu0 0.0
      %860 = vmatprep.mubr.f32.mxu0 0.0
      %861 = vmatmul.mubr.f32.gmra.mrb[0].mxu0 %v791
      %v862 = vpop.f32.mrb[0].mxu0
      %v863 = vadd.f32 %v789, %v862
      %v864 = vpop.f32.mrb[0].mxu0
      %865 = vmatprep.mubr.f32.mxu0 0.0
      %866 = vmatmul.mubr.f32.gmra.mrb[0].mxu0 %v794
      %v867 = vpop.f32.mrb[0].mxu0
      %v868 = vadd.f32 %v789, %v867
      %v869 = vpop.f32.mrb[0].mxu0
      %870 = vdwg.mxu0
      %v871 = vld [vmem:[%s3 + $0x1] sm:$0x1]
      %v872 = vld [vmem:[%s3 + $0x2] sm:$0x1]
      %vm873 = vcmask 261120
      %v874 = vsel %vm873, %v863, 0.0
      %875 = vadd.xlane.f32.xlu0 %v874
      %v876 = vpop.xlane.xlu0 %875
      %vm877 = vcmask 253952
      %v878 = vsel %vm877, %v868, 0.0
      %879 = vadd.xlane.f32.xlu0 %v878
      %v880 = vpop.xlane.xlu0 %879
      %v881 = vrcp.pop 32.0
      %v882 = vmul.f32 %v876, %v881
      %v883 = vmul.f32 %v880, %v881
      %v884 = vsub.f32 %v863, %v882
      %v885 = vsub.f32 %v868, %v883
      %v886 = vmul.f32 %v884, %v884
      %v887 = vmul.f32 %v885, %v885
      %v888 = vsel %vm873, %v886, 0.0
      %889 = vadd.xlane.f32.xlu0 %v888
      %v890 = vpop.xlane.xlu0 %889
      %v891 = vsel %vm877, %v887, 0.0
      %892 = vadd.xlane.f32.xlu0 %v891
      %v893 = vpop.xlane.xlu0 %892
      %v894 = vmul.f32 %v890, %v881
      %v895 = vmul.f32 %v893, %v881
      %v896 = vadd.f32 %v894, 1e-05
      %v897 = vadd.f32 %v895, 1e-05
      %v898 = vrsqrt.pop %v896
      %v899 = vrsqrt.pop %v897
      %v900 = vmul.f32 %v884, %v898
      %v901 = vmul.f32 %v885, %v899
      %v902 = vlaneseq
      %v903 = vshrl.u32 %v902, 7
      %v904 = vsub.s32 0, %v903
      %v905 = vrot.slane %v871, %v904
      %v906 = vmul.f32 %v900, %v905
      %v907 = vmul.f32 %v901, %v905
      %v908 = vlaneseq
      %v909 = vshrl.u32 %v908, 7
      %v910 = vsub.s32 0, %v909
      %v911 = vrot.slane %v872, %v910
      %v912 = vadd.f32 %v906, %v911
      %v913 = vadd.f32 %v907, %v911
      %v914 = vlaneseq
      %v915 = vshrl.u32 %v914, 7
      %v916 = vadd.s32 %v915, 8
      %vm917 = vcmp.eq.s32.totalorder %v915, 0
      %vm918 = vcmp.eq.s32.totalorder %v916, 0
      %v919 = vsel %vm917, 0.0, %v912
      %v920 = vsel %vm918, 0.0, %v913
      %v921 = vld [vmem:[%s4] sm:$0xff]
      %v922 = vld [vmem:[%s4 + $0x8] sm:$0x1]
      %v923 = vadd.f32 %v919, %v921
      %v924 = vadd.f32 %v920, %v922
      %v925 = vld [vmem:[%s5] sm:$0x1]
      %v926 = vld [vmem:[%s5 + $0x1] sm:$0x1]
      %v927 = vsel %vm873, %v923, 0.0
      %928 = vadd.xlane.f32.xlu0 %v927
      %v929 = vpop.xlane.xlu0 %928
      %v930 = vsel %vm877, %v924, 0.0
      %931 = vadd.xlane.f32.xlu0 %v930
      %v932 = vpop.xlane.xlu0 %931
      %v933 = vmul.f32 %v929, %v881
      %v934 = vmul.f32 %v932, %v881
      %v935 = vsub.f32 %v923, %v933
      %v936 = vsub.f32 %v924, %v934
      %v937 = vmul.f32 %v935, %v935
      %v938 = vmul.f32 %v936, %v936
      %v939 = vsel %vm873, %v937, 0.0
      %940 = vadd.xlane.f32.xlu0 %v939
      %v941 = vpop.xlane.xlu0 %940
      %v942 = vsel %vm877, %v938, 0.0
      %943 = vadd.xlane.f32.xlu0 %v942
      %v944 = vpop.xlane.xlu0 %943
      %v945 = vmul.f32 %v941, %v881
      %v946 = vmul.f32 %v944, %v881
      %v947 = vadd.f32 %v945, 1e-05
      %v948 = vadd.f32 %v946, 1e-05
      %v949 = vrsqrt.pop %v947
      %v950 = vrsqrt.pop %v948
      %v951 = vmul.f32 %v935, %v949
      %v952 = vmul.f32 %v936, %v950
      %v953 = vlaneseq
      %v954 = vshrl.u32 %v953, 7
      %v955 = vsub.s32 0, %v954
      %v956 = vrot.slane %v925, %v955
      %v957 = vmul.f32 %v951, %v956
      %v958 = vmul.f32 %v952, %v956
      %v959 = vlaneseq
      %v960 = vshrl.u32 %v959, 7
      %v961 = vsub.s32 0, %v960
      %v962 = vrot.slane %v926, %v961
      %v963 = vadd.f32 %v957, %v962
      %v964 = vadd.f32 %v958, %v962
      %v965 = vld [vmem:[%s6] sm:$0xff]
      %v966 = vld [vmem:[%s6 + $0x8] sm:$0xff]
      %v967 = vld [vmem:[%s6 + $0x10] sm:$0xff]
      %v968 = vld [vmem:[%s6 + $0x18] sm:$0xff]
      %v969 = vld [vmem:[%s6 + $0x20] sm:$0xff]
      %v970 = vld [vmem:[%s6 + $0x28] sm:$0xff]
      %v971 = vld [vmem:[%s6 + $0x30] sm:$0xff]
      %v972 = vld [vmem:[%s6 + $0x38] sm:$0xff]
      %v973 = vld [vmem:[%s6 + $0x40] sm:$0xff]
      %v974 = vld [vmem:[%s6 + $0x48] sm:$0xff]
      %v975 = vld [vmem:[%s6 + $0x50] sm:$0xff]
      %v976 = vld [vmem:[%s6 + $0x58] sm:$0xff]
      %v977 = vld [vmem:[%s6 + $0x60] sm:$0xff]
      %v978 = vld [vmem:[%s6 + $0x68] sm:$0xff]
      %v979 = vld [vmem:[%s6 + $0x70] sm:$0xff]
      %v980 = vld [vmem:[%s6 + $0x78] sm:$0xff]
      %v981 = vld [vmem:[%s6 + $0x80] sm:$0xff]
      %v982 = vld [vmem:[%s6 + $0x88] sm:$0xff]
      %v983 = vld [vmem:[%s6 + $0x90] sm:$0xff]
      %v984 = vld [vmem:[%s6 + $0x98] sm:$0xff]
      %v985 = vld [vmem:[%s6 + $0xa0] sm:$0xff]
      %v986 = vld [vmem:[%s6 + $0xa8] sm:$0xff]
      %v987 = vld [vmem:[%s6 + $0xb0] sm:$0xff]
      %v988 = vld [vmem:[%s6 + $0xb8] sm:$0xff]
      %v990 = vsel %vm873, %v963, 0
      %v993 = vsel %vm873, %v964, 0
      %995 = vmatprep.subr.mxu0 %v966
      %996 = vmatpush1.msra.mxu0 %v965
      %997 = vmatprep.subr.mxu0 %v972
      %998 = vmatpush1.msra.mxu0 %v971
      %999 = vmatprep.subr.mxu0 %v978
      %1000 = vmatpush1.msra.mxu0 %v977
      %1001 = vmatprep.subr.mxu0 %v984
      %1002 = vmatpush1.msra.mxu0 %v983
      %1003 = vmatprep.subr.mxu0 0.0
      %1004 = vmatpush1.msra.mxu0 0.0
      %1005 = vmatprep.subr.mxu0 0.0
      %1006 = vmatpush1.msra.mxu0 0.0
      %1007 = vmatprep.subr.mxu0 0.0
      %1008 = vmatpush1.msra.mxu0 0.0
      %1009 = vmatprep.subr.mxu0 0.0
      %1010 = vmatpush1.msra.mxu0 0.0
      %1011 = vmatprep.subr.mxu0 0.0
      %1012 = vmatpush1.msra.mxu0 0.0
      %1013 = vmatprep.subr.mxu0 0.0
      %1014 = vmatpush1.msra.mxu0 0.0
      %1015 = vmatprep.subr.mxu0 0.0
      %1016 = vmatpush1.msra.mxu0 0.0
      %1017 = vmatprep.subr.mxu0 0.0
      %1018 = vmatpush1.msra.mxu0 0.0
      %1019 = vmatprep.subr.mxu0 0.0
      %1020 = vmatpush1.msra.mxu0 0.0
      %1021 = vmatprep.subr.mxu0 0.0
      %1022 = vmatpush1.msra.mxu0 0.0
      %1023 = vmatprep.subr.mxu0 0.0
      %1024 = vmatpush1.msra.mxu0 0.0
      %1025 = vmatprep.subr.mxu0 0.0
      %1026 = vmatpush1.msra.mxu0 0.0
      %1027 = vmatprep.subr.mxu0 0.0
      %1028 = vmatpush1.msra.mxu0 0.0
      %1029 = vmatprep.subr.mxu0 0.0
      %1030 = vmatpush1.msra.mxu0 0.0
      %1031 = vmatprep.subr.mxu0 0.0
      %1032 = vmatpush1.msra.mxu0 0.0
      %1033 = vmatprep.subr.mxu0 0.0
      %1034 = vmatpush1.msra.mxu0 0.0
      %1035 = vmatprep.subr.mxu0 0.0
      %1036 = vmatpush1.msra.mxu0 0.0
      %1037 = vmatprep.subr.mxu0 0.0
      %1038 = vmatpush1.msra.mxu0 0.0
      %1039 = vmatprep.subr.mxu0 0.0
      %1040 = vmatpush1.msra.mxu0 0.0
      %1041 = vmatprep.subr.mxu0 0.0
      %1042 = vmatpush1.msra.mxu0 0.0
      %1043 = vmatprep.subr.mxu0 0.0
      %1044 = vmatpush1.msra.mxu0 0.0
      %1045 = vmatprep.subr.mxu0 0.0
      %1046 = vmatpush1.msra.mxu0 0.0
      %1047 = vmatprep.subr.mxu0 0.0
      %1048 = vmatpush1.msra.mxu0 0.0
      %1049 = vmatprep.subr.mxu0 0.0
      %1050 = vmatpush1.msra.mxu0 0.0
      %1051 = vmatprep.subr.mxu0 0.0
      %1052 = vmatpush1.msra.mxu0 0.0
      %1053 = vmatprep.subr.mxu0 0.0
      %1054 = vmatpush1.msra.mxu0 0.0
      %1055 = vmatprep.subr.mxu0 0.0
      %1056 = vmatpush1.msra.mxu0 0.0
      %1057 = vmatprep.subr.mxu0 0.0
      %1058 = vmatpush1.msra.mxu0 0.0
      %1059 = vmatprep.mubr.f32.mxu0 0.0
      %1060 = vmatmul.mubr.f32.gmra.mrb[0].mxu0 %v990
      %v1061 = vpop.f32.mrb[0].mxu0
      %v1062 = vadd.f32 0.0, %v1061
      %v1063 = vpop.f32.mrb[0].mxu0
      %v1064 = vadd.f32 0.0, %v1063
      %1065 = vmatprep.mubr.f32.mxu0 0.0
      %1066 = vmatmul.mubr.f32.gmra.mrb[0].mxu0 %v993
      %v1067 = vpop.f32.mrb[0].mxu0
      %v1068 = vadd.f32 0.0, %v1067
      %v1069 = vpop.f32.mrb[0].mxu0
      %v1070 = vadd.f32 0.0, %v1069
      %1071 = vdwg.mxu0
      %1072 = vmatprep.subr.mxu0 %v968
      %1073 = vmatpush1.msra.mxu0 %v967
      %1074 = vmatprep.subr.mxu0 %v974
      %1075 = vmatpush1.msra.mxu0 %v973
      %1076 = vmatprep.subr.mxu0 %v980
      %1077 = vmatpush1.msra.mxu0 %v979
      %1078 = vmatprep.subr.mxu0 %v986
      %1079 = vmatpush1.msra.mxu0 %v985
      %1080 = vmatprep.subr.mxu0 0.0
      %1081 = vmatpush1.msra.mxu0 0.0
      %1082 = vmatprep.subr.mxu0 0.0
      %1083 = vmatpush1.msra.mxu0 0.0
      %1084 = vmatprep.subr.mxu0 0.0
      %1085 = vmatpush1.msra.mxu0 0.0
      %1086 = vmatprep.subr.mxu0 0.0
      %1087 = vmatpush1.msra.mxu0 0.0
      %1088 = vmatprep.subr.mxu0 0.0
      %1089 = vmatpush1.msra.mxu0 0.0
      %1090 = vmatprep.subr.mxu0 0.0
      %1091 = vmatpush1.msra.mxu0 0.0
      %1092 = vmatprep.subr.mxu0 0.0
      %1093 = vmatpush1.msra.mxu0 0.0
      %1094 = vmatprep.subr.mxu0 0.0
      %1095 = vmatpush1.msra.mxu0 0.0
      %1096 = vmatprep.subr.mxu0 0.0
      %1097 = vmatpush1.msra.mxu0 0.0
      %1098 = vmatprep.subr.mxu0 0.0
      %1099 = vmatpush1.msra.mxu0 0.0
      %1100 = vmatprep.subr.mxu0 0.0
      %1101 = vmatpush1.msra.mxu0 0.0
      %1102 = vmatprep.subr.mxu0 0.0
      %1103 = vmatpush1.msra.mxu0 0.0
      %1104 = vmatprep.subr.mxu0 0.0
      %1105 = vmatpush1.msra.mxu0 0.0
      %1106 = vmatprep.subr.mxu0 0.0
      %1107 = vmatpush1.msra.mxu0 0.0
      %1108 = vmatprep.subr.mxu0 0.0
      %1109 = vmatpush1.msra.mxu0 0.0
      %1110 = vmatprep.subr.mxu0 0.0
      %1111 = vmatpush1.msra.mxu0 0.0
      %1112 = vmatprep.subr.mxu0 0.0
      %1113 = vmatpush1.msra.mxu0 0.0
      %1114 = vmatprep.subr.mxu0 0.0
      %1115 = vmatpush1.msra.mxu0 0.0
      %1116 = vmatprep.subr.mxu0 0.0
      %1117 = vmatpush1.msra.mxu0 0.0
      %1118 = vmatprep.subr.mxu0 0.0
      %1119 = vmatpush1.msra.mxu0 0.0
      %1120 = vmatprep.subr.mxu0 0.0
      %1121 = vmatpush1.msra.mxu0 0.0
      %1122 = vmatprep.subr.mxu0 0.0
      %1123 = vmatpush1.msra.mxu0 0.0
      %1124 = vmatprep.subr.mxu0 0.0
      %1125 = vmatpush1.msra.mxu0 0.0
      %1126 = vmatprep.subr.mxu0 0.0
      %1127 = vmatpush1.msra.mxu0 0.0
      %1128 = vmatprep.subr.mxu0 0.0
      %1129 = vmatpush1.msra.mxu0 0.0
      %1130 = vmatprep.subr.mxu0 0.0
      %1131 = vmatpush1.msra.mxu0 0.0
      %1132 = vmatprep.subr.mxu0 0.0
      %1133 = vmatpush1.msra.mxu0 0.0
      %1134 = vmatprep.subr.mxu0 0.0
      %1135 = vmatpush1.msra.mxu0 0.0
      %1136 = vmatprep.mubr.f32.mxu0 0.0
      %1137 = vmatmul.mubr.f32.gmra.mrb[0].mxu0 %v990
      %v1138 = vpop.f32.mrb[0].mxu0
      %v1139 = vadd.f32 0.0, %v1138
      %v1140 = vpop.f32.mrb[0].mxu0
      %v1141 = vadd.f32 0.0, %v1140
      %1142 = vmatprep.mubr.f32.mxu0 0.0
      %1143 = vmatmul.mubr.f32.gmra.mrb[0].mxu0 %v993
      %v1144 = vpop.f32.mrb[0].mxu0
      %v1145 = vadd.f32 0.0, %v1144
      %v1146 = vpop.f32.mrb[0].mxu0
      %v1147 = vadd.f32 0.0, %v1146
      %1148 = vdwg.mxu0
      %1149 = vmatprep.subr.mxu0 %v970
      %1150 = vmatpush1.msra.mxu0 %v969
      %1151 = vmatprep.subr.mxu0 %v976
      %1152 = vmatpush1.msra.mxu0 %v975
      %1153 = vmatprep.subr.mxu0 %v982
      %1154 = vmatpush1.msra.mxu0 %v981
      %1155 = vmatprep.subr.mxu0 %v988
      %1156 = vmatpush1.msra.mxu0 %v987
      %1157 = vmatprep.subr.mxu0 0.0
      %1158 = vmatpush1.msra.mxu0 0.0
      %1159 = vmatprep.subr.mxu0 0.0
      %1160 = vmatpush1.msra.mxu0 0.0
      %1161 = vmatprep.subr.mxu0 0.0
      %1162 = vmatpush1.msra.mxu0 0.0
      %1163 = vmatprep.subr.mxu0 0.0
      %1164 = vmatpush1.msra.mxu0 0.0
      %1165 = vmatprep.subr.mxu0 0.0
      %1166 = vmatpush1.msra.mxu0 0.0
      %1167 = vmatprep.subr.mxu0 0.0
      %1168 = vmatpush1.msra.mxu0 0.0
      %1169 = vmatprep.subr.mxu0 0.0
      %1170 = vmatpush1.msra.mxu0 0.0
      %1171 = vmatprep.subr.mxu0 0.0
      %1172 = vmatpush1.msra.mxu0 0.0
      %1173 = vmatprep.subr.mxu0 0.0
      %1174 = vmatpush1.msra.mxu0 0.0
      %1175 = vmatprep.subr.mxu0 0.0
      %1176 = vmatpush1.msra.mxu0 0.0
      %1177 = vmatprep.subr.mxu0 0.0
      %1178 = vmatpush1.msra.mxu0 0.0
      %1179 = vmatprep.subr.mxu0 0.0
      %1180 = vmatpush1.msra.mxu0 0.0
      %1181 = vmatprep.subr.mxu0 0.0
      %1182 = vmatpush1.msra.mxu0 0.0
      %1183 = vmatprep.subr.mxu0 0.0
      %1184 = vmatpush1.msra.mxu0 0.0
      %1185 = vmatprep.subr.mxu0 0.0
      %1186 = vmatpush1.msra.mxu0 0.0
      %1187 = vmatprep.subr.mxu0 0.0
      %1188 = vmatpush1.msra.mxu0 0.0
      %1189 = vmatprep.subr.mxu0 0.0
      %1190 = vmatpush1.msra.mxu0 0.0
      %1191 = vmatprep.subr.mxu0 0.0
      %1192 = vmatpush1.msra.mxu0 0.0
      %1193 = vmatprep.subr.mxu0 0.0
      %1194 = vmatpush1.msra.mxu0 0.0
      %1195 = vmatprep.subr.mxu0 0.0
      %1196 = vmatpush1.msra.mxu0 0.0
      %1197 = vmatprep.subr.mxu0 0.0
      %1198 = vmatpush1.msra.mxu0 0.0
      %1199 = vmatprep.subr.mxu0 0.0
      %1200 = vmatpush1.msra.mxu0 0.0
      %1201 = vmatprep.subr.mxu0 0.0
      %1202 = vmatpush1.msra.mxu0 0.0
      %1203 = vmatprep.subr.mxu0 0.0
      %1204 = vmatpush1.msra.mxu0 0.0
      %1205 = vmatprep.subr.mxu0 0.0
      %1206 = vmatpush1.msra.mxu0 0.0
      %1207 = vmatprep.subr.mxu0 0.0
      %1208 = vmatpush1.msra.mxu0 0.0
      %1209 = vmatprep.subr.mxu0 0.0
      %1210 = vmatpush1.msra.mxu0 0.0
      %1211 = vmatprep.subr.mxu0 0.0
      %1212 = vmatpush1.msra.mxu0 0.0
      %1213 = vmatprep.mubr.f32.mxu0 0.0
      %1214 = vmatmul.mubr.f32.gmra.mrb[0].mxu0 %v990
      %v1215 = vpop.f32.mrb[0].mxu0
      %v1216 = vadd.f32 0.0, %v1215
      %v1217 = vpop.f32.mrb[0].mxu0
      %v1218 = vadd.f32 0.0, %v1217
      %1219 = vmatprep.mubr.f32.mxu0 0.0
      %1220 = vmatmul.mubr.f32.gmra.mrb[0].mxu0 %v993
      %v1221 = vpop.f32.mrb[0].mxu0
      %v1222 = vadd.f32 0.0, %v1221
      %v1223 = vpop.f32.mrb[0].mxu0
      %v1224 = vadd.f32 0.0, %v1223
      %1225 = vdwg.mxu0
      %1226 = vmatprep.subr.mxu0 0.0
      %1227 = vmatpush1.xpose.msra.mxu0 %v1139
      %1228 = vmatprep.subr.mxu0 0.0
      %1229 = vmatpush1.xpose.msra.mxu0 %v1145
      %1230 = vmatprep.subr.mxu0 0.0
      %1231 = vmatpush1.xpose.msra.mxu0 0.0
      %1232 = vmatprep.subr.mxu0 0.0
      %1233 = vmatpush1.xpose.msra.mxu0 0.0
      %1234 = vmatprep.subr.mxu0 0.0
      %1235 = vmatpush1.xpose.msra.mxu0 0.0
      %1236 = vmatprep.subr.mxu0 0.0
      %1237 = vmatpush1.xpose.msra.mxu0 0.0
      %1238 = vmatprep.subr.mxu0 0.0
      %1239 = vmatpush1.xpose.msra.mxu0 0.0
      %1240 = vmatprep.subr.mxu0 0.0
      %1241 = vmatpush1.xpose.msra.mxu0 0.0
      %1242 = vmatprep.subr.mxu0 0.0
      %1243 = vmatpush1.xpose.msra.mxu0 0.0
      %1244 = vmatprep.subr.mxu0 0.0
      %1245 = vmatpush1.xpose.msra.mxu0 0.0
      %1246 = vmatprep.subr.mxu0 0.0
      %1247 = vmatpush1.xpose.msra.mxu0 0.0
      %1248 = vmatprep.subr.mxu0 0.0
      %1249 = vmatpush1.xpose.msra.mxu0 0.0
      %1250 = vmatprep.subr.mxu0 0.0
      %1251 = vmatpush1.xpose.msra.mxu0 0.0
      %1252 = vmatprep.subr.mxu0 0.0
      %1253 = vmatpush1.xpose.msra.mxu0 0.0
      %1254 = vmatprep.subr.mxu0 0.0
      %1255 = vmatpush1.xpose.msra.mxu0 0.0
      %1256 = vmatprep.subr.mxu0 0.0
      %1257 = vmatpush1.xpose.msra.mxu0 0.0
      %1258 = vmatprep.subr.mxu0 0.0
      %1259 = vmatpush1.xpose.msra.mxu0 0.0
      %1260 = vmatprep.subr.mxu0 0.0
      %1261 = vmatpush1.xpose.msra.mxu0 0.0
      %1262 = vmatprep.subr.mxu0 0.0
      %1263 = vmatpush1.xpose.msra.mxu0 0.0
      %1264 = vmatprep.subr.mxu0 0.0
      %1265 = vmatpush1.xpose.msra.mxu0 0.0
      %1266 = vmatprep.subr.mxu0 0.0
      %1267 = vmatpush1.xpose.msra.mxu0 0.0
      %1268 = vmatprep.subr.mxu0 0.0
      %1269 = vmatpush1.xpose.msra.mxu0 0.0
      %1270 = vmatprep.subr.mxu0 0.0
      %1271 = vmatpush1.xpose.msra.mxu0 0.0
      %1272 = vmatprep.subr.mxu0 0.0
      %1273 = vmatpush1.xpose.msra.mxu0 0.0
      %1274 = vmatprep.subr.mxu0 0.0
      %1275 = vmatpush1.xpose.msra.mxu0 0.0
      %1276 = vmatprep.subr.mxu0 0.0
      %1277 = vmatpush1.xpose.msra.mxu0 0.0
      %1278 = vmatprep.subr.mxu0 0.0
      %1279 = vmatpush1.xpose.msra.mxu0 0.0
      %1280 = vmatprep.subr.mxu0 0.0
      %1281 = vmatpush1.xpose.msra.mxu0 0.0
      %1282 = vmatprep.subr.mxu0 0.0
      %1283 = vmatpush1.xpose.msra.mxu0 0.0
      %1284 = vmatprep.subr.mxu0 0.0
      %1285 = vmatpush1.xpose.msra.mxu0 0.0
      %1286 = vmatprep.subr.mxu0 0.0
      %1287 = vmatpush1.xpose.msra.mxu0 0.0
      %1288 = vmatprep.subr.mxu0 0.0
      %1289 = vmatpush1.xpose.msra.mxu0 0.0
      %1290 = vmatprep.mubr.f32.mxu0 0.0
      %1291 = vmatmul.mubr.f32.gmra.mrb[0].mxu0 %v1062
      %v1292 = vpop.f32.mrb[0].mxu0
      %v1293 = vadd.f32 0.0, %v1292
      %v1294 = vpop.f32.mrb[0].mxu0
      %1295 = vmatprep.mubr.f32.mxu0 0.0
      %1296 = vmatmul.mubr.f32.gmra.mrb[0].mxu0 %v1068
      %v1297 = vpop.f32.mrb[0].mxu0
      %v1298 = vadd.f32 0.0, %v1297
      %v1299 = vpop.f32.mrb[0].mxu0
      %1300 = vdwg.mxu0
      %v1301 = vmul.f32 %v1293, 0.125
      %v1302 = vmul.f32 %v1298, 0.125
      %vm1303 = vcmask 72704
      %v1304 = vsel %vm1303, %v1301, -inf
      %1305 = vmax.xlane.f32.xlu0 %v1304
      %v1306 = vpop.xlane.xlu0 %1305
      %vm1307 = vcmask 65536
      %v1308 = vsel %vm1307, %v1302, -inf
      %1309 = vmax.xlane.f32.xlu0 %v1308
      %v1310 = vpop.xlane.xlu0 %1309
      %v1311 = vsub.f32 %v1301, %v1306
      %v1312 = vsub.f32 %v1302, %v1310
      %v1313 = vmul.f32 %v1311, 1.442695
      %v1314 = vpow.pop %v1313
      %v1315 = vmul.f32 %v1312, 1.442695
      %v1316 = vpow.pop %v1315
      %v1317 = vsel %vm1303, %v1314, 0.0
      %1318 = vadd.xlane.f32.xlu0 %v1317
      %v1319 = vpop.xlane.xlu0 %1318
      %v1320 = vsel %vm1307, %v1316, 0.0
      %1321 = vadd.xlane.f32.xlu0 %v1320
      %v1322 = vpop.xlane.xlu0 %1321
      %v1323 = vrcp.pop %v1319
      %v1324 = vmul.f32 %v1314, %v1323
      %v1325 = vrcp.pop %v1322
      %v1326 = vmul.f32 %v1316, %v1325
      %v1328 = vsel %vm1303, %v1324, 0
      %v1331 = vsel %vm1303, %v1326, 0
      %vm1333 = vcmask 1040384
      %v1335 = vsel %vm1333, %v1222, 0
      %1337 = vmatprep.subr.mxu0 0.0
      %1338 = vmatpush1.msra.mxu0 %v1216
      %1339 = vmatprep.subr.mxu0 0.0
      %1340 = vmatpush1.msra.mxu0 %v1335
      %1341 = vmatprep.subr.mxu0 0.0
      %1342 = vmatpush1.msra.mxu0 0.0
      %1343 = vmatprep.subr.mxu0 0.0
      %1344 = vmatpush1.msra.mxu0 0.0
      %1345 = vmatprep.subr.mxu0 0.0
      %1346 = vmatpush1.msra.mxu0 0.0
      %1347 = vmatprep.subr.mxu0 0.0
      %1348 = vmatpush1.msra.mxu0 0.0
      %1349 = vmatprep.subr.mxu0 0.0
      %1350 = vmatpush1.msra.mxu0 0.0
      %1351 = vmatprep.subr.mxu0 0.0
      %1352 = vmatpush1.msra.mxu0 0.0
      %1353 = vmatprep.subr.mxu0 0.0
      %1354 = vmatpush1.msra.mxu0 0.0
      %1355 = vmatprep.subr.mxu0 0.0
      %1356 = vmatpush1.msra.mxu0 0.0
      %1357 = vmatprep.subr.mxu0 0.0
      %1358 = vmatpush1.msra.mxu0 0.0
      %1359 = vmatprep.subr.mxu0 0.0
      %1360 = vmatpush1.msra.mxu0 0.0
      %1361 = vmatprep.subr.mxu0 0.0
      %1362 = vmatpush1.msra.mxu0 0.0
      %1363 = vmatprep.subr.mxu0 0.0
      %1364 = vmatpush1.msra.mxu0 0.0
      %1365 = vmatprep.subr.mxu0 0.0
      %1366 = vmatpush1.msra.mxu0 0.0
      %1367 = vmatprep.subr.mxu0 0.0
      %1368 = vmatpush1.msra.mxu0 0.0
      %1369 = vmatprep.subr.mxu0 0.0
      %1370 = vmatpush1.msra.mxu0 0.0
      %1371 = vmatprep.subr.mxu0 0.0
      %1372 = vmatpush1.msra.mxu0 0.0
      %1373 = vmatprep.subr.mxu0 0.0
      %1374 = vmatpush1.msra.mxu0 0.0
      %1375 = vmatprep.subr.mxu0 0.0
      %1376 = vmatpush1.msra.mxu0 0.0
      %1377 = vmatprep.subr.mxu0 0.0
      %1378 = vmatpush1.msra.mxu0 0.0
      %1379 = vmatprep.subr.mxu0 0.0
      %1380 = vmatpush1.msra.mxu0 0.0
      %1381 = vmatprep.subr.mxu0 0.0
      %1382 = vmatpush1.msra.mxu0 0.0
      %1383 = vmatprep.subr.mxu0 0.0
      %1384 = vmatpush1.msra.mxu0 0.0
      %1385 = vmatprep.subr.mxu0 0.0
      %1386 = vmatpush1.msra.mxu0 0.0
      %1387 = vmatprep.subr.mxu0 0.0
      %1388 = vmatpush1.msra.mxu0 0.0
      %1389 = vmatprep.subr.mxu0 0.0
      %1390 = vmatpush1.msra.mxu0 0.0
      %1391 = vmatprep.subr.mxu0 0.0
      %1392 = vmatpush1.msra.mxu0 0.0
      %1393 = vmatprep.subr.mxu0 0.0
      %1394 = vmatpush1.msra.mxu0 0.0
      %1395 = vmatprep.subr.mxu0 0.0
      %1396 = vmatpush1.msra.mxu0 0.0
      %1397 = vmatprep.subr.mxu0 0.0
      %1398 = vmatpush1.msra.mxu0 0.0
      %1399 = vmatprep.subr.mxu0 0.0
      %1400 = vmatpush1.msra.mxu0 0.0
      %1401 = vmatprep.mubr.f32.mxu0 0.0
      %1402 = vmatmul.mubr.f32.gmra.mrb[0].mxu0 %v1328
      %v1403 = vpop.f32.mrb[0].mxu0
      %v1404 = vadd.f32 0.0, %v1403
      %v1405 = vpop.f32.mrb[0].mxu0
      %1406 = vmatprep.mubr.f32.mxu0 0.0
      %1407 = vmatmul.mubr.f32.gmra.mrb[0].mxu0 %v1331
      %v1408 = vpop.f32.mrb[0].mxu0
      %v1409 = vadd.f32 0.0, %v1408
      %v1410 = vpop.f32.mrb[0].mxu0
      %1411 = vdwg.mxu0
      %1412 = vmatprep.subr.mxu0 0.0
      %1413 = vmatpush1.xpose.msra.mxu0 %v1141
      %1414 = vmatprep.subr.mxu0 0.0
      %1415 = vmatpush1.xpose.msra.mxu0 %v1147
      %1416 = vmatprep.subr.mxu0 0.0
      %1417 = vmatpush1.xpose.msra.mxu0 0.0
      %1418 = vmatprep.subr.mxu0 0.0
      %1419 = vmatpush1.xpose.msra.mxu0 0.0
      %1420 = vmatprep.subr.mxu0 0.0
      %1421 = vmatpush1.xpose.msra.mxu0 0.0
      %1422 = vmatprep.subr.mxu0 0.0
      %1423 = vmatpush1.xpose.msra.mxu0 0.0
      %1424 = vmatprep.subr.mxu0 0.0
      %1425 = vmatpush1.xpose.msra.mxu0 0.0
      %1426 = vmatprep.subr.mxu0 0.0
      %1427 = vmatpush1.xpose.msra.mxu0 0.0
      %1428 = vmatprep.subr.mxu0 0.0
      %1429 = vmatpush1.xpose.msra.mxu0 0.0
      %1430 = vmatprep.subr.mxu0 0.0
      %1431 = vmatpush1.xpose.msra.mxu0 0.0
      %1432 = vmatprep.subr.mxu0 0.0
      %1433 = vmatpush1.xpose.msra.mxu0 0.0
      %1434 = vmatprep.subr.mxu0 0.0
      %1435 = vmatpush1.xpose.msra.mxu0 0.0
      %1436 = vmatprep.subr.mxu0 0.0
      %1437 = vmatpush1.xpose.msra.mxu0 0.0
      %1438 = vmatprep.subr.mxu0 0.0
      %1439 = vmatpush1.xpose.msra.mxu0 0.0
      %1440 = vmatprep.subr.mxu0 0.0
      %1441 = vmatpush1.xpose.msra.mxu0 0.0
      %1442 = vmatprep.subr.mxu0 0.0
      %1443 = vmatpush1.xpose.msra.mxu0 0.0
      %1444 = vmatprep.subr.mxu0 0.0
      %1445 = vmatpush1.xpose.msra.mxu0 0.0
      %1446 = vmatprep.subr.mxu0 0.0
      %1447 = vmatpush1.xpose.msra.mxu0 0.0
      %1448 = vmatprep.subr.mxu0 0.0
      %1449 = vmatpush1.xpose.msra.mxu0 0.0
      %1450 = vmatprep.subr.mxu0 0.0
      %1451 = vmatpush1.xpose.msra.mxu0 0.0
      %1452 = vmatprep.subr.mxu0 0.0
      %1453 = vmatpush1.xpose.msra.mxu0 0.0
      %1454 = vmatprep.subr.mxu0 0.0
      %1455 = vmatpush1.xpose.msra.mxu0 0.0
      %1456 = vmatprep.subr.mxu0 0.0
      %1457 = vmatpush1.xpose.msra.mxu0 0.0
      %1458 = vmatprep.subr.mxu0 0.0
      %1459 = vmatpush1.xpose.msra.mxu0 0.0
      %1460 = vmatprep.subr.mxu0 0.0
      %1461 = vmatpush1.xpose.msra.mxu0 0.0
      %1462 = vmatprep.subr.mxu0 0.0
      %1463 = vmatpush1.xpose.msra.mxu0 0.0
      %1464 = vmatprep.subr.mxu0 0.0
      %1465 = vmatpush1.xpose.msra.mxu0 0.0
      %1466 = vmatprep.subr.mxu0 0.0
      %1467 = vmatpush1.xpose.msra.mxu0 0.0
      %1468 = vmatprep.subr.mxu0 0.0
      %1469 = vmatpush1.xpose.msra.mxu0 0.0
      %1470 = vmatprep.subr.mxu0 0.0
      %1471 = vmatpush1.xpose.msra.mxu0 0.0
      %1472 = vmatprep.subr.mxu0 0.0
      %1473 = vmatpush1.xpose.msra.mxu0 0.0
      %1474 = vmatprep.subr.mxu0 0.0
      %1475 = vmatpush1.xpose.msra.mxu0 0.0
      %1476 = vmatprep.mubr.f32.mxu0 0.0
      %1477 = vmatmul.mubr.f32.gmra.mrb[0].mxu0 %v1064
      %v1478 = vpop.f32.mrb[0].mxu0
      %v1479 = vadd.f32 0.0, %v1478
      %v1480 = vpop.f32.mrb[0].mxu0
      %1481 = vmatprep.mubr.f32.mxu0 0.0
      %1482 = vmatmul.mubr.f32.gmra.mrb[0].mxu0 %v1070
      %v1483 = vpop.f32.mrb[0].mxu0
      %v1484 = vadd.f32 0.0, %v1483
      %v1485 = vpop.f32.mrb[0].mxu0
      %1486 = vdwg.mxu0
      %v1487 = vmul.f32 %v1479, 0.125
      %v1488 = vmul.f32 %v1484, 0.125
      %v1489 = vsel %vm1303, %v1487, -inf
      %1490 = vmax.xlane.f32.xlu0 %v1489
      %v1491 = vpop.xlane.xlu0 %1490
      %v1492 = vsel %vm1307, %v1488, -inf
      %1493 = vmax.xlane.f32.xlu0 %v1492
      %v1494 = vpop.xlane.xlu0 %1493
      %v1495 = vsub.f32 %v1487, %v1491
      %v1496 = vsub.f32 %v1488, %v1494
      %v1497 = vmul.f32 %v1495, 1.442695
      %v1498 = vpow.pop %v1497
      %v1499 = vmul.f32 %v1496, 1.442695
      %v1500 = vpow.pop %v1499
      %v1501 = vsel %vm1303, %v1498, 0.0
      %1502 = vadd.xlane.f32.xlu0 %v1501
      %v1503 = vpop.xlane.xlu0 %1502
      %v1504 = vsel %vm1307, %v1500, 0.0
      %1505 = vadd.xlane.f32.xlu0 %v1504
      %v1506 = vpop.xlane.xlu0 %1505
      %v1507 = vrcp.pop %v1503
      %v1508 = vmul.f32 %v1498, %v1507
      %v1509 = vrcp.pop %v1506
      %v1510 = vmul.f32 %v1500, %v1509
      %v1512 = vsel %vm1303, %v1508, 0
      %v1515 = vsel %vm1303, %v1510, 0
      %v1518 = vsel %vm1333, %v1224, 0
      %1520 = vmatprep.subr.mxu0 0.0
      %1521 = vmatpush1.msra.mxu0 %v1218
      %1522 = vmatprep.subr.mxu0 0.0
      %1523 = vmatpush1.msra.mxu0 %v1518
      %1524 = vmatprep.subr.mxu0 0.0
      %1525 = vmatpush1.msra.mxu0 0.0
      %1526 = vmatprep.subr.mxu0 0.0
      %1527 = vmatpush1.msra.mxu0 0.0
      %1528 = vmatprep.subr.mxu0 0.0
      %1529 = vmatpush1.msra.mxu0 0.0
      %1530 = vmatprep.subr.mxu0 0.0
      %1531 = vmatpush1.msra.mxu0 0.0
      %1532 = vmatprep.subr.mxu0 0.0
      %1533 = vmatpush1.msra.mxu0 0.0
      %1534 = vmatprep.subr.mxu0 0.0
      %1535 = vmatpush1.msra.mxu0 0.0
      %1536 = vmatprep.subr.mxu0 0.0
      %1537 = vmatpush1.msra.mxu0 0.0
      %1538 = vmatprep.subr.mxu0 0.0
      %1539 = vmatpush1.msra.mxu0 0.0
      %1540 = vmatprep.subr.mxu0 0.0
      %1541 = vmatpush1.msra.mxu0 0.0
      %1542 = vmatprep.subr.mxu0 0.0
      %1543 = vmatpush1.msra.mxu0 0.0
      %1544 = vmatprep.subr.mxu0 0.0
      %1545 = vmatpush1.msra.mxu0 0.0
      %1546 = vmatprep.subr.mxu0 0.0
      %1547 = vmatpush1.msra.mxu0 0.0
      %1548 = vmatprep.subr.mxu0 0.0
      %1549 = vmatpush1.msra.mxu0 0.0
      %1550 = vmatprep.subr.mxu0 0.0
      %1551 = vmatpush1.msra.mxu0 0.0
      %1552 = vmatprep.subr.mxu0 0.0
      %1553 = vmatpush1.msra.mxu0 0.0
      %1554 = vmatprep.subr.mxu0 0.0
      %1555 = vmatpush1.msra.mxu0 0.0
      %1556 = vmatprep.subr.mxu0 0.0
      %1557 = vmatpush1.msra.mxu0 0.0
      %1558 = vmatprep.subr.mxu0 0.0
      %1559 = vmatpush1.msra.mxu0 0.0
      %1560 = vmatprep.subr.mxu0 0.0
      %1561 = vmatpush1.msra.mxu0 0.0
      %1562 = vmatprep.subr.mxu0 0.0
      %1563 = vmatpush1.msra.mxu0 0.0
      %1564 = vmatprep.subr.mxu0 0.0
      %1565 = vmatpush1.msra.mxu0 0.0
      %1566 = vmatprep.subr.mxu0 0.0
      %1567 = vmatpush1.msra.mxu0 0.0
      %1568 = vmatprep.subr.mxu0 0.0
      %1569 = vmatpush1.msra.mxu0 0.0
      %1570 = vmatprep.subr.mxu0 0.0
      %1571 = vmatpush1.msra.mxu0 0.0
      %1572 = vmatprep.subr.mxu0 0.0
      %1573 = vmatpush1.msra.mxu0 0.0
      %1574 = vmatprep.subr.mxu0 0.0
      %1575 = vmatpush1.msra.mxu0 0.0
      %1576 = vmatprep.subr.mxu0 0.0
      %1577 = vmatpush1.msra.mxu0 0.0
      %1578 = vmatprep.subr.mxu0 0.0
      %1579 = vmatpush1.msra.mxu0 0.0
      %1580 = vmatprep.subr.mxu0 0.0
      %1581 = vmatpush1.msra.mxu0 0.0
      %1582 = vmatprep.subr.mxu0 0.0
      %1583 = vmatpush1.msra.mxu0 0.0
      %1584 = vmatprep.mubr.f32.mxu0 0.0
      %1585 = vmatmul.mubr.f32.gmra.mrb[0].mxu0 %v1512
      %v1586 = vpop.f32.mrb[0].mxu0
      %v1587 = vadd.f32 0.0, %v1586
      %v1588 = vpop.f32.mrb[0].mxu0
      %1589 = vmatprep.mubr.f32.mxu0 0.0
      %1590 = vmatmul.mubr.f32.gmra.mrb[0].mxu0 %v1515
      %v1591 = vpop.f32.mrb[0].mxu0
      %v1592 = vadd.f32 0.0, %v1591
      %v1593 = vpop.f32.mrb[0].mxu0
      %1594 = vdwg.mxu0
      %v1595 = vld [vmem:[%s5 + $0x2] sm:$0x1]
      %v1596 = vlaneseq
      %v1597 = vshrl.u32 %v1596, 7
      %v1598 = vsub.s32 0, %v1597
      %v1599 = vrot.slane %v1595, %v1598
      %v1600 = vadd.f32 %v923, %v1599
      %v1601 = vadd.f32 %v924, %v1599
      %v1602 = vld [vmem:[%s7] sm:$0xff]
      %v1603 = vld [vmem:[%s7 + $0x8] sm:$0xff]
      %v1604 = vld [vmem:[%s7 + $0x10] sm:$0xff]
      %v1605 = vld [vmem:[%s7 + $0x18] sm:$0xff]
      %v1606 = vld [vmem:[%s7 + $0x20] sm:$0xff]
      %v1607 = vld [vmem:[%s7 + $0x28] sm:$0xff]
      %v1608 = vld [vmem:[%s7 + $0x30] sm:$0xff]
      %v1609 = vld [vmem:[%s7 + $0x38] sm:$0xff]
      %v1610 = vld [vmem:[%s7 + $0x40] sm:$0xff]
      %v1611 = vld [vmem:[%s7 + $0x48] sm:$0xff]
      %v1612 = vld [vmem:[%s7 + $0x50] sm:$0xff]
      %v1613 = vld [vmem:[%s7 + $0x58] sm:$0xff]
      %v1614 = vld [vmem:[%s7 + $0x60] sm:$0xff]
      %v1615 = vld [vmem:[%s7 + $0x68] sm:$0xff]
      %v1616 = vld [vmem:[%s7 + $0x70] sm:$0xff]
      %v1617 = vld [vmem:[%s7 + $0x78] sm:$0xff]
      %v1618 = vld [vmem:[%s7 + $0x80] sm:$0xff]
      %v1619 = vld [vmem:[%s7 + $0x88] sm:$0xff]
      %v1620 = vld [vmem:[%s7 + $0x90] sm:$0xff]
      %v1621 = vld [vmem:[%s7 + $0x98] sm:$0xff]
      %v1622 = vld [vmem:[%s7 + $0xa0] sm:$0xff]
      %v1623 = vld [vmem:[%s7 + $0xa8] sm:$0xff]
      %v1624 = vld [vmem:[%s7 + $0xb0] sm:$0xff]
      %v1625 = vld [vmem:[%s7 + $0xb8] sm:$0xff]
      %v1626 = vld [vmem:[%s7 + $0xc0] sm:$0xff]
      %v1627 = vld [vmem:[%s7 + $0xc8] sm:$0xff]
      %v1628 = vld [vmem:[%s7 + $0xd0] sm:$0xff]
      %v1629 = vld [vmem:[%s7 + $0xd8] sm:$0xff]
      %v1630 = vld [vmem:[%s7 + $0xe0] sm:$0xff]
      %v1631 = vld [vmem:[%s7 + $0xe8] sm:$0xff]
      %v1632 = vld [vmem:[%s7 + $0xf0] sm:$0xff]
      %v1633 = vld [vmem:[%s7 + $0xf8] sm:$0xff]
      %1634 = vmatprep.subr.mxu0 0.0
      %1635 = vmatpush1.msra.mxu0 %v1602
      %1636 = vmatprep.subr.mxu0 0.0
      %1637 = vmatpush1.msra.mxu0 %v1603
      %1638 = vmatprep.subr.mxu0 0.0
      %1639 = vmatpush1.msra.mxu0 %v1604
      %1640 = vmatprep.subr.mxu0 0.0
      %1641 = vmatpush1.msra.mxu0 %v1605
      %1642 = vmatprep.subr.mxu0 0.0
      %1643 = vmatpush1.msra.mxu0 %v1606
      %1644 = vmatprep.subr.mxu0 0.0
      %1645 = vmatpush1.msra.mxu0 %v1607
      %1646 = vmatprep.subr.mxu0 0.0
      %1647 = vmatpush1.msra.mxu0 %v1608
      %1648 = vmatprep.subr.mxu0 0.0
      %1649 = vmatpush1.msra.mxu0 %v1609
      %1650 = vmatprep.subr.mxu0 0.0
      %1651 = vmatpush1.msra.mxu0 %v1610
      %1652 = vmatprep.subr.mxu0 0.0
      %1653 = vmatpush1.msra.mxu0 %v1611
      %1654 = vmatprep.subr.mxu0 0.0
      %1655 = vmatpush1.msra.mxu0 %v1612
      %1656 = vmatprep.subr.mxu0 0.0
      %1657 = vmatpush1.msra.mxu0 %v1613
      %1658 = vmatprep.subr.mxu0 0.0
      %1659 = vmatpush1.msra.mxu0 %v1614
      %1660 = vmatprep.subr.mxu0 0.0
      %1661 = vmatpush1.msra.mxu0 %v1615
      %1662 = vmatprep.subr.mxu0 0.0
      %1663 = vmatpush1.msra.mxu0 %v1616
      %1664 = vmatprep.subr.mxu0 0.0
      %1665 = vmatpush1.msra.mxu0 %v1617
      %1666 = vmatprep.subr.mxu0 0.0
      %1667 = vmatpush1.msra.mxu0 %v1618
      %1668 = vmatprep.subr.mxu0 0.0
      %1669 = vmatpush1.msra.mxu0 %v1619
      %1670 = vmatprep.subr.mxu0 0.0
      %1671 = vmatpush1.msra.mxu0 %v1620
      %1672 = vmatprep.subr.mxu0 0.0
      %1673 = vmatpush1.msra.mxu0 %v1621
      %1674 = vmatprep.subr.mxu0 0.0
      %1675 = vmatpush1.msra.mxu0 %v1622
      %1676 = vmatprep.subr.mxu0 0.0
      %1677 = vmatpush1.msra.mxu0 %v1623
      %1678 = vmatprep.subr.mxu0 0.0
      %1679 = vmatpush1.msra.mxu0 %v1624
      %1680 = vmatprep.subr.mxu0 0.0
      %1681 = vmatpush1.msra.mxu0 %v1625
      %1682 = vmatprep.subr.mxu0 0.0
      %1683 = vmatpush1.msra.mxu0 %v1626
      %1684 = vmatprep.subr.mxu0 0.0
      %1685 = vmatpush1.msra.mxu0 %v1627
      %1686 = vmatprep.subr.mxu0 0.0
      %1687 = vmatpush1.msra.mxu0 %v1628
      %1688 = vmatprep.subr.mxu0 0.0
      %1689 = vmatpush1.msra.mxu0 %v1629
      %1690 = vmatprep.subr.mxu0 0.0
      %1691 = vmatpush1.msra.mxu0 %v1630
      %1692 = vmatprep.subr.mxu0 0.0
      %1693 = vmatpush1.msra.mxu0 %v1631
      %1694 = vmatprep.subr.mxu0 0.0
      %1695 = vmatpush1.msra.mxu0 %v1632
      %1696 = vmatprep.subr.mxu0 0.0
      %1697 = vmatpush1.msra.mxu0 %v1633
      %1698 = vmatprep.mubr.f32.mxu0 %v1587
      %1699 = vmatmul.mubr.f32.gmra.mrb[0].mxu0 %v1404
      %v1700 = vpop.f32.mrb[0].mxu0
      %v1701 = vadd.f32 0.0, %v1700
      %v1702 = vpop.f32.mrb[0].mxu0
      %1703 = vmatprep.mubr.f32.mxu0 %v1592
      %1704 = vmatmul.mubr.f32.gmra.mrb[0].mxu0 %v1409
      %v1705 = vpop.f32.mrb[0].mxu0
      %v1706 = vadd.f32 0.0, %v1705
      %v1707 = vpop.f32.mrb[0].mxu0
      %1708 = vdwg.mxu0
      %v1709 = vadd.f32 %v1600, %v1701
      %v1710 = vadd.f32 %v1601, %v1706
      %v1711 = vld [vmem:[%s5 + $0x3] sm:$0x1]
      %v1712 = vld [vmem:[%s5 + $0x4] sm:$0x1]
      %v1713 = vsel %vm873, %v1709, 0.0
      %1714 = vadd.xlane.f32.xlu0 %v1713
      %v1715 = vpop.xlane.xlu0 %1714
      %v1716 = vsel %vm877, %v1710, 0.0
      %1717 = vadd.xlane.f32.xlu0 %v1716
      %v1718 = vpop.xlane.xlu0 %1717
      %v1719 = vmul.f32 %v1715, %v881
      %v1720 = vmul.f32 %v1718, %v881
      %v1721 = vsub.f32 %v1709, %v1719
      %v1722 = vsub.f32 %v1710, %v1720
      %v1723 = vmul.f32 %v1721, %v1721
      %v1724 = vmul.f32 %v1722, %v1722
      %v1725 = vsel %vm873, %v1723, 0.0
      %1726 = vadd.xlane.f32.xlu0 %v1725
      %v1727 = vpop.xlane.xlu0 %1726
      %v1728 = vsel %vm877, %v1724, 0.0
      %1729 = vadd.xlane.f32.xlu0 %v1728
      %v1730 = vpop.xlane.xlu0 %1729
      %v1731 = vmul.f32 %v1727, %v881
      %v1732 = vmul.f32 %v1730, %v881
      %v1733 = vadd.f32 %v1731, 1e-05
      %v1734 = vadd.f32 %v1732, 1e-05
      %v1735 = vrsqrt.pop %v1733
      %v1736 = vrsqrt.pop %v1734
      %v1737 = vmul.f32 %v1721, %v1735
      %v1738 = vmul.f32 %v1722, %v1736
      %v1739 = vlaneseq
      %v1740 = vshrl.u32 %v1739, 7
      %v1741 = vsub.s32 0, %v1740
      %v1742 = vrot.slane %v1711, %v1741
      %v1743 = vmul.f32 %v1737, %v1742
      %v1744 = vmul.f32 %v1738, %v1742
      %v1745 = vlaneseq
      %v1746 = vshrl.u32 %v1745, 7
      %v1747 = vsub.s32 0, %v1746
      %v1748 = vrot.slane %v1712, %v1747
      %v1749 = vadd.f32 %v1743, %v1748
      %v1750 = vadd.f32 %v1744, %v1748
      %v1751 = vld [vmem:[%s8] sm:$0xff]
      %v1752 = vld [vmem:[%s8 + $0x8] sm:$0xff]
      %v1753 = vld [vmem:[%s8 + $0x10] sm:$0xff]
      %v1754 = vld [vmem:[%s8 + $0x18] sm:$0xff]
      %v1755 = vld [vmem:[%s9] sm:$0x1]
      %v1757 = vlaneseq
      %v1758 = vshrl.u32 %v1757, 7
      %v1759 = vsub.s32 0, %v1758
      %v1760 = vrot.slane %v1755, %v1759
      %v1763 = vsel %vm873, %v1749, 0
      %v1766 = vsel %vm873, %v1750, 0
      %1768 = vmatprep.subr.mxu0 0.0
      %1769 = vmatpush1.msra.mxu0 %v1751
      %1770 = vmatprep.subr.mxu0 0.0
      %1771 = vmatpush1.msra.mxu0 %v1752
      %1772 = vmatprep.subr.mxu0 0.0
      %1773 = vmatpush1.msra.mxu0 %v1753
      %1774 = vmatprep.subr.mxu0 0.0
      %1775 = vmatpush1.msra.mxu0 %v1754
      %1776 = vmatprep.subr.mxu0 0.0
      %1777 = vmatpush1.msra.mxu0 0.0
      %1778 = vmatprep.subr.mxu0 0.0
      %1779 = vmatpush1.msra.mxu0 0.0
      %1780 = vmatprep.subr.mxu0 0.0
      %1781 = vmatpush1.msra.mxu0 0.0
      %1782 = vmatprep.subr.mxu0 0.0
      %1783 = vmatpush1.msra.mxu0 0.0
      %1784 = vmatprep.subr.mxu0 0.0
      %1785 = vmatpush1.msra.mxu0 0.0
      %1786 = vmatprep.subr.mxu0 0.0
      %1787 = vmatpush1.msra.mxu0 0.0
      %1788 = vmatprep.subr.mxu0 0.0
      %1789 = vmatpush1.msra.mxu0 0.0
      %1790 = vmatprep.subr.mxu0 0.0
      %1791 = vmatpush1.msra.mxu0 0.0
      %1792 = vmatprep.subr.mxu0 0.0
      %1793 = vmatpush1.msra.mxu0 0.0
      %1794 = vmatprep.subr.mxu0 0.0
      %1795 = vmatpush1.msra.mxu0 0.0
      %1796 = vmatprep.subr.mxu0 0.0
      %1797 = vmatpush1.msra.mxu0 0.0
      %1798 = vmatprep.subr.mxu0 0.0
      %1799 = vmatpush1.msra.mxu0 0.0
      %1800 = vmatprep.subr.mxu0 0.0
      %1801 = vmatpush1.msra.mxu0 0.0
      %1802 = vmatprep.subr.mxu0 0.0
      %1803 = vmatpush1.msra.mxu0 0.0
      %1804 = vmatprep.subr.mxu0 0.0
      %1805 = vmatpush1.msra.mxu0 0.0
      %1806 = vmatprep.subr.mxu0 0.0
      %1807 = vmatpush1.msra.mxu0 0.0
      %1808 = vmatprep.subr.mxu0 0.0
      %1809 = vmatpush1.msra.mxu0 0.0
      %1810 = vmatprep.subr.mxu0 0.0
      %1811 = vmatpush1.msra.mxu0 0.0
      %1812 = vmatprep.subr.mxu0 0.0
      %1813 = vmatpush1.msra.mxu0 0.0
      %1814 = vmatprep.subr.mxu0 0.0
      %1815 = vmatpush1.msra.mxu0 0.0
      %1816 = vmatprep.subr.mxu0 0.0
      %1817 = vmatpush1.msra.mxu0 0.0
      %1818 = vmatprep.subr.mxu0 0.0
      %1819 = vmatpush1.msra.mxu0 0.0
      %1820 = vmatprep.subr.mxu0 0.0
      %1821 = vmatpush1.msra.mxu0 0.0
      %1822 = vmatprep.subr.mxu0 0.0
      %1823 = vmatpush1.msra.mxu0 0.0
      %1824 = vmatprep.subr.mxu0 0.0
      %1825 = vmatpush1.msra.mxu0 0.0
      %1826 = vmatprep.subr.mxu0 0.0
      %1827 = vmatpush1.msra.mxu0 0.0
      %1828 = vmatprep.subr.mxu0 0.0
      %1829 = vmatpush1.msra.mxu0 0.0
      %1830 = vmatprep.subr.mxu0 0.0
      %1831 = vmatpush1.msra.mxu0 0.0
      %1832 = vmatprep.mubr.f32.mxu0 0.0
      %1833 = vmatmul.mubr.f32.gmra.mrb[0].mxu0 %v1763
      %v1834 = vpop.f32.mrb[0].mxu0
      %v1835 = vadd.f32 %v1760, %v1834
      %v1836 = vpop.f32.mrb[0].mxu0
      %1837 = vmatprep.mubr.f32.mxu0 0.0
      %1838 = vmatmul.mubr.f32.gmra.mrb[0].mxu0 %v1766
      %v1839 = vpop.f32.mrb[0].mxu0
      %v1840 = vadd.f32 %v1760, %v1839
      %v1841 = vpop.f32.mrb[0].mxu0
      %1842 = vdwg.mxu0
      %v1843 = vmul.f32 %v1835, 0.5
      %v1844 = vmul.f32 %v1840, 0.5
      %v1845 = vmul.f32 %v1835, 0.70710677
      %v1846 = vmul.f32 %v1840, 0.70710677
      %vm1847 = vcmp.lt.f32.partialorder %v1845, 0.0
      %vm1848 = vcmp.lt.f32.partialorder %v1846, 0.0
      %v1849 = vsel %vm1847, -1.0, 1.0
      %v1850 = vsel %vm1848, -1.0, 1.0
      %v1851 = vand.u32 2147483647, %v1845
      %v1852 = vand.u32 2147483647, %v1846
      %v1853 = vmul.f32 %v1851, 0.3275911
      %v1854 = vmul.f32 %v1852, 0.3275911
      %v1855 = vadd.f32 %v1853, 1.0
      %v1856 = vadd.f32 %v1854, 1.0
      %v1857 = vrcp.pop %v1855
      %v1858 = vmul.f32 1.0, %v1857
      %v1859 = vrcp.pop %v1856
      %v1860 = vmul.f32 1.0, %v1859
      %v1861 = vmul.f32 %v1858, 1.0614054
      %v1862 = vmul.f32 %v1860, 1.0614054
      %v1863 = vadd.f32 %v1861, -1.4531521
      %v1864 = vadd.f32 %v1862, -1.4531521
      %v1865 = vmul.f32 %v1858, %v1863
      %v1866 = vmul.f32 %v1860, %v1864
      %v1867 = vadd.f32 %v1865, 1.4214138
      %v1868 = vadd.f32 %v1866, 1.4214138
      %v1869 = vmul.f32 %v1858, %v1867
      %v1870 = vmul.f32 %v1860, %v1868
      %v1871 = vadd.f32 %v1869, -0.28449672
      %v1872 = vadd.f32 %v1870, -0.28449672
      %v1873 = vmul.f32 %v1858, %v1871
      %v1874 = vmul.f32 %v1860, %v1872
      %v1875 = vadd.f32 %v1873, 0.2548296
      %v1876 = vadd.f32 %v1874, 0.2548296
      %v1877 = vmul.f32 %v1858, %v1875
      %v1878 = vmul.f32 %v1860, %v1876
      %v1879 = vsub.f32 0.0, %v1851
      %v1880 = vsub.f32 0.0, %v1852
      %v1881 = vmul.f32 %v1879, %v1851
      %v1882 = vmul.f32 %v1880, %v1852
      %v1883 = vmul.f32 %v1881, 1.442695
      %v1884 = vpow.pop %v1883
      %v1885 = vmul.f32 %v1882, 1.442695
      %v1886 = vpow.pop %v1885
      %v1887 = vmul.f32 %v1877, %v1884
      %v1888 = vmul.f32 %v1878, %v1886
      %v1889 = vsub.f32 1.0, %v1887
      %v1890 = vsub.f32 1.0, %v1888
      %v1891 = vmul.f32 %v1849, %v1889
      %v1892 = vmul.f32 %v1850, %v1890
      %v1893 = vadd.f32 %v1891, 1.0
      %v1894 = vadd.f32 %v1892, 1.0
      %v1895 = vmul.f32 %v1843, %v1893
      %v1896 = vmul.f32 %v1844, %v1894
      %v1897 = vld [vmem:[%s10] sm:$0xf]
      %vm1898 = vcmask 31744
      %v1900 = vsel %vm1898, %v1895, 0
      %v1903 = vsel %vm1898, %v1896, 0
      %vm1905 = vcmask 1043456
      %v1907 = vsel %vm1905, %v1897, 0
      %1909 = vmatprep.subr.mxu0 0.0
      %1910 = vmatpush1.msra.mxu0 %v1907
      %1911 = vmatprep.subr.mxu0 0.0
      %1912 = vmatpush1.msra.mxu0 0.0
      %1913 = vmatprep.subr.mxu0 0.0
      %1914 = vmatpush1.msra.mxu0 0.0
      %1915 = vmatprep.subr.mxu0 0.0
      %1916 = vmatpush1.msra.mxu0 0.0
      %1917 = vmatprep.subr.mxu0 0.0
      %1918 = vmatpush1.msra.mxu0 0.0
      %1919 = vmatprep.subr.mxu0 0.0
      %1920 = vmatpush1.msra.mxu0 0.0
      %1921 = vmatprep.subr.mxu0 0.0
      %1922 = vmatpush1.msra.mxu0 0.0
      %1923 = vmatprep.subr.mxu0 0.0
      %1924 = vmatpush1.msra.mxu0 0.0
      %1925 = vmatprep.subr.mxu0 0.0
      %1926 = vmatpush1.msra.mxu0 0.0
      %1927 = vmatprep.subr.mxu0 0.0
      %1928 = vmatpush1.msra.mxu0 0.0
      %1929 = vmatprep.subr.mxu0 0.0
      %1930 = vmatpush1.msra.mxu0 0.0
      %1931 = vmatprep.subr.mxu0 0.0
      %1932 = vmatpush1.msra.mxu0 0.0
      %1933 = vmatprep.subr.mxu0 0.0
      %1934 = vmatpush1.msra.mxu0 0.0
      %1935 = vmatprep.subr.mxu0 0.0
      %1936 = vmatpush1.msra.mxu0 0.0
      %1937 = vmatprep.subr.mxu0 0.0
      %1938 = vmatpush1.msra.mxu0 0.0
      %1939 = vmatprep.subr.mxu0 0.0
      %1940 = vmatpush1.msra.mxu0 0.0
      %1941 = vmatprep.subr.mxu0 0.0
      %1942 = vmatpush1.msra.mxu0 0.0
      %1943 = vmatprep.subr.mxu0 0.0
      %1944 = vmatpush1.msra.mxu0 0.0
      %1945 = vmatprep.subr.mxu0 0.0
      %1946 = vmatpush1.msra.mxu0 0.0
      %1947 = vmatprep.subr.mxu0 0.0
      %1948 = vmatpush1.msra.mxu0 0.0
      %1949 = vmatprep.subr.mxu0 0.0
      %1950 = vmatpush1.msra.mxu0 0.0
      %1951 = vmatprep.subr.mxu0 0.0
      %1952 = vmatpush1.msra.mxu0 0.0
      %1953 = vmatprep.subr.mxu0 0.0
      %1954 = vmatpush1.msra.mxu0 0.0
      %1955 = vmatprep.subr.mxu0 0.0
      %1956 = vmatpush1.msra.mxu0 0.0
      %1957 = vmatprep.subr.mxu0 0.0
      %1958 = vmatpush1.msra.mxu0 0.0
      %1959 = vmatprep.subr.mxu0 0.0
      %1960 = vmatpush1.msra.mxu0 0.0
      %1961 = vmatprep.subr.mxu0 0.0
      %1962 = vmatpush1.msra.mxu0 0.0
      %1963 = vmatprep.subr.mxu0 0.0
      %1964 = vmatpush1.msra.mxu0 0.0
      %1965 = vmatprep.subr.mxu0 0.0
      %1966 = vmatpush1.msra.mxu0 0.0
      %1967 = vmatprep.subr.mxu0 0.0
      %1968 = vmatpush1.msra.mxu0 0.0
      %1969 = vmatprep.subr.mxu0 0.0
      %1970 = vmatpush1.msra.mxu0 0.0
      %1971 = vmatprep.subr.mxu0 0.0
      %1972 = vmatpush1.msra.mxu0 0.0
      %1973 = vmatprep.mubr.f32.mxu0 0.0
      %1974 = vmatmul.mubr.f32.gmra.mrb[0].mxu0 %v1900
      %v1975 = vpop.f32.mrb[0].mxu0
      %v1976 = vadd.f32 0.0, %v1975
      %v1977 = vpop.f32.mrb[0].mxu0
      %1978 = vmatprep.mubr.f32.mxu0 0.0
      %1979 = vmatmul.mubr.f32.gmra.mrb[0].mxu0 %v1903
      %v1980 = vpop.f32.mrb[0].mxu0
      %v1981 = vadd.f32 0.0, %v1980
      %v1982 = vpop.f32.mrb[0].mxu0
      %1983 = vdwg.mxu0
      %v1984 = vadd.f32 %v1709, %v1976
      %v1985 = vadd.f32 %v1710, %v1981
      %v1986 = vld [vmem:[%s5 + $0x5] sm:$0x1]
      %v1987 = vlaneseq
      %v1988 = vshrl.u32 %v1987, 7
      %v1989 = vsub.s32 0, %v1988
      %v1990 = vrot.slane %v1986, %v1989
      %v1991 = vadd.f32 %v1984, %v1990
      %v1992 = vadd.f32 %v1985, %v1990
      %s1993 = scalar_lea.vmem %s5, 8
      %v1994 = vld [vmem:[%s1993] sm:$0x1]
      %v1995 = vld [vmem:[%s1993 + $0x1] sm:$0x1]
      %v1996 = vsel %vm873, %v1991, 0.0
      %1997 = vadd.xlane.f32.xlu0 %v1996
      %v1998 = vpop.xlane.xlu0 %1997
      %v1999 = vsel %vm877, %v1992, 0.0
      %2000 = vadd.xlane.f32.xlu0 %v1999
      %v2001 = vpop.xlane.xlu0 %2000
      %v2002 = vmul.f32 %v1998, %v881
      %v2003 = vmul.f32 %v2001, %v881
      %v2004 = vsub.f32 %v1991, %v2002
      %v2005 = vsub.f32 %v1992, %v2003
      %v2006 = vmul.f32 %v2004, %v2004
      %v2007 = vmul.f32 %v2005, %v2005
      %v2008 = vsel %vm873, %v2006, 0.0
      %2009 = vadd.xlane.f32.xlu0 %v2008
      %v2010 = vpop.xlane.xlu0 %2009
      %v2011 = vsel %vm877, %v2007, 0.0
      %2012 = vadd.xlane.f32.xlu0 %v2011
      %v2013 = vpop.xlane.xlu0 %2012
      %v2014 = vmul.f32 %v2010, %v881
      %v2015 = vmul.f32 %v2013, %v881
      %v2016 = vadd.f32 %v2014, 1e-05
      %v2017 = vadd.f32 %v2015, 1e-05
      %v2018 = vrsqrt.pop %v2016
      %v2019 = vrsqrt.pop %v2017
      %v2020 = vmul.f32 %v2004, %v2018
      %v2021 = vmul.f32 %v2005, %v2019
      %v2022 = vlaneseq
      %v2023 = vshrl.u32 %v2022, 7
      %v2024 = vsub.s32 0, %v2023
      %v2025 = vrot.slane %v1994, %v2024
      %v2026 = vmul.f32 %v2020, %v2025
      %v2027 = vmul.f32 %v2021, %v2025
      %v2028 = vlaneseq
      %v2029 = vshrl.u32 %v2028, 7
      %v2030 = vsub.s32 0, %v2029
      %v2031 = vrot.slane %v1995, %v2030
      %v2032 = vadd.f32 %v2026, %v2031
      %v2033 = vadd.f32 %v2027, %v2031
      %s2034 = scalar_lea.vmem %s6, 192
      %v2035 = vld [vmem:[%s2034] sm:$0xff]
      %v2036 = vld [vmem:[%s2034 + $0x8] sm:$0xff]
      %v2037 = vld [vmem:[%s2034 + $0x10] sm:$0xff]
      %v2038 = vld [vmem:[%s2034 + $0x18] sm:$0xff]
      %v2039 = vld [vmem:[%s2034 + $0x20] sm:$0xff]
      %v2040 = vld [vmem:[%s2034 + $0x28] sm:$0xff]
      %v2041 = vld [vmem:[%s2034 + $0x30] sm:$0xff]
      %v2042 = vld [vmem:[%s2034 + $0x38] sm:$0xff]
      %v2043 = vld [vmem:[%s2034 + $0x40] sm:$0xff]
      %v2044 = vld [vmem:[%s2034 + $0x48] sm:$0xff]
      %v2045 = vld [vmem:[%s2034 + $0x50] sm:$0xff]
      %v2046 = vld [vmem:[%s2034 + $0x58] sm:$0xff]
      %v2047 = vld [vmem:[%s2034 + $0x60] sm:$0xff]
      %v2048 = vld [vmem:[%s2034 + $0x68] sm:$0xff]
      %v2049 = vld [vmem:[%s2034 + $0x70] sm:$0xff]
      %v2050 = vld [vmem:[%s2034 + $0x78] sm:$0xff]
      %v2051 = vld [vmem:[%s2034 + $0x80] sm:$0xff]
      %v2052 = vld [vmem:[%s2034 + $0x88] sm:$0xff]
      %v2053 = vld [vmem:[%s2034 + $0x90] sm:$0xff]
      %v2054 = vld [vmem:[%s2034 + $0x98] sm:$0xff]
      %v2055 = vld [vmem:[%s2034 + $0xa0] sm:$0xff]
      %v2056 = vld [vmem:[%s2034 + $0xa8] sm:$0xff]
      %v2057 = vld [vmem:[%s2034 + $0xb0] sm:$0xff]
      %v2058 = vld [vmem:[%s2034 + $0xb8] sm:$0xff]
      %v2060 = vsel %vm873, %v2032, 0
      %v2063 = vsel %vm873, %v2033, 0
      %2065 = vmatprep.subr.mxu0 %v2036
      %2066 = vmatpush1.msra.mxu0 %v2035
      %2067 = vmatprep.subr.mxu0 %v2042
      %2068 = vmatpush1.msra.mxu0 %v2041
      %2069 = vmatprep.subr.mxu0 %v2048
      %2070 = vmatpush1.msra.mxu0 %v2047
      %2071 = vmatprep.subr.mxu0 %v2054
      %2072 = vmatpush1.msra.mxu0 %v2053
      %2073 = vmatprep.subr.mxu0 0.0
      %2074 = vmatpush1.msra.mxu0 0.0
      %2075 = vmatprep.subr.mxu0 0.0
      %2076 = vmatpush1.msra.mxu0 0.0
      %2077 = vmatprep.subr.mxu0 0.0
      %2078 = vmatpush1.msra.mxu0 0.0
      %2079 = vmatprep.subr.mxu0 0.0
      %2080 = vmatpush1.msra.mxu0 0.0
      %2081 = vmatprep.subr.mxu0 0.0
      %2082 = vmatpush1.msra.mxu0 0.0
      %2083 = vmatprep.subr.mxu0 0.0
      %2084 = vmatpush1.msra.mxu0 0.0
      %2085 = vmatprep.subr.mxu0 0.0
      %2086 = vmatpush1.msra.mxu0 0.0
      %2087 = vmatprep.subr.mxu0 0.0
      %2088 = vmatpush1.msra.mxu0 0.0
      %2089 = vmatprep.subr.mxu0 0.0
      %2090 = vmatpush1.msra.mxu0 0.0
      %2091 = vmatprep.subr.mxu0 0.0
      %2092 = vmatpush1.msra.mxu0 0.0
      %2093 = vmatprep.subr.mxu0 0.0
      %2094 = vmatpush1.msra.mxu0 0.0
      %2095 = vmatprep.subr.mxu0 0.0
      %2096 = vmatpush1.msra.mxu0 0.0
      %2097 = vmatprep.subr.mxu0 0.0
      %2098 = vmatpush1.msra.mxu0 0.0
      %2099 = vmatprep.subr.mxu0 0.0
      %2100 = vmatpush1.msra.mxu0 0.0
      %2101 = vmatprep.subr.mxu0 0.0
      %2102 = vmatpush1.msra.mxu0 0.0
      %2103 = vmatprep.subr.mxu0 0.0
      %2104 = vmatpush1.msra.mxu0 0.0
      %2105 = vmatprep.subr.mxu0 0.0
      %2106 = vmatpush1.msra.mxu0 0.0
      %2107 = vmatprep.subr.mxu0 0.0
      %2108 = vmatpush1.msra.mxu0 0.0
      %2109 = vmatprep.subr.mxu0 0.0
      %2110 = vmatpush1.msra.mxu0 0.0
      %2111 = vmatprep.subr.mxu0 0.0
      %2112 = vmatpush1.msra.mxu0 0.0
      %2113 = vmatprep.subr.mxu0 0.0
      %2114 = vmatpush1.msra.mxu0 0.0
      %2115 = vmatprep.subr.mxu0 0.0
      %2116 = vmatpush1.msra.mxu0 0.0
      %2117 = vmatprep.subr.mxu0 0.0
      %2118 = vmatpush1.msra.mxu0 0.0
      %2119 = vmatprep.subr.mxu0 0.0
      %2120 = vmatpush1.msra.mxu0 0.0
      %2121 = vmatprep.subr.mxu0 0.0
      %2122 = vmatpush1.msra.mxu0 0.0
      %2123 = vmatprep.subr.mxu0 0.0
      %2124 = vmatpush1.msra.mxu0 0.0
      %2125 = vmatprep.subr.mxu0 0.0
      %2126 = vmatpush1.msra.mxu0 0.0
      %2127 = vmatprep.subr.mxu0 0.0
      %2128 = vmatpush1.msra.mxu0 0.0
      %2129 = vmatprep.mubr.f32.mxu0 0.0
      %2130 = vmatmul.mubr.f32.gmra.mrb[0].mxu0 %v2060
      %v2131 = vpop.f32.mrb[0].mxu0
      %v2132 = vadd.f32 0.0, %v2131
      %v2133 = vpop.f32.mrb[0].mxu0
      %v2134 = vadd.f32 0.0, %v2133
      %2135 = vmatprep.mubr.f32.mxu0 0.0
      %2136 = vmatmul.mubr.f32.gmra.mrb[0].mxu0 %v2063
      %v2137 = vpop.f32.mrb[0].mxu0
      %v2138 = vadd.f32 0.0, %v2137
      %v2139 = vpop.f32.mrb[0].mxu0
      %v2140 = vadd.f32 0.0, %v2139
      %2141 = vdwg.mxu0
      %2142 = vmatprep.subr.mxu0 %v2038
      %2143 = vmatpush1.msra.mxu0 %v2037
      %2144 = vmatprep.subr.mxu0 %v2044
      %2145 = vmatpush1.msra.mxu0 %v2043
      %2146 = vmatprep.subr.mxu0 %v2050
      %2147 = vmatpush1.msra.mxu0 %v2049
      %2148 = vmatprep.subr.mxu0 %v2056
      %2149 = vmatpush1.msra.mxu0 %v2055
      %2150 = vmatprep.subr.mxu0 0.0
      %2151 = vmatpush1.msra.mxu0 0.0
      %2152 = vmatprep.subr.mxu0 0.0
      %2153 = vmatpush1.msra.mxu0 0.0
      %2154 = vmatprep.subr.mxu0 0.0
      %2155 = vmatpush1.msra.mxu0 0.0
      %2156 = vmatprep.subr.mxu0 0.0
      %2157 = vmatpush1.msra.mxu0 0.0
      %2158 = vmatprep.subr.mxu0 0.0
      %2159 = vmatpush1.msra.mxu0 0.0
      %2160 = vmatprep.subr.mxu0 0.0
      %2161 = vmatpush1.msra.mxu0 0.0
      %2162 = vmatprep.subr.mxu0 0.0
      %2163 = vmatpush1.msra.mxu0 0.0
      %2164 = vmatprep.subr.mxu0 0.0
      %2165 = vmatpush1.msra.mxu0 0.0
      %2166 = vmatprep.subr.mxu0 0.0
      %2167 = vmatpush1.msra.mxu0 0.0
      %2168 = vmatprep.subr.mxu0 0.0
      %2169 = vmatpush1.msra.mxu0 0.0
      %2170 = vmatprep.subr.mxu0 0.0
      %2171 = vmatpush1.msra.mxu0 0.0
      %2172 = vmatprep.subr.mxu0 0.0
      %2173 = vmatpush1.msra.mxu0 0.0
      %2174 = vmatprep.subr.mxu0 0.0
      %2175 = vmatpush1.msra.mxu0 0.0
      %2176 = vmatprep.subr.mxu0 0.0
      %2177 = vmatpush1.msra.mxu0 0.0
      %2178 = vmatprep.subr.mxu0 0.0
      %2179 = vmatpush1.msra.mxu0 0.0
      %2180 = vmatprep.subr.mxu0 0.0
      %2181 = vmatpush1.msra.mxu0 0.0
      %2182 = vmatprep.subr.mxu0 0.0
      %2183 = vmatpush1.msra.mxu0 0.0
      %2184 = vmatprep.subr.mxu0 0.0
      %2185 = vmatpush1.msra.mxu0 0.0
      %2186 = vmatprep.subr.mxu0 0.0
      %2187 = vmatpush1.msra.mxu0 0.0
      %2188 = vmatprep.subr.mxu0 0.0
      %2189 = vmatpush1.msra.mxu0 0.0
      %2190 = vmatprep.subr.mxu0 0.0
      %2191 = vmatpush1.msra.mxu0 0.0
      %2192 = vmatprep.subr.mxu0 0.0
      %2193 = vmatpush1.msra.mxu0 0.0
      %2194 = vmatprep.subr.mxu0 0.0
      %2195 = vmatpush1.msra.mxu0 0.0
      %2196 = vmatprep.subr.mxu0 0.0
      %2197 = vmatpush1.msra.mxu0 0.0
      %2198 = vmatprep.subr.mxu0 0.0
      %2199 = vmatpush1.msra.mxu0 0.0
      %2200 = vmatprep.subr.mxu0 0.0
      %2201 = vmatpush1.msra.mxu0 0.0
      %2202 = vmatprep.subr.mxu0 0.0
      %2203 = vmatpush1.msra.mxu0 0.0
      %2204 = vmatprep.subr.mxu0 0.0
      %2205 = vmatpush1.msra.mxu0 0.0
      %2206 = vmatprep.mubr.f32.mxu0 0.0
      %2207 = vmatmul.mubr.f32.gmra.mrb[0].mxu0 %v2060
      %v2208 = vpop.f32.mrb[0].mxu0
      %v2209 = vadd.f32 0.0, %v2208
      %v2210 = vpop.f32.mrb[0].mxu0
      %v2211 = vadd.f32 0.0, %v2210
      %2212 = vmatprep.mubr.f32.mxu0 0.0
      %2213 = vmatmul.mubr.f32.gmra.mrb[0].mxu0 %v2063
      %v2214 = vpop.f32.mrb[0].mxu0
      %v2215 = vadd.f32 0.0, %v2214
      %v2216 = vpop.f32.mrb[0].mxu0
      %v2217 = vadd.f32 0.0, %v2216
      %2218 = vdwg.mxu0
      %2219 = vmatprep.subr.mxu0 %v2040
      %2220 = vmatpush1.msra.mxu0 %v2039
      %2221 = vmatprep.subr.mxu0 %v2046
      %2222 = vmatpush1.msra.mxu0 %v2045
      %2223 = vmatprep.subr.mxu0 %v2052
      %2224 = vmatpush1.msra.mxu0 %v2051
      %2225 = vmatprep.subr.mxu0 %v2058
      %2226 = vmatpush1.msra.mxu0 %v2057
      %2227 = vmatprep.subr.mxu0 0.0
      %2228 = vmatpush1.msra.mxu0 0.0
      %2229 = vmatprep.subr.mxu0 0.0
      %2230 = vmatpush1.msra.mxu0 0.0
      %2231 = vmatprep.subr.mxu0 0.0
      %2232 = vmatpush1.msra.mxu0 0.0
      %2233 = vmatprep.subr.mxu0 0.0
      %2234 = vmatpush1.msra.mxu0 0.0
      %2235 = vmatprep.subr.mxu0 0.0
      %2236 = vmatpush1.msra.mxu0 0.0
      %2237 = vmatprep.subr.mxu0 0.0
      %2238 = vmatpush1.msra.mxu0 0.0
      %2239 = vmatprep.subr.mxu0 0.0
      %2240 = vmatpush1.msra.mxu0 0.0
      %2241 = vmatprep.subr.mxu0 0.0
      %2242 = vmatpush1.msra.mxu0 0.0
      %2243 = vmatprep.subr.mxu0 0.0
      %2244 = vmatpush1.msra.mxu0 0.0
      %2245 = vmatprep.subr.mxu0 0.0
      %2246 = vmatpush1.msra.mxu0 0.0
      %2247 = vmatprep.subr.mxu0 0.0
      %2248 = vmatpush1.msra.mxu0 0.0
      %2249 = vmatprep.subr.mxu0 0.0
      %2250 = vmatpush1.msra.mxu0 0.0
      %2251 = vmatprep.subr.mxu0 0.0
      %2252 = vmatpush1.msra.mxu0 0.0
      %2253 = vmatprep.subr.mxu0 0.0
      %2254 = vmatpush1.msra.mxu0 0.0
      %2255 = vmatprep.subr.mxu0 0.0
      %2256 = vmatpush1.msra.mxu0 0.0
      %2257 = vmatprep.subr.mxu0 0.0
      %2258 = vmatpush1.msra.mxu0 0.0
      %2259 = vmatprep.subr.mxu0 0.0
      %2260 = vmatpush1.msra.mxu0 0.0
      %2261 = vmatprep.subr.mxu0 0.0
      %2262 = vmatpush1.msra.mxu0 0.0
      %2263 = vmatprep.subr.mxu0 0.0
      %2264 = vmatpush1.msra.mxu0 0.0
      %2265 = vmatprep.subr.mxu0 0.0
      %2266 = vmatpush1.msra.mxu0 0.0
      %2267 = vmatprep.subr.mxu0 0.0
      %2268 = vmatpush1.msra.mxu0 0.0
      %2269 = vmatprep.subr.mxu0 0.0
      %2270 = vmatpush1.msra.mxu0 0.0
      %2271 = vmatprep.subr.mxu0 0.0
      %2272 = vmatpush1.msra.mxu0 0.0
      %2273 = vmatprep.subr.mxu0 0.0
      %2274 = vmatpush1.msra.mxu0 0.0
      %2275 = vmatprep.subr.mxu0 0.0
      %2276 = vmatpush1.msra.mxu0 0.0
      %2277 = vmatprep.subr.mxu0 0.0
      %2278 = vmatpush1.msra.mxu0 0.0
      %2279 = vmatprep.subr.mxu0 0.0
      %2280 = vmatpush1.msra.mxu0 0.0
      %2281 = vmatprep.subr.mxu0 0.0
      %2282 = vmatpush1.msra.mxu0 0.0
      %2283 = vmatprep.mubr.f32.mxu0 0.0
      %2284 = vmatmul.mubr.f32.gmra.mrb[0].mxu0 %v2060
      %v2285 = vpop.f32.mrb[0].mxu0
      %v2286 = vadd.f32 0.0, %v2285
      %v2287 = vpop.f32.mrb[0].mxu0
      %v2288 = vadd.f32 0.0, %v2287
      %2289 = vmatprep.mubr.f32.mxu0 0.0
      %2290 = vmatmul.mubr.f32.gmra.mrb[0].mxu0 %v2063
      %v2291 = vpop.f32.mrb[0].mxu0
      %v2292 = vadd.f32 0.0, %v2291
      %v2293 = vpop.f32.mrb[0].mxu0
      %v2294 = vadd.f32 0.0, %v2293
      %2295 = vdwg.mxu0
      %2296 = vmatprep.subr.mxu0 0.0
      %2297 = vmatpush1.xpose.msra.mxu0 %v2209
      %2298 = vmatprep.subr.mxu0 0.0
      %2299 = vmatpush1.xpose.msra.mxu0 %v2215
      %2300 = vmatprep.subr.mxu0 0.0
      %2301 = vmatpush1.xpose.msra.mxu0 0.0
      %2302 = vmatprep.subr.mxu0 0.0
      %2303 = vmatpush1.xpose.msra.mxu0 0.0
      %2304 = vmatprep.subr.mxu0 0.0
      %2305 = vmatpush1.xpose.msra.mxu0 0.0
      %2306 = vmatprep.subr.mxu0 0.0
      %2307 = vmatpush1.xpose.msra.mxu0 0.0
      %2308 = vmatprep.subr.mxu0 0.0
      %2309 = vmatpush1.xpose.msra.mxu0 0.0
      %2310 = vmatprep.subr.mxu0 0.0
      %2311 = vmatpush1.xpose.msra.mxu0 0.0
      %2312 = vmatprep.subr.mxu0 0.0
      %2313 = vmatpush1.xpose.msra.mxu0 0.0
      %2314 = vmatprep.subr.mxu0 0.0
      %2315 = vmatpush1.xpose.msra.mxu0 0.0
      %2316 = vmatprep.subr.mxu0 0.0
      %2317 = vmatpush1.xpose.msra.mxu0 0.0
      %2318 = vmatprep.subr.mxu0 0.0
      %2319 = vmatpush1.xpose.msra.mxu0 0.0
      %2320 = vmatprep.subr.mxu0 0.0
      %2321 = vmatpush1.xpose.msra.mxu0 0.0
      %2322 = vmatprep.subr.mxu0 0.0
      %2323 = vmatpush1.xpose.msra.mxu0 0.0
      %2324 = vmatprep.subr.mxu0 0.0
      %2325 = vmatpush1.xpose.msra.mxu0 0.0
      %2326 = vmatprep.subr.mxu0 0.0
      %2327 = vmatpush1.xpose.msra.mxu0 0.0
      %2328 = vmatprep.subr.mxu0 0.0
      %2329 = vmatpush1.xpose.msra.mxu0 0.0
      %2330 = vmatprep.subr.mxu0 0.0
      %2331 = vmatpush1.xpose.msra.mxu0 0.0
      %2332 = vmatprep.subr.mxu0 0.0
      %2333 = vmatpush1.xpose.msra.mxu0 0.0
      %2334 = vmatprep.subr.mxu0 0.0
      %2335 = vmatpush1.xpose.msra.mxu0 0.0
      %2336 = vmatprep.subr.mxu0 0.0
      %2337 = vmatpush1.xpose.msra.mxu0 0.0
      %2338 = vmatprep.subr.mxu0 0.0
      %2339 = vmatpush1.xpose.msra.mxu0 0.0
      %2340 = vmatprep.subr.mxu0 0.0
      %2341 = vmatpush1.xpose.msra.mxu0 0.0
      %2342 = vmatprep.subr.mxu0 0.0
      %2343 = vmatpush1.xpose.msra.mxu0 0.0
      %2344 = vmatprep.subr.mxu0 0.0
      %2345 = vmatpush1.xpose.msra.mxu0 0.0
      %2346 = vmatprep.subr.mxu0 0.0
      %2347 = vmatpush1.xpose.msra.mxu0 0.0
      %2348 = vmatprep.subr.mxu0 0.0
      %2349 = vmatpush1.xpose.msra.mxu0 0.0
      %2350 = vmatprep.subr.mxu0 0.0
      %2351 = vmatpush1.xpose.msra.mxu0 0.0
      %2352 = vmatprep.subr.mxu0 0.0
      %2353 = vmatpush1.xpose.msra.mxu0 0.0
      %2354 = vmatprep.subr.mxu0 0.0
      %2355 = vmatpush1.xpose.msra.mxu0 0.0
      %2356 = vmatprep.subr.mxu0 0.0
      %2357 = vmatpush1.xpose.msra.mxu0 0.0
      %2358 = vmatprep.subr.mxu0 0.0
      %2359 = vmatpush1.xpose.msra.mxu0 0.0
      %2360 = vmatprep.mubr.f32.mxu0 0.0
      %2361 = vmatmul.mubr.f32.gmra.mrb[0].mxu0 %v2132
      %v2362 = vpop.f32.mrb[0].mxu0
      %v2363 = vadd.f32 0.0, %v2362
      %v2364 = vpop.f32.mrb[0].mxu0
      %2365 = vmatprep.mubr.f32.mxu0 0.0
      %2366 = vmatmul.mubr.f32.gmra.mrb[0].mxu0 %v2138
      %v2367 = vpop.f32.mrb[0].mxu0
      %v2368 = vadd.f32 0.0, %v2367
      %v2369 = vpop.f32.mrb[0].mxu0
      %2370 = vdwg.mxu0
      %v2371 = vmul.f32 %v2363, 0.125
      %v2372 = vmul.f32 %v2368, 0.125
      %v2373 = vsel %vm1303, %v2371, -inf
      %2374 = vmax.xlane.f32.xlu0 %v2373
      %v2375 = vpop.xlane.xlu0 %2374
      %v2376 = vsel %vm1307, %v2372, -inf
      %2377 = vmax.xlane.f32.xlu0 %v2376
      %v2378 = vpop.xlane.xlu0 %2377
      %v2379 = vsub.f32 %v2371, %v2375
      %v2380 = vsub.f32 %v2372, %v2378
      %v2381 = vmul.f32 %v2379, 1.442695
      %v2382 = vpow.pop %v2381
      %v2383 = vmul.f32 %v2380, 1.442695
      %v2384 = vpow.pop %v2383
      %v2385 = vsel %vm1303, %v2382, 0.0
      %2386 = vadd.xlane.f32.xlu0 %v2385
      %v2387 = vpop.xlane.xlu0 %2386
      %v2388 = vsel %vm1307, %v2384, 0.0
      %2389 = vadd.xlane.f32.xlu0 %v2388
      %v2390 = vpop.xlane.xlu0 %2389
      %v2391 = vrcp.pop %v2387
      %v2392 = vmul.f32 %v2382, %v2391
      %v2393 = vrcp.pop %v2390
      %v2394 = vmul.f32 %v2384, %v2393
      %v2396 = vsel %vm1303, %v2392, 0
      %v2399 = vsel %vm1303, %v2394, 0
      %v2402 = vsel %vm1333, %v2292, 0
      %2404 = vmatprep.subr.mxu0 0.0
      %2405 = vmatpush1.msra.mxu0 %v2286
      %2406 = vmatprep.subr.mxu0 0.0
      %2407 = vmatpush1.msra.mxu0 %v2402
      %2408 = vmatprep.subr.mxu0 0.0
      %2409 = vmatpush1.msra.mxu0 0.0
      %2410 = vmatprep.subr.mxu0 0.0
      %2411 = vmatpush1.msra.mxu0 0.0
      %2412 = vmatprep.subr.mxu0 0.0
      %2413 = vmatpush1.msra.mxu0 0.0
      %2414 = vmatprep.subr.mxu0 0.0
      %2415 = vmatpush1.msra.mxu0 0.0
      %2416 = vmatprep.subr.mxu0 0.0
      %2417 = vmatpush1.msra.mxu0 0.0
      %2418 = vmatprep.subr.mxu0 0.0
      %2419 = vmatpush1.msra.mxu0 0.0
      %2420 = vmatprep.subr.mxu0 0.0
      %2421 = vmatpush1.msra.mxu0 0.0
      %2422 = vmatprep.subr.mxu0 0.0
      %2423 = vmatpush1.msra.mxu0 0.0
      %2424 = vmatprep.subr.mxu0 0.0
      %2425 = vmatpush1.msra.mxu0 0.0
      %2426 = vmatprep.subr.mxu0 0.0
      %2427 = vmatpush1.msra.mxu0 0.0
      %2428 = vmatprep.subr.mxu0 0.0
      %2429 = vmatpush1.msra.mxu0 0.0
      %2430 = vmatprep.subr.mxu0 0.0
      %2431 = vmatpush1.msra.mxu0 0.0
      %2432 = vmatprep.subr.mxu0 0.0
      %2433 = vmatpush1.msra.mxu0 0.0
      %2434 = vmatprep.subr.mxu0 0.0
      %2435 = vmatpush1.msra.mxu0 0.0
      %2436 = vmatprep.subr.mxu0 0.0
      %2437 = vmatpush1.msra.mxu0 0.0
      %2438 = vmatprep.subr.mxu0 0.0
      %2439 = vmatpush1.msra.mxu0 0.0
      %2440 = vmatprep.subr.mxu0 0.0
      %2441 = vmatpush1.msra.mxu0 0.0
      %2442 = vmatprep.subr.mxu0 0.0
      %2443 = vmatpush1.msra.mxu0 0.0
      %2444 = vmatprep.subr.mxu0 0.0
      %2445 = vmatpush1.msra.mxu0 0.0
      %2446 = vmatprep.subr.mxu0 0.0
      %2447 = vmatpush1.msra.mxu0 0.0
      %2448 = vmatprep.subr.mxu0 0.0
      %2449 = vmatpush1.msra.mxu0 0.0
      %2450 = vmatprep.subr.mxu0 0.0
      %2451 = vmatpush1.msra.mxu0 0.0
      %2452 = vmatprep.subr.mxu0 0.0
      %2453 = vmatpush1.msra.mxu0 0.0
      %2454 = vmatprep.subr.mxu0 0.0
      %2455 = vmatpush1.msra.mxu0 0.0
      %2456 = vmatprep.subr.mxu0 0.0
      %2457 = vmatpush1.msra.mxu0 0.0
      %2458 = vmatprep.subr.mxu0 0.0
      %2459 = vmatpush1.msra.mxu0 0.0
      %2460 = vmatprep.subr.mxu0 0.0
      %2461 = vmatpush1.msra.mxu0 0.0
      %2462 = vmatprep.subr.mxu0 0.0
      %2463 = vmatpush1.msra.mxu0 0.0
      %2464 = vmatprep.subr.mxu0 0.0
      %2465 = vmatpush1.msra.mxu0 0.0
      %2466 = vmatprep.subr.mxu0 0.0
      %2467 = vmatpush1.msra.mxu0 0.0
      %2468 = vmatprep.mubr.f32.mxu0 0.0
      %2469 = vmatmul.mubr.f32.gmra.mrb[0].mxu0 %v2396
      %v2470 = vpop.f32.mrb[0].mxu0
      %v2471 = vadd.f32 0.0, %v2470
      %v2472 = vpop.f32.mrb[0].mxu0
      %2473 = vmatprep.mubr.f32.mxu0 0.0
      %2474 = vmatmul.mubr.f32.gmra.mrb[0].mxu0 %v2399
      %v2475 = vpop.f32.mrb[0].mxu0
      %v2476 = vadd.f32 0.0, %v2475
      %v2477 = vpop.f32.mrb[0].mxu0
      %2478 = vdwg.mxu0
      %2479 = vmatprep.subr.mxu0 0.0
      %2480 = vmatpush1.xpose.msra.mxu0 %v2211
      %2481 = vmatprep.subr.mxu0 0.0
      %2482 = vmatpush1.xpose.msra.mxu0 %v2217
      %2483 = vmatprep.subr.mxu0 0.0
      %2484 = vmatpush1.xpose.msra.mxu0 0.0
      %2485 = vmatprep.subr.mxu0 0.0
      %2486 = vmatpush1.xpose.msra.mxu0 0.0
      %2487 = vmatprep.subr.mxu0 0.0
      %2488 = vmatpush1.xpose.msra.mxu0 0.0
      %2489 = vmatprep.subr.mxu0 0.0
      %2490 = vmatpush1.xpose.msra.mxu0 0.0
      %2491 = vmatprep.subr.mxu0 0.0
      %2492 = vmatpush1.xpose.msra.mxu0 0.0
      %2493 = vmatprep.subr.mxu0 0.0
      %2494 = vmatpush1.xpose.msra.mxu0 0.0
      %2495 = vmatprep.subr.mxu0 0.0
      %2496 = vmatpush1.xpose.msra.mxu0 0.0
      %2497 = vmatprep.subr.mxu0 0.0
      %2498 = vmatpush1.xpose.msra.mxu0 0.0
      %2499 = vmatprep.subr.mxu0 0.0
      %2500 = vmatpush1.xpose.msra.mxu0 0.0
      %2501 = vmatprep.subr.mxu0 0.0
      %2502 = vmatpush1.xpose.msra.mxu0 0.0
      %2503 = vmatprep.subr.mxu0 0.0
      %2504 = vmatpush1.xpose.msra.mxu0 0.0
      %2505 = vmatprep.subr.mxu0 0.0
      %2506 = vmatpush1.xpose.msra.mxu0 0.0
      %2507 = vmatprep.subr.mxu0 0.0
      %2508 = vmatpush1.xpose.msra.mxu0 0.0
      %2509 = vmatprep.subr.mxu0 0.0
      %2510 = vmatpush1.xpose.msra.mxu0 0.0
      %2511 = vmatprep.subr.mxu0 0.0
      %2512 = vmatpush1.xpose.msra.mxu0 0.0
      %2513 = vmatprep.subr.mxu0 0.0
      %2514 = vmatpush1.xpose.msra.mxu0 0.0
      %2515 = vmatprep.subr.mxu0 0.0
      %2516 = vmatpush1.xpose.msra.mxu0 0.0
      %2517 = vmatprep.subr.mxu0 0.0
      %2518 = vmatpush1.xpose.msra.mxu0 0.0
      %2519 = vmatprep.subr.mxu0 0.0
      %2520 = vmatpush1.xpose.msra.mxu0 0.0
      %2521 = vmatprep.subr.mxu0 0.0
      %2522 = vmatpush1.xpose.msra.mxu0 0.0
      %2523 = vmatprep.subr.mxu0 0.0
      %2524 = vmatpush1.xpose.msra.mxu0 0.0
      %2525 = vmatprep.subr.mxu0 0.0
      %2526 = vmatpush1.xpose.msra.mxu0 0.0
      %2527 = vmatprep.subr.mxu0 0.0
      %2528 = vmatpush1.xpose.msra.mxu0 0.0
      %2529 = vmatprep.subr.mxu0 0.0
      %2530 = vmatpush1.xpose.msra.mxu0 0.0
      %2531 = vmatprep.subr.mxu0 0.0
      %2532 = vmatpush1.xpose.msra.mxu0 0.0
      %2533 = vmatprep.subr.mxu0 0.0
      %2534 = vmatpush1.xpose.msra.mxu0 0.0
      %2535 = vmatprep.subr.mxu0 0.0
      %2536 = vmatpush1.xpose.msra.mxu0 0.0
      %2537 = vmatprep.subr.mxu0 0.0
      %2538 = vmatpush1.xpose.msra.mxu0 0.0
      %2539 = vmatprep.subr.mxu0 0.0
      %2540 = vmatpush1.xpose.msra.mxu0 0.0
      %2541 = vmatprep.subr.mxu0 0.0
      %2542 = vmatpush1.xpose.msra.mxu0 0.0
      %2543 = vmatprep.mubr.f32.mxu0 0.0
      %2544 = vmatmul.mubr.f32.gmra.mrb[0].mxu0 %v2134
      %v2545 = vpop.f32.mrb[0].mxu0
      %v2546 = vadd.f32 0.0, %v2545
      %v2547 = vpop.f32.mrb[0].mxu0
      %2548 = vmatprep.mubr.f32.mxu0 0.0
      %2549 = vmatmul.mubr.f32.gmra.mrb[0].mxu0 %v2140
      %v2550 = vpop.f32.mrb[0].mxu0
      %v2551 = vadd.f32 0.0, %v2550
      %v2552 = vpop.f32.mrb[0].mxu0
      %2553 = vdwg.mxu0
      %v2554 = vmul.f32 %v2546, 0.125
      %v2555 = vmul.f32 %v2551, 0.125
      %v2556 = vsel %vm1303, %v2554, -inf
      %2557 = vmax.xlane.f32.xlu0 %v2556
      %v2558 = vpop.xlane.xlu0 %2557
      %v2559 = vsel %vm1307, %v2555, -inf
      %2560 = vmax.xlane.f32.xlu0 %v2559
      %v2561 = vpop.xlane.xlu0 %2560
      %v2562 = vsub.f32 %v2554, %v2558
      %v2563 = vsub.f32 %v2555, %v2561
      %v2564 = vmul.f32 %v2562, 1.442695
      %v2565 = vpow.pop %v2564
      %v2566 = vmul.f32 %v2563, 1.442695
      %v2567 = vpow.pop %v2566
      %v2568 = vsel %vm1303, %v2565, 0.0
      %2569 = vadd.xlane.f32.xlu0 %v2568
      %v2570 = vpop.xlane.xlu0 %2569
      %v2571 = vsel %vm1307, %v2567, 0.0
      %2572 = vadd.xlane.f32.xlu0 %v2571
      %v2573 = vpop.xlane.xlu0 %2572
      %v2574 = vrcp.pop %v2570
      %v2575 = vmul.f32 %v2565, %v2574
      %v2576 = vrcp.pop %v2573
      %v2577 = vmul.f32 %v2567, %v2576
      %v2579 = vsel %vm1303, %v2575, 0
      %v2582 = vsel %vm1303, %v2577, 0
      %v2585 = vsel %vm1333, %v2294, 0
      %2587 = vmatprep.subr.mxu0 0.0
      %2588 = vmatpush1.msra.mxu0 %v2288
      %2589 = vmatprep.subr.mxu0 0.0
      %2590 = vmatpush1.msra.mxu0 %v2585
      %2591 = vmatprep.subr.mxu0 0.0
      %2592 = vmatpush1.msra.mxu0 0.0
      %2593 = vmatprep.subr.mxu0 0.0
      %2594 = vmatpush1.msra.mxu0 0.0
      %2595 = vmatprep.subr.mxu0 0.0
      %2596 = vmatpush1.msra.mxu0 0.0
      %2597 = vmatprep.subr.mxu0 0.0
      %2598 = vmatpush1.msra.mxu0 0.0
      %2599 = vmatprep.subr.mxu0 0.0
      %2600 = vmatpush1.msra.mxu0 0.0
      %2601 = vmatprep.subr.mxu0 0.0
      %2602 = vmatpush1.msra.mxu0 0.0
      %2603 = vmatprep.subr.mxu0 0.0
      %2604 = vmatpush1.msra.mxu0 0.0
      %2605 = vmatprep.subr.mxu0 0.0
      %2606 = vmatpush1.msra.mxu0 0.0
      %2607 = vmatprep.subr.mxu0 0.0
      %2608 = vmatpush1.msra.mxu0 0.0
      %2609 = vmatprep.subr.mxu0 0.0
      %2610 = vmatpush1.msra.mxu0 0.0
      %2611 = vmatprep.subr.mxu0 0.0
      %2612 = vmatpush1.msra.mxu0 0.0
      %2613 = vmatprep.subr.mxu0 0.0
      %2614 = vmatpush1.msra.mxu0 0.0
      %2615 = vmatprep.subr.mxu0 0.0
      %2616 = vmatpush1.msra.mxu0 0.0
      %2617 = vmatprep.subr.mxu0 0.0
      %2618 = vmatpush1.msra.mxu0 0.0
      %2619 = vmatprep.subr.mxu0 0.0
      %2620 = vmatpush1.msra.mxu0 0.0
      %2621 = vmatprep.subr.mxu0 0.0
      %2622 = vmatpush1.msra.mxu0 0.0
      %2623 = vmatprep.subr.mxu0 0.0
      %2624 = vmatpush1.msra.mxu0 0.0
      %2625 = vmatprep.subr.mxu0 0.0
      %2626 = vmatpush1.msra.mxu0 0.0
      %2627 = vmatprep.subr.mxu0 0.0
      %2628 = vmatpush1.msra.mxu0 0.0
      %2629 = vmatprep.subr.mxu0 0.0
      %2630 = vmatpush1.msra.mxu0 0.0
      %2631 = vmatprep.subr.mxu0 0.0
      %2632 = vmatpush1.msra.mxu0 0.0
      %2633 = vmatprep.subr.mxu0 0.0
      %2634 = vmatpush1.msra.mxu0 0.0
      %2635 = vmatprep.subr.mxu0 0.0
      %2636 = vmatpush1.msra.mxu0 0.0
      %2637 = vmatprep.subr.mxu0 0.0
      %2638 = vmatpush1.msra.mxu0 0.0
      %2639 = vmatprep.subr.mxu0 0.0
      %2640 = vmatpush1.msra.mxu0 0.0
      %2641 = vmatprep.subr.mxu0 0.0
      %2642 = vmatpush1.msra.mxu0 0.0
      %2643 = vmatprep.subr.mxu0 0.0
      %2644 = vmatpush1.msra.mxu0 0.0
      %2645 = vmatprep.subr.mxu0 0.0
      %2646 = vmatpush1.msra.mxu0 0.0
      %2647 = vmatprep.subr.mxu0 0.0
      %2648 = vmatpush1.msra.mxu0 0.0
      %2649 = vmatprep.subr.mxu0 0.0
      %2650 = vmatpush1.msra.mxu0 0.0
      %2651 = vmatprep.mubr.f32.mxu0 0.0
      %2652 = vmatmul.mubr.f32.gmra.mrb[0].mxu0 %v2579
      %v2653 = vpop.f32.mrb[0].mxu0
      %v2654 = vadd.f32 0.0, %v2653
      %v2655 = vpop.f32.mrb[0].mxu0
      %2656 = vmatprep.mubr.f32.mxu0 0.0
      %2657 = vmatmul.mubr.f32.gmra.mrb[0].mxu0 %v2582
      %v2658 = vpop.f32.mrb[0].mxu0
      %v2659 = vadd.f32 0.0, %v2658
      %v2660 = vpop.f32.mrb[0].mxu0
      %2661 = vdwg.mxu0
      %v2662 = vld [vmem:[%s1993 + $0x2] sm:$0x1]
      %v2663 = vlaneseq
      %v2664 = vshrl.u32 %v2663, 7
      %v2665 = vsub.s32 0, %v2664
      %v2666 = vrot.slane %v2662, %v2665
      %v2667 = vadd.f32 %v1991, %v2666
      %v2668 = vadd.f32 %v1992, %v2666
      %s2669 = scalar_lea.vmem %s7, 256
      %v2670 = vld [vmem:[%s2669] sm:$0xff]
      %v2671 = vld [vmem:[%s2669 + $0x8] sm:$0xff]
      %v2672 = vld [vmem:[%s2669 + $0x10] sm:$0xff]
      %v2673 = vld [vmem:[%s2669 + $0x18] sm:$0xff]
      %v2674 = vld [vmem:[%s2669 + $0x20] sm:$0xff]
      %v2675 = vld [vmem:[%s2669 + $0x28] sm:$0xff]
      %v2676 = vld [vmem:[%s2669 + $0x30] sm:$0xff]
      %v2677 = vld [vmem:[%s2669 + $0x38] sm:$0xff]
      %v2678 = vld [vmem:[%s2669 + $0x40] sm:$0xff]
      %v2679 = vld [vmem:[%s2669 + $0x48] sm:$0xff]
      %v2680 = vld [vmem:[%s2669 + $0x50] sm:$0xff]
      %v2681 = vld [vmem:[%s2669 + $0x58] sm:$0xff]
      %v2682 = vld [vmem:[%s2669 + $0x60] sm:$0xff]
      %v2683 = vld [vmem:[%s2669 + $0x68] sm:$0xff]
      %v2684 = vld [vmem:[%s2669 + $0x70] sm:$0xff]
      %v2685 = vld [vmem:[%s2669 + $0x78] sm:$0xff]
      %v2686 = vld [vmem:[%s2669 + $0x80] sm:$0xff]
      %v2687 = vld [vmem:[%s2669 + $0x88] sm:$0xff]
      %v2688 = vld [vmem:[%s2669 + $0x90] sm:$0xff]
      %v2689 = vld [vmem:[%s2669 + $0x98] sm:$0xff]
      %v2690 = vld [vmem:[%s2669 + $0xa0] sm:$0xff]
      %v2691 = vld [vmem:[%s2669 + $0xa8] sm:$0xff]
      %v2692 = vld [vmem:[%s2669 + $0xb0] sm:$0xff]
      %v2693 = vld [vmem:[%s2669 + $0xb8] sm:$0xff]
      %v2694 = vld [vmem:[%s2669 + $0xc0] sm:$0xff]
      %v2695 = vld [vmem:[%s2669 + $0xc8] sm:$0xff]
      %v2696 = vld [vmem:[%s2669 + $0xd0] sm:$0xff]
      %v2697 = vld [vmem:[%s2669 + $0xd8] sm:$0xff]
      %v2698 = vld [vmem:[%s2669 + $0xe0] sm:$0xff]
      %v2699 = vld [vmem:[%s2669 + $0xe8] sm:$0xff]
      %v2700 = vld [vmem:[%s2669 + $0xf0] sm:$0xff]
      %v2701 = vld [vmem:[%s2669 + $0xf8] sm:$0xff]
      %2702 = vmatprep.subr.mxu0 0.0
      %2703 = vmatpush1.msra.mxu0 %v2670
      %2704 = vmatprep.subr.mxu0 0.0
      %2705 = vmatpush1.msra.mxu0 %v2671
      %2706 = vmatprep.subr.mxu0 0.0
      %2707 = vmatpush1.msra.mxu0 %v2672
      %2708 = vmatprep.subr.mxu0 0.0
      %2709 = vmatpush1.msra.mxu0 %v2673
      %2710 = vmatprep.subr.mxu0 0.0
      %2711 = vmatpush1.msra.mxu0 %v2674
      %2712 = vmatprep.subr.mxu0 0.0
      %2713 = vmatpush1.msra.mxu0 %v2675
      %2714 = vmatprep.subr.mxu0 0.0
      %2715 = vmatpush1.msra.mxu0 %v2676
      %2716 = vmatprep.subr.mxu0 0.0
      %2717 = vmatpush1.msra.mxu0 %v2677
      %2718 = vmatprep.subr.mxu0 0.0
      %2719 = vmatpush1.msra.mxu0 %v2678
      %2720 = vmatprep.subr.mxu0 0.0
      %2721 = vmatpush1.msra.mxu0 %v2679
      %2722 = vmatprep.subr.mxu0 0.0
      %2723 = vmatpush1.msra.mxu0 %v2680
      %2724 = vmatprep.subr.mxu0 0.0
      %2725 = vmatpush1.msra.mxu0 %v2681
      %2726 = vmatprep.subr.mxu0 0.0
      %2727 = vmatpush1.msra.mxu0 %v2682
      %2728 = vmatprep.subr.mxu0 0.0
      %2729 = vmatpush1.msra.mxu0 %v2683
      %2730 = vmatprep.subr.mxu0 0.0
      %2731 = vmatpush1.msra.mxu0 %v2684
      %2732 = vmatprep.subr.mxu0 0.0
      %2733 = vmatpush1.msra.mxu0 %v2685
      %2734 = vmatprep.subr.mxu0 0.0
      %2735 = vmatpush1.msra.mxu0 %v2686
      %2736 = vmatprep.subr.mxu0 0.0
      %2737 = vmatpush1.msra.mxu0 %v2687
      %2738 = vmatprep.subr.mxu0 0.0
      %2739 = vmatpush1.msra.mxu0 %v2688
      %2740 = vmatprep.subr.mxu0 0.0
      %2741 = vmatpush1.msra.mxu0 %v2689
      %2742 = vmatprep.subr.mxu0 0.0
      %2743 = vmatpush1.msra.mxu0 %v2690
      %2744 = vmatprep.subr.mxu0 0.0
      %2745 = vmatpush1.msra.mxu0 %v2691
      %2746 = vmatprep.subr.mxu0 0.0
      %2747 = vmatpush1.msra.mxu0 %v2692
      %2748 = vmatprep.subr.mxu0 0.0
      %2749 = vmatpush1.msra.mxu0 %v2693
      %2750 = vmatprep.subr.mxu0 0.0
      %2751 = vmatpush1.msra.mxu0 %v2694
      %2752 = vmatprep.subr.mxu0 0.0
      %2753 = vmatpush1.msra.mxu0 %v2695
      %2754 = vmatprep.subr.mxu0 0.0
      %2755 = vmatpush1.msra.mxu0 %v2696
      %2756 = vmatprep.subr.mxu0 0.0
      %2757 = vmatpush1.msra.mxu0 %v2697
      %2758 = vmatprep.subr.mxu0 0.0
      %2759 = vmatpush1.msra.mxu0 %v2698
      %2760 = vmatprep.subr.mxu0 0.0
      %2761 = vmatpush1.msra.mxu0 %v2699
      %2762 = vmatprep.subr.mxu0 0.0
      %2763 = vmatpush1.msra.mxu0 %v2700
      %2764 = vmatprep.subr.mxu0 0.0
      %2765 = vmatpush1.msra.mxu0 %v2701
      %2766 = vmatprep.mubr.f32.mxu0 %v2654
      %2767 = vmatmul.mubr.f32.gmra.mrb[0].mxu0 %v2471
      %v2768 = vpop.f32.mrb[0].mxu0
      %v2769 = vadd.f32 0.0, %v2768
      %v2770 = vpop.f32.mrb[0].mxu0
      %2771 = vmatprep.mubr.f32.mxu0 %v2659
      %2772 = vmatmul.mubr.f32.gmra.mrb[0].mxu0 %v2476
      %v2773 = vpop.f32.mrb[0].mxu0
      %v2774 = vadd.f32 0.0, %v2773
      %v2775 = vpop.f32.mrb[0].mxu0
      %2776 = vdwg.mxu0
      %v2777 = vadd.f32 %v2667, %v2769
      %v2778 = vadd.f32 %v2668, %v2774
      %v2779 = vld [vmem:[%s1993 + $0x3] sm:$0x1]
      %v2780 = vld [vmem:[%s1993 + $0x4] sm:$0x1]
      %v2781 = vsel %vm873, %v2777, 0.0
      %2782 = vadd.xlane.f32.xlu0 %v2781
      %v2783 = vpop.xlane.xlu0 %2782
      %v2784 = vsel %vm877, %v2778, 0.0
      %2785 = vadd.xlane.f32.xlu0 %v2784
      %v2786 = vpop.xlane.xlu0 %2785
      %v2787 = vmul.f32 %v2783, %v881
      %v2788 = vmul.f32 %v2786, %v881
      %v2789 = vsub.f32 %v2777, %v2787
      %v2790 = vsub.f32 %v2778, %v2788
      %v2791 = vmul.f32 %v2789, %v2789
      %v2792 = vmul.f32 %v2790, %v2790
      %v2793 = vsel %vm873, %v2791, 0.0
      %2794 = vadd.xlane.f32.xlu0 %v2793
      %v2795 = vpop.xlane.xlu0 %2794
      %v2796 = vsel %vm877, %v2792, 0.0
      %2797 = vadd.xlane.f32.xlu0 %v2796
      %v2798 = vpop.xlane.xlu0 %2797
      %v2799 = vmul.f32 %v2795, %v881
      %v2800 = vmul.f32 %v2798, %v881
      %v2801 = vadd.f32 %v2799, 1e-05
      %v2802 = vadd.f32 %v2800, 1e-05
      %v2803 = vrsqrt.pop %v2801
      %v2804 = vrsqrt.pop %v2802
      %v2805 = vmul.f32 %v2789, %v2803
      %v2806 = vmul.f32 %v2790, %v2804
      %v2807 = vlaneseq
      %v2808 = vshrl.u32 %v2807, 7
      %v2809 = vsub.s32 0, %v2808
      %v2810 = vrot.slane %v2779, %v2809
      %v2811 = vmul.f32 %v2805, %v2810
      %v2812 = vmul.f32 %v2806, %v2810
      %v2813 = vlaneseq
      %v2814 = vshrl.u32 %v2813, 7
      %v2815 = vsub.s32 0, %v2814
      %v2816 = vrot.slane %v2780, %v2815
      %v2817 = vadd.f32 %v2811, %v2816
      %v2818 = vadd.f32 %v2812, %v2816
      %s2819 = scalar_lea.vmem %s8, 32
      %v2820 = vld [vmem:[%s2819] sm:$0xff]
      %v2821 = vld [vmem:[%s2819 + $0x8] sm:$0xff]
      %v2822 = vld [vmem:[%s2819 + $0x10] sm:$0xff]
      %v2823 = vld [vmem:[%s2819 + $0x18] sm:$0xff]
      %s2824 = scalar_lea.vmem %s9, 1
      %v2825 = vld [vmem:[%s2824] sm:$0x1]
      %v2827 = vlaneseq
      %v2828 = vshrl.u32 %v2827, 7
      %v2829 = vsub.s32 0, %v2828
      %v2830 = vrot.slane %v2825, %v2829
      %v2833 = vsel %vm873, %v2817, 0
      %v2836 = vsel %vm873, %v2818, 0
      %2838 = vmatprep.subr.mxu0 0.0
      %2839 = vmatpush1.msra.mxu0 %v2820
      %2840 = vmatprep.subr.mxu0 0.0
      %2841 = vmatpush1.msra.mxu0 %v2821
      %2842 = vmatprep.subr.mxu0 0.0
      %2843 = vmatpush1.msra.mxu0 %v2822
      %2844 = vmatprep.subr.mxu0 0.0
      %2845 = vmatpush1.msra.mxu0 %v2823
      %2846 = vmatprep.subr.mxu0 0.0
      %2847 = vmatpush1.msra.mxu0 0.0
      %2848 = vmatprep.subr.mxu0 0.0
      %2849 = vmatpush1.msra.mxu0 0.0
      %2850 = vmatprep.subr.mxu0 0.0
      %2851 = vmatpush1.msra.mxu0 0.0
      %2852 = vmatprep.subr.mxu0 0.0
      %2853 = vmatpush1.msra.mxu0 0.0
      %2854 = vmatprep.subr.mxu0 0.0
      %2855 = vmatpush1.msra.mxu0 0.0
      %2856 = vmatprep.subr.mxu0 0.0
      %2857 = vmatpush1.msra.mxu0 0.0
      %2858 = vmatprep.subr.mxu0 0.0
      %2859 = vmatpush1.msra.mxu0 0.0
      %2860 = vmatprep.subr.mxu0 0.0
      %2861 = vmatpush1.msra.mxu0 0.0
      %2862 = vmatprep.subr.mxu0 0.0
      %2863 = vmatpush1.msra.mxu0 0.0
      %2864 = vmatprep.subr.mxu0 0.0
      %2865 = vmatpush1.msra.mxu0 0.0
      %2866 = vmatprep.subr.mxu0 0.0
      %2867 = vmatpush1.msra.mxu0 0.0
      %2868 = vmatprep.subr.mxu0 0.0
      %2869 = vmatpush1.msra.mxu0 0.0
      %2870 = vmatprep.subr.mxu0 0.0
      %2871 = vmatpush1.msra.mxu0 0.0
      %2872 = vmatprep.subr.mxu0 0.0
      %2873 = vmatpush1.msra.mxu0 0.0
      %2874 = vmatprep.subr.mxu0 0.0
      %2875 = vmatpush1.msra.mxu0 0.0
      %2876 = vmatprep.subr.mxu0 0.0
      %2877 = vmatpush1.msra.mxu0 0.0
      %2878 = vmatprep.subr.mxu0 0.0
      %2879 = vmatpush1.msra.mxu0 0.0
      %2880 = vmatprep.subr.mxu0 0.0
      %2881 = vmatpush1.msra.mxu0 0.0
      %2882 = vmatprep.subr.mxu0 0.0
      %2883 = vmatpush1.msra.mxu0 0.0
      %2884 = vmatprep.subr.mxu0 0.0
      %2885 = vmatpush1.msra.mxu0 0.0
      %2886 = vmatprep.subr.mxu0 0.0
      %2887 = vmatpush1.msra.mxu0 0.0
      %2888 = vmatprep.subr.mxu0 0.0
      %2889 = vmatpush1.msra.mxu0 0.0
      %2890 = vmatprep.subr.mxu0 0.0
      %2891 = vmatpush1.msra.mxu0 0.0
      %2892 = vmatprep.subr.mxu0 0.0
      %2893 = vmatpush1.msra.mxu0 0.0
      %2894 = vmatprep.subr.mxu0 0.0
      %2895 = vmatpush1.msra.mxu0 0.0
      %2896 = vmatprep.subr.mxu0 0.0
      %2897 = vmatpush1.msra.mxu0 0.0
      %2898 = vmatprep.subr.mxu0 0.0
      %2899 = vmatpush1.msra.mxu0 0.0
      %2900 = vmatprep.subr.mxu0 0.0
      %2901 = vmatpush1.msra.mxu0 0.0
      %2902 = vmatprep.mubr.f32.mxu0 0.0
      %2903 = vmatmul.mubr.f32.gmra.mrb[0].mxu0 %v2833
      %v2904 = vpop.f32.mrb[0].mxu0
      %v2905 = vadd.f32 %v2830, %v2904
      %v2906 = vpop.f32.mrb[0].mxu0
      %2907 = vmatprep.mubr.f32.mxu0 0.0
      %2908 = vmatmul.mubr.f32.gmra.mrb[0].mxu0 %v2836
      %v2909 = vpop.f32.mrb[0].mxu0
      %v2910 = vadd.f32 %v2830, %v2909
      %v2911 = vpop.f32.mrb[0].mxu0
      %2912 = vdwg.mxu0
      %v2913 = vmul.f32 %v2905, 0.5
      %v2914 = vmul.f32 %v2910, 0.5
      %v2915 = vmul.f32 %v2905, 0.70710677
      %v2916 = vmul.f32 %v2910, 0.70710677
      %vm2917 = vcmp.lt.f32.partialorder %v2915, 0.0
      %vm2918 = vcmp.lt.f32.partialorder %v2916, 0.0
      %v2919 = vsel %vm2917, -1.0, 1.0
      %v2920 = vsel %vm2918, -1.0, 1.0
      %v2921 = vand.u32 2147483647, %v2915
      %v2922 = vand.u32 2147483647, %v2916
      %v2923 = vmul.f32 %v2921, 0.3275911
      %v2924 = vmul.f32 %v2922, 0.3275911
      %v2925 = vadd.f32 %v2923, 1.0
      %v2926 = vadd.f32 %v2924, 1.0
      %v2927 = vrcp.pop %v2925
      %v2928 = vmul.f32 1.0, %v2927
      %v2929 = vrcp.pop %v2926
      %v2930 = vmul.f32 1.0, %v2929
      %v2931 = vmul.f32 %v2928, 1.0614054
      %v2932 = vmul.f32 %v2930, 1.0614054
      %v2933 = vadd.f32 %v2931, -1.4531521
      %v2934 = vadd.f32 %v2932, -1.4531521
      %v2935 = vmul.f32 %v2928, %v2933
      %v2936 = vmul.f32 %v2930, %v2934
      %v2937 = vadd.f32 %v2935, 1.4214138
      %v2938 = vadd.f32 %v2936, 1.4214138
      %v2939 = vmul.f32 %v2928, %v2937
      %v2940 = vmul.f32 %v2930, %v2938
      %v2941 = vadd.f32 %v2939, -0.28449672
      %v2942 = vadd.f32 %v2940, -0.28449672
      %v2943 = vmul.f32 %v2928, %v2941
      %v2944 = vmul.f32 %v2930, %v2942
      %v2945 = vadd.f32 %v2943, 0.2548296
      %v2946 = vadd.f32 %v2944, 0.2548296
      %v2947 = vmul.f32 %v2928, %v2945
      %v2948 = vmul.f32 %v2930, %v2946
      %v2949 = vsub.f32 0.0, %v2921
      %v2950 = vsub.f32 0.0, %v2922
      %v2951 = vmul.f32 %v2949, %v2921
      %v2952 = vmul.f32 %v2950, %v2922
      %v2953 = vmul.f32 %v2951, 1.442695
      %v2954 = vpow.pop %v2953
      %v2955 = vmul.f32 %v2952, 1.442695
      %v2956 = vpow.pop %v2955
      %v2957 = vmul.f32 %v2947, %v2954
      %v2958 = vmul.f32 %v2948, %v2956
      %v2959 = vsub.f32 1.0, %v2957
      %v2960 = vsub.f32 1.0, %v2958
      %v2961 = vmul.f32 %v2919, %v2959
      %v2962 = vmul.f32 %v2920, %v2960
      %v2963 = vadd.f32 %v2961, 1.0
      %v2964 = vadd.f32 %v2962, 1.0
      %v2965 = vmul.f32 %v2913, %v2963
      %v2966 = vmul.f32 %v2914, %v2964
      %s2967 = scalar_lea.vmem %s10, 4
      %v2968 = vld [vmem:[%s2967] sm:$0xf]
      %v2970 = vsel %vm1898, %v2965, 0
      %v2973 = vsel %vm1898, %v2966, 0
      %v2976 = vsel %vm1905, %v2968, 0
      %2978 = vmatprep.subr.mxu0 0.0
      %2979 = vmatpush1.msra.mxu0 %v2976
      %2980 = vmatprep.subr.mxu0 0.0
      %2981 = vmatpush1.msra.mxu0 0.0
      %2982 = vmatprep.subr.mxu0 0.0
      %2983 = vmatpush1.msra.mxu0 0.0
      %2984 = vmatprep.subr.mxu0 0.0
      %2985 = vmatpush1.msra.mxu0 0.0
      %2986 = vmatprep.subr.mxu0 0.0
      %2987 = vmatpush1.msra.mxu0 0.0
      %2988 = vmatprep.subr.mxu0 0.0
      %2989 = vmatpush1.msra.mxu0 0.0
      %2990 = vmatprep.subr.mxu0 0.0
      %2991 = vmatpush1.msra.mxu0 0.0
      %2992 = vmatprep.subr.mxu0 0.0
      %2993 = vmatpush1.msra.mxu0 0.0
      %2994 = vmatprep.subr.mxu0 0.0
      %2995 = vmatpush1.msra.mxu0 0.0
      %2996 = vmatprep.subr.mxu0 0.0
      %2997 = vmatpush1.msra.mxu0 0.0
      %2998 = vmatprep.subr.mxu0 0.0
      %2999 = vmatpush1.msra.mxu0 0.0
      %3000 = vmatprep.subr.mxu0 0.0
      %3001 = vmatpush1.msra.mxu0 0.0
      %3002 = vmatprep.subr.mxu0 0.0
      %3003 = vmatpush1.msra.mxu0 0.0
      %3004 = vmatprep.subr.mxu0 0.0
      %3005 = vmatpush1.msra.mxu0 0.0
      %3006 = vmatprep.subr.mxu0 0.0
      %3007 = vmatpush1.msra.mxu0 0.0
      %3008 = vmatprep.subr.mxu0 0.0
      %3009 = vmatpush1.msra.mxu0 0.0
      %3010 = vmatprep.subr.mxu0 0.0
      %3011 = vmatpush1.msra.mxu0 0.0
      %3012 = vmatprep.subr.mxu0 0.0
      %3013 = vmatpush1.msra.mxu0 0.0
      %3014 = vmatprep.subr.mxu0 0.0
      %3015 = vmatpush1.msra.mxu0 0.0
      %3016 = vmatprep.subr.mxu0 0.0
      %3017 = vmatpush1.msra.mxu0 0.0
      %3018 = vmatprep.subr.mxu0 0.0
      %3019 = vmatpush1.msra.mxu0 0.0
      %3020 = vmatprep.subr.mxu0 0.0
      %3021 = vmatpush1.msra.mxu0 0.0
      %3022 = vmatprep.subr.mxu0 0.0
      %3023 = vmatpush1.msra.mxu0 0.0
      %3024 = vmatprep.subr.mxu0 0.0
      %3025 = vmatpush1.msra.mxu0 0.0
      %3026 = vmatprep.subr.mxu0 0.0
      %3027 = vmatpush1.msra.mxu0 0.0
      %3028 = vmatprep.subr.mxu0 0.0
      %3029 = vmatpush1.msra.mxu0 0.0
      %3030 = vmatprep.subr.mxu0 0.0
      %3031 = vmatpush1.msra.mxu0 0.0
      %3032 = vmatprep.subr.mxu0 0.0
      %3033 = vmatpush1.msra.mxu0 0.0
      %3034 = vmatprep.subr.mxu0 0.0
      %3035 = vmatpush1.msra.mxu0 0.0
      %3036 = vmatprep.subr.mxu0 0.0
      %3037 = vmatpush1.msra.mxu0 0.0
      %3038 = vmatprep.subr.mxu0 0.0
      %3039 = vmatpush1.msra.mxu0 0.0
      %3040 = vmatprep.subr.mxu0 0.0
      %3041 = vmatpush1.msra.mxu0 0.0
      %3042 = vmatprep.mubr.f32.mxu0 0.0
      %3043 = vmatmul.mubr.f32.gmra.mrb[0].mxu0 %v2970
      %v3044 = vpop.f32.mrb[0].mxu0
      %v3045 = vadd.f32 0.0, %v3044
      %v3046 = vpop.f32.mrb[0].mxu0
      %3047 = vmatprep.mubr.f32.mxu0 0.0
      %3048 = vmatmul.mubr.f32.gmra.mrb[0].mxu0 %v2973
      %v3049 = vpop.f32.mrb[0].mxu0
      %v3050 = vadd.f32 0.0, %v3049
      %v3051 = vpop.f32.mrb[0].mxu0
      %3052 = vdwg.mxu0
      %v3053 = vadd.f32 %v2777, %v3045
      %v3054 = vadd.f32 %v2778, %v3050
      %v3055 = vld [vmem:[%s1993 + $0x5] sm:$0x1]
      %v3056 = vlaneseq
      %v3057 = vshrl.u32 %v3056, 7
      %v3058 = vsub.s32 0, %v3057
      %v3059 = vrot.slane %v3055, %v3058
      %v3060 = vadd.f32 %v3053, %v3059
      %v3061 = vadd.f32 %v3054, %v3059
      %v3062 = vld [vmem:[%s11] sm:$0x1]
      %v3063 = vld [vmem:[%s11 + $0x1] sm:$0x1]
      %v3064 = vsel %vm873, %v3060, 0.0
      %3065 = vadd.xlane.f32.xlu0 %v3064
      %v3066 = vpop.xlane.xlu0 %3065
      %v3067 = vsel %vm877, %v3061, 0.0
      %3068 = vadd.xlane.f32.xlu0 %v3067
      %v3069 = vpop.xlane.xlu0 %3068
      %v3070 = vmul.f32 %v3066, %v881
      %v3071 = vmul.f32 %v3069, %v881
      %v3072 = vsub.f32 %v3060, %v3070
      %v3073 = vsub.f32 %v3061, %v3071
      %v3074 = vmul.f32 %v3072, %v3072
      %v3075 = vmul.f32 %v3073, %v3073
      %v3076 = vsel %vm873, %v3074, 0.0
      %3077 = vadd.xlane.f32.xlu0 %v3076
      %v3078 = vpop.xlane.xlu0 %3077
      %v3079 = vsel %vm877, %v3075, 0.0
      %3080 = vadd.xlane.f32.xlu0 %v3079
      %v3081 = vpop.xlane.xlu0 %3080
      %v3082 = vmul.f32 %v3078, %v881
      %v3083 = vmul.f32 %v3081, %v881
      %v3084 = vadd.f32 %v3082, 1e-05
      %v3085 = vadd.f32 %v3083, 1e-05
      %v3086 = vrsqrt.pop %v3084
      %v3087 = vrsqrt.pop %v3085
      %v3088 = vmul.f32 %v3072, %v3086
      %v3089 = vmul.f32 %v3073, %v3087
      %v3090 = vlaneseq
      %v3091 = vshrl.u32 %v3090, 7
      %v3092 = vsub.s32 0, %v3091
      %v3093 = vrot.slane %v3062, %v3092
      %v3094 = vmul.f32 %v3088, %v3093
      %v3095 = vmul.f32 %v3089, %v3093
      %v3096 = vlaneseq
      %v3097 = vshrl.u32 %v3096, 7
      %v3098 = vsub.s32 0, %v3097
      %v3099 = vrot.slane %v3063, %v3098
      %v3100 = vadd.f32 %v3094, %v3099
      %v3101 = vadd.f32 %v3095, %v3099
      %v3102 = vld [vmem:[%s11 + $0x2] sm:$0x1]
      %v3103 = vld [vmem:[%s11 + $0x3] sm:$0x1]
      %v3104 = vsel %vm873, %v3100, 0.0
      %3105 = vadd.xlane.f32.xlu0 %v3104
      %v3106 = vpop.xlane.xlu0 %3105
      %v3107 = vsel %vm877, %v3101, 0.0
      %3108 = vadd.xlane.f32.xlu0 %v3107
      %v3109 = vpop.xlane.xlu0 %3108
      %v3110 = vmul.f32 %v3106, %v881
      %v3111 = vmul.f32 %v3109, %v881
      %v3112 = vsub.f32 %v3100, %v3110
      %v3113 = vsub.f32 %v3101, %v3111
      %v3114 = vmul.f32 %v3112, %v3112
      %v3115 = vmul.f32 %v3113, %v3113
      %v3116 = vsel %vm873, %v3114, 0.0
      %3117 = vadd.xlane.f32.xlu0 %v3116
      %v3118 = vpop.xlane.xlu0 %3117
      %v3119 = vsel %vm877, %v3115, 0.0
      %3120 = vadd.xlane.f32.xlu0 %v3119
      %v3121 = vpop.xlane.xlu0 %3120
      %v3122 = vmul.f32 %v3118, %v881
      %v3123 = vmul.f32 %v3121, %v881
      %v3124 = vadd.f32 %v3122, 1e-05
      %v3125 = vadd.f32 %v3123, 1e-05
      %v3126 = vrsqrt.pop %v3124
      %v3127 = vrsqrt.pop %v3125
      %v3128 = vmul.f32 %v3112, %v3126
      %v3129 = vmul.f32 %v3113, %v3127
      %v3130 = vlaneseq
      %v3131 = vshrl.u32 %v3130, 7
      %v3132 = vsub.s32 0, %v3131
      %v3133 = vrot.slane %v3102, %v3132
      %v3134 = vmul.f32 %v3128, %v3133
      %v3135 = vmul.f32 %v3129, %v3133
      %v3136 = vlaneseq
      %v3137 = vshrl.u32 %v3136, 7
      %v3138 = vsub.s32 0, %v3137
      %v3139 = vrot.slane %v3103, %v3138
      %v3140 = vadd.f32 %v3134, %v3139
      %v3141 = vadd.f32 %v3135, %v3139
      %v3142 = vld [vmem:[%s12] sm:$0xff]
      %v3143 = vld [vmem:[%s12 + $0x8] sm:$0xff]
      %v3144 = vld [vmem:[%s12 + $0x10] sm:$0xff]
      %v3145 = vld [vmem:[%s12 + $0x18] sm:$0xff]
      %v3146 = vld [vmem:[%s13] sm:$0x1]
      %v3147 = vlaneseq
      %v3148 = vshrl.u32 %v3147, 7
      %v3149 = vsub.s32 0, %v3148
      %v3150 = vrot.slane %v3146, %v3149
      %v3152 = vsel %vm873, %v3140, 0
      %v3155 = vsel %vm873, %v3141, 0
      %3157 = vmatprep.subr.mxu0 0.0
      %3158 = vmatpush1.msra.mxu0 %v3142
      %3159 = vmatprep.subr.mxu0 0.0
      %3160 = vmatpush1.msra.mxu0 %v3143
      %3161 = vmatprep.subr.mxu0 0.0
      %3162 = vmatpush1.msra.mxu0 %v3144
      %3163 = vmatprep.subr.mxu0 0.0
      %3164 = vmatpush1.msra.mxu0 %v3145
      %3165 = vmatprep.subr.mxu0 0.0
      %3166 = vmatpush1.msra.mxu0 0.0
      %3167 = vmatprep.subr.mxu0 0.0
      %3168 = vmatpush1.msra.mxu0 0.0
      %3169 = vmatprep.subr.mxu0 0.0
      %3170 = vmatpush1.msra.mxu0 0.0
      %3171 = vmatprep.subr.mxu0 0.0
      %3172 = vmatpush1.msra.mxu0 0.0
      %3173 = vmatprep.subr.mxu0 0.0
      %3174 = vmatpush1.msra.mxu0 0.0
      %3175 = vmatprep.subr.mxu0 0.0
      %3176 = vmatpush1.msra.mxu0 0.0
      %3177 = vmatprep.subr.mxu0 0.0
      %3178 = vmatpush1.msra.mxu0 0.0
      %3179 = vmatprep.subr.mxu0 0.0
      %3180 = vmatpush1.msra.mxu0 0.0
      %3181 = vmatprep.subr.mxu0 0.0
      %3182 = vmatpush1.msra.mxu0 0.0
      %3183 = vmatprep.subr.mxu0 0.0
      %3184 = vmatpush1.msra.mxu0 0.0
      %3185 = vmatprep.subr.mxu0 0.0
      %3186 = vmatpush1.msra.mxu0 0.0
      %3187 = vmatprep.subr.mxu0 0.0
      %3188 = vmatpush1.msra.mxu0 0.0
      %3189 = vmatprep.subr.mxu0 0.0
      %3190 = vmatpush1.msra.mxu0 0.0
      %3191 = vmatprep.subr.mxu0 0.0
      %3192 = vmatpush1.msra.mxu0 0.0
      %3193 = vmatprep.subr.mxu0 0.0
      %3194 = vmatpush1.msra.mxu0 0.0
      %3195 = vmatprep.subr.mxu0 0.0
      %3196 = vmatpush1.msra.mxu0 0.0
      %3197 = vmatprep.subr.mxu0 0.0
      %3198 = vmatpush1.msra.mxu0 0.0
      %3199 = vmatprep.subr.mxu0 0.0
      %3200 = vmatpush1.msra.mxu0 0.0
      %3201 = vmatprep.subr.mxu0 0.0
      %3202 = vmatpush1.msra.mxu0 0.0
      %3203 = vmatprep.subr.mxu0 0.0
      %3204 = vmatpush1.msra.mxu0 0.0
      %3205 = vmatprep.subr.mxu0 0.0
      %3206 = vmatpush1.msra.mxu0 0.0
      %3207 = vmatprep.subr.mxu0 0.0
      %3208 = vmatpush1.msra.mxu0 0.0
      %3209 = vmatprep.subr.mxu0 0.0
      %3210 = vmatpush1.msra.mxu0 0.0
      %3211 = vmatprep.subr.mxu0 0.0
      %3212 = vmatpush1.msra.mxu0 0.0
      %3213 = vmatprep.subr.mxu0 0.0
      %3214 = vmatpush1.msra.mxu0 0.0
      %3215 = vmatprep.subr.mxu0 0.0
      %3216 = vmatpush1.msra.mxu0 0.0
      %3217 = vmatprep.subr.mxu0 0.0
      %3218 = vmatpush1.msra.mxu0 0.0
      %3219 = vmatprep.subr.mxu0 0.0
      %3220 = vmatpush1.msra.mxu0 0.0
      %3221 = vmatprep.mubr.f32.mxu0 0.0
      %3222 = vmatmul.mubr.f32.gmra.mrb[0].mxu0 %v3152
      %v3223 = vpop.f32.mrb[0].mxu0
      %v3224 = vadd.f32 %v3150, %v3223
      %v3225 = vpop.f32.mrb[0].mxu0
      %3226 = vmatprep.mubr.f32.mxu0 0.0
      %3227 = vmatmul.mubr.f32.gmra.mrb[0].mxu0 %v3155
      %v3228 = vpop.f32.mrb[0].mxu0
      %v3229 = vadd.f32 %v3150, %v3228
      %v3230 = vpop.f32.mrb[0].mxu0
      %3231 = vdwg.mxu0
      %v3232 = vld [vmem:[%s14] sm:$0xff]
      %v3233 = vld [vmem:[%s14 + $0x8] sm:$0x1]
      %v3234 = vadd.f32 %v3224, %v3232
      %v3235 = vadd.f32 %v3229, %v3233
      %v3236 = vld [vmem:[%s15] sm:$0x1]
      %v3237 = vld [vmem:[%s15 + $0x1] sm:$0x1]
      %v3238 = vsel %vm742, %v3234, 0.0
      %3239 = vadd.xlane.f32.xlu0 %v3238
      %v3240 = vpop.xlane.xlu0 %3239
      %v3241 = vsel %vm746, %v3235, 0.0
      %3242 = vadd.xlane.f32.xlu0 %v3241
      %v3243 = vpop.xlane.xlu0 %3242
      %v3244 = vmul.f32 %v3240, %v750
      %v3245 = vmul.f32 %v3243, %v750
      %v3246 = vsub.f32 %v3234, %v3244
      %v3247 = vsub.f32 %v3235, %v3245
      %v3248 = vmul.f32 %v3246, %v3246
      %v3249 = vmul.f32 %v3247, %v3247
      %v3250 = vsel %vm742, %v3248, 0.0
      %3251 = vadd.xlane.f32.xlu0 %v3250
      %v3252 = vpop.xlane.xlu0 %3251
      %v3253 = vsel %vm746, %v3249, 0.0
      %3254 = vadd.xlane.f32.xlu0 %v3253
      %v3255 = vpop.xlane.xlu0 %3254
      %v3256 = vmul.f32 %v3252, %v750
      %v3257 = vmul.f32 %v3255, %v750
      %v3258 = vadd.f32 %v3256, 1e-05
      %v3259 = vadd.f32 %v3257, 1e-05
      %v3260 = vrsqrt.pop %v3258
      %v3261 = vrsqrt.pop %v3259
      %v3262 = vmul.f32 %v3246, %v3260
      %v3263 = vmul.f32 %v3247, %v3261
      %v3264 = vlaneseq
      %v3265 = vshrl.u32 %v3264, 7
      %v3266 = vsub.s32 0, %v3265
      %v3267 = vrot.slane %v3236, %v3266
      %v3268 = vmul.f32 %v3262, %v3267
      %v3269 = vmul.f32 %v3263, %v3267
      %v3270 = vlaneseq
      %v3271 = vshrl.u32 %v3270, 7
      %v3272 = vsub.s32 0, %v3271
      %v3273 = vrot.slane %v3237, %v3272
      %v3274 = vadd.f32 %v3268, %v3273
      %v3275 = vadd.f32 %v3269, %v3273
      %v3276 = vld [vmem:[%s16] sm:$0xff]
      %v3277 = vld [vmem:[%s16 + $0x8] sm:$0xff]
      %v3278 = vld [vmem:[%s16 + $0x10] sm:$0xff]
      %v3279 = vld [vmem:[%s16 + $0x18] sm:$0xff]
      %v3280 = vld [vmem:[%s16 + $0x20] sm:$0xff]
      %v3281 = vld [vmem:[%s16 + $0x28] sm:$0xff]
      %v3282 = vld [vmem:[%s16 + $0x30] sm:$0xff]
      %v3283 = vld [vmem:[%s16 + $0x38] sm:$0xff]
      %v3284 = vld [vmem:[%s16 + $0x40] sm:$0xff]
      %v3285 = vld [vmem:[%s16 + $0x48] sm:$0xff]
      %v3286 = vld [vmem:[%s16 + $0x50] sm:$0xff]
      %v3287 = vld [vmem:[%s16 + $0x58] sm:$0xff]
      %v3289 = vsel %vm742, %v3274, 0
      %v3292 = vsel %vm742, %v3275, 0
      %3294 = vmatprep.subr.mxu0 %v3277
      %3295 = vmatpush1.msra.mxu0 %v3276
      %3296 = vmatprep.subr.mxu0 %v3283
      %3297 = vmatpush1.msra.mxu0 %v3282
      %3298 = vmatprep.subr.mxu0 0.0
      %3299 = vmatpush1.msra.mxu0 0.0
      %3300 = vmatprep.subr.mxu0 0.0
      %3301 = vmatpush1.msra.mxu0 0.0
      %3302 = vmatprep.subr.mxu0 0.0
      %3303 = vmatpush1.msra.mxu0 0.0
      %3304 = vmatprep.subr.mxu0 0.0
      %3305 = vmatpush1.msra.mxu0 0.0
      %3306 = vmatprep.subr.mxu0 0.0
      %3307 = vmatpush1.msra.mxu0 0.0
      %3308 = vmatprep.subr.mxu0 0.0
      %3309 = vmatpush1.msra.mxu0 0.0
      %3310 = vmatprep.subr.mxu0 0.0
      %3311 = vmatpush1.msra.mxu0 0.0
      %3312 = vmatprep.subr.mxu0 0.0
      %3313 = vmatpush1.msra.mxu0 0.0
      %3314 = vmatprep.subr.mxu0 0.0
      %3315 = vmatpush1.msra.mxu0 0.0
      %3316 = vmatprep.subr.mxu0 0.0
      %3317 = vmatpush1.msra.mxu0 0.0
      %3318 = vmatprep.subr.mxu0 0.0
      %3319 = vmatpush1.msra.mxu0 0.0
      %3320 = vmatprep.subr.mxu0 0.0
      %3321 = vmatpush1.msra.mxu0 0.0
      %3322 = vmatprep.subr.mxu0 0.0
      %3323 = vmatpush1.msra.mxu0 0.0
      %3324 = vmatprep.subr.mxu0 0.0
      %3325 = vmatpush1.msra.mxu0 0.0
      %3326 = vmatprep.subr.mxu0 0.0
      %3327 = vmatpush1.msra.mxu0 0.0
      %3328 = vmatprep.subr.mxu0 0.0
      %3329 = vmatpush1.msra.mxu0 0.0
      %3330 = vmatprep.subr.mxu0 0.0
      %3331 = vmatpush1.msra.mxu0 0.0
      %3332 = vmatprep.subr.mxu0 0.0
      %3333 = vmatpush1.msra.mxu0 0.0
      %3334 = vmatprep.subr.mxu0 0.0
      %3335 = vmatpush1.msra.mxu0 0.0
      %3336 = vmatprep.subr.mxu0 0.0
      %3337 = vmatpush1.msra.mxu0 0.0
      %3338 = vmatprep.subr.mxu0 0.0
      %3339 = vmatpush1.msra.mxu0 0.0
      %3340 = vmatprep.subr.mxu0 0.0
      %3341 = vmatpush1.msra.mxu0 0.0
      %3342 = vmatprep.subr.mxu0 0.0
      %3343 = vmatpush1.msra.mxu0 0.0
      %3344 = vmatprep.subr.mxu0 0.0
      %3345 = vmatpush1.msra.mxu0 0.0
      %3346 = vmatprep.subr.mxu0 0.0
      %3347 = vmatpush1.msra.mxu0 0.0
      %3348 = vmatprep.subr.mxu0 0.0
      %3349 = vmatpush1.msra.mxu0 0.0
      %3350 = vmatprep.subr.mxu0 0.0
      %3351 = vmatpush1.msra.mxu0 0.0
      %3352 = vmatprep.subr.mxu0 0.0
      %3353 = vmatpush1.msra.mxu0 0.0
      %3354 = vmatprep.subr.mxu0 0.0
      %3355 = vmatpush1.msra.mxu0 0.0
      %3356 = vmatprep.subr.mxu0 0.0
      %3357 = vmatpush1.msra.mxu0 0.0
      %3358 = vmatprep.mubr.f32.mxu0 0.0
      %3359 = vmatmul.mubr.f32.gmra.mrb[0].mxu0 %v3289
      %v3360 = vpop.f32.mrb[0].mxu0
      %v3361 = vadd.f32 0.0, %v3360
      %v3362 = vpop.f32.mrb[0].mxu0
      %v3363 = vadd.f32 0.0, %v3362
      %3364 = vmatprep.mubr.f32.mxu0 0.0
      %3365 = vmatmul.mubr.f32.gmra.mrb[0].mxu0 %v3292
      %v3366 = vpop.f32.mrb[0].mxu0
      %v3367 = vadd.f32 0.0, %v3366
      %v3368 = vpop.f32.mrb[0].mxu0
      %v3369 = vadd.f32 0.0, %v3368
      %3370 = vdwg.mxu0
      %3371 = vmatprep.subr.mxu0 %v3279
      %3372 = vmatpush1.msra.mxu0 %v3278
      %3373 = vmatprep.subr.mxu0 %v3285
      %3374 = vmatpush1.msra.mxu0 %v3284
      %3375 = vmatprep.subr.mxu0 0.0
      %3376 = vmatpush1.msra.mxu0 0.0
      %3377 = vmatprep.subr.mxu0 0.0
      %3378 = vmatpush1.msra.mxu0 0.0
      %3379 = vmatprep.subr.mxu0 0.0
      %3380 = vmatpush1.msra.mxu0 0.0
      %3381 = vmatprep.subr.mxu0 0.0
      %3382 = vmatpush1.msra.mxu0 0.0
      %3383 = vmatprep.subr.mxu0 0.0
      %3384 = vmatpush1.msra.mxu0 0.0
      %3385 = vmatprep.subr.mxu0 0.0
      %3386 = vmatpush1.msra.mxu0 0.0
      %3387 = vmatprep.subr.mxu0 0.0
      %3388 = vmatpush1.msra.mxu0 0.0
      %3389 = vmatprep.subr.mxu0 0.0
      %3390 = vmatpush1.msra.mxu0 0.0
      %3391 = vmatprep.subr.mxu0 0.0
      %3392 = vmatpush1.msra.mxu0 0.0
      %3393 = vmatprep.subr.mxu0 0.0
      %3394 = vmatpush1.msra.mxu0 0.0
      %3395 = vmatprep.subr.mxu0 0.0
      %3396 = vmatpush1.msra.mxu0 0.0
      %3397 = vmatprep.subr.mxu0 0.0
      %3398 = vmatpush1.msra.mxu0 0.0
      %3399 = vmatprep.subr.mxu0 0.0
      %3400 = vmatpush1.msra.mxu0 0.0
      %3401 = vmatprep.subr.mxu0 0.0
      %3402 = vmatpush1.msra.mxu0 0.0
      %3403 = vmatprep.subr.mxu0 0.0
      %3404 = vmatpush1.msra.mxu0 0.0
      %3405 = vmatprep.subr.mxu0 0.0
      %3406 = vmatpush1.msra.mxu0 0.0
      %3407 = vmatprep.subr.mxu0 0.0
      %3408 = vmatpush1.msra.mxu0 0.0
      %3409 = vmatprep.subr.mxu0 0.0
      %3410 = vmatpush1.msra.mxu0 0.0
      %3411 = vmatprep.subr.mxu0 0.0
      %3412 = vmatpush1.msra.mxu0 0.0
      %3413 = vmatprep.subr.mxu0 0.0
      %3414 = vmatpush1.msra.mxu0 0.0
      %3415 = vmatprep.subr.mxu0 0.0
      %3416 = vmatpush1.msra.mxu0 0.0
      %3417 = vmatprep.subr.mxu0 0.0
      %3418 = vmatpush1.msra.mxu0 0.0
      %3419 = vmatprep.subr.mxu0 0.0
      %3420 = vmatpush1.msra.mxu0 0.0
      %3421 = vmatprep.subr.mxu0 0.0
      %3422 = vmatpush1.msra.mxu0 0.0
      %3423 = vmatprep.subr.mxu0 0.0
      %3424 = vmatpush1.msra.mxu0 0.0
      %3425 = vmatprep.subr.mxu0 0.0
      %3426 = vmatpush1.msra.mxu0 0.0
      %3427 = vmatprep.subr.mxu0 0.0
      %3428 = vmatpush1.msra.mxu0 0.0
      %3429 = vmatprep.subr.mxu0 0.0
      %3430 = vmatpush1.msra.mxu0 0.0
      %3431 = vmatprep.subr.mxu0 0.0
      %3432 = vmatpush1.msra.mxu0 0.0
      %3433 = vmatprep.subr.mxu0 0.0
      %3434 = vmatpush1.msra.mxu0 0.0
      %3435 = vmatprep.mubr.f32.mxu0 0.0
      %3436 = vmatmul.mubr.f32.gmra.mrb[0].mxu0 %v3289
      %v3437 = vpop.f32.mrb[0].mxu0
      %v3438 = vadd.f32 0.0, %v3437
      %v3439 = vpop.f32.mrb[0].mxu0
      %v3440 = vadd.f32 0.0, %v3439
      %3441 = vmatprep.mubr.f32.mxu0 0.0
      %3442 = vmatmul.mubr.f32.gmra.mrb[0].mxu0 %v3292
      %v3443 = vpop.f32.mrb[0].mxu0
      %v3444 = vadd.f32 0.0, %v3443
      %v3445 = vpop.f32.mrb[0].mxu0
      %v3446 = vadd.f32 0.0, %v3445
      %3447 = vdwg.mxu0
      %3448 = vmatprep.subr.mxu0 %v3281
      %3449 = vmatpush1.msra.mxu0 %v3280
      %3450 = vmatprep.subr.mxu0 %v3287
      %3451 = vmatpush1.msra.mxu0 %v3286
      %3452 = vmatprep.subr.mxu0 0.0
      %3453 = vmatpush1.msra.mxu0 0.0
      %3454 = vmatprep.subr.mxu0 0.0
      %3455 = vmatpush1.msra.mxu0 0.0
      %3456 = vmatprep.subr.mxu0 0.0
      %3457 = vmatpush1.msra.mxu0 0.0
      %3458 = vmatprep.subr.mxu0 0.0
      %3459 = vmatpush1.msra.mxu0 0.0
      %3460 = vmatprep.subr.mxu0 0.0
      %3461 = vmatpush1.msra.mxu0 0.0
      %3462 = vmatprep.subr.mxu0 0.0
      %3463 = vmatpush1.msra.mxu0 0.0
      %3464 = vmatprep.subr.mxu0 0.0
      %3465 = vmatpush1.msra.mxu0 0.0
      %3466 = vmatprep.subr.mxu0 0.0
      %3467 = vmatpush1.msra.mxu0 0.0
      %3468 = vmatprep.subr.mxu0 0.0
      %3469 = vmatpush1.msra.mxu0 0.0
      %3470 = vmatprep.subr.mxu0 0.0
      %3471 = vmatpush1.msra.mxu0 0.0
      %3472 = vmatprep.subr.mxu0 0.0
      %3473 = vmatpush1.msra.mxu0 0.0
      %3474 = vmatprep.subr.mxu0 0.0
      %3475 = vmatpush1.msra.mxu0 0.0
      %3476 = vmatprep.subr.mxu0 0.0
      %3477 = vmatpush1.msra.mxu0 0.0
      %3478 = vmatprep.subr.mxu0 0.0
      %3479 = vmatpush1.msra.mxu0 0.0
      %3480 = vmatprep.subr.mxu0 0.0
      %3481 = vmatpush1.msra.mxu0 0.0
      %3482 = vmatprep.subr.mxu0 0.0
      %3483 = vmatpush1.msra.mxu0 0.0
      %3484 = vmatprep.subr.mxu0 0.0
      %3485 = vmatpush1.msra.mxu0 0.0
      %3486 = vmatprep.subr.mxu0 0.0
      %3487 = vmatpush1.msra.mxu0 0.0
      %3488 = vmatprep.subr.mxu0 0.0
      %3489 = vmatpush1.msra.mxu0 0.0
      %3490 = vmatprep.subr.mxu0 0.0
      %3491 = vmatpush1.msra.mxu0 0.0
      %3492 = vmatprep.subr.mxu0 0.0
      %3493 = vmatpush1.msra.mxu0 0.0
      %3494 = vmatprep.subr.mxu0 0.0
      %3495 = vmatpush1.msra.mxu0 0.0
      %3496 = vmatprep.subr.mxu0 0.0
      %3497 = vmatpush1.msra.mxu0 0.0
      %3498 = vmatprep.subr.mxu0 0.0
      %3499 = vmatpush1.msra.mxu0 0.0
      %3500 = vmatprep.subr.mxu0 0.0
      %3501 = vmatpush1.msra.mxu0 0.0
      %3502 = vmatprep.subr.mxu0 0.0
      %3503 = vmatpush1.msra.mxu0 0.0
      %3504 = vmatprep.subr.mxu0 0.0
      %3505 = vmatpush1.msra.mxu0 0.0
      %3506 = vmatprep.subr.mxu0 0.0
      %3507 = vmatpush1.msra.mxu0 0.0
      %3508 = vmatprep.subr.mxu0 0.0
      %3509 = vmatpush1.msra.mxu0 0.0
      %3510 = vmatprep.subr.mxu0 0.0
      %3511 = vmatpush1.msra.mxu0 0.0
      %3512 = vmatprep.mubr.f32.mxu0 0.0
      %3513 = vmatmul.mubr.f32.gmra.mrb[0].mxu0 %v3289
      %v3514 = vpop.f32.mrb[0].mxu0
      %v3515 = vadd.f32 0.0, %v3514
      %v3516 = vpop.f32.mrb[0].mxu0
      %v3517 = vadd.f32 0.0, %v3516
      %3518 = vmatprep.mubr.f32.mxu0 0.0
      %3519 = vmatmul.mubr.f32.gmra.mrb[0].mxu0 %v3292
      %v3520 = vpop.f32.mrb[0].mxu0
      %v3521 = vadd.f32 0.0, %v3520
      %v3522 = vpop.f32.mrb[0].mxu0
      %v3523 = vadd.f32 0.0, %v3522
      %3524 = vdwg.mxu0
      %3525 = vmatprep.subr.mxu0 0.0
      %3526 = vmatpush1.xpose.msra.mxu0 %v3438
      %3527 = vmatprep.subr.mxu0 0.0
      %3528 = vmatpush1.xpose.msra.mxu0 %v3444
      %3529 = vmatprep.subr.mxu0 0.0
      %3530 = vmatpush1.xpose.msra.mxu0 0.0
      %3531 = vmatprep.subr.mxu0 0.0
      %3532 = vmatpush1.xpose.msra.mxu0 0.0
      %3533 = vmatprep.subr.mxu0 0.0
      %3534 = vmatpush1.xpose.msra.mxu0 0.0
      %3535 = vmatprep.subr.mxu0 0.0
      %3536 = vmatpush1.xpose.msra.mxu0 0.0
      %3537 = vmatprep.subr.mxu0 0.0
      %3538 = vmatpush1.xpose.msra.mxu0 0.0
      %3539 = vmatprep.subr.mxu0 0.0
      %3540 = vmatpush1.xpose.msra.mxu0 0.0
      %3541 = vmatprep.subr.mxu0 0.0
      %3542 = vmatpush1.xpose.msra.mxu0 0.0
      %3543 = vmatprep.subr.mxu0 0.0
      %3544 = vmatpush1.xpose.msra.mxu0 0.0
      %3545 = vmatprep.subr.mxu0 0.0
      %3546 = vmatpush1.xpose.msra.mxu0 0.0
      %3547 = vmatprep.subr.mxu0 0.0
      %3548 = vmatpush1.xpose.msra.mxu0 0.0
      %3549 = vmatprep.subr.mxu0 0.0
      %3550 = vmatpush1.xpose.msra.mxu0 0.0
      %3551 = vmatprep.subr.mxu0 0.0
      %3552 = vmatpush1.xpose.msra.mxu0 0.0
      %3553 = vmatprep.subr.mxu0 0.0
      %3554 = vmatpush1.xpose.msra.mxu0 0.0
      %3555 = vmatprep.subr.mxu0 0.0
      %3556 = vmatpush1.xpose.msra.mxu0 0.0
      %3557 = vmatprep.subr.mxu0 0.0
      %3558 = vmatpush1.xpose.msra.mxu0 0.0
      %3559 = vmatprep.subr.mxu0 0.0
      %3560 = vmatpush1.xpose.msra.mxu0 0.0
      %3561 = vmatprep.subr.mxu0 0.0
      %3562 = vmatpush1.xpose.msra.mxu0 0.0
      %3563 = vmatprep.subr.mxu0 0.0
      %3564 = vmatpush1.xpose.msra.mxu0 0.0
      %3565 = vmatprep.subr.mxu0 0.0
      %3566 = vmatpush1.xpose.msra.mxu0 0.0
      %3567 = vmatprep.subr.mxu0 0.0
      %3568 = vmatpush1.xpose.msra.mxu0 0.0
      %3569 = vmatprep.subr.mxu0 0.0
      %3570 = vmatpush1.xpose.msra.mxu0 0.0
      %3571 = vmatprep.subr.mxu0 0.0
      %3572 = vmatpush1.xpose.msra.mxu0 0.0
      %3573 = vmatprep.subr.mxu0 0.0
      %3574 = vmatpush1.xpose.msra.mxu0 0.0
      %3575 = vmatprep.subr.mxu0 0.0
      %3576 = vmatpush1.xpose.msra.mxu0 0.0
      %3577 = vmatprep.subr.mxu0 0.0
      %3578 = vmatpush1.xpose.msra.mxu0 0.0
      %3579 = vmatprep.subr.mxu0 0.0
      %3580 = vmatpush1.xpose.msra.mxu0 0.0
      %3581 = vmatprep.subr.mxu0 0.0
      %3582 = vmatpush1.xpose.msra.mxu0 0.0
      %3583 = vmatprep.subr.mxu0 0.0
      %3584 = vmatpush1.xpose.msra.mxu0 0.0
      %3585 = vmatprep.subr.mxu0 0.0
      %3586 = vmatpush1.xpose.msra.mxu0 0.0
      %3587 = vmatprep.subr.mxu0 0.0
      %3588 = vmatpush1.xpose.msra.mxu0 0.0
      %3589 = vmatprep.mubr.f32.mxu0 0.0
      %3590 = vmatmul.mubr.f32.gmra.mrb[0].mxu0 %v3361
      %v3591 = vpop.f32.mrb[0].mxu0
      %v3592 = vadd.f32 0.0, %v3591
      %v3593 = vpop.f32.mrb[0].mxu0
      %3594 = vmatprep.mubr.f32.mxu0 0.0
      %3595 = vmatmul.mubr.f32.gmra.mrb[0].mxu0 %v3367
      %v3596 = vpop.f32.mrb[0].mxu0
      %v3597 = vadd.f32 0.0, %v3596
      %v3598 = vpop.f32.mrb[0].mxu0
      %3599 = vdwg.mxu0
      %v3600 = vmul.f32 %v3592, 0.125
      %v3601 = vmul.f32 %v3597, 0.125
      %v3602 = vsel %vm1303, %v3600, -inf
      %3603 = vmax.xlane.f32.xlu0 %v3602
      %v3604 = vpop.xlane.xlu0 %3603
      %v3605 = vsel %vm1307, %v3601, -inf
      %3606 = vmax.xlane.f32.xlu0 %v3605
      %v3607 = vpop.xlane.xlu0 %3606
      %v3608 = vsub.f32 %v3600, %v3604
      %v3609 = vsub.f32 %v3601, %v3607
      %v3610 = vmul.f32 %v3608, 1.442695
      %v3611 = vpow.pop %v3610
      %v3612 = vmul.f32 %v3609, 1.442695
      %v3613 = vpow.pop %v3612
      %v3614 = vsel %vm1303, %v3611, 0.0
      %3615 = vadd.xlane.f32.xlu0 %v3614
      %v3616 = vpop.xlane.xlu0 %3615
      %v3617 = vsel %vm1307, %v3613, 0.0
      %3618 = vadd.xlane.f32.xlu0 %v3617
      %v3619 = vpop.xlane.xlu0 %3618
      %v3620 = vrcp.pop %v3616
      %v3621 = vmul.f32 %v3611, %v3620
      %v3622 = vrcp.pop %v3619
      %v3623 = vmul.f32 %v3613, %v3622
      %v3625 = vsel %vm1303, %v3621, 0
      %v3628 = vsel %vm1303, %v3623, 0
      %v3631 = vsel %vm1333, %v3521, 0
      %3633 = vmatprep.subr.mxu0 0.0
      %3634 = vmatpush1.msra.mxu0 %v3515
      %3635 = vmatprep.subr.mxu0 0.0
      %3636 = vmatpush1.msra.mxu0 %v3631
      %3637 = vmatprep.subr.mxu0 0.0
      %3638 = vmatpush1.msra.mxu0 0.0
      %3639 = vmatprep.subr.mxu0 0.0
      %3640 = vmatpush1.msra.mxu0 0.0
      %3641 = vmatprep.subr.mxu0 0.0
      %3642 = vmatpush1.msra.mxu0 0.0
      %3643 = vmatprep.subr.mxu0 0.0
      %3644 = vmatpush1.msra.mxu0 0.0
      %3645 = vmatprep.subr.mxu0 0.0
      %3646 = vmatpush1.msra.mxu0 0.0
      %3647 = vmatprep.subr.mxu0 0.0
      %3648 = vmatpush1.msra.mxu0 0.0
      %3649 = vmatprep.subr.mxu0 0.0
      %3650 = vmatpush1.msra.mxu0 0.0
      %3651 = vmatprep.subr.mxu0 0.0
      %3652 = vmatpush1.msra.mxu0 0.0
      %3653 = vmatprep.subr.mxu0 0.0
      %3654 = vmatpush1.msra.mxu0 0.0
      %3655 = vmatprep.subr.mxu0 0.0
      %3656 = vmatpush1.msra.mxu0 0.0
      %3657 = vmatprep.subr.mxu0 0.0
      %3658 = vmatpush1.msra.mxu0 0.0
      %3659 = vmatprep.subr.mxu0 0.0
      %3660 = vmatpush1.msra.mxu0 0.0
      %3661 = vmatprep.subr.mxu0 0.0
      %3662 = vmatpush1.msra.mxu0 0.0
      %3663 = vmatprep.subr.mxu0 0.0
      %3664 = vmatpush1.msra.mxu0 0.0
      %3665 = vmatprep.subr.mxu0 0.0
      %3666 = vmatpush1.msra.mxu0 0.0
      %3667 = vmatprep.subr.mxu0 0.0
      %3668 = vmatpush1.msra.mxu0 0.0
      %3669 = vmatprep.subr.mxu0 0.0
      %3670 = vmatpush1.msra.mxu0 0.0
      %3671 = vmatprep.subr.mxu0 0.0
      %3672 = vmatpush1.msra.mxu0 0.0
      %3673 = vmatprep.subr.mxu0 0.0
      %3674 = vmatpush1.msra.mxu0 0.0
      %3675 = vmatprep.subr.mxu0 0.0
      %3676 = vmatpush1.msra.mxu0 0.0
      %3677 = vmatprep.subr.mxu0 0.0
      %3678 = vmatpush1.msra.mxu0 0.0
      %3679 = vmatprep.subr.mxu0 0.0
      %3680 = vmatpush1.msra.mxu0 0.0
      %3681 = vmatprep.subr.mxu0 0.0
      %3682 = vmatpush1.msra.mxu0 0.0
      %3683 = vmatprep.subr.mxu0 0.0
      %3684 = vmatpush1.msra.mxu0 0.0
      %3685 = vmatprep.subr.mxu0 0.0
      %3686 = vmatpush1.msra.mxu0 0.0
      %3687 = vmatprep.subr.mxu0 0.0
      %3688 = vmatpush1.msra.mxu0 0.0
      %3689 = vmatprep.subr.mxu0 0.0
      %3690 = vmatpush1.msra.mxu0 0.0
      %3691 = vmatprep.subr.mxu0 0.0
      %3692 = vmatpush1.msra.mxu0 0.0
      %3693 = vmatprep.subr.mxu0 0.0
      %3694 = vmatpush1.msra.mxu0 0.0
      %3695 = vmatprep.subr.mxu0 0.0
      %3696 = vmatpush1.msra.mxu0 0.0
      %3697 = vmatprep.mubr.f32.mxu0 0.0
      %3698 = vmatmul.mubr.f32.gmra.mrb[0].mxu0 %v3625
      %v3699 = vpop.f32.mrb[0].mxu0
      %v3700 = vadd.f32 0.0, %v3699
      %v3701 = vpop.f32.mrb[0].mxu0
      %3702 = vmatprep.mubr.f32.mxu0 0.0
      %3703 = vmatmul.mubr.f32.gmra.mrb[0].mxu0 %v3628
      %v3704 = vpop.f32.mrb[0].mxu0
      %v3705 = vadd.f32 0.0, %v3704
      %v3706 = vpop.f32.mrb[0].mxu0
      %3707 = vdwg.mxu0
      %3708 = vmatprep.subr.mxu0 0.0
      %3709 = vmatpush1.xpose.msra.mxu0 %v3440
      %3710 = vmatprep.subr.mxu0 0.0
      %3711 = vmatpush1.xpose.msra.mxu0 %v3446
      %3712 = vmatprep.subr.mxu0 0.0
      %3713 = vmatpush1.xpose.msra.mxu0 0.0
      %3714 = vmatprep.subr.mxu0 0.0
      %3715 = vmatpush1.xpose.msra.mxu0 0.0
      %3716 = vmatprep.subr.mxu0 0.0
      %3717 = vmatpush1.xpose.msra.mxu0 0.0
      %3718 = vmatprep.subr.mxu0 0.0
      %3719 = vmatpush1.xpose.msra.mxu0 0.0
      %3720 = vmatprep.subr.mxu0 0.0
      %3721 = vmatpush1.xpose.msra.mxu0 0.0
      %3722 = vmatprep.subr.mxu0 0.0
      %3723 = vmatpush1.xpose.msra.mxu0 0.0
      %3724 = vmatprep.subr.mxu0 0.0
      %3725 = vmatpush1.xpose.msra.mxu0 0.0
      %3726 = vmatprep.subr.mxu0 0.0
      %3727 = vmatpush1.xpose.msra.mxu0 0.0
      %3728 = vmatprep.subr.mxu0 0.0
      %3729 = vmatpush1.xpose.msra.mxu0 0.0
      %3730 = vmatprep.subr.mxu0 0.0
      %3731 = vmatpush1.xpose.msra.mxu0 0.0
      %3732 = vmatprep.subr.mxu0 0.0
      %3733 = vmatpush1.xpose.msra.mxu0 0.0
      %3734 = vmatprep.subr.mxu0 0.0
      %3735 = vmatpush1.xpose.msra.mxu0 0.0
      %3736 = vmatprep.subr.mxu0 0.0
      %3737 = vmatpush1.xpose.msra.mxu0 0.0
      %3738 = vmatprep.subr.mxu0 0.0
      %3739 = vmatpush1.xpose.msra.mxu0 0.0
      %3740 = vmatprep.subr.mxu0 0.0
      %3741 = vmatpush1.xpose.msra.mxu0 0.0
      %3742 = vmatprep.subr.mxu0 0.0
      %3743 = vmatpush1.xpose.msra.mxu0 0.0
      %3744 = vmatprep.subr.mxu0 0.0
      %3745 = vmatpush1.xpose.msra.mxu0 0.0
      %3746 = vmatprep.subr.mxu0 0.0
      %3747 = vmatpush1.xpose.msra.mxu0 0.0
      %3748 = vmatprep.subr.mxu0 0.0
      %3749 = vmatpush1.xpose.msra.mxu0 0.0
      %3750 = vmatprep.subr.mxu0 0.0
      %3751 = vmatpush1.xpose.msra.mxu0 0.0
      %3752 = vmatprep.subr.mxu0 0.0
      %3753 = vmatpush1.xpose.msra.mxu0 0.0
      %3754 = vmatprep.subr.mxu0 0.0
      %3755 = vmatpush1.xpose.msra.mxu0 0.0
      %3756 = vmatprep.subr.mxu0 0.0
      %3757 = vmatpush1.xpose.msra.mxu0 0.0
      %3758 = vmatprep.subr.mxu0 0.0
      %3759 = vmatpush1.xpose.msra.mxu0 0.0
      %3760 = vmatprep.subr.mxu0 0.0
      %3761 = vmatpush1.xpose.msra.mxu0 0.0
      %3762 = vmatprep.subr.mxu0 0.0
      %3763 = vmatpush1.xpose.msra.mxu0 0.0
      %3764 = vmatprep.subr.mxu0 0.0
      %3765 = vmatpush1.xpose.msra.mxu0 0.0
      %3766 = vmatprep.subr.mxu0 0.0
      %3767 = vmatpush1.xpose.msra.mxu0 0.0
      %3768 = vmatprep.subr.mxu0 0.0
      %3769 = vmatpush1.xpose.msra.mxu0 0.0
      %3770 = vmatprep.subr.mxu0 0.0
      %3771 = vmatpush1.xpose.msra.mxu0 0.0
      %3772 = vmatprep.mubr.f32.mxu0 0.0
      %3773 = vmatmul.mubr.f32.gmra.mrb[0].mxu0 %v3363
      %v3774 = vpop.f32.mrb[0].mxu0
      %v3775 = vadd.f32 0.0, %v3774
      %v3776 = vpop.f32.mrb[0].mxu0
      %3777 = vmatprep.mubr.f32.mxu0 0.0
      %3778 = vmatmul.mubr.f32.gmra.mrb[0].mxu0 %v3369
      %v3779 = vpop.f32.mrb[0].mxu0
      %v3780 = vadd.f32 0.0, %v3779
      %v3781 = vpop.f32.mrb[0].mxu0
      %3782 = vdwg.mxu0
      %v3783 = vmul.f32 %v3775, 0.125
      %v3784 = vmul.f32 %v3780, 0.125
      %v3785 = vsel %vm1303, %v3783, -inf
      %3786 = vmax.xlane.f32.xlu0 %v3785
      %v3787 = vpop.xlane.xlu0 %3786
      %v3788 = vsel %vm1307, %v3784, -inf
      %3789 = vmax.xlane.f32.xlu0 %v3788
      %v3790 = vpop.xlane.xlu0 %3789
      %v3791 = vsub.f32 %v3783, %v3787
      %v3792 = vsub.f32 %v3784, %v3790
      %v3793 = vmul.f32 %v3791, 1.442695
      %v3794 = vpow.pop %v3793
      %v3795 = vmul.f32 %v3792, 1.442695
      %v3796 = vpow.pop %v3795
      %v3797 = vsel %vm1303, %v3794, 0.0
      %3798 = vadd.xlane.f32.xlu0 %v3797
      %v3799 = vpop.xlane.xlu0 %3798
      %v3800 = vsel %vm1307, %v3796, 0.0
      %3801 = vadd.xlane.f32.xlu0 %v3800
      %v3802 = vpop.xlane.xlu0 %3801
      %v3803 = vrcp.pop %v3799
      %v3804 = vmul.f32 %v3794, %v3803
      %v3805 = vrcp.pop %v3802
      %v3806 = vmul.f32 %v3796, %v3805
      %v3808 = vsel %vm1303, %v3804, 0
      %v3811 = vsel %vm1303, %v3806, 0
      %v3814 = vsel %vm1333, %v3523, 0
      %3816 = vmatprep.subr.mxu0 0.0
      %3817 = vmatpush1.msra.mxu0 %v3517
      %3818 = vmatprep.subr.mxu0 0.0
      %3819 = vmatpush1.msra.mxu0 %v3814
      %3820 = vmatprep.subr.mxu0 0.0
      %3821 = vmatpush1.msra.mxu0 0.0
      %3822 = vmatprep.subr.mxu0 0.0
      %3823 = vmatpush1.msra.mxu0 0.0
      %3824 = vmatprep.subr.mxu0 0.0
      %3825 = vmatpush1.msra.mxu0 0.0
      %3826 = vmatprep.subr.mxu0 0.0
      %3827 = vmatpush1.msra.mxu0 0.0
      %3828 = vmatprep.subr.mxu0 0.0
      %3829 = vmatpush1.msra.mxu0 0.0
      %3830 = vmatprep.subr.mxu0 0.0
      %3831 = vmatpush1.msra.mxu0 0.0
      %3832 = vmatprep.subr.mxu0 0.0
      %3833 = vmatpush1.msra.mxu0 0.0
      %3834 = vmatprep.subr.mxu0 0.0
      %3835 = vmatpush1.msra.mxu0 0.0
      %3836 = vmatprep.subr.mxu0 0.0
      %3837 = vmatpush1.msra.mxu0 0.0
      %3838 = vmatprep.subr.mxu0 0.0
      %3839 = vmatpush1.msra.mxu0 0.0
      %3840 = vmatprep.subr.mxu0 0.0
      %3841 = vmatpush1.msra.mxu0 0.0
      %3842 = vmatprep.subr.mxu0 0.0
      %3843 = vmatpush1.msra.mxu0 0.0
      %3844 = vmatprep.subr.mxu0 0.0
      %3845 = vmatpush1.msra.mxu0 0.0
      %3846 = vmatprep.subr.mxu0 0.0
      %3847 = vmatpush1.msra.mxu0 0.0
      %3848 = vmatprep.subr.mxu0 0.0
      %3849 = vmatpush1.msra.mxu0 0.0
      %3850 = vmatprep.subr.mxu0 0.0
      %3851 = vmatpush1.msra.mxu0 0.0
      %3852 = vmatprep.subr.mxu0 0.0
      %3853 = vmatpush1.msra.mxu0 0.0
      %3854 = vmatprep.subr.mxu0 0.0
      %3855 = vmatpush1.msra.mxu0 0.0
      %3856 = vmatprep.subr.mxu0 0.0
      %3857 = vmatpush1.msra.mxu0 0.0
      %3858 = vmatprep.subr.mxu0 0.0
      %3859 = vmatpush1.msra.mxu0 0.0
      %3860 = vmatprep.subr.mxu0 0.0
      %3861 = vmatpush1.msra.mxu0 0.0
      %3862 = vmatprep.subr.mxu0 0.0
      %3863 = vmatpush1.msra.mxu0 0.0
      %3864 = vmatprep.subr.mxu0 0.0
      %3865 = vmatpush1.msra.mxu0 0.0
      %3866 = vmatprep.subr.mxu0 0.0
      %3867 = vmatpush1.msra.mxu0 0.0
      %3868 = vmatprep.subr.mxu0 0.0
      %3869 = vmatpush1.msra.mxu0 0.0
      %3870 = vmatprep.subr.mxu0 0.0
      %3871 = vmatpush1.msra.mxu0 0.0
      %3872 = vmatprep.subr.mxu0 0.0
      %3873 = vmatpush1.msra.mxu0 0.0
      %3874 = vmatprep.subr.mxu0 0.0
      %3875 = vmatpush1.msra.mxu0 0.0
      %3876 = vmatprep.subr.mxu0 0.0
      %3877 = vmatpush1.msra.mxu0 0.0
      %3878 = vmatprep.subr.mxu0 0.0
      %3879 = vmatpush1.msra.mxu0 0.0
      %3880 = vmatprep.mubr.f32.mxu0 0.0
      %3881 = vmatmul.mubr.f32.gmra.mrb[0].mxu0 %v3808
      %v3882 = vpop.f32.mrb[0].mxu0
      %v3883 = vadd.f32 0.0, %v3882
      %v3884 = vpop.f32.mrb[0].mxu0
      %3885 = vmatprep.mubr.f32.mxu0 0.0
      %3886 = vmatmul.mubr.f32.gmra.mrb[0].mxu0 %v3811
      %v3887 = vpop.f32.mrb[0].mxu0
      %v3888 = vadd.f32 0.0, %v3887
      %v3889 = vpop.f32.mrb[0].mxu0
      %3890 = vdwg.mxu0
      %v3891 = vld [vmem:[%s15 + $0x2] sm:$0x1]
      %v3892 = vlaneseq
      %v3893 = vshrl.u32 %v3892, 7
      %v3894 = vsub.s32 0, %v3893
      %v3895 = vrot.slane %v3891, %v3894
      %v3896 = vadd.f32 %v3234, %v3895
      %v3897 = vadd.f32 %v3235, %v3895
      %v3898 = vld [vmem:[%s17] sm:$0xff]
      %v3899 = vld [vmem:[%s17 + $0x8] sm:$0xff]
      %v3900 = vld [vmem:[%s17 + $0x10] sm:$0xff]
      %v3901 = vld [vmem:[%s17 + $0x18] sm:$0xff]
      %v3902 = vld [vmem:[%s17 + $0x20] sm:$0xff]
      %v3903 = vld [vmem:[%s17 + $0x28] sm:$0xff]
      %v3904 = vld [vmem:[%s17 + $0x30] sm:$0xff]
      %v3905 = vld [vmem:[%s17 + $0x38] sm:$0xff]
      %v3906 = vld [vmem:[%s17 + $0x40] sm:$0xff]
      %v3907 = vld [vmem:[%s17 + $0x48] sm:$0xff]
      %v3908 = vld [vmem:[%s17 + $0x50] sm:$0xff]
      %v3909 = vld [vmem:[%s17 + $0x58] sm:$0xff]
      %v3910 = vld [vmem:[%s17 + $0x60] sm:$0xff]
      %v3911 = vld [vmem:[%s17 + $0x68] sm:$0xff]
      %v3912 = vld [vmem:[%s17 + $0x70] sm:$0xff]
      %v3913 = vld [vmem:[%s17 + $0x78] sm:$0xff]
      %v3914 = vld [vmem:[%s17 + $0x80] sm:$0xff]
      %v3915 = vld [vmem:[%s17 + $0x88] sm:$0xff]
      %v3916 = vld [vmem:[%s17 + $0x90] sm:$0xff]
      %v3917 = vld [vmem:[%s17 + $0x98] sm:$0xff]
      %v3918 = vld [vmem:[%s17 + $0xa0] sm:$0xff]
      %v3919 = vld [vmem:[%s17 + $0xa8] sm:$0xff]
      %v3920 = vld [vmem:[%s17 + $0xb0] sm:$0xff]
      %v3921 = vld [vmem:[%s17 + $0xb8] sm:$0xff]
      %v3922 = vld [vmem:[%s17 + $0xc0] sm:$0xff]
      %v3923 = vld [vmem:[%s17 + $0xc8] sm:$0xff]
      %v3924 = vld [vmem:[%s17 + $0xd0] sm:$0xff]
      %v3925 = vld [vmem:[%s17 + $0xd8] sm:$0xff]
      %v3926 = vld [vmem:[%s17 + $0xe0] sm:$0xff]
      %v3927 = vld [vmem:[%s17 + $0xe8] sm:$0xff]
      %v3928 = vld [vmem:[%s17 + $0xf0] sm:$0xff]
      %v3929 = vld [vmem:[%s17 + $0xf8] sm:$0xff]
      %3930 = vmatprep.subr.mxu0 0.0
      %3931 = vmatpush1.msra.mxu0 %v3898
      %3932 = vmatprep.subr.mxu0 0.0
      %3933 = vmatpush1.msra.mxu0 %v3899
      %3934 = vmatprep.subr.mxu0 0.0
      %3935 = vmatpush1.msra.mxu0 %v3900
      %3936 = vmatprep.subr.mxu0 0.0
      %3937 = vmatpush1.msra.mxu0 %v3901
      %3938 = vmatprep.subr.mxu0 0.0
      %3939 = vmatpush1.msra.mxu0 %v3902
      %3940 = vmatprep.subr.mxu0 0.0
      %3941 = vmatpush1.msra.mxu0 %v3903
      %3942 = vmatprep.subr.mxu0 0.0
      %3943 = vmatpush1.msra.mxu0 %v3904
      %3944 = vmatprep.subr.mxu0 0.0
      %3945 = vmatpush1.msra.mxu0 %v3905
      %3946 = vmatprep.subr.mxu0 0.0
      %3947 = vmatpush1.msra.mxu0 %v3906
      %3948 = vmatprep.subr.mxu0 0.0
      %3949 = vmatpush1.msra.mxu0 %v3907
      %3950 = vmatprep.subr.mxu0 0.0
      %3951 = vmatpush1.msra.mxu0 %v3908
      %3952 = vmatprep.subr.mxu0 0.0
      %3953 = vmatpush1.msra.mxu0 %v3909
      %3954 = vmatprep.subr.mxu0 0.0
      %3955 = vmatpush1.msra.mxu0 %v3910
      %3956 = vmatprep.subr.mxu0 0.0
      %3957 = vmatpush1.msra.mxu0 %v3911
      %3958 = vmatprep.subr.mxu0 0.0
      %3959 = vmatpush1.msra.mxu0 %v3912
      %3960 = vmatprep.subr.mxu0 0.0
      %3961 = vmatpush1.msra.mxu0 %v3913
      %3962 = vmatprep.subr.mxu0 0.0
      %3963 = vmatpush1.msra.mxu0 %v3914
      %3964 = vmatprep.subr.mxu0 0.0
      %3965 = vmatpush1.msra.mxu0 %v3915
      %3966 = vmatprep.subr.mxu0 0.0
      %3967 = vmatpush1.msra.mxu0 %v3916
      %3968 = vmatprep.subr.mxu0 0.0
      %3969 = vmatpush1.msra.mxu0 %v3917
      %3970 = vmatprep.subr.mxu0 0.0
      %3971 = vmatpush1.msra.mxu0 %v3918
      %3972 = vmatprep.subr.mxu0 0.0
      %3973 = vmatpush1.msra.mxu0 %v3919
      %3974 = vmatprep.subr.mxu0 0.0
      %3975 = vmatpush1.msra.mxu0 %v3920
      %3976 = vmatprep.subr.mxu0 0.0
      %3977 = vmatpush1.msra.mxu0 %v3921
      %3978 = vmatprep.subr.mxu0 0.0
      %3979 = vmatpush1.msra.mxu0 %v3922
      %3980 = vmatprep.subr.mxu0 0.0
      %3981 = vmatpush1.msra.mxu0 %v3923
      %3982 = vmatprep.subr.mxu0 0.0
      %3983 = vmatpush1.msra.mxu0 %v3924
      %3984 = vmatprep.subr.mxu0 0.0
      %3985 = vmatpush1.msra.mxu0 %v3925
      %3986 = vmatprep.subr.mxu0 0.0
      %3987 = vmatpush1.msra.mxu0 %v3926
      %3988 = vmatprep.subr.mxu0 0.0
      %3989 = vmatpush1.msra.mxu0 %v3927
      %3990 = vmatprep.subr.mxu0 0.0
      %3991 = vmatpush1.msra.mxu0 %v3928
      %3992 = vmatprep.subr.mxu0 0.0
      %3993 = vmatpush1.msra.mxu0 %v3929
      %3994 = vmatprep.mubr.f32.mxu0 %v3883
      %3995 = vmatmul.mubr.f32.gmra.mrb[0].mxu0 %v3700
      %v3996 = vpop.f32.mrb[0].mxu0
      %v3997 = vadd.f32 0.0, %v3996
      %v3998 = vpop.f32.mrb[0].mxu0
      %3999 = vmatprep.mubr.f32.mxu0 %v3888
      %4000 = vmatmul.mubr.f32.gmra.mrb[0].mxu0 %v3705
      %v4001 = vpop.f32.mrb[0].mxu0
      %v4002 = vadd.f32 0.0, %v4001
      %v4003 = vpop.f32.mrb[0].mxu0
      %4004 = vdwg.mxu0
      %v4005 = vadd.f32 %v3896, %v3997
      %v4006 = vadd.f32 %v3897, %v4002
      %v4007 = vld [vmem:[%s15 + $0x3] sm:$0x1]
      %v4008 = vld [vmem:[%s15 + $0x4] sm:$0x1]
      %v4009 = vsel %vm742, %v4005, 0.0
      %4010 = vadd.xlane.f32.xlu0 %v4009
      %v4011 = vpop.xlane.xlu0 %4010
      %v4012 = vsel %vm746, %v4006, 0.0
      %4013 = vadd.xlane.f32.xlu0 %v4012
      %v4014 = vpop.xlane.xlu0 %4013
      %v4015 = vmul.f32 %v4011, %v750
      %v4016 = vmul.f32 %v4014, %v750
      %v4017 = vsub.f32 %v4005, %v4015
      %v4018 = vsub.f32 %v4006, %v4016
      %v4019 = vmul.f32 %v4017, %v4017
      %v4020 = vmul.f32 %v4018, %v4018
      %v4021 = vsel %vm742, %v4019, 0.0
      %4022 = vadd.xlane.f32.xlu0 %v4021
      %v4023 = vpop.xlane.xlu0 %4022
      %v4024 = vsel %vm746, %v4020, 0.0
      %4025 = vadd.xlane.f32.xlu0 %v4024
      %v4026 = vpop.xlane.xlu0 %4025
      %v4027 = vmul.f32 %v4023, %v750
      %v4028 = vmul.f32 %v4026, %v750
      %v4029 = vadd.f32 %v4027, 1e-05
      %v4030 = vadd.f32 %v4028, 1e-05
      %v4031 = vrsqrt.pop %v4029
      %v4032 = vrsqrt.pop %v4030
      %v4033 = vmul.f32 %v4017, %v4031
      %v4034 = vmul.f32 %v4018, %v4032
      %v4035 = vlaneseq
      %v4036 = vshrl.u32 %v4035, 7
      %v4037 = vsub.s32 0, %v4036
      %v4038 = vrot.slane %v4007, %v4037
      %v4039 = vmul.f32 %v4033, %v4038
      %v4040 = vmul.f32 %v4034, %v4038
      %v4041 = vlaneseq
      %v4042 = vshrl.u32 %v4041, 7
      %v4043 = vsub.s32 0, %v4042
      %v4044 = vrot.slane %v4008, %v4043
      %v4045 = vadd.f32 %v4039, %v4044
      %v4046 = vadd.f32 %v4040, %v4044
      %v4047 = vld [vmem:[%s18] sm:$0xff]
      %v4048 = vld [vmem:[%s18 + $0x8] sm:$0xff]
      %v4049 = vld [vmem:[%s19] sm:$0x1]
      %v4051 = vlaneseq
      %v4052 = vshrl.u32 %v4051, 7
      %v4053 = vsub.s32 0, %v4052
      %v4054 = vrot.slane %v4049, %v4053
      %v4057 = vsel %vm742, %v4045, 0
      %v4060 = vsel %vm742, %v4046, 0
      %4062 = vmatprep.subr.mxu0 0.0
      %4063 = vmatpush1.msra.mxu0 %v4047
      %4064 = vmatprep.subr.mxu0 0.0
      %4065 = vmatpush1.msra.mxu0 %v4048
      %4066 = vmatprep.subr.mxu0 0.0
      %4067 = vmatpush1.msra.mxu0 0.0
      %4068 = vmatprep.subr.mxu0 0.0
      %4069 = vmatpush1.msra.mxu0 0.0
      %4070 = vmatprep.subr.mxu0 0.0
      %4071 = vmatpush1.msra.mxu0 0.0
      %4072 = vmatprep.subr.mxu0 0.0
      %4073 = vmatpush1.msra.mxu0 0.0
      %4074 = vmatprep.subr.mxu0 0.0
      %4075 = vmatpush1.msra.mxu0 0.0
      %4076 = vmatprep.subr.mxu0 0.0
      %4077 = vmatpush1.msra.mxu0 0.0
      %4078 = vmatprep.subr.mxu0 0.0
      %4079 = vmatpush1.msra.mxu0 0.0
      %4080 = vmatprep.subr.mxu0 0.0
      %4081 = vmatpush1.msra.mxu0 0.0
      %4082 = vmatprep.subr.mxu0 0.0
      %4083 = vmatpush1.msra.mxu0 0.0
      %4084 = vmatprep.subr.mxu0 0.0
      %4085 = vmatpush1.msra.mxu0 0.0
      %4086 = vmatprep.subr.mxu0 0.0
      %4087 = vmatpush1.msra.mxu0 0.0
      %4088 = vmatprep.subr.mxu0 0.0
      %4089 = vmatpush1.msra.mxu0 0.0
      %4090 = vmatprep.subr.mxu0 0.0
      %4091 = vmatpush1.msra.mxu0 0.0
      %4092 = vmatprep.subr.mxu0 0.0
      %4093 = vmatpush1.msra.mxu0 0.0
      %4094 = vmatprep.subr.mxu0 0.0
      %4095 = vmatpush1.msra.mxu0 0.0
      %4096 = vmatprep.subr.mxu0 0.0
      %4097 = vmatpush1.msra.mxu0 0.0
      %4098 = vmatprep.subr.mxu0 0.0
      %4099 = vmatpush1.msra.mxu0 0.0
      %4100 = vmatprep.subr.mxu0 0.0
      %4101 = vmatpush1.msra.mxu0 0.0
      %4102 = vmatprep.subr.mxu0 0.0
      %4103 = vmatpush1.msra.mxu0 0.0
      %4104 = vmatprep.subr.mxu0 0.0
      %4105 = vmatpush1.msra.mxu0 0.0
      %4106 = vmatprep.subr.mxu0 0.0
      %4107 = vmatpush1.msra.mxu0 0.0
      %4108 = vmatprep.subr.mxu0 0.0
      %4109 = vmatpush1.msra.mxu0 0.0
      %4110 = vmatprep.subr.mxu0 0.0
      %4111 = vmatpush1.msra.mxu0 0.0
      %4112 = vmatprep.subr.mxu0 0.0
      %4113 = vmatpush1.msra.mxu0 0.0
      %4114 = vmatprep.subr.mxu0 0.0
      %4115 = vmatpush1.msra.mxu0 0.0
      %4116 = vmatprep.subr.mxu0 0.0
      %4117 = vmatpush1.msra.mxu0 0.0
      %4118 = vmatprep.subr.mxu0 0.0
      %4119 = vmatpush1.msra.mxu0 0.0
      %4120 = vmatprep.subr.mxu0 0.0
      %4121 = vmatpush1.msra.mxu0 0.0
      %4122 = vmatprep.subr.mxu0 0.0
      %4123 = vmatpush1.msra.mxu0 0.0
      %4124 = vmatprep.subr.mxu0 0.0
      %4125 = vmatpush1.msra.mxu0 0.0
      %4126 = vmatprep.mubr.f32.mxu0 0.0
      %4127 = vmatmul.mubr.f32.gmra.mrb[0].mxu0 %v4057
      %v4128 = vpop.f32.mrb[0].mxu0
      %v4129 = vadd.f32 %v4054, %v4128
      %v4130 = vpop.f32.mrb[0].mxu0
      %4131 = vmatprep.mubr.f32.mxu0 0.0
      %4132 = vmatmul.mubr.f32.gmra.mrb[0].mxu0 %v4060
      %v4133 = vpop.f32.mrb[0].mxu0
      %v4134 = vadd.f32 %v4054, %v4133
      %v4135 = vpop.f32.mrb[0].mxu0
      %4136 = vdwg.mxu0
      %v4137 = vmul.f32 %v4129, 0.5
      %v4138 = vmul.f32 %v4134, 0.5
      %v4139 = vmul.f32 %v4129, 0.70710677
      %v4140 = vmul.f32 %v4134, 0.70710677
      %vm4141 = vcmp.lt.f32.partialorder %v4139, 0.0
      %vm4142 = vcmp.lt.f32.partialorder %v4140, 0.0
      %v4143 = vsel %vm4141, -1.0, 1.0
      %v4144 = vsel %vm4142, -1.0, 1.0
      %v4145 = vand.u32 2147483647, %v4139
      %v4146 = vand.u32 2147483647, %v4140
      %v4147 = vmul.f32 %v4145, 0.3275911
      %v4148 = vmul.f32 %v4146, 0.3275911
      %v4149 = vadd.f32 %v4147, 1.0
      %v4150 = vadd.f32 %v4148, 1.0
      %v4151 = vrcp.pop %v4149
      %v4152 = vmul.f32 1.0, %v4151
      %v4153 = vrcp.pop %v4150
      %v4154 = vmul.f32 1.0, %v4153
      %v4155 = vmul.f32 %v4152, 1.0614054
      %v4156 = vmul.f32 %v4154, 1.0614054
      %v4157 = vadd.f32 %v4155, -1.4531521
      %v4158 = vadd.f32 %v4156, -1.4531521
      %v4159 = vmul.f32 %v4152, %v4157
      %v4160 = vmul.f32 %v4154, %v4158
      %v4161 = vadd.f32 %v4159, 1.4214138
      %v4162 = vadd.f32 %v4160, 1.4214138
      %v4163 = vmul.f32 %v4152, %v4161
      %v4164 = vmul.f32 %v4154, %v4162
      %v4165 = vadd.f32 %v4163, -0.28449672
      %v4166 = vadd.f32 %v4164, -0.28449672
      %v4167 = vmul.f32 %v4152, %v4165
      %v4168 = vmul.f32 %v4154, %v4166
      %v4169 = vadd.f32 %v4167, 0.2548296
      %v4170 = vadd.f32 %v4168, 0.2548296
      %v4171 = vmul.f32 %v4152, %v4169
      %v4172 = vmul.f32 %v4154, %v4170
      %v4173 = vsub.f32 0.0, %v4145
      %v4174 = vsub.f32 0.0, %v4146
      %v4175 = vmul.f32 %v4173, %v4145
      %v4176 = vmul.f32 %v4174, %v4146
      %v4177 = vmul.f32 %v4175, 1.442695
      %v4178 = vpow.pop %v4177
      %v4179 = vmul.f32 %v4176, 1.442695
      %v4180 = vpow.pop %v4179
      %v4181 = vmul.f32 %v4171, %v4178
      %v4182 = vmul.f32 %v4172, %v4180
      %v4183 = vsub.f32 1.0, %v4181
      %v4184 = vsub.f32 1.0, %v4182
      %v4185 = vmul.f32 %v4143, %v4183
      %v4186 = vmul.f32 %v4144, %v4184
      %v4187 = vadd.f32 %v4185, 1.0
      %v4188 = vadd.f32 %v4186, 1.0
      %v4189 = vmul.f32 %v4137, %v4187
      %v4190 = vmul.f32 %v4138, %v4188
      %v4191 = vld [vmem:[%s20] sm:$0xf]
      %v4193 = vsel %vm1898, %v4189, 0
      %v4196 = vsel %vm1898, %v4190, 0
      %v4199 = vsel %vm1905, %v4191, 0
      %4201 = vmatprep.subr.mxu0 0.0
      %4202 = vmatpush1.msra.mxu0 %v4199
      %4203 = vmatprep.subr.mxu0 0.0
      %4204 = vmatpush1.msra.mxu0 0.0
      %4205 = vmatprep.subr.mxu0 0.0
      %4206 = vmatpush1.msra.mxu0 0.0
      %4207 = vmatprep.subr.mxu0 0.0
      %4208 = vmatpush1.msra.mxu0 0.0
      %4209 = vmatprep.subr.mxu0 0.0
      %4210 = vmatpush1.msra.mxu0 0.0
      %4211 = vmatprep.subr.mxu0 0.0
      %4212 = vmatpush1.msra.mxu0 0.0
      %4213 = vmatprep.subr.mxu0 0.0
      %4214 = vmatpush1.msra.mxu0 0.0
      %4215 = vmatprep.subr.mxu0 0.0
      %4216 = vmatpush1.msra.mxu0 0.0
      %4217 = vmatprep.subr.mxu0 0.0
      %4218 = vmatpush1.msra.mxu0 0.0
      %4219 = vmatprep.subr.mxu0 0.0
      %4220 = vmatpush1.msra.mxu0 0.0
      %4221 = vmatprep.subr.mxu0 0.0
      %4222 = vmatpush1.msra.mxu0 0.0
      %4223 = vmatprep.subr.mxu0 0.0
      %4224 = vmatpush1.msra.mxu0 0.0
      %4225 = vmatprep.subr.mxu0 0.0
      %4226 = vmatpush1.msra.mxu0 0.0
      %4227 = vmatprep.subr.mxu0 0.0
      %4228 = vmatpush1.msra.mxu0 0.0
      %4229 = vmatprep.subr.mxu0 0.0
      %4230 = vmatpush1.msra.mxu0 0.0
      %4231 = vmatprep.subr.mxu0 0.0
      %4232 = vmatpush1.msra.mxu0 0.0
      %4233 = vmatprep.subr.mxu0 0.0
      %4234 = vmatpush1.msra.mxu0 0.0
      %4235 = vmatprep.subr.mxu0 0.0
      %4236 = vmatpush1.msra.mxu0 0.0
      %4237 = vmatprep.subr.mxu0 0.0
      %4238 = vmatpush1.msra.mxu0 0.0
      %4239 = vmatprep.subr.mxu0 0.0
      %4240 = vmatpush1.msra.mxu0 0.0
      %4241 = vmatprep.subr.mxu0 0.0
      %4242 = vmatpush1.msra.mxu0 0.0
      %4243 = vmatprep.subr.mxu0 0.0
      %4244 = vmatpush1.msra.mxu0 0.0
      %4245 = vmatprep.subr.mxu0 0.0
      %4246 = vmatpush1.msra.mxu0 0.0
      %4247 = vmatprep.subr.mxu0 0.0
      %4248 = vmatpush1.msra.mxu0 0.0
      %4249 = vmatprep.subr.mxu0 0.0
      %4250 = vmatpush1.msra.mxu0 0.0
      %4251 = vmatprep.subr.mxu0 0.0
      %4252 = vmatpush1.msra.mxu0 0.0
      %4253 = vmatprep.subr.mxu0 0.0
      %4254 = vmatpush1.msra.mxu0 0.0
      %4255 = vmatprep.subr.mxu0 0.0
      %4256 = vmatpush1.msra.mxu0 0.0
      %4257 = vmatprep.subr.mxu0 0.0
      %4258 = vmatpush1.msra.mxu0 0.0
      %4259 = vmatprep.subr.mxu0 0.0
      %4260 = vmatpush1.msra.mxu0 0.0
      %4261 = vmatprep.subr.mxu0 0.0
      %4262 = vmatpush1.msra.mxu0 0.0
      %4263 = vmatprep.subr.mxu0 0.0
      %4264 = vmatpush1.msra.mxu0 0.0
      %4265 = vmatprep.mubr.f32.mxu0 0.0
      %4266 = vmatmul.mubr.f32.gmra.mrb[0].mxu0 %v4193
      %v4267 = vpop.f32.mrb[0].mxu0
      %v4268 = vadd.f32 0.0, %v4267
      %v4269 = vpop.f32.mrb[0].mxu0
      %4270 = vmatprep.mubr.f32.mxu0 0.0
      %4271 = vmatmul.mubr.f32.gmra.mrb[0].mxu0 %v4196
      %v4272 = vpop.f32.mrb[0].mxu0
      %v4273 = vadd.f32 0.0, %v4272
      %v4274 = vpop.f32.mrb[0].mxu0
      %4275 = vdwg.mxu0
      %v4276 = vadd.f32 %v4005, %v4268
      %v4277 = vadd.f32 %v4006, %v4273
      %v4278 = vld [vmem:[%s15 + $0x5] sm:$0x1]
      %v4279 = vlaneseq
      %v4280 = vshrl.u32 %v4279, 7
      %v4281 = vsub.s32 0, %v4280
      %v4282 = vrot.slane %v4278, %v4281
      %v4283 = vadd.f32 %v4276, %v4282
      %v4284 = vadd.f32 %v4277, %v4282
      %s4285 = scalar_lea.vmem %s15, 8
      %v4286 = vld [vmem:[%s4285] sm:$0x1]
      %v4287 = vld [vmem:[%s4285 + $0x1] sm:$0x1]
      %v4288 = vsel %vm742, %v4283, 0.0
      %4289 = vadd.xlane.f32.xlu0 %v4288
      %v4290 = vpop.xlane.xlu0 %4289
      %v4291 = vsel %vm746, %v4284, 0.0
      %4292 = vadd.xlane.f32.xlu0 %v4291
      %v4293 = vpop.xlane.xlu0 %4292
      %v4294 = vmul.f32 %v4290, %v750
      %v4295 = vmul.f32 %v4293, %v750
      %v4296 = vsub.f32 %v4283, %v4294
      %v4297 = vsub.f32 %v4284, %v4295
      %v4298 = vmul.f32 %v4296, %v4296
      %v4299 = vmul.f32 %v4297, %v4297
      %v4300 = vsel %vm742, %v4298, 0.0
      %4301 = vadd.xlane.f32.xlu0 %v4300
      %v4302 = vpop.xlane.xlu0 %4301
      %v4303 = vsel %vm746, %v4299, 0.0
      %4304 = vadd.xlane.f32.xlu0 %v4303
      %v4305 = vpop.xlane.xlu0 %4304
      %v4306 = vmul.f32 %v4302, %v750
      %v4307 = vmul.f32 %v4305, %v750
      %v4308 = vadd.f32 %v4306, 1e-05
      %v4309 = vadd.f32 %v4307, 1e-05
      %v4310 = vrsqrt.pop %v4308
      %v4311 = vrsqrt.pop %v4309
      %v4312 = vmul.f32 %v4296, %v4310
      %v4313 = vmul.f32 %v4297, %v4311
      %v4314 = vlaneseq
      %v4315 = vshrl.u32 %v4314, 7
      %v4316 = vsub.s32 0, %v4315
      %v4317 = vrot.slane %v4286, %v4316
      %v4318 = vmul.f32 %v4312, %v4317
      %v4319 = vmul.f32 %v4313, %v4317
      %v4320 = vlaneseq
      %v4321 = vshrl.u32 %v4320, 7
      %v4322 = vsub.s32 0, %v4321
      %v4323 = vrot.slane %v4287, %v4322
      %v4324 = vadd.f32 %v4318, %v4323
      %v4325 = vadd.f32 %v4319, %v4323
      %s4326 = scalar_lea.vmem %s16, 96
      %v4327 = vld [vmem:[%s4326] sm:$0xff]
      %v4328 = vld [vmem:[%s4326 + $0x8] sm:$0xff]
      %v4329 = vld [vmem:[%s4326 + $0x10] sm:$0xff]
      %v4330 = vld [vmem:[%s4326 + $0x18] sm:$0xff]
      %v4331 = vld [vmem:[%s4326 + $0x20] sm:$0xff]
      %v4332 = vld [vmem:[%s4326 + $0x28] sm:$0xff]
      %v4333 = vld [vmem:[%s4326 + $0x30] sm:$0xff]
      %v4334 = vld [vmem:[%s4326 + $0x38] sm:$0xff]
      %v4335 = vld [vmem:[%s4326 + $0x40] sm:$0xff]
      %v4336 = vld [vmem:[%s4326 + $0x48] sm:$0xff]
      %v4337 = vld [vmem:[%s4326 + $0x50] sm:$0xff]
      %v4338 = vld [vmem:[%s4326 + $0x58] sm:$0xff]
      %v4340 = vsel %vm742, %v4324, 0
      %v4343 = vsel %vm742, %v4325, 0
      %4345 = vmatprep.subr.mxu0 %v4328
      %4346 = vmatpush1.msra.mxu0 %v4327
      %4347 = vmatprep.subr.mxu0 %v4334
      %4348 = vmatpush1.msra.mxu0 %v4333
      %4349 = vmatprep.subr.mxu0 0.0
      %4350 = vmatpush1.msra.mxu0 0.0
      %4351 = vmatprep.subr.mxu0 0.0
      %4352 = vmatpush1.msra.mxu0 0.0
      %4353 = vmatprep.subr.mxu0 0.0
      %4354 = vmatpush1.msra.mxu0 0.0
      %4355 = vmatprep.subr.mxu0 0.0
      %4356 = vmatpush1.msra.mxu0 0.0
      %4357 = vmatprep.subr.mxu0 0.0
      %4358 = vmatpush1.msra.mxu0 0.0
      %4359 = vmatprep.subr.mxu0 0.0
      %4360 = vmatpush1.msra.mxu0 0.0
      %4361 = vmatprep.subr.mxu0 0.0
      %4362 = vmatpush1.msra.mxu0 0.0
      %4363 = vmatprep.subr.mxu0 0.0
      %4364 = vmatpush1.msra.mxu0 0.0
      %4365 = vmatprep.subr.mxu0 0.0
      %4366 = vmatpush1.msra.mxu0 0.0
      %4367 = vmatprep.subr.mxu0 0.0
      %4368 = vmatpush1.msra.mxu0 0.0
      %4369 = vmatprep.subr.mxu0 0.0
      %4370 = vmatpush1.msra.mxu0 0.0
      %4371 = vmatprep.subr.mxu0 0.0
      %4372 = vmatpush1.msra.mxu0 0.0
      %4373 = vmatprep.subr.mxu0 0.0
      %4374 = vmatpush1.msra.mxu0 0.0
      %4375 = vmatprep.subr.mxu0 0.0
      %4376 = vmatpush1.msra.mxu0 0.0
      %4377 = vmatprep.subr.mxu0 0.0
      %4378 = vmatpush1.msra.mxu0 0.0
      %4379 = vmatprep.subr.mxu0 0.0
      %4380 = vmatpush1.msra.mxu0 0.0
      %4381 = vmatprep.subr.mxu0 0.0
      %4382 = vmatpush1.msra.mxu0 0.0
      %4383 = vmatprep.subr.mxu0 0.0
      %4384 = vmatpush1.msra.mxu0 0.0
      %4385 = vmatprep.subr.mxu0 0.0
      %4386 = vmatpush1.msra.mxu0 0.0
      %4387 = vmatprep.subr.mxu0 0.0
      %4388 = vmatpush1.msra.mxu0 0.0
      %4389 = vmatprep.subr.mxu0 0.0
      %4390 = vmatpush1.msra.mxu0 0.0
      %4391 = vmatprep.subr.mxu0 0.0
      %4392 = vmatpush1.msra.mxu0 0.0
      %4393 = vmatprep.subr.mxu0 0.0
      %4394 = vmatpush1.msra.mxu0 0.0
      %4395 = vmatprep.subr.mxu0 0.0
      %4396 = vmatpush1.msra.mxu0 0.0
      %4397 = vmatprep.subr.mxu0 0.0
      %4398 = vmatpush1.msra.mxu0 0.0
      %4399 = vmatprep.subr.mxu0 0.0
      %4400 = vmatpush1.msra.mxu0 0.0
      %4401 = vmatprep.subr.mxu0 0.0
      %4402 = vmatpush1.msra.mxu0 0.0
      %4403 = vmatprep.subr.mxu0 0.0
      %4404 = vmatpush1.msra.mxu0 0.0
      %4405 = vmatprep.subr.mxu0 0.0
      %4406 = vmatpush1.msra.mxu0 0.0
      %4407 = vmatprep.subr.mxu0 0.0
      %4408 = vmatpush1.msra.mxu0 0.0
      %4409 = vmatprep.mubr.f32.mxu0 0.0
      %4410 = vmatmul.mubr.f32.gmra.mrb[0].mxu0 %v4340
      %v4411 = vpop.f32.mrb[0].mxu0
      %v4412 = vadd.f32 0.0, %v4411
      %v4413 = vpop.f32.mrb[0].mxu0
      %v4414 = vadd.f32 0.0, %v4413
      %4415 = vmatprep.mubr.f32.mxu0 0.0
      %4416 = vmatmul.mubr.f32.gmra.mrb[0].mxu0 %v4343
      %v4417 = vpop.f32.mrb[0].mxu0
      %v4418 = vadd.f32 0.0, %v4417
      %v4419 = vpop.f32.mrb[0].mxu0
      %v4420 = vadd.f32 0.0, %v4419
      %4421 = vdwg.mxu0
      %4422 = vmatprep.subr.mxu0 %v4330
      %4423 = vmatpush1.msra.mxu0 %v4329
      %4424 = vmatprep.subr.mxu0 %v4336
      %4425 = vmatpush1.msra.mxu0 %v4335
      %4426 = vmatprep.subr.mxu0 0.0
      %4427 = vmatpush1.msra.mxu0 0.0
      %4428 = vmatprep.subr.mxu0 0.0
      %4429 = vmatpush1.msra.mxu0 0.0
      %4430 = vmatprep.subr.mxu0 0.0
      %4431 = vmatpush1.msra.mxu0 0.0
      %4432 = vmatprep.subr.mxu0 0.0
      %4433 = vmatpush1.msra.mxu0 0.0
      %4434 = vmatprep.subr.mxu0 0.0
      %4435 = vmatpush1.msra.mxu0 0.0
      %4436 = vmatprep.subr.mxu0 0.0
      %4437 = vmatpush1.msra.mxu0 0.0
      %4438 = vmatprep.subr.mxu0 0.0
      %4439 = vmatpush1.msra.mxu0 0.0
      %4440 = vmatprep.subr.mxu0 0.0
      %4441 = vmatpush1.msra.mxu0 0.0
      %4442 = vmatprep.subr.mxu0 0.0
      %4443 = vmatpush1.msra.mxu0 0.0
      %4444 = vmatprep.subr.mxu0 0.0
      %4445 = vmatpush1.msra.mxu0 0.0
      %4446 = vmatprep.subr.mxu0 0.0
      %4447 = vmatpush1.msra.mxu0 0.0
      %4448 = vmatprep.subr.mxu0 0.0
      %4449 = vmatpush1.msra.mxu0 0.0
      %4450 = vmatprep.subr.mxu0 0.0
      %4451 = vmatpush1.msra.mxu0 0.0
      %4452 = vmatprep.subr.mxu0 0.0
      %4453 = vmatpush1.msra.mxu0 0.0
      %4454 = vmatprep.subr.mxu0 0.0
      %4455 = vmatpush1.msra.mxu0 0.0
      %4456 = vmatprep.subr.mxu0 0.0
      %4457 = vmatpush1.msra.mxu0 0.0
      %4458 = vmatprep.subr.mxu0 0.0
      %4459 = vmatpush1.msra.mxu0 0.0
      %4460 = vmatprep.subr.mxu0 0.0
      %4461 = vmatpush1.msra.mxu0 0.0
      %4462 = vmatprep.subr.mxu0 0.0
      %4463 = vmatpush1.msra.mxu0 0.0
      %4464 = vmatprep.subr.mxu0 0.0
      %4465 = vmatpush1.msra.mxu0 0.0
      %4466 = vmatprep.subr.mxu0 0.0
      %4467 = vmatpush1.msra.mxu0 0.0
      %4468 = vmatprep.subr.mxu0 0.0
      %4469 = vmatpush1.msra.mxu0 0.0
      %4470 = vmatprep.subr.mxu0 0.0
      %4471 = vmatpush1.msra.mxu0 0.0
      %4472 = vmatprep.subr.mxu0 0.0
      %4473 = vmatpush1.msra.mxu0 0.0
      %4474 = vmatprep.subr.mxu0 0.0
      %4475 = vmatpush1.msra.mxu0 0.0
      %4476 = vmatprep.subr.mxu0 0.0
      %4477 = vmatpush1.msra.mxu0 0.0
      %4478 = vmatprep.subr.mxu0 0.0
      %4479 = vmatpush1.msra.mxu0 0.0
      %4480 = vmatprep.subr.mxu0 0.0
      %4481 = vmatpush1.msra.mxu0 0.0
      %4482 = vmatprep.subr.mxu0 0.0
      %4483 = vmatpush1.msra.mxu0 0.0
      %4484 = vmatprep.subr.mxu0 0.0
      %4485 = vmatpush1.msra.mxu0 0.0
      %4486 = vmatprep.mubr.f32.mxu0 0.0
      %4487 = vmatmul.mubr.f32.gmra.mrb[0].mxu0 %v4340
      %v4488 = vpop.f32.mrb[0].mxu0
      %v4489 = vadd.f32 0.0, %v4488
      %v4490 = vpop.f32.mrb[0].mxu0
      %v4491 = vadd.f32 0.0, %v4490
      %4492 = vmatprep.mubr.f32.mxu0 0.0
      %4493 = vmatmul.mubr.f32.gmra.mrb[0].mxu0 %v4343
      %v4494 = vpop.f32.mrb[0].mxu0
      %v4495 = vadd.f32 0.0, %v4494
      %v4496 = vpop.f32.mrb[0].mxu0
      %v4497 = vadd.f32 0.0, %v4496
      %4498 = vdwg.mxu0
      %4499 = vmatprep.subr.mxu0 %v4332
      %4500 = vmatpush1.msra.mxu0 %v4331
      %4501 = vmatprep.subr.mxu0 %v4338
      %4502 = vmatpush1.msra.mxu0 %v4337
      %4503 = vmatprep.subr.mxu0 0.0
      %4504 = vmatpush1.msra.mxu0 0.0
      %4505 = vmatprep.subr.mxu0 0.0
      %4506 = vmatpush1.msra.mxu0 0.0
      %4507 = vmatprep.subr.mxu0 0.0
      %4508 = vmatpush1.msra.mxu0 0.0
      %4509 = vmatprep.subr.mxu0 0.0
      %4510 = vmatpush1.msra.mxu0 0.0
      %4511 = vmatprep.subr.mxu0 0.0
      %4512 = vmatpush1.msra.mxu0 0.0
      %4513 = vmatprep.subr.mxu0 0.0
      %4514 = vmatpush1.msra.mxu0 0.0
      %4515 = vmatprep.subr.mxu0 0.0
      %4516 = vmatpush1.msra.mxu0 0.0
      %4517 = vmatprep.subr.mxu0 0.0
      %4518 = vmatpush1.msra.mxu0 0.0
      %4519 = vmatprep.subr.mxu0 0.0
      %4520 = vmatpush1.msra.mxu0 0.0
      %4521 = vmatprep.subr.mxu0 0.0
      %4522 = vmatpush1.msra.mxu0 0.0
      %4523 = vmatprep.subr.mxu0 0.0
      %4524 = vmatpush1.msra.mxu0 0.0
      %4525 = vmatprep.subr.mxu0 0.0
      %4526 = vmatpush1.msra.mxu0 0.0
      %4527 = vmatprep.subr.mxu0 0.0
      %4528 = vmatpush1.msra.mxu0 0.0
      %4529 = vmatprep.subr.mxu0 0.0
      %4530 = vmatpush1.msra.mxu0 0.0
      %4531 = vmatprep.subr.mxu0 0.0
      %4532 = vmatpush1.msra.mxu0 0.0
      %4533 = vmatprep.subr.mxu0 0.0
      %4534 = vmatpush1.msra.mxu0 0.0
      %4535 = vmatprep.subr.mxu0 0.0
      %4536 = vmatpush1.msra.mxu0 0.0
      %4537 = vmatprep.subr.mxu0 0.0
      %4538 = vmatpush1.msra.mxu0 0.0
      %4539 = vmatprep.subr.mxu0 0.0
      %4540 = vmatpush1.msra.mxu0 0.0
      %4541 = vmatprep.subr.mxu0 0.0
      %4542 = vmatpush1.msra.mxu0 0.0
      %4543 = vmatprep.subr.mxu0 0.0
      %4544 = vmatpush1.msra.mxu0 0.0
      %4545 = vmatprep.subr.mxu0 0.0
      %4546 = vmatpush1.msra.mxu0 0.0
      %4547 = vmatprep.subr.mxu0 0.0
      %4548 = vmatpush1.msra.mxu0 0.0
      %4549 = vmatprep.subr.mxu0 0.0
      %4550 = vmatpush1.msra.mxu0 0.0
      %4551 = vmatprep.subr.mxu0 0.0
      %4552 = vmatpush1.msra.mxu0 0.0
      %4553 = vmatprep.subr.mxu0 0.0
      %4554 = vmatpush1.msra.mxu0 0.0
      %4555 = vmatprep.subr.mxu0 0.0
      %4556 = vmatpush1.msra.mxu0 0.0
      %4557 = vmatprep.subr.mxu0 0.0
      %4558 = vmatpush1.msra.mxu0 0.0
      %4559 = vmatprep.subr.mxu0 0.0
      %4560 = vmatpush1.msra.mxu0 0.0
      %4561 = vmatprep.subr.mxu0 0.0
      %4562 = vmatpush1.msra.mxu0 0.0
      %4563 = vmatprep.mubr.f32.mxu0 0.0
      %4564 = vmatmul.mubr.f32.gmra.mrb[0].mxu0 %v4340
      %v4565 = vpop.f32.mrb[0].mxu0
      %v4566 = vadd.f32 0.0, %v4565
      %v4567 = vpop.f32.mrb[0].mxu0
      %v4568 = vadd.f32 0.0, %v4567
      %4569 = vmatprep.mubr.f32.mxu0 0.0
      %4570 = vmatmul.mubr.f32.gmra.mrb[0].mxu0 %v4343
      %v4571 = vpop.f32.mrb[0].mxu0
      %v4572 = vadd.f32 0.0, %v4571
      %v4573 = vpop.f32.mrb[0].mxu0
      %v4574 = vadd.f32 0.0, %v4573
      %4575 = vdwg.mxu0
      %4576 = vmatprep.subr.mxu0 0.0
      %4577 = vmatpush1.xpose.msra.mxu0 %v4489
      %4578 = vmatprep.subr.mxu0 0.0
      %4579 = vmatpush1.xpose.msra.mxu0 %v4495
      %4580 = vmatprep.subr.mxu0 0.0
      %4581 = vmatpush1.xpose.msra.mxu0 0.0
      %4582 = vmatprep.subr.mxu0 0.0
      %4583 = vmatpush1.xpose.msra.mxu0 0.0
      %4584 = vmatprep.subr.mxu0 0.0
      %4585 = vmatpush1.xpose.msra.mxu0 0.0
      %4586 = vmatprep.subr.mxu0 0.0
      %4587 = vmatpush1.xpose.msra.mxu0 0.0
      %4588 = vmatprep.subr.mxu0 0.0
      %4589 = vmatpush1.xpose.msra.mxu0 0.0
      %4590 = vmatprep.subr.mxu0 0.0
      %4591 = vmatpush1.xpose.msra.mxu0 0.0
      %4592 = vmatprep.subr.mxu0 0.0
      %4593 = vmatpush1.xpose.msra.mxu0 0.0
      %4594 = vmatprep.subr.mxu0 0.0
      %4595 = vmatpush1.xpose.msra.mxu0 0.0
      %4596 = vmatprep.subr.mxu0 0.0
      %4597 = vmatpush1.xpose.msra.mxu0 0.0
      %4598 = vmatprep.subr.mxu0 0.0
      %4599 = vmatpush1.xpose.msra.mxu0 0.0
      %4600 = vmatprep.subr.mxu0 0.0
      %4601 = vmatpush1.xpose.msra.mxu0 0.0
      %4602 = vmatprep.subr.mxu0 0.0
      %4603 = vmatpush1.xpose.msra.mxu0 0.0
      %4604 = vmatprep.subr.mxu0 0.0
      %4605 = vmatpush1.xpose.msra.mxu0 0.0
      %4606 = vmatprep.subr.mxu0 0.0
      %4607 = vmatpush1.xpose.msra.mxu0 0.0
      %4608 = vmatprep.subr.mxu0 0.0
      %4609 = vmatpush1.xpose.msra.mxu0 0.0
      %4610 = vmatprep.subr.mxu0 0.0
      %4611 = vmatpush1.xpose.msra.mxu0 0.0
      %4612 = vmatprep.subr.mxu0 0.0
      %4613 = vmatpush1.xpose.msra.mxu0 0.0
      %4614 = vmatprep.subr.mxu0 0.0
      %4615 = vmatpush1.xpose.msra.mxu0 0.0
      %4616 = vmatprep.subr.mxu0 0.0
      %4617 = vmatpush1.xpose.msra.mxu0 0.0
      %4618 = vmatprep.subr.mxu0 0.0
      %4619 = vmatpush1.xpose.msra.mxu0 0.0
      %4620 = vmatprep.subr.mxu0 0.0
      %4621 = vmatpush1.xpose.msra.mxu0 0.0
      %4622 = vmatprep.subr.mxu0 0.0
      %4623 = vmatpush1.xpose.msra.mxu0 0.0
      %4624 = vmatprep.subr.mxu0 0.0
      %4625 = vmatpush1.xpose.msra.mxu0 0.0
      %4626 = vmatprep.subr.mxu0 0.0
      %4627 = vmatpush1.xpose.msra.mxu0 0.0
      %4628 = vmatprep.subr.mxu0 0.0
      %4629 = vmatpush1.xpose.msra.mxu0 0.0
      %4630 = vmatprep.subr.mxu0 0.0
      %4631 = vmatpush1.xpose.msra.mxu0 0.0
      %4632 = vmatprep.subr.mxu0 0.0
      %4633 = vmatpush1.xpose.msra.mxu0 0.0
      %4634 = vmatprep.subr.mxu0 0.0
      %4635 = vmatpush1.xpose.msra.mxu0 0.0
      %4636 = vmatprep.subr.mxu0 0.0
      %4637 = vmatpush1.xpose.msra.mxu0 0.0
      %4638 = vmatprep.subr.mxu0 0.0
      %4639 = vmatpush1.xpose.msra.mxu0 0.0
      %4640 = vmatprep.mubr.f32.mxu0 0.0
      %4641 = vmatmul.mubr.f32.gmra.mrb[0].mxu0 %v4412
      %v4642 = vpop.f32.mrb[0].mxu0
      %v4643 = vadd.f32 0.0, %v4642
      %v4644 = vpop.f32.mrb[0].mxu0
      %4645 = vmatprep.mubr.f32.mxu0 0.0
      %4646 = vmatmul.mubr.f32.gmra.mrb[0].mxu0 %v4418
      %v4647 = vpop.f32.mrb[0].mxu0
      %v4648 = vadd.f32 0.0, %v4647
      %v4649 = vpop.f32.mrb[0].mxu0
      %4650 = vdwg.mxu0
      %v4651 = vmul.f32 %v4643, 0.125
      %v4652 = vmul.f32 %v4648, 0.125
      %v4653 = vsel %vm1303, %v4651, -inf
      %4654 = vmax.xlane.f32.xlu0 %v4653
      %v4655 = vpop.xlane.xlu0 %4654
      %v4656 = vsel %vm1307, %v4652, -inf
      %4657 = vmax.xlane.f32.xlu0 %v4656
      %v4658 = vpop.xlane.xlu0 %4657
      %v4659 = vsub.f32 %v4651, %v4655
      %v4660 = vsub.f32 %v4652, %v4658
      %v4661 = vmul.f32 %v4659, 1.442695
      %v4662 = vpow.pop %v4661
      %v4663 = vmul.f32 %v4660, 1.442695
      %v4664 = vpow.pop %v4663
      %v4665 = vsel %vm1303, %v4662, 0.0
      %4666 = vadd.xlane.f32.xlu0 %v4665
      %v4667 = vpop.xlane.xlu0 %4666
      %v4668 = vsel %vm1307, %v4664, 0.0
      %4669 = vadd.xlane.f32.xlu0 %v4668
      %v4670 = vpop.xlane.xlu0 %4669
      %v4671 = vrcp.pop %v4667
      %v4672 = vmul.f32 %v4662, %v4671
      %v4673 = vrcp.pop %v4670
      %v4674 = vmul.f32 %v4664, %v4673
      %v4676 = vsel %vm1303, %v4672, 0
      %v4679 = vsel %vm1303, %v4674, 0
      %v4682 = vsel %vm1333, %v4572, 0
      %4684 = vmatprep.subr.mxu0 0.0
      %4685 = vmatpush1.msra.mxu0 %v4566
      %4686 = vmatprep.subr.mxu0 0.0
      %4687 = vmatpush1.msra.mxu0 %v4682
      %4688 = vmatprep.subr.mxu0 0.0
      %4689 = vmatpush1.msra.mxu0 0.0
      %4690 = vmatprep.subr.mxu0 0.0
      %4691 = vmatpush1.msra.mxu0 0.0
      %4692 = vmatprep.subr.mxu0 0.0
      %4693 = vmatpush1.msra.mxu0 0.0
      %4694 = vmatprep.subr.mxu0 0.0
      %4695 = vmatpush1.msra.mxu0 0.0
      %4696 = vmatprep.subr.mxu0 0.0
      %4697 = vmatpush1.msra.mxu0 0.0
      %4698 = vmatprep.subr.mxu0 0.0
      %4699 = vmatpush1.msra.mxu0 0.0
      %4700 = vmatprep.subr.mxu0 0.0
      %4701 = vmatpush1.msra.mxu0 0.0
      %4702 = vmatprep.subr.mxu0 0.0
      %4703 = vmatpush1.msra.mxu0 0.0
      %4704 = vmatprep.subr.mxu0 0.0
      %4705 = vmatpush1.msra.mxu0 0.0
      %4706 = vmatprep.subr.mxu0 0.0
      %4707 = vmatpush1.msra.mxu0 0.0
      %4708 = vmatprep.subr.mxu0 0.0
      %4709 = vmatpush1.msra.mxu0 0.0
      %4710 = vmatprep.subr.mxu0 0.0
      %4711 = vmatpush1.msra.mxu0 0.0
      %4712 = vmatprep.subr.mxu0 0.0
      %4713 = vmatpush1.msra.mxu0 0.0
      %4714 = vmatprep.subr.mxu0 0.0
      %4715 = vmatpush1.msra.mxu0 0.0
      %4716 = vmatprep.subr.mxu0 0.0
      %4717 = vmatpush1.msra.mxu0 0.0
      %4718 = vmatprep.subr.mxu0 0.0
      %4719 = vmatpush1.msra.mxu0 0.0
      %4720 = vmatprep.subr.mxu0 0.0
      %4721 = vmatpush1.msra.mxu0 0.0
      %4722 = vmatprep.subr.mxu0 0.0
      %4723 = vmatpush1.msra.mxu0 0.0
      %4724 = vmatprep.subr.mxu0 0.0
      %4725 = vmatpush1.msra.mxu0 0.0
      %4726 = vmatprep.subr.mxu0 0.0
      %4727 = vmatpush1.msra.mxu0 0.0
      %4728 = vmatprep.subr.mxu0 0.0
      %4729 = vmatpush1.msra.mxu0 0.0
      %4730 = vmatprep.subr.mxu0 0.0
      %4731 = vmatpush1.msra.mxu0 0.0
      %4732 = vmatprep.subr.mxu0 0.0
      %4733 = vmatpush1.msra.mxu0 0.0
      %4734 = vmatprep.subr.mxu0 0.0
      %4735 = vmatpush1.msra.mxu0 0.0
      %4736 = vmatprep.subr.mxu0 0.0
      %4737 = vmatpush1.msra.mxu0 0.0
      %4738 = vmatprep.subr.mxu0 0.0
      %4739 = vmatpush1.msra.mxu0 0.0
      %4740 = vmatprep.subr.mxu0 0.0
      %4741 = vmatpush1.msra.mxu0 0.0
      %4742 = vmatprep.subr.mxu0 0.0
      %4743 = vmatpush1.msra.mxu0 0.0
      %4744 = vmatprep.subr.mxu0 0.0
      %4745 = vmatpush1.msra.mxu0 0.0
      %4746 = vmatprep.subr.mxu0 0.0
      %4747 = vmatpush1.msra.mxu0 0.0
      %4748 = vmatprep.mubr.f32.mxu0 0.0
      %4749 = vmatmul.mubr.f32.gmra.mrb[0].mxu0 %v4676
      %v4750 = vpop.f32.mrb[0].mxu0
      %v4751 = vadd.f32 0.0, %v4750
      %v4752 = vpop.f32.mrb[0].mxu0
      %4753 = vmatprep.mubr.f32.mxu0 0.0
      %4754 = vmatmul.mubr.f32.gmra.mrb[0].mxu0 %v4679
      %v4755 = vpop.f32.mrb[0].mxu0
      %v4756 = vadd.f32 0.0, %v4755
      %v4757 = vpop.f32.mrb[0].mxu0
      %4758 = vdwg.mxu0
      %4759 = vmatprep.subr.mxu0 0.0
      %4760 = vmatpush1.xpose.msra.mxu0 %v4491
      %4761 = vmatprep.subr.mxu0 0.0
      %4762 = vmatpush1.xpose.msra.mxu0 %v4497
      %4763 = vmatprep.subr.mxu0 0.0
      %4764 = vmatpush1.xpose.msra.mxu0 0.0
      %4765 = vmatprep.subr.mxu0 0.0
      %4766 = vmatpush1.xpose.msra.mxu0 0.0
      %4767 = vmatprep.subr.mxu0 0.0
      %4768 = vmatpush1.xpose.msra.mxu0 0.0
      %4769 = vmatprep.subr.mxu0 0.0
      %4770 = vmatpush1.xpose.msra.mxu0 0.0
      %4771 = vmatprep.subr.mxu0 0.0
      %4772 = vmatpush1.xpose.msra.mxu0 0.0
      %4773 = vmatprep.subr.mxu0 0.0
      %4774 = vmatpush1.xpose.msra.mxu0 0.0
      %4775 = vmatprep.subr.mxu0 0.0
      %4776 = vmatpush1.xpose.msra.mxu0 0.0
      %4777 = vmatprep.subr.mxu0 0.0
      %4778 = vmatpush1.xpose.msra.mxu0 0.0
      %4779 = vmatprep.subr.mxu0 0.0
      %4780 = vmatpush1.xpose.msra.mxu0 0.0
      %4781 = vmatprep.subr.mxu0 0.0
      %4782 = vmatpush1.xpose.msra.mxu0 0.0
      %4783 = vmatprep.subr.mxu0 0.0
      %4784 = vmatpush1.xpose.msra.mxu0 0.0
      %4785 = vmatprep.subr.mxu0 0.0
      %4786 = vmatpush1.xpose.msra.mxu0 0.0
      %4787 = vmatprep.subr.mxu0 0.0
      %4788 = vmatpush1.xpose.msra.mxu0 0.0
      %4789 = vmatprep.subr.mxu0 0.0
      %4790 = vmatpush1.xpose.msra.mxu0 0.0
      %4791 = vmatprep.subr.mxu0 0.0
      %4792 = vmatpush1.xpose.msra.mxu0 0.0
      %4793 = vmatprep.subr.mxu0 0.0
      %4794 = vmatpush1.xpose.msra.mxu0 0.0
      %4795 = vmatprep.subr.mxu0 0.0
      %4796 = vmatpush1.xpose.msra.mxu0 0.0
      %4797 = vmatprep.subr.mxu0 0.0
      %4798 = vmatpush1.xpose.msra.mxu0 0.0
      %4799 = vmatprep.subr.mxu0 0.0
      %4800 = vmatpush1.xpose.msra.mxu0 0.0
      %4801 = vmatprep.subr.mxu0 0.0
      %4802 = vmatpush1.xpose.msra.mxu0 0.0
      %4803 = vmatprep.subr.mxu0 0.0
      %4804 = vmatpush1.xpose.msra.mxu0 0.0
      %4805 = vmatprep.subr.mxu0 0.0
      %4806 = vmatpush1.xpose.msra.mxu0 0.0
      %4807 = vmatprep.subr.mxu0 0.0
      %4808 = vmatpush1.xpose.msra.mxu0 0.0
      %4809 = vmatprep.subr.mxu0 0.0
      %4810 = vmatpush1.xpose.msra.mxu0 0.0
      %4811 = vmatprep.subr.mxu0 0.0
      %4812 = vmatpush1.xpose.msra.mxu0 0.0
      %4813 = vmatprep.subr.mxu0 0.0
      %4814 = vmatpush1.xpose.msra.mxu0 0.0
      %4815 = vmatprep.subr.mxu0 0.0
      %4816 = vmatpush1.xpose.msra.mxu0 0.0
      %4817 = vmatprep.subr.mxu0 0.0
      %4818 = vmatpush1.xpose.msra.mxu0 0.0
      %4819 = vmatprep.subr.mxu0 0.0
      %4820 = vmatpush1.xpose.msra.mxu0 0.0
      %4821 = vmatprep.subr.mxu0 0.0
      %4822 = vmatpush1.xpose.msra.mxu0 0.0
      %4823 = vmatprep.mubr.f32.mxu0 0.0
      %4824 = vmatmul.mubr.f32.gmra.mrb[0].mxu0 %v4414
      %v4825 = vpop.f32.mrb[0].mxu0
      %v4826 = vadd.f32 0.0, %v4825
      %v4827 = vpop.f32.mrb[0].mxu0
      %4828 = vmatprep.mubr.f32.mxu0 0.0
      %4829 = vmatmul.mubr.f32.gmra.mrb[0].mxu0 %v4420
      %v4830 = vpop.f32.mrb[0].mxu0
      %v4831 = vadd.f32 0.0, %v4830
      %v4832 = vpop.f32.mrb[0].mxu0
      %4833 = vdwg.mxu0
      %v4834 = vmul.f32 %v4826, 0.125
      %v4835 = vmul.f32 %v4831, 0.125
      %v4836 = vsel %vm1303, %v4834, -inf
      %4837 = vmax.xlane.f32.xlu0 %v4836
      %v4838 = vpop.xlane.xlu0 %4837
      %v4839 = vsel %vm1307, %v4835, -inf
      %4840 = vmax.xlane.f32.xlu0 %v4839
      %v4841 = vpop.xlane.xlu0 %4840
      %v4842 = vsub.f32 %v4834, %v4838
      %v4843 = vsub.f32 %v4835, %v4841
      %v4844 = vmul.f32 %v4842, 1.442695
      %v4845 = vpow.pop %v4844
      %v4846 = vmul.f32 %v4843, 1.442695
      %v4847 = vpow.pop %v4846
      %v4848 = vsel %vm1303, %v4845, 0.0
      %4849 = vadd.xlane.f32.xlu0 %v4848
      %v4850 = vpop.xlane.xlu0 %4849
      %v4851 = vsel %vm1307, %v4847, 0.0
      %4852 = vadd.xlane.f32.xlu0 %v4851
      %v4853 = vpop.xlane.xlu0 %4852
      %v4854 = vrcp.pop %v4850
      %v4855 = vmul.f32 %v4845, %v4854
      %v4856 = vrcp.pop %v4853
      %v4857 = vmul.f32 %v4847, %v4856
      %v4859 = vsel %vm1303, %v4855, 0
      %v4862 = vsel %vm1303, %v4857, 0
      %v4865 = vsel %vm1333, %v4574, 0
      %4867 = vmatprep.subr.mxu0 0.0
      %4868 = vmatpush1.msra.mxu0 %v4568
      %4869 = vmatprep.subr.mxu0 0.0
      %4870 = vmatpush1.msra.mxu0 %v4865
      %4871 = vmatprep.subr.mxu0 0.0
      %4872 = vmatpush1.msra.mxu0 0.0
      %4873 = vmatprep.subr.mxu0 0.0
      %4874 = vmatpush1.msra.mxu0 0.0
      %4875 = vmatprep.subr.mxu0 0.0
      %4876 = vmatpush1.msra.mxu0 0.0
      %4877 = vmatprep.subr.mxu0 0.0
      %4878 = vmatpush1.msra.mxu0 0.0
      %4879 = vmatprep.subr.mxu0 0.0
      %4880 = vmatpush1.msra.mxu0 0.0
      %4881 = vmatprep.subr.mxu0 0.0
      %4882 = vmatpush1.msra.mxu0 0.0
      %4883 = vmatprep.subr.mxu0 0.0
      %4884 = vmatpush1.msra.mxu0 0.0
      %4885 = vmatprep.subr.mxu0 0.0
      %4886 = vmatpush1.msra.mxu0 0.0
      %4887 = vmatprep.subr.mxu0 0.0
      %4888 = vmatpush1.msra.mxu0 0.0
      %4889 = vmatprep.subr.mxu0 0.0
      %4890 = vmatpush1.msra.mxu0 0.0
      %4891 = vmatprep.subr.mxu0 0.0
      %4892 = vmatpush1.msra.mxu0 0.0
      %4893 = vmatprep.subr.mxu0 0.0
      %4894 = vmatpush1.msra.mxu0 0.0
      %4895 = vmatprep.subr.mxu0 0.0
      %4896 = vmatpush1.msra.mxu0 0.0
      %4897 = vmatprep.subr.mxu0 0.0
      %4898 = vmatpush1.msra.mxu0 0.0
      %4899 = vmatprep.subr.mxu0 0.0
      %4900 = vmatpush1.msra.mxu0 0.0
      %4901 = vmatprep.subr.mxu0 0.0
      %4902 = vmatpush1.msra.mxu0 0.0
      %4903 = vmatprep.subr.mxu0 0.0
      %4904 = vmatpush1.msra.mxu0 0.0
      %4905 = vmatprep.subr.mxu0 0.0
      %4906 = vmatpush1.msra.mxu0 0.0
      %4907 = vmatprep.subr.mxu0 0.0
      %4908 = vmatpush1.msra.mxu0 0.0
      %4909 = vmatprep.subr.mxu0 0.0
      %4910 = vmatpush1.msra.mxu0 0.0
      %4911 = vmatprep.subr.mxu0 0.0
      %4912 = vmatpush1.msra.mxu0 0.0
      %4913 = vmatprep.subr.mxu0 0.0
      %4914 = vmatpush1.msra.mxu0 0.0
      %4915 = vmatprep.subr.mxu0 0.0
      %4916 = vmatpush1.msra.mxu0 0.0
      %4917 = vmatprep.subr.mxu0 0.0
      %4918 = vmatpush1.msra.mxu0 0.0
      %4919 = vmatprep.subr.mxu0 0.0
      %4920 = vmatpush1.msra.mxu0 0.0
      %4921 = vmatprep.subr.mxu0 0.0
      %4922 = vmatpush1.msra.mxu0 0.0
      %4923 = vmatprep.subr.mxu0 0.0
      %4924 = vmatpush1.msra.mxu0 0.0
      %4925 = vmatprep.subr.mxu0 0.0
      %4926 = vmatpush1.msra.mxu0 0.0
      %4927 = vmatprep.subr.mxu0 0.0
      %4928 = vmatpush1.msra.mxu0 0.0
      %4929 = vmatprep.subr.mxu0 0.0
      %4930 = vmatpush1.msra.mxu0 0.0
      %4931 = vmatprep.mubr.f32.mxu0 0.0
      %4932 = vmatmul.mubr.f32.gmra.mrb[0].mxu0 %v4859
      %v4933 = vpop.f32.mrb[0].mxu0
      %v4934 = vadd.f32 0.0, %v4933
      %v4935 = vpop.f32.mrb[0].mxu0
      %4936 = vmatprep.mubr.f32.mxu0 0.0
      %4937 = vmatmul.mubr.f32.gmra.mrb[0].mxu0 %v4862
      %v4938 = vpop.f32.mrb[0].mxu0
      %v4939 = vadd.f32 0.0, %v4938
      %v4940 = vpop.f32.mrb[0].mxu0
      %4941 = vdwg.mxu0
      %v4942 = vld [vmem:[%s4285 + $0x2] sm:$0x1]
      %v4943 = vlaneseq
      %v4944 = vshrl.u32 %v4943, 7
      %v4945 = vsub.s32 0, %v4944
      %v4946 = vrot.slane %v4942, %v4945
      %v4947 = vadd.f32 %v4283, %v4946
      %v4948 = vadd.f32 %v4284, %v4946
      %s4949 = scalar_lea.vmem %s17, 256
      %v4950 = vld [vmem:[%s4949] sm:$0xff]
      %v4951 = vld [vmem:[%s4949 + $0x8] sm:$0xff]
      %v4952 = vld [vmem:[%s4949 + $0x10] sm:$0xff]
      %v4953 = vld [vmem:[%s4949 + $0x18] sm:$0xff]
      %v4954 = vld [vmem:[%s4949 + $0x20] sm:$0xff]
      %v4955 = vld [vmem:[%s4949 + $0x28] sm:$0xff]
      %v4956 = vld [vmem:[%s4949 + $0x30] sm:$0xff]
      %v4957 = vld [vmem:[%s4949 + $0x38] sm:$0xff]
      %v4958 = vld [vmem:[%s4949 + $0x40] sm:$0xff]
      %v4959 = vld [vmem:[%s4949 + $0x48] sm:$0xff]
      %v4960 = vld [vmem:[%s4949 + $0x50] sm:$0xff]
      %v4961 = vld [vmem:[%s4949 + $0x58] sm:$0xff]
      %v4962 = vld [vmem:[%s4949 + $0x60] sm:$0xff]
      %v4963 = vld [vmem:[%s4949 + $0x68] sm:$0xff]
      %v4964 = vld [vmem:[%s4949 + $0x70] sm:$0xff]
      %v4965 = vld [vmem:[%s4949 + $0x78] sm:$0xff]
      %v4966 = vld [vmem:[%s4949 + $0x80] sm:$0xff]
      %v4967 = vld [vmem:[%s4949 + $0x88] sm:$0xff]
      %v4968 = vld [vmem:[%s4949 + $0x90] sm:$0xff]
      %v4969 = vld [vmem:[%s4949 + $0x98] sm:$0xff]
      %v4970 = vld [vmem:[%s4949 + $0xa0] sm:$0xff]
      %v4971 = vld [vmem:[%s4949 + $0xa8] sm:$0xff]
      %v4972 = vld [vmem:[%s4949 + $0xb0] sm:$0xff]
      %v4973 = vld [vmem:[%s4949 + $0xb8] sm:$0xff]
      %v4974 = vld [vmem:[%s4949 + $0xc0] sm:$0xff]
      %v4975 = vld [vmem:[%s4949 + $0xc8] sm:$0xff]
      %v4976 = vld [vmem:[%s4949 + $0xd0] sm:$0xff]
      %v4977 = vld [vmem:[%s4949 + $0xd8] sm:$0xff]
      %v4978 = vld [vmem:[%s4949 + $0xe0] sm:$0xff]
      %v4979 = vld [vmem:[%s4949 + $0xe8] sm:$0xff]
      %v4980 = vld [vmem:[%s4949 + $0xf0] sm:$0xff]
      %v4981 = vld [vmem:[%s4949 + $0xf8] sm:$0xff]
      %4982 = vmatprep.subr.mxu0 0.0
      %4983 = vmatpush1.msra.mxu0 %v4950
      %4984 = vmatprep.subr.mxu0 0.0
      %4985 = vmatpush1.msra.mxu0 %v4951
      %4986 = vmatprep.subr.mxu0 0.0
      %4987 = vmatpush1.msra.mxu0 %v4952
      %4988 = vmatprep.subr.mxu0 0.0
      %4989 = vmatpush1.msra.mxu0 %v4953
      %4990 = vmatprep.subr.mxu0 0.0
      %4991 = vmatpush1.msra.mxu0 %v4954
      %4992 = vmatprep.subr.mxu0 0.0
      %4993 = vmatpush1.msra.mxu0 %v4955
      %4994 = vmatprep.subr.mxu0 0.0
      %4995 = vmatpush1.msra.mxu0 %v4956
      %4996 = vmatprep.subr.mxu0 0.0
      %4997 = vmatpush1.msra.mxu0 %v4957
      %4998 = vmatprep.subr.mxu0 0.0
      %4999 = vmatpush1.msra.mxu0 %v4958
      %5000 = vmatprep.subr.mxu0 0.0
      %5001 = vmatpush1.msra.mxu0 %v4959
      %5002 = vmatprep.subr.mxu0 0.0
      %5003 = vmatpush1.msra.mxu0 %v4960
      %5004 = vmatprep.subr.mxu0 0.0
      %5005 = vmatpush1.msra.mxu0 %v4961
      %5006 = vmatprep.subr.mxu0 0.0
      %5007 = vmatpush1.msra.mxu0 %v4962
      %5008 = vmatprep.subr.mxu0 0.0
      %5009 = vmatpush1.msra.mxu0 %v4963
      %5010 = vmatprep.subr.mxu0 0.0
      %5011 = vmatpush1.msra.mxu0 %v4964
      %5012 = vmatprep.subr.mxu0 0.0
      %5013 = vmatpush1.msra.mxu0 %v4965
      %5014 = vmatprep.subr.mxu0 0.0
      %5015 = vmatpush1.msra.mxu0 %v4966
      %5016 = vmatprep.subr.mxu0 0.0
      %5017 = vmatpush1.msra.mxu0 %v4967
      %5018 = vmatprep.subr.mxu0 0.0
      %5019 = vmatpush1.msra.mxu0 %v4968
      %5020 = vmatprep.subr.mxu0 0.0
      %5021 = vmatpush1.msra.mxu0 %v4969
      %5022 = vmatprep.subr.mxu0 0.0
      %5023 = vmatpush1.msra.mxu0 %v4970
      %5024 = vmatprep.subr.mxu0 0.0
      %5025 = vmatpush1.msra.mxu0 %v4971
      %5026 = vmatprep.subr.mxu0 0.0
      %5027 = vmatpush1.msra.mxu0 %v4972
      %5028 = vmatprep.subr.mxu0 0.0
      %5029 = vmatpush1.msra.mxu0 %v4973
      %5030 = vmatprep.subr.mxu0 0.0
      %5031 = vmatpush1.msra.mxu0 %v4974
      %5032 = vmatprep.subr.mxu0 0.0
      %5033 = vmatpush1.msra.mxu0 %v4975
      %5034 = vmatprep.subr.mxu0 0.0
      %5035 = vmatpush1.msra.mxu0 %v4976
      %5036 = vmatprep.subr.mxu0 0.0
      %5037 = vmatpush1.msra.mxu0 %v4977
      %5038 = vmatprep.subr.mxu0 0.0
      %5039 = vmatpush1.msra.mxu0 %v4978
      %5040 = vmatprep.subr.mxu0 0.0
      %5041 = vmatpush1.msra.mxu0 %v4979
      %5042 = vmatprep.subr.mxu0 0.0
      %5043 = vmatpush1.msra.mxu0 %v4980
      %5044 = vmatprep.subr.mxu0 0.0
      %5045 = vmatpush1.msra.mxu0 %v4981
      %5046 = vmatprep.mubr.f32.mxu0 %v4934
      %5047 = vmatmul.mubr.f32.gmra.mrb[0].mxu0 %v4751
      %v5048 = vpop.f32.mrb[0].mxu0
      %v5049 = vadd.f32 0.0, %v5048
      %v5050 = vpop.f32.mrb[0].mxu0
      %5051 = vmatprep.mubr.f32.mxu0 %v4939
      %5052 = vmatmul.mubr.f32.gmra.mrb[0].mxu0 %v4756
      %v5053 = vpop.f32.mrb[0].mxu0
      %v5054 = vadd.f32 0.0, %v5053
      %v5055 = vpop.f32.mrb[0].mxu0
      %5056 = vdwg.mxu0
      %v5057 = vadd.f32 %v4947, %v5049
      %v5058 = vadd.f32 %v4948, %v5054
      %v5059 = vld [vmem:[%s4285 + $0x3] sm:$0x1]
      %v5060 = vld [vmem:[%s4285 + $0x4] sm:$0x1]
      %v5061 = vsel %vm742, %v5057, 0.0
      %5062 = vadd.xlane.f32.xlu0 %v5061
      %v5063 = vpop.xlane.xlu0 %5062
      %v5064 = vsel %vm746, %v5058, 0.0
      %5065 = vadd.xlane.f32.xlu0 %v5064
      %v5066 = vpop.xlane.xlu0 %5065
      %v5067 = vmul.f32 %v5063, %v750
      %v5068 = vmul.f32 %v5066, %v750
      %v5069 = vsub.f32 %v5057, %v5067
      %v5070 = vsub.f32 %v5058, %v5068
      %v5071 = vmul.f32 %v5069, %v5069
      %v5072 = vmul.f32 %v5070, %v5070
      %v5073 = vsel %vm742, %v5071, 0.0
      %5074 = vadd.xlane.f32.xlu0 %v5073
      %v5075 = vpop.xlane.xlu0 %5074
      %v5076 = vsel %vm746, %v5072, 0.0
      %5077 = vadd.xlane.f32.xlu0 %v5076
      %v5078 = vpop.xlane.xlu0 %5077
      %v5079 = vmul.f32 %v5075, %v750
      %v5080 = vmul.f32 %v5078, %v750
      %v5081 = vadd.f32 %v5079, 1e-05
      %v5082 = vadd.f32 %v5080, 1e-05
      %v5083 = vrsqrt.pop %v5081
      %v5084 = vrsqrt.pop %v5082
      %v5085 = vmul.f32 %v5069, %v5083
      %v5086 = vmul.f32 %v5070, %v5084
      %v5087 = vlaneseq
      %v5088 = vshrl.u32 %v5087, 7
      %v5089 = vsub.s32 0, %v5088
      %v5090 = vrot.slane %v5059, %v5089
      %v5091 = vmul.f32 %v5085, %v5090
      %v5092 = vmul.f32 %v5086, %v5090
      %v5093 = vlaneseq
      %v5094 = vshrl.u32 %v5093, 7
      %v5095 = vsub.s32 0, %v5094
      %v5096 = vrot.slane %v5060, %v5095
      %v5097 = vadd.f32 %v5091, %v5096
      %v5098 = vadd.f32 %v5092, %v5096
      %s5099 = scalar_lea.vmem %s18, 16
      %v5100 = vld [vmem:[%s5099] sm:$0xff]
      %v5101 = vld [vmem:[%s5099 + $0x8] sm:$0xff]
      %s5102 = scalar_lea.vmem %s19, 1
      %v5103 = vld [vmem:[%s5102] sm:$0x1]
      %v5105 = vlaneseq
      %v5106 = vshrl.u32 %v5105, 7
      %v5107 = vsub.s32 0, %v5106
      %v5108 = vrot.slane %v5103, %v5107
      %v5111 = vsel %vm742, %v5097, 0
      %v5114 = vsel %vm742, %v5098, 0
      %5116 = vmatprep.subr.mxu0 0.0
      %5117 = vmatpush1.msra.mxu0 %v5100
      %5118 = vmatprep.subr.mxu0 0.0
      %5119 = vmatpush1.msra.mxu0 %v5101
      %5120 = vmatprep.subr.mxu0 0.0
      %5121 = vmatpush1.msra.mxu0 0.0
      %5122 = vmatprep.subr.mxu0 0.0
      %5123 = vmatpush1.msra.mxu0 0.0
      %5124 = vmatprep.subr.mxu0 0.0
      %5125 = vmatpush1.msra.mxu0 0.0
      %5126 = vmatprep.subr.mxu0 0.0
      %5127 = vmatpush1.msra.mxu0 0.0
      %5128 = vmatprep.subr.mxu0 0.0
      %5129 = vmatpush1.msra.mxu0 0.0
      %5130 = vmatprep.subr.mxu0 0.0
      %5131 = vmatpush1.msra.mxu0 0.0
      %5132 = vmatprep.subr.mxu0 0.0
      %5133 = vmatpush1.msra.mxu0 0.0
      %5134 = vmatprep.subr.mxu0 0.0
      %5135 = vmatpush1.msra.mxu0 0.0
      %5136 = vmatprep.subr.mxu0 0.0
      %5137 = vmatpush1.msra.mxu0 0.0
      %5138 = vmatprep.subr.mxu0 0.0
      %5139 = vmatpush1.msra.mxu0 0.0
      %5140 = vmatprep.subr.mxu0 0.0
      %5141 = vmatpush1.msra.mxu0 0.0
      %5142 = vmatprep.subr.mxu0 0.0
      %5143 = vmatpush1.msra.mxu0 0.0
      %5144 = vmatprep.subr.mxu0 0.0
      %5145 = vmatpush1.msra.mxu0 0.0
      %5146 = vmatprep.subr.mxu0 0.0
      %5147 = vmatpush1.msra.mxu0 0.0
      %5148 = vmatprep.subr.mxu0 0.0
      %5149 = vmatpush1.msra.mxu0 0.0
      %5150 = vmatprep.subr.mxu0 0.0
      %5151 = vmatpush1.msra.mxu0 0.0
      %5152 = vmatprep.subr.mxu0 0.0
      %5153 = vmatpush1.msra.mxu0 0.0
      %5154 = vmatprep.subr.mxu0 0.0
      %5155 = vmatpush1.msra.mxu0 0.0
      %5156 = vmatprep.subr.mxu0 0.0
      %5157 = vmatpush1.msra.mxu0 0.0
      %5158 = vmatprep.subr.mxu0 0.0
      %5159 = vmatpush1.msra.mxu0 0.0
      %5160 = vmatprep.subr.mxu0 0.0
      %5161 = vmatpush1.msra.mxu0 0.0
      %5162 = vmatprep.subr.mxu0 0.0
      %5163 = vmatpush1.msra.mxu0 0.0
      %5164 = vmatprep.subr.mxu0 0.0
      %5165 = vmatpush1.msra.mxu0 0.0
      %5166 = vmatprep.subr.mxu0 0.0
      %5167 = vmatpush1.msra.mxu0 0.0
      %5168 = vmatprep.subr.mxu0 0.0
      %5169 = vmatpush1.msra.mxu0 0.0
      %5170 = vmatprep.subr.mxu0 0.0
      %5171 = vmatpush1.msra.mxu0 0.0
      %5172 = vmatprep.subr.mxu0 0.0
      %5173 = vmatpush1.msra.mxu0 0.0
      %5174 = vmatprep.subr.mxu0 0.0
      %5175 = vmatpush1.msra.mxu0 0.0
      %5176 = vmatprep.subr.mxu0 0.0
      %5177 = vmatpush1.msra.mxu0 0.0
      %5178 = vmatprep.subr.mxu0 0.0
      %5179 = vmatpush1.msra.mxu0 0.0
      %5180 = vmatprep.mubr.f32.mxu0 0.0
      %5181 = vmatmul.mubr.f32.gmra.mrb[0].mxu0 %v5111
      %v5182 = vpop.f32.mrb[0].mxu0
      %v5183 = vadd.f32 %v5108, %v5182
      %v5184 = vpop.f32.mrb[0].mxu0
      %5185 = vmatprep.mubr.f32.mxu0 0.0
      %5186 = vmatmul.mubr.f32.gmra.mrb[0].mxu0 %v5114
      %v5187 = vpop.f32.mrb[0].mxu0
      %v5188 = vadd.f32 %v5108, %v5187
      %v5189 = vpop.f32.mrb[0].mxu0
      %5190 = vdwg.mxu0
      %v5191 = vmul.f32 %v5183, 0.5
      %v5192 = vmul.f32 %v5188, 0.5
      %v5193 = vmul.f32 %v5183, 0.70710677
      %v5194 = vmul.f32 %v5188, 0.70710677
      %vm5195 = vcmp.lt.f32.partialorder %v5193, 0.0
      %vm5196 = vcmp.lt.f32.partialorder %v5194, 0.0
      %v5197 = vsel %vm5195, -1.0, 1.0
      %v5198 = vsel %vm5196, -1.0, 1.0
      %v5199 = vand.u32 2147483647, %v5193
      %v5200 = vand.u32 2147483647, %v5194
      %v5201 = vmul.f32 %v5199, 0.3275911
      %v5202 = vmul.f32 %v5200, 0.3275911
      %v5203 = vadd.f32 %v5201, 1.0
      %v5204 = vadd.f32 %v5202, 1.0
      %v5205 = vrcp.pop %v5203
      %v5206 = vmul.f32 1.0, %v5205
      %v5207 = vrcp.pop %v5204
      %v5208 = vmul.f32 1.0, %v5207
      %v5209 = vmul.f32 %v5206, 1.0614054
      %v5210 = vmul.f32 %v5208, 1.0614054
      %v5211 = vadd.f32 %v5209, -1.4531521
      %v5212 = vadd.f32 %v5210, -1.4531521
      %v5213 = vmul.f32 %v5206, %v5211
      %v5214 = vmul.f32 %v5208, %v5212
      %v5215 = vadd.f32 %v5213, 1.4214138
      %v5216 = vadd.f32 %v5214, 1.4214138
      %v5217 = vmul.f32 %v5206, %v5215
      %v5218 = vmul.f32 %v5208, %v5216
      %v5219 = vadd.f32 %v5217, -0.28449672
      %v5220 = vadd.f32 %v5218, -0.28449672
      %v5221 = vmul.f32 %v5206, %v5219
      %v5222 = vmul.f32 %v5208, %v5220
      %v5223 = vadd.f32 %v5221, 0.2548296
      %v5224 = vadd.f32 %v5222, 0.2548296
      %v5225 = vmul.f32 %v5206, %v5223
      %v5226 = vmul.f32 %v5208, %v5224
      %v5227 = vsub.f32 0.0, %v5199
      %v5228 = vsub.f32 0.0, %v5200
      %v5229 = vmul.f32 %v5227, %v5199
      %v5230 = vmul.f32 %v5228, %v5200
      %v5231 = vmul.f32 %v5229, 1.442695
      %v5232 = vpow.pop %v5231
      %v5233 = vmul.f32 %v5230, 1.442695
      %v5234 = vpow.pop %v5233
      %v5235 = vmul.f32 %v5225, %v5232
      %v5236 = vmul.f32 %v5226, %v5234
      %v5237 = vsub.f32 1.0, %v5235
      %v5238 = vsub.f32 1.0, %v5236
      %v5239 = vmul.f32 %v5197, %v5237
      %v5240 = vmul.f32 %v5198, %v5238
      %v5241 = vadd.f32 %v5239, 1.0
      %v5242 = vadd.f32 %v5240, 1.0
      %v5243 = vmul.f32 %v5191, %v5241
      %v5244 = vmul.f32 %v5192, %v5242
      %s5245 = scalar_lea.vmem %s20, 4
      %v5246 = vld [vmem:[%s5245] sm:$0xf]
      %v5248 = vsel %vm1898, %v5243, 0
      %v5251 = vsel %vm1898, %v5244, 0
      %v5254 = vsel %vm1905, %v5246, 0
      %5256 = vmatprep.subr.mxu0 0.0
      %5257 = vmatpush1.msra.mxu0 %v5254
      %5258 = vmatprep.subr.mxu0 0.0
      %5259 = vmatpush1.msra.mxu0 0.0
      %5260 = vmatprep.subr.mxu0 0.0
      %5261 = vmatpush1.msra.mxu0 0.0
      %5262 = vmatprep.subr.mxu0 0.0
      %5263 = vmatpush1.msra.mxu0 0.0
      %5264 = vmatprep.subr.mxu0 0.0
      %5265 = vmatpush1.msra.mxu0 0.0
      %5266 = vmatprep.subr.mxu0 0.0
      %5267 = vmatpush1.msra.mxu0 0.0
      %5268 = vmatprep.subr.mxu0 0.0
      %5269 = vmatpush1.msra.mxu0 0.0
      %5270 = vmatprep.subr.mxu0 0.0
      %5271 = vmatpush1.msra.mxu0 0.0
      %5272 = vmatprep.subr.mxu0 0.0
      %5273 = vmatpush1.msra.mxu0 0.0
      %5274 = vmatprep.subr.mxu0 0.0
      %5275 = vmatpush1.msra.mxu0 0.0
      %5276 = vmatprep.subr.mxu0 0.0
      %5277 = vmatpush1.msra.mxu0 0.0
      %5278 = vmatprep.subr.mxu0 0.0
      %5279 = vmatpush1.msra.mxu0 0.0
      %5280 = vmatprep.subr.mxu0 0.0
      %5281 = vmatpush1.msra.mxu0 0.0
      %5282 = vmatprep.subr.mxu0 0.0
      %5283 = vmatpush1.msra.mxu0 0.0
      %5284 = vmatprep.subr.mxu0 0.0
      %5285 = vmatpush1.msra.mxu0 0.0
      %5286 = vmatprep.subr.mxu0 0.0
      %5287 = vmatpush1.msra.mxu0 0.0
      %5288 = vmatprep.subr.mxu0 0.0
      %5289 = vmatpush1.msra.mxu0 0.0
      %5290 = vmatprep.subr.mxu0 0.0
      %5291 = vmatpush1.msra.mxu0 0.0
      %5292 = vmatprep.subr.mxu0 0.0
      %5293 = vmatpush1.msra.mxu0 0.0
      %5294 = vmatprep.subr.mxu0 0.0
      %5295 = vmatpush1.msra.mxu0 0.0
      %5296 = vmatprep.subr.mxu0 0.0
      %5297 = vmatpush1.msra.mxu0 0.0
      %5298 = vmatprep.subr.mxu0 0.0
      %5299 = vmatpush1.msra.mxu0 0.0
      %5300 = vmatprep.subr.mxu0 0.0
      %5301 = vmatpush1.msra.mxu0 0.0
      %5302 = vmatprep.subr.mxu0 0.0
      %5303 = vmatpush1.msra.mxu0 0.0
      %5304 = vmatprep.subr.mxu0 0.0
      %5305 = vmatpush1.msra.mxu0 0.0
      %5306 = vmatprep.subr.mxu0 0.0
      %5307 = vmatpush1.msra.mxu0 0.0
      %5308 = vmatprep.subr.mxu0 0.0
      %5309 = vmatpush1.msra.mxu0 0.0
      %5310 = vmatprep.subr.mxu0 0.0
      %5311 = vmatpush1.msra.mxu0 0.0
      %5312 = vmatprep.subr.mxu0 0.0
      %5313 = vmatpush1.msra.mxu0 0.0
      %5314 = vmatprep.subr.mxu0 0.0
      %5315 = vmatpush1.msra.mxu0 0.0
      %5316 = vmatprep.subr.mxu0 0.0
      %5317 = vmatpush1.msra.mxu0 0.0
      %5318 = vmatprep.subr.mxu0 0.0
      %5319 = vmatpush1.msra.mxu0 0.0
      %5320 = vmatprep.mubr.f32.mxu0 0.0
      %5321 = vmatmul.mubr.f32.gmra.mrb[0].mxu0 %v5248
      %v5322 = vpop.f32.mrb[0].mxu0
      %v5323 = vadd.f32 0.0, %v5322
      %v5324 = vpop.f32.mrb[0].mxu0
      %5325 = vmatprep.mubr.f32.mxu0 0.0
      %5326 = vmatmul.mubr.f32.gmra.mrb[0].mxu0 %v5251
      %v5327 = vpop.f32.mrb[0].mxu0
      %v5328 = vadd.f32 0.0, %v5327
      %v5329 = vpop.f32.mrb[0].mxu0
      %5330 = vdwg.mxu0
      %v5331 = vadd.f32 %v5057, %v5323
      %v5332 = vadd.f32 %v5058, %v5328
      %v5333 = vld [vmem:[%s4285 + $0x5] sm:$0x1]
      %v5334 = vlaneseq
      %v5335 = vshrl.u32 %v5334, 7
      %v5336 = vsub.s32 0, %v5335
      %v5337 = vrot.slane %v5333, %v5336
      %v5338 = vadd.f32 %v5331, %v5337
      %v5339 = vadd.f32 %v5332, %v5337
      %v5340 = vld [vmem:[%s13 + $0x1] sm:$0x1]
      %v5341 = vld [vmem:[%s13 + $0x2] sm:$0x1]
      %v5342 = vsel %vm742, %v5338, 0.0
      %5343 = vadd.xlane.f32.xlu0 %v5342
      %v5344 = vpop.xlane.xlu0 %5343
      %v5345 = vsel %vm746, %v5339, 0.0
      %5346 = vadd.xlane.f32.xlu0 %v5345
      %v5347 = vpop.xlane.xlu0 %5346
      %v5348 = vmul.f32 %v5344, %v750
      %v5349 = vmul.f32 %v5347, %v750
      %v5350 = vsub.f32 %v5338, %v5348
      %v5351 = vsub.f32 %v5339, %v5349
      %v5352 = vmul.f32 %v5350, %v5350
      %v5353 = vmul.f32 %v5351, %v5351
      %v5354 = vsel %vm742, %v5352, 0.0
      %5355 = vadd.xlane.f32.xlu0 %v5354
      %v5356 = vpop.xlane.xlu0 %5355
      %v5357 = vsel %vm746, %v5353, 0.0
      %5358 = vadd.xlane.f32.xlu0 %v5357
      %v5359 = vpop.xlane.xlu0 %5358
      %v5360 = vmul.f32 %v5356, %v750
      %v5361 = vmul.f32 %v5359, %v750
      %v5362 = vadd.f32 %v5360, 1e-05
      %v5363 = vadd.f32 %v5361, 1e-05
      %v5364 = vrsqrt.pop %v5362
      %v5365 = vrsqrt.pop %v5363
      %v5366 = vmul.f32 %v5350, %v5364
      %v5367 = vmul.f32 %v5351, %v5365
      %v5368 = vlaneseq
      %v5369 = vshrl.u32 %v5368, 7
      %v5370 = vsub.s32 0, %v5369
      %v5371 = vrot.slane %v5340, %v5370
      %v5372 = vmul.f32 %v5366, %v5371
      %v5373 = vmul.f32 %v5367, %v5371
      %v5374 = vlaneseq
      %v5375 = vshrl.u32 %v5374, 7
      %v5376 = vsub.s32 0, %v5375
      %v5377 = vrot.slane %v5341, %v5376
      %v5378 = vadd.f32 %v5372, %v5377
      %v5379 = vadd.f32 %v5373, %v5377
      %v5380 = vld [vmem:[%s21] sm:$0xff]
      %v5381 = vld [vmem:[%s21 + $0x8] sm:$0xff]
      %v5382 = vld [vmem:[%s22] sm:$0x1]
      %v5383 = vlaneseq
      %v5384 = vshrl.u32 %v5383, 7
      %v5385 = vsub.s32 0, %v5384
      %v5386 = vrot.slane %v5382, %v5385
      %v5388 = vsel %vm742, %v5378, 0
      %v5391 = vsel %vm742, %v5379, 0
      %5393 = vmatprep.subr.mxu0 0.0
      %5394 = vmatpush1.msra.mxu0 %v5380
      %5395 = vmatprep.subr.mxu0 0.0
      %5396 = vmatpush1.msra.mxu0 %v5381
      %5397 = vmatprep.subr.mxu0 0.0
      %5398 = vmatpush1.msra.mxu0 0.0
      %5399 = vmatprep.subr.mxu0 0.0
      %5400 = vmatpush1.msra.mxu0 0.0
      %5401 = vmatprep.subr.mxu0 0.0
      %5402 = vmatpush1.msra.mxu0 0.0
      %5403 = vmatprep.subr.mxu0 0.0
      %5404 = vmatpush1.msra.mxu0 0.0
      %5405 = vmatprep.subr.mxu0 0.0
      %5406 = vmatpush1.msra.mxu0 0.0
      %5407 = vmatprep.subr.mxu0 0.0
      %5408 = vmatpush1.msra.mxu0 0.0
      %5409 = vmatprep.subr.mxu0 0.0
      %5410 = vmatpush1.msra.mxu0 0.0
      %5411 = vmatprep.subr.mxu0 0.0
      %5412 = vmatpush1.msra.mxu0 0.0
      %5413 = vmatprep.subr.mxu0 0.0
      %5414 = vmatpush1.msra.mxu0 0.0
      %5415 = vmatprep.subr.mxu0 0.0
      %5416 = vmatpush1.msra.mxu0 0.0
      %5417 = vmatprep.subr.mxu0 0.0
      %5418 = vmatpush1.msra.mxu0 0.0
      %5419 = vmatprep.subr.mxu0 0.0
      %5420 = vmatpush1.msra.mxu0 0.0
      %5421 = vmatprep.subr.mxu0 0.0
      %5422 = vmatpush1.msra.mxu0 0.0
      %5423 = vmatprep.subr.mxu0 0.0
      %5424 = vmatpush1.msra.mxu0 0.0
      %5425 = vmatprep.subr.mxu0 0.0
      %5426 = vmatpush1.msra.mxu0 0.0
      %5427 = vmatprep.subr.mxu0 0.0
      %5428 = vmatpush1.msra.mxu0 0.0
      %5429 = vmatprep.subr.mxu0 0.0
      %5430 = vmatpush1.msra.mxu0 0.0
      %5431 = vmatprep.subr.mxu0 0.0
      %5432 = vmatpush1.msra.mxu0 0.0
      %5433 = vmatprep.subr.mxu0 0.0
      %5434 = vmatpush1.msra.mxu0 0.0
      %5435 = vmatprep.subr.mxu0 0.0
      %5436 = vmatpush1.msra.mxu0 0.0
      %5437 = vmatprep.subr.mxu0 0.0
      %5438 = vmatpush1.msra.mxu0 0.0
      %5439 = vmatprep.subr.mxu0 0.0
      %5440 = vmatpush1.msra.mxu0 0.0
      %5441 = vmatprep.subr.mxu0 0.0
      %5442 = vmatpush1.msra.mxu0 0.0
      %5443 = vmatprep.subr.mxu0 0.0
      %5444 = vmatpush1.msra.mxu0 0.0
      %5445 = vmatprep.subr.mxu0 0.0
      %5446 = vmatpush1.msra.mxu0 0.0
      %5447 = vmatprep.subr.mxu0 0.0
      %5448 = vmatpush1.msra.mxu0 0.0
      %5449 = vmatprep.subr.mxu0 0.0
      %5450 = vmatpush1.msra.mxu0 0.0
      %5451 = vmatprep.subr.mxu0 0.0
      %5452 = vmatpush1.msra.mxu0 0.0
      %5453 = vmatprep.subr.mxu0 0.0
      %5454 = vmatpush1.msra.mxu0 0.0
      %5455 = vmatprep.subr.mxu0 0.0
      %5456 = vmatpush1.msra.mxu0 0.0
      %5457 = vmatprep.mubr.f32.mxu0 0.0
      %5458 = vmatmul.mubr.f32.gmra.mrb[0].mxu0 %v5388
      %v5459 = vpop.f32.mrb[0].mxu0
      %v5460 = vadd.f32 %v5386, %v5459
      %v5461 = vpop.f32.mrb[0].mxu0
      %5462 = vmatprep.mubr.f32.mxu0 0.0
      %5463 = vmatmul.mubr.f32.gmra.mrb[0].mxu0 %v5391
      %v5464 = vpop.f32.mrb[0].mxu0
      %v5465 = vadd.f32 %v5386, %v5464
      %v5466 = vpop.f32.mrb[0].mxu0
      %5467 = vdwg.mxu0
      %v5468 = vld [vmem:[%s22 + $0x1] sm:$0x1]
      %v5469 = vld [vmem:[%s22 + $0x2] sm:$0x1]
      %v5470 = vsel %vm742, %v5460, 0.0
      %5471 = vadd.xlane.f32.xlu0 %v5470
      %v5472 = vpop.xlane.xlu0 %5471
      %v5473 = vsel %vm746, %v5465, 0.0
      %5474 = vadd.xlane.f32.xlu0 %v5473
      %v5475 = vpop.xlane.xlu0 %5474
      %v5476 = vmul.f32 %v5472, %v750
      %v5477 = vmul.f32 %v5475, %v750
      %v5478 = vsub.f32 %v5460, %v5476
      %v5479 = vsub.f32 %v5465, %v5477
      %v5480 = vmul.f32 %v5478, %v5478
      %v5481 = vmul.f32 %v5479, %v5479
      %v5482 = vsel %vm742, %v5480, 0.0
      %5483 = vadd.xlane.f32.xlu0 %v5482
      %v5484 = vpop.xlane.xlu0 %5483
      %v5485 = vsel %vm746, %v5481, 0.0
      %5486 = vadd.xlane.f32.xlu0 %v5485
      %v5487 = vpop.xlane.xlu0 %5486
      %v5488 = vmul.f32 %v5484, %v750
      %v5489 = vmul.f32 %v5487, %v750
      %v5490 = vadd.f32 %v5488, 1e-12
      %v5491 = vadd.f32 %v5489, 1e-12
      %v5492 = vrsqrt.pop %v5490
      %v5493 = vrsqrt.pop %v5491
      %v5494 = vmul.f32 %v5478, %v5492
      %v5495 = vmul.f32 %v5479, %v5493
      %v5496 = vlaneseq
      %v5497 = vshrl.u32 %v5496, 7
      %v5498 = vsub.s32 0, %v5497
      %v5499 = vrot.slane %v5468, %v5498
      %v5500 = vmul.f32 %v5494, %v5499
      %v5501 = vmul.f32 %v5495, %v5499
      %v5502 = vlaneseq
      %v5503 = vshrl.u32 %v5502, 7
      %v5504 = vsub.s32 0, %v5503
      %v5505 = vrot.slane %v5469, %v5504
      %v5506 = vadd.f32 %v5500, %v5505
      %v5507 = vadd.f32 %v5501, %v5505
      %v5508 = vld [vmem:[%s23] sm:$0xff]
      %v5509 = vld [vmem:[%s23 + $0x8] sm:$0xff]
      %v5510 = vld [vmem:[%s22 + $0x3] sm:$0x1]
      %v5511 = vlaneseq
      %v5512 = vshrl.u32 %v5511, 7
      %v5513 = vsub.s32 0, %v5512
      %v5514 = vrot.slane %v5510, %v5513
      %v5516 = vsel %vm742, %v5506, 0
      %v5519 = vsel %vm742, %v5507, 0
      %5521 = vmatprep.subr.mxu0 0.0
      %5522 = vmatpush1.msra.mxu0 %v5508
      %5523 = vmatprep.subr.mxu0 0.0
      %5524 = vmatpush1.msra.mxu0 %v5509
      %5525 = vmatprep.subr.mxu0 0.0
      %5526 = vmatpush1.msra.mxu0 0.0
      %5527 = vmatprep.subr.mxu0 0.0
      %5528 = vmatpush1.msra.mxu0 0.0
      %5529 = vmatprep.subr.mxu0 0.0
      %5530 = vmatpush1.msra.mxu0 0.0
      %5531 = vmatprep.subr.mxu0 0.0
      %5532 = vmatpush1.msra.mxu0 0.0
      %5533 = vmatprep.subr.mxu0 0.0
      %5534 = vmatpush1.msra.mxu0 0.0
      %5535 = vmatprep.subr.mxu0 0.0
      %5536 = vmatpush1.msra.mxu0 0.0
      %5537 = vmatprep.subr.mxu0 0.0
      %5538 = vmatpush1.msra.mxu0 0.0
      %5539 = vmatprep.subr.mxu0 0.0
      %5540 = vmatpush1.msra.mxu0 0.0
      %5541 = vmatprep.subr.mxu0 0.0
      %5542 = vmatpush1.msra.mxu0 0.0
      %5543 = vmatprep.subr.mxu0 0.0
      %5544 = vmatpush1.msra.mxu0 0.0
      %5545 = vmatprep.subr.mxu0 0.0
      %5546 = vmatpush1.msra.mxu0 0.0
      %5547 = vmatprep.subr.mxu0 0.0
      %5548 = vmatpush1.msra.mxu0 0.0
      %5549 = vmatprep.subr.mxu0 0.0
      %5550 = vmatpush1.msra.mxu0 0.0
      %5551 = vmatprep.subr.mxu0 0.0
      %5552 = vmatpush1.msra.mxu0 0.0
      %5553 = vmatprep.subr.mxu0 0.0
      %5554 = vmatpush1.msra.mxu0 0.0
      %5555 = vmatprep.subr.mxu0 0.0
      %5556 = vmatpush1.msra.mxu0 0.0
      %5557 = vmatprep.subr.mxu0 0.0
      %5558 = vmatpush1.msra.mxu0 0.0
      %5559 = vmatprep.subr.mxu0 0.0
      %5560 = vmatpush1.msra.mxu0 0.0
      %5561 = vmatprep.subr.mxu0 0.0
      %5562 = vmatpush1.msra.mxu0 0.0
      %5563 = vmatprep.subr.mxu0 0.0
      %5564 = vmatpush1.msra.mxu0 0.0
      %5565 = vmatprep.subr.mxu0 0.0
      %5566 = vmatpush1.msra.mxu0 0.0
      %5567 = vmatprep.subr.mxu0 0.0
      %5568 = vmatpush1.msra.mxu0 0.0
      %5569 = vmatprep.subr.mxu0 0.0
      %5570 = vmatpush1.msra.mxu0 0.0
      %5571 = vmatprep.subr.mxu0 0.0
      %5572 = vmatpush1.msra.mxu0 0.0
      %5573 = vmatprep.subr.mxu0 0.0
      %5574 = vmatpush1.msra.mxu0 0.0
      %5575 = vmatprep.subr.mxu0 0.0
      %5576 = vmatpush1.msra.mxu0 0.0
      %5577 = vmatprep.subr.mxu0 0.0
      %5578 = vmatpush1.msra.mxu0 0.0
      %5579 = vmatprep.subr.mxu0 0.0
      %5580 = vmatpush1.msra.mxu0 0.0
      %5581 = vmatprep.subr.mxu0 0.0
      %5582 = vmatpush1.msra.mxu0 0.0
      %5583 = vmatprep.subr.mxu0 0.0
      %5584 = vmatpush1.msra.mxu0 0.0
      %5585 = vmatprep.mubr.f32.mxu0 0.0
      %5586 = vmatmul.mubr.f32.gmra.mrb[0].mxu0 %v5516
      %v5587 = vpop.f32.mrb[0].mxu0
      %v5588 = vadd.f32 %v5514, %v5587
      %v5589 = vpop.f32.mrb[0].mxu0
      %5590 = vmatprep.mubr.f32.mxu0 0.0
      %5591 = vmatmul.mubr.f32.gmra.mrb[0].mxu0 %v5519
      %v5592 = vpop.f32.mrb[0].mxu0
      %v5593 = vadd.f32 %v5514, %v5592
      %v5594 = vpop.f32.mrb[0].mxu0
      %5595 = vdwg.mxu0
      %5596 = vst.msk [vmem:[%s737] sm:$0xff] %vm742, %v5588
      %5597 = vst.msk [vmem:[%s737 + $0x8] sm:$0x1] %vm746, %v5593
      %p5598 = scmp.lt.s32.totalorder %s35, 1
      %s5599 = scalar_select %p5598, %s35, 1
      %s5600 = smul.addr %s5599, 2
      %s5601 = smul.addr %s5600, 8
      %s5602 = scalar_lea.vmem %s24, %s5601
      // Predicated region
      $region117: #{_lambda_.1} parent=115 // pred_check
        %p5603 = pneg %p562
      $region118: #{_lambda_.1} parent=115 // pred_check_branch
        %5605 = sbr.rel (%p5603) target = $region120
      $region119: #{_lambda_.1} parent=115 // pred_region
        _
      $region120: #{_lambda_.1} parent=115 // pred_fallthru
        _
    $region116: #{_lambda_.1} parent=5 // pred_fallthru
      _
    %p5606 = scmp.le.s32.totalorder 2, %s30
    // Predicated region
    $region121: #{_lambda_.1} parent=5 // pred_check
      %p5607 = pneg %p5606
    $region122: #{_lambda_.1} parent=5 // pred_check_branch
      %5609 = sbr.rel (%p5607) target = $region124
    $region123: #{_lambda_.1} parent=5 // pred_region
      %s5610 = ssub.s32 %s30, 2
      // Predicated region
      $region125: #{_lambda_.1} parent=123 // pred_check
        %p5611 = pneg %p568
      $region126: #{_lambda_.1} parent=123 // pred_check_branch
        %5613 = sbr.rel (%p5611) target = $region128
      $region127: #{_lambda_.1} parent=123 // pred_region
        %p5614 = scmp.lt.s32.totalorder %s36, 1
        %s5615 = scalar_select %p5614, %s36, 1
        %s5616 = smul.addr %s5615, 2
        %s5617 = smul.addr %s5616, 8
        %s5618 = scalar_lea.vmem %s24, %s5617
      $region128: #{_lambda_.1} parent=123 // pred_fallthru
        _
    $region124: #{_lambda_.1} parent=5 // pred_fallthru
      _
  $region6: #{_lambda_.1} parent=0 // loop_footer
    %s34 = sadd.s32 1, %s30
  $region7: #{_lambda_.1} parent=0 // loop_footer_branch
    %29 = sbr.rel target = $region3
  $region8: #{_lambda_.1} parent=0 // loop_exit
    _

</llo_original>
